<compile_context>
chip_gen: v7x
topology: tpu7x:2x2x1
jax: 0.10.0
libtpu: 0.0.40
codegen_flags: <defaults>
</compile_context>

<pallas_src>
import functools

import jax
import jax.numpy as jnp
import numpy as np
from jax.experimental import pallas as pl
from jax.experimental.pallas import tpu as pltpu


BLOCK_B = 8  # images processed per grid step (per-step VMEM stays in KBs)


# ----------------------------- Pallas kernels ------------------------------ #

def _conv_pool_image(xe_ref, xo_ref, w_ref, bias, t, kh, hq):
    """Fused conv(5x5, valid) + bias + 2x2 max-pool + ReLU for image `t`.

    xe_ref / xo_ref : even / odd input rows, (TB, Hh, Win*Cin) refs.
    w_ref           : (2*kh, Win*Cin, Wq*Cout) Toeplitz weights; entry
                      [2*di + wb] maps one input row to the conv outputs at
                      output columns of W-parity `wb` for kernel row `di`.
    bias            : (1, Wq*Cout) bias, already tiled over output columns.
    Returns the pooled activation, shape (hq, Wq*Cout).
    """
    pooled = None
    for ha in (0, 1):          # H-parity of the conv row inside the pool window
        for wb in (0, 1):      # W-parity of the conv col inside the pool window
            acc = None
            for di in range(kh):
                s = ha + di
                src = xe_ref if s % 2 == 0 else xo_ref
                slab = src[t, s // 2: s // 2 + hq, :]        # contiguous slice
                prod = jnp.dot(slab, w_ref[2 * di + wb],
                               preferred_element_type=jnp.float32)
                acc = prod if acc is None else acc + prod
            pooled = acc if pooled is None else jnp.maximum(pooled, acc)
    return jnp.maximum(pooled + bias, 0.0)


def _conv_pool_kernel(xe_ref, xo_ref, w_ref, b_ref, o_ref, *, n_img, kh, hq):
    bias = b_ref[...]
    for t in range(n_img):
        o_ref[t] = _conv_pool_image(xe_ref, xo_ref, w_ref, bias, t, kh, hq)


def _conv_pool_fc_kernel(pe_ref, po_ref, w2_ref, b2_ref,
                         wf1_ref, bf1_ref, wf2_ref, bf2_ref,
                         o_ref, *, n_img, kh, hq):
    b2 = b2_ref[...]
    bf1 = bf1_ref[...]
    bf2 = bf2_ref[...]
    wf2 = wf2_ref[...]
    for t in range(n_img):
        # conv2 + bias + 2x2 max-pool + ReLU -> (4, 80)
        h = _conv_pool_image(pe_ref, po_ref, w2_ref, b2, t, kh, hq)
        # TODO(synk): Dropout2d / F.dropout are eval-mode identities here.
        # fc1 + ReLU: contract over the (row, col*chan) grid; the PyTorch
        # flatten permutation is baked into wf1's packing (no reshape needed).
        z = None
        for p in range(hq):
            prod = jnp.dot(h[p:p + 1, :], wf1_ref[p],
                           preferred_element_type=jnp.float32)
            z = prod if z is None else z + prod
        z = jnp.maximum(z + bf1, 0.0)                         # (1, 128)
        # fc2 + log_softmax
        logits = jnp.dot(z, wf2, preferred_element_type=jnp.float32) + bf2
        m = jnp.max(logits, axis=-1, keepdims=True)
        s = logits - m
        lse = jnp.log(jnp.sum(jnp.exp(s), axis=-1, keepdims=True))
        o_ref[pl.ds(t, 1), :] = s - lse


# ----------------------------- pallas_call glue ----------------------------- #

_COMPILER_PARAMS = pltpu.CompilerParams(
    dimension_semantics=("parallel",),     # batch blocks shard across TCs (v7x)
    vmem_limit_bytes=32 * 1024 * 1024,
)


def _batch_grid(batch):
    tb = batch if batch <= BLOCK_B else BLOCK_B
    return tb, (pl.cdiv(batch, tb),)


def conv_pool(xe, xo, w, brow, hq):
    """Fused conv + bias + 2x2 max-pool + ReLU over a batch of images."""
    B = xe.shape[0]
    nq = w.shape[2]
    tb, grid = _batch_grid(B)
    kernel = functools.partial(_conv_pool_kernel, n_img=tb,
                               kh=w.shape[0] // 2, hq=hq)
    return pl.pallas_call(
        kernel,
        out_shape=jax.ShapeDtypeStruct((B, hq, nq), jnp.float32),
        grid=grid,
        in_specs=[
            pl.BlockSpec((tb,) + xe.shape[1:], lambda i: (i, 0, 0)),
            pl.BlockSpec((tb,) + xo.shape[1:], lambda i: (i, 0, 0)),
            pl.BlockSpec(w.shape, lambda i: (0, 0, 0)),     # VMEM-resident
            pl.BlockSpec(brow.shape, lambda i: (0, 0)),
        ],
        out_specs=pl.BlockSpec((tb, hq, nq), lambda i: (i, 0, 0)),
        compiler_params=_COMPILER_PARAMS,
    )(xe, xo, w, brow)


def conv_pool_fc(pe, po, w2, b2row, wf1, bf1, wf2, bf2, hq):
    """Fused conv2 + pool + ReLU + fc1 + ReLU + fc2 + log_softmax."""
    B = pe.shape[0]
    nout = wf2.shape[1]
    tb, grid = _batch_grid(B)
    kernel = functools.partial(_conv_pool_fc_kernel, n_img=tb,
                               kh=w2.shape[0] // 2, hq=hq)
    return pl.pallas_call(
        kernel,
        out_shape=jax.ShapeDtypeStruct((B, nout), jnp.float32),
        grid=grid,
        in_specs=[
            pl.BlockSpec((tb,) + pe.shape[1:], lambda i: (i, 0, 0)),
            pl.BlockSpec((tb,) + po.shape[1:], lambda i: (i, 0, 0)),
            pl.BlockSpec(w2.shape, lambda i: (0, 0, 0)),
            pl.BlockSpec(b2row.shape, lambda i: (0, 0)),
            pl.BlockSpec(wf1.shape, lambda i: (0, 0, 0)),
            pl.BlockSpec(bf1.shape, lambda i: (0, 0)),
            pl.BlockSpec(wf2.shape, lambda i: (0, 0)),
            pl.BlockSpec(bf2.shape, lambda i: (0, 0)),
        ],
        out_specs=pl.BlockSpec((tb, nout), lambda i: (i, 0)),
        compiler_params=_COMPILER_PARAMS,
    )(pe, po, w2, b2row, wf1, bf1, wf2, bf2)


# ---------------------------- parameter packing ----------------------------- #

def init_params(key):
    ks = jax.random.split(key, 8)
    scale = 0.1
    return {
        "conv1_w": scale * jax.random.normal(ks[0], (10, 1, 5, 5), jnp.float32),
        "conv1_b": scale * jax.random.normal(ks[1], (10,), jnp.float32),
        "conv2_w": scale * jax.random.normal(ks[2], (20, 10, 5, 5), jnp.float32),
        "conv2_b": scale * jax.random.normal(ks[3], (20,), jnp.float32),
        "fc1_w": scale * jax.random.normal(ks[4], (50, 320), jnp.float32),
        "fc1_b": scale * jax.random.normal(ks[5], (50,), jnp.float32),
        "fc2_w": scale * jax.random.normal(ks[6], (10, 50), jnp.float32),
        "fc2_b": scale * jax.random.normal(ks[7], (10,), jnp.float32),
    }


def _conv_pool_toeplitz(w_oihw, win):
    """Build T[2*di + wb] of shape (Win*Cin, Wq*Cout) such that
    conv_out[2p+a, 2q+wb, co] = sum_di x_row[2p+a+di, :] @ T[2*di+wb] at column
    q*Cout+co, with rows/columns in interleaved (w, c) minor layout."""
    w = np.asarray(w_oihw, np.float32)
    cout, cin, kh, kw = w.shape
    wq = (win - kw + 1) // 2
    t = np.zeros((kh, 2, win * cin, wq * cout), np.float32)
    for di in range(kh):
        for wb in range(2):
            for q in range(wq):
                for dj in range(kw):
                    w_in = 2 * q + wb + dj
                    if w_in >= win:
                        continue
                    t[di, wb, w_in * cin:(w_in + 1) * cin,
                      q * cout:(q + 1) * cout] = w[:, :, di, dj].T
    return t.reshape(kh * 2, win * cin, wq * cout)


def pack_params(params):
    """One-time weight prep: Toeplitz conv matrices, tiled biases, fc weight
    permutation (absorbs PyTorch's NCHW flatten) and zero padding for lane / K
    alignment.  Nothing here is on the per-forward hot path."""
    w1 = np.asarray(params["conv1_w"]); b1 = np.asarray(params["conv1_b"])
    w2 = np.asarray(params["conv2_w"]); b2 = np.asarray(params["conv2_b"])
    f1w = np.asarray(params["fc1_w"]);  f1b = np.asarray(params["fc1_b"])
    f2w = np.asarray(params["fc2_w"]);  f2b = np.asarray(params["fc2_b"])

    # conv1: Win=28, Cin=1, Cout=10 -> pooled1 minor = 12*10, padded to 128.
    w1t = _conv_pool_toeplitz(w1, win=28)                    # (10, 28, 120)
    w1t = np.pad(w1t, ((0, 0), (0, 0), (0, 8)))              # (10, 28, 128)
    b1row = np.pad(np.tile(b1, 12), (0, 8))[None, :]         # (1, 128)

    # conv2: Win=12, Cin=10, Cout=20 ; K padded 120 -> 128 to match pooled1.
    w2t = _conv_pool_toeplitz(w2, win=12)                    # (10, 120, 80)
    w2t = np.pad(w2t, ((0, 0), (0, 8), (0, 0)))              # (10, 128, 80)
    b2row = np.tile(b2, 4)[None, :]                          # (1, 80)

    # fc1: permute the 320 features from PyTorch's (c, h, w) flatten order to
    # our (h, (w, c)) activation layout; pad 50 -> 128 outputs.
    hq2, wq2, c2, npad = 4, 4, 20, 128
    fc1w = np.zeros((hq2, wq2 * c2, npad), np.float32)
    for p in range(hq2):
        for q in range(wq2):
            for co in range(c2):
                f = co * (hq2 * wq2) + p * wq2 + q
                fc1w[p, q * c2 + co, :f1w.shape[0]] = f1w[:, f]
    fc1b = np.zeros((1, npad), np.float32)
    fc1b[0, :f1b.shape[0]] = f1b

    fc2w = np.zeros((npad, f2w.shape[0]), np.float32)        # (128, 10)
    fc2w[:f2w.shape[1], :] = f2w.T
    fc2b = f2b.astype(np.float32)[None, :]                   # (1, 10)

    packed = dict(w1t=w1t, b1row=b1row, w2t=w2t, b2row=b2row,
                  fc1w=fc1w, fc1b=fc1b, fc2w=fc2w, fc2b=fc2b)
    return {k: jnp.asarray(v) for k, v in packed.items()}


# ------------------------------ ConvNet model ------------------------------ #

def convnet_forward(packed, x_nchw):
    """Forward pass equivalent to the PyTorch ConvNet (eval mode)."""
    B = x_nchw.shape[0]
    # Cin == 1: NCHW -> per-image 2-D (H, W*Cin) slabs.
    xf = x_nchw.reshape(B, 28, 28)
    # Even/odd input rows: one cheap rearrangement of the *input*, replacing
    # the previous 4x strided re-read of the full-resolution conv activation.
    xe, xo = xf[:, 0::2, :], xf[:, 1::2, :]                  # (B, 14, 28)

    # conv1 + bias + 2x2 max-pool + ReLU -> (B, 12, 128) (12*10 real + pad)
    pooled1 = conv_pool(xe, xo, packed["w1t"], packed["b1row"], hq=12)

    pe, po = pooled1[:, 0::2, :], pooled1[:, 1::2, :]        # (B, 6, 128)

    # conv2 + pool + ReLU + fc1 + ReLU + fc2 + log_softmax, all in one kernel.
    return conv_pool_fc(pe, po, packed["w2t"], packed["b2row"],
                        packed["fc1w"], packed["fc1b"],
                        packed["fc2w"], packed["fc2b"], hq=4)


# ----------------------- plain-JAX reference (checking) --------------------- #

def _conv2d_ref(x_nchw, w, b):
    cout, cin, kh, kw = w.shape
    B, C, H, W = x_nchw.shape
    ho, wo = H - kh + 1, W - kw + 1
    y = jnp.zeros((B, cout, ho, wo), jnp.float32)
    for di in range(kh):
        for dj in range(kw):
            patch = x_nchw[:, :, di:di + ho, dj:dj + wo]
            y = y + jnp.einsum("bchw,oc->bohw", patch, w[:, :, di, dj])
    return y + b[None, :, None, None]


def _maxpool2_ref(y):
    B, C, H, W = y.shape
    return jnp.max(y.reshape(B, C, H // 2, 2, W // 2, 2), axis=(3, 5))


def convnet_reference(params, x):
    y = jax.nn.relu(_maxpool2_ref(_conv2d_ref(x, params["conv1_w"], params["conv1_b"])))
    y = jax.nn.relu(_maxpool2_ref(_conv2d_ref(y, params["conv2_w"], params["conv2_b"])))
    y = y.reshape(y.shape[0], -1)                            # (B, 320), (c,h,w)
    y = jax.nn.relu(y @ params["fc1_w"].T + params["fc1_b"])
    y = y @ params["fc2_w"].T + params["fc2_b"]
    return jax.nn.log_softmax(y, axis=-1)


if __name__ == "__main__":
    key = jax.random.PRNGKey(0)
    pkey, xkey = jax.random.split(key)
    params = init_params(pkey)
    packed = pack_params(params)

    # MNIST-style input: batch=2, 1 channel, 28x28 (required so flatten -> 320).
    x = jax.random.normal(xkey, (2, 1, 28, 28), jnp.float32)

    out = jax.jit(convnet_forward)(packed, x)
    out = jax.block_until_ready(out)
    assert out.shape == (2, 10)

    # Numerical parity with a plain-JAX implementation of the PyTorch module.
    ref = convnet_reference(params, x)
    assert bool(jnp.allclose(out, ref, atol=2e-4, rtol=2e-4))
    # log_softmax rows must (approximately) sum to 1 in prob space.
    assert bool(jnp.all(jnp.abs(jnp.sum(jnp.exp(out), axis=-1) - 1.0) < 1e-4))
    print("KERNEL_OK")
</pallas_src>

<mosaic_0001>
module attributes {stable_mosaic.version = 11 : i64} {
  func.func @_conv_pool_kernel(%arg0: i32, %arg1: memref<2x14x28xf32, #tpu.memory_space<vmem>>, %arg2: memref<2x14x28xf32, #tpu.memory_space<vmem>>, %arg3: memref<10x28x128xf32, #tpu.memory_space<vmem>>, %arg4: memref<1x128xf32, #tpu.memory_space<vmem>>, %arg5: memref<2x12x128xf32, #tpu.memory_space<vmem>>) attributes {dimension_semantics = [#tpu.dimension_semantics<parallel>], iteration_bounds = array<i64: 1>, scalar_prefetch = 0 : i64, scratch_operands = 0 : i64, tpu.core_type = #tpu.core_type<tc>, window_params = [{transform_indices = @transform_0, window_bounds = array<i64: 2, 14, 28>}, {transform_indices = @transform_1, window_bounds = array<i64: 2, 14, 28>}, {pipeline_mode = #tpu.pipeline_mode<synchronous>, transform_indices = @transform_2, window_bounds = array<i64: 10, 28, 128>}, {pipeline_mode = #tpu.pipeline_mode<synchronous>, transform_indices = @transform_3, window_bounds = array<i64: 1, 128>}, {transform_indices = @transform_4, window_bounds = array<i64: 2, 12, 128>}]} {
    %c0 = arith.constant 0 : index
    %c0_0 = arith.constant 0 : index
    %0 = vector.load %arg4[%c0, %c0_0] : memref<1x128xf32, #tpu.memory_space<vmem>>, vector<1x128xf32>
    %c0_1 = arith.constant 0 : index
    %c0_2 = arith.constant 0 : index
    %c0_3 = arith.constant 0 : index
    %1 = vector.load %arg1[%c0_1, %c0_2, %c0_3] : memref<2x14x28xf32, #tpu.memory_space<vmem>>, vector<1x12x28xf32>
    %2 = vector.shape_cast %1 : vector<1x12x28xf32> to vector<12x28xf32>
    %c0_4 = arith.constant 0 : index
    %c0_5 = arith.constant 0 : index
    %c0_6 = arith.constant 0 : index
    %3 = vector.load %arg3[%c0_4, %c0_5, %c0_6] : memref<10x28x128xf32, #tpu.memory_space<vmem>>, vector<1x28x128xf32>
    %4 = vector.shape_cast %3 : vector<1x28x128xf32> to vector<28x128xf32>
    %cst = arith.constant dense<0.000000e+00> : vector<12x128xf32>
    %5 = tpu.matmul %2, %4, %cst {dimension_numbers = #tpu.dot_dimension_numbers<[1], [0], [0], [1], [0, 0, 1, 1], [], []>} : vector<12x28xf32>, vector<28x128xf32>, vector<12x128xf32> -> vector<12x128xf32>
    %c0_7 = arith.constant 0 : index
    %c0_8 = arith.constant 0 : index
    %c0_9 = arith.constant 0 : index
    %6 = vector.load %arg2[%c0_7, %c0_8, %c0_9] : memref<2x14x28xf32, #tpu.memory_space<vmem>>, vector<1x12x28xf32>
    %7 = vector.shape_cast %6 : vector<1x12x28xf32> to vector<12x28xf32>
    %c2 = arith.constant 2 : index
    %c0_10 = arith.constant 0 : index
    %c0_11 = arith.constant 0 : index
    %8 = vector.load %arg3[%c2, %c0_10, %c0_11] : memref<10x28x128xf32, #tpu.memory_space<vmem>>, vector<1x28x128xf32>
    %9 = vector.shape_cast %8 : vector<1x28x128xf32> to vector<28x128xf32>
    %cst_12 = arith.constant dense<0.000000e+00> : vector<12x128xf32>
    %10 = tpu.matmul %7, %9, %cst_12 {dimension_numbers = #tpu.dot_dimension_numbers<[1], [0], [0], [1], [0, 0, 1, 1], [], []>} : vector<12x28xf32>, vector<28x128xf32>, vector<12x128xf32> -> vector<12x128xf32>
    %11 = arith.addf %5, %10 : vector<12x128xf32>
    %c0_13 = arith.constant 0 : index
    %c1 = arith.constant 1 : index
    %c0_14 = arith.constant 0 : index
    %12 = vector.load %arg1[%c0_13, %c1, %c0_14] : memref<2x14x28xf32, #tpu.memory_space<vmem>>, vector<1x12x28xf32>
    %13 = vector.shape_cast %12 : vector<1x12x28xf32> to vector<12x28xf32>
    %c4 = arith.constant 4 : index
    %c0_15 = arith.constant 0 : index
    %c0_16 = arith.constant 0 : index
    %14 = vector.load %arg3[%c4, %c0_15, %c0_16] : memref<10x28x128xf32, #tpu.memory_space<vmem>>, vector<1x28x128xf32>
    %15 = vector.shape_cast %14 : vector<1x28x128xf32> to vector<28x128xf32>
    %cst_17 = arith.constant dense<0.000000e+00> : vector<12x128xf32>
    %16 = tpu.matmul %13, %15, %cst_17 {dimension_numbers = #tpu.dot_dimension_numbers<[1], [0], [0], [1], [0, 0, 1, 1], [], []>} : vector<12x28xf32>, vector<28x128xf32>, vector<12x128xf32> -> vector<12x128xf32>
    %17 = arith.addf %11, %16 : vector<12x128xf32>
    %c0_18 = arith.constant 0 : index
    %c1_19 = arith.constant 1 : index
    %c0_20 = arith.constant 0 : index
    %18 = vector.load %arg2[%c0_18, %c1_19, %c0_20] : memref<2x14x28xf32, #tpu.memory_space<vmem>>, vector<1x12x28xf32>
    %19 = vector.shape_cast %18 : vector<1x12x28xf32> to vector<12x28xf32>
    %c6 = arith.constant 6 : index
    %c0_21 = arith.constant 0 : index
    %c0_22 = arith.constant 0 : index
    %20 = vector.load %arg3[%c6, %c0_21, %c0_22] : memref<10x28x128xf32, #tpu.memory_space<vmem>>, vector<1x28x128xf32>
    %21 = vector.shape_cast %20 : vector<1x28x128xf32> to vector<28x128xf32>
    %cst_23 = arith.constant dense<0.000000e+00> : vector<12x128xf32>
    %22 = tpu.matmul %19, %21, %cst_23 {dimension_numbers = #tpu.dot_dimension_numbers<[1], [0], [0], [1], [0, 0, 1, 1], [], []>} : vector<12x28xf32>, vector<28x128xf32>, vector<12x128xf32> -> vector<12x128xf32>
    %23 = arith.addf %17, %22 : vector<12x128xf32>
    %c0_24 = arith.constant 0 : index
    %c2_25 = arith.constant 2 : index
    %c0_26 = arith.constant 0 : index
    %24 = vector.load %arg1[%c0_24, %c2_25, %c0_26] : memref<2x14x28xf32, #tpu.memory_space<vmem>>, vector<1x12x28xf32>
    %25 = vector.shape_cast %24 : vector<1x12x28xf32> to vector<12x28xf32>
    %c8 = arith.constant 8 : index
    %c0_27 = arith.constant 0 : index
    %c0_28 = arith.constant 0 : index
    %26 = vector.load %arg3[%c8, %c0_27, %c0_28] : memref<10x28x128xf32, #tpu.memory_space<vmem>>, vector<1x28x128xf32>
    %27 = vector.shape_cast %26 : vector<1x28x128xf32> to vector<28x128xf32>
    %cst_29 = arith.constant dense<0.000000e+00> : vector<12x128xf32>
    %28 = tpu.matmul %25, %27, %cst_29 {dimension_numbers = #tpu.dot_dimension_numbers<[1], [0], [0], [1], [0, 0, 1, 1], [], []>} : vector<12x28xf32>, vector<28x128xf32>, vector<12x128xf32> -> vector<12x128xf32>
    %29 = arith.addf %23, %28 : vector<12x128xf32>
    %c0_30 = arith.constant 0 : index
    %c0_31 = arith.constant 0 : index
    %c0_32 = arith.constant 0 : index
    %30 = vector.load %arg1[%c0_30, %c0_31, %c0_32] : memref<2x14x28xf32, #tpu.memory_space<vmem>>, vector<1x12x28xf32>
    %31 = vector.shape_cast %30 : vector<1x12x28xf32> to vector<12x28xf32>
    %c1_33 = arith.constant 1 : index
    %c0_34 = arith.constant 0 : index
    %c0_35 = arith.constant 0 : index
    %32 = vector.load %arg3[%c1_33, %c0_34, %c0_35] : memref<10x28x128xf32, #tpu.memory_space<vmem>>, vector<1x28x128xf32>
    %33 = vector.shape_cast %32 : vector<1x28x128xf32> to vector<28x128xf32>
    %cst_36 = arith.constant dense<0.000000e+00> : vector<12x128xf32>
    %34 = tpu.matmul %31, %33, %cst_36 {dimension_numbers = #tpu.dot_dimension_numbers<[1], [0], [0], [1], [0, 0, 1, 1], [], []>} : vector<12x28xf32>, vector<28x128xf32>, vector<12x128xf32> -> vector<12x128xf32>
    %c0_37 = arith.constant 0 : index
    %c0_38 = arith.constant 0 : index
    %c0_39 = arith.constant 0 : index
    %35 = vector.load %arg2[%c0_37, %c0_38, %c0_39] : memref<2x14x28xf32, #tpu.memory_space<vmem>>, vector<1x12x28xf32>
    %36 = vector.shape_cast %35 : vector<1x12x28xf32> to vector<12x28xf32>
    %c3 = arith.constant 3 : index
    %c0_40 = arith.constant 0 : index
    %c0_41 = arith.constant 0 : index
    %37 = vector.load %arg3[%c3, %c0_40, %c0_41] : memref<10x28x128xf32, #tpu.memory_space<vmem>>, vector<1x28x128xf32>
    %38 = vector.shape_cast %37 : vector<1x28x128xf32> to vector<28x128xf32>
    %cst_42 = arith.constant dense<0.000000e+00> : vector<12x128xf32>
    %39 = tpu.matmul %36, %38, %cst_42 {dimension_numbers = #tpu.dot_dimension_numbers<[1], [0], [0], [1], [0, 0, 1, 1], [], []>} : vector<12x28xf32>, vector<28x128xf32>, vector<12x128xf32> -> vector<12x128xf32>
    %40 = arith.addf %34, %39 : vector<12x128xf32>
    %c0_43 = arith.constant 0 : index
    %c1_44 = arith.constant 1 : index
    %c0_45 = arith.constant 0 : index
    %41 = vector.load %arg1[%c0_43, %c1_44, %c0_45] : memref<2x14x28xf32, #tpu.memory_space<vmem>>, vector<1x12x28xf32>
    %42 = vector.shape_cast %41 : vector<1x12x28xf32> to vector<12x28xf32>
    %c5 = arith.constant 5 : index
    %c0_46 = arith.constant 0 : index
    %c0_47 = arith.constant 0 : index
    %43 = vector.load %arg3[%c5, %c0_46, %c0_47] : memref<10x28x128xf32, #tpu.memory_space<vmem>>, vector<1x28x128xf32>
    %44 = vector.shape_cast %43 : vector<1x28x128xf32> to vector<28x128xf32>
    %cst_48 = arith.constant dense<0.000000e+00> : vector<12x128xf32>
    %45 = tpu.matmul %42, %44, %cst_48 {dimension_numbers = #tpu.dot_dimension_numbers<[1], [0], [0], [1], [0, 0, 1, 1], [], []>} : vector<12x28xf32>, vector<28x128xf32>, vector<12x128xf32> -> vector<12x128xf32>
    %46 = arith.addf %40, %45 : vector<12x128xf32>
    %c0_49 = arith.constant 0 : index
    %c1_50 = arith.constant 1 : index
    %c0_51 = arith.constant 0 : index
    %47 = vector.load %arg2[%c0_49, %c1_50, %c0_51] : memref<2x14x28xf32, #tpu.memory_space<vmem>>, vector<1x12x28xf32>
    %48 = vector.shape_cast %47 : vector<1x12x28xf32> to vector<12x28xf32>
    %c7 = arith.constant 7 : index
    %c0_52 = arith.constant 0 : index
    %c0_53 = arith.constant 0 : index
    %49 = vector.load %arg3[%c7, %c0_52, %c0_53] : memref<10x28x128xf32, #tpu.memory_space<vmem>>, vector<1x28x128xf32>
    %50 = vector.shape_cast %49 : vector<1x28x128xf32> to vector<28x128xf32>
    %cst_54 = arith.constant dense<0.000000e+00> : vector<12x128xf32>
    %51 = tpu.matmul %48, %50, %cst_54 {dimension_numbers = #tpu.dot_dimension_numbers<[1], [0], [0], [1], [0, 0, 1, 1], [], []>} : vector<12x28xf32>, vector<28x128xf32>, vector<12x128xf32> -> vector<12x128xf32>
    %52 = arith.addf %46, %51 : vector<12x128xf32>
    %c0_55 = arith.constant 0 : index
    %c2_56 = arith.constant 2 : index
    %c0_57 = arith.constant 0 : index
    %53 = vector.load %arg1[%c0_55, %c2_56, %c0_57] : memref<2x14x28xf32, #tpu.memory_space<vmem>>, vector<1x12x28xf32>
    %54 = vector.shape_cast %53 : vector<1x12x28xf32> to vector<12x28xf32>
    %c9 = arith.constant 9 : index
    %c0_58 = arith.constant 0 : index
    %c0_59 = arith.constant 0 : index
    %55 = vector.load %arg3[%c9, %c0_58, %c0_59] : memref<10x28x128xf32, #tpu.memory_space<vmem>>, vector<1x28x128xf32>
    %56 = vector.shape_cast %55 : vector<1x28x128xf32> to vector<28x128xf32>
    %cst_60 = arith.constant dense<0.000000e+00> : vector<12x128xf32>
    %57 = tpu.matmul %54, %56, %cst_60 {dimension_numbers = #tpu.dot_dimension_numbers<[1], [0], [0], [1], [0, 0, 1, 1], [], []>} : vector<12x28xf32>, vector<28x128xf32>, vector<12x128xf32> -> vector<12x128xf32>
    %58 = arith.addf %52, %57 : vector<12x128xf32>
    %59 = arith.maximumf %29, %58 : vector<12x128xf32>
    %c0_61 = arith.constant 0 : index
    %c0_62 = arith.constant 0 : index
    %c0_63 = arith.constant 0 : index
    %60 = vector.load %arg2[%c0_61, %c0_62, %c0_63] : memref<2x14x28xf32, #tpu.memory_space<vmem>>, vector<1x12x28xf32>
    %61 = vector.shape_cast %60 : vector<1x12x28xf32> to vector<12x28xf32>
    %c0_64 = arith.constant 0 : index
    %c0_65 = arith.constant 0 : index
    %c0_66 = arith.constant 0 : index
    %62 = vector.load %arg3[%c0_64, %c0_65, %c0_66] : memref<10x28x128xf32, #tpu.memory_space<vmem>>, vector<1x28x128xf32>
    %63 = vector.shape_cast %62 : vector<1x28x128xf32> to vector<28x128xf32>
    %cst_67 = arith.constant dense<0.000000e+00> : vector<12x128xf32>
    %64 = tpu.matmul %61, %63, %cst_67 {dimension_numbers = #tpu.dot_dimension_numbers<[1], [0], [0], [1], [0, 0, 1, 1], [], []>} : vector<12x28xf32>, vector<28x128xf32>, vector<12x128xf32> -> vector<12x128xf32>
    %c0_68 = arith.constant 0 : index
    %c1_69 = arith.constant 1 : index
    %c0_70 = arith.constant 0 : index
    %65 = vector.load %arg1[%c0_68, %c1_69, %c0_70] : memref<2x14x28xf32, #tpu.memory_space<vmem>>, vector<1x12x28xf32>
    %66 = vector.shape_cast %65 : vector<1x12x28xf32> to vector<12x28xf32>
    %c2_71 = arith.constant 2 : index
    %c0_72 = arith.constant 0 : index
    %c0_73 = arith.constant 0 : index
    %67 = vector.load %arg3[%c2_71, %c0_72, %c0_73] : memref<10x28x128xf32, #tpu.memory_space<vmem>>, vector<1x28x128xf32>
    %68 = vector.shape_cast %67 : vector<1x28x128xf32> to vector<28x128xf32>
    %cst_74 = arith.constant dense<0.000000e+00> : vector<12x128xf32>
    %69 = tpu.matmul %66, %68, %cst_74 {dimension_numbers = #tpu.dot_dimension_numbers<[1], [0], [0], [1], [0, 0, 1, 1], [], []>} : vector<12x28xf32>, vector<28x128xf32>, vector<12x128xf32> -> vector<12x128xf32>
    %70 = arith.addf %64, %69 : vector<12x128xf32>
    %c0_75 = arith.constant 0 : index
    %c1_76 = arith.constant 1 : index
    %c0_77 = arith.constant 0 : index
    %71 = vector.load %arg2[%c0_75, %c1_76, %c0_77] : memref<2x14x28xf32, #tpu.memory_space<vmem>>, vector<1x12x28xf32>
    %72 = vector.shape_cast %71 : vector<1x12x28xf32> to vector<12x28xf32>
    %c4_78 = arith.constant 4 : index
    %c0_79 = arith.constant 0 : index
    %c0_80 = arith.constant 0 : index
    %73 = vector.load %arg3[%c4_78, %c0_79, %c0_80] : memref<10x28x128xf32, #tpu.memory_space<vmem>>, vector<1x28x128xf32>
    %74 = vector.shape_cast %73 : vector<1x28x128xf32> to vector<28x128xf32>
    %cst_81 = arith.constant dense<0.000000e+00> : vector<12x128xf32>
    %75 = tpu.matmul %72, %74, %cst_81 {dimension_numbers = #tpu.dot_dimension_numbers<[1], [0], [0], [1], [0, 0, 1, 1], [], []>} : vector<12x28xf32>, vector<28x128xf32>, vector<12x128xf32> -> vector<12x128xf32>
    %76 = arith.addf %70, %75 : vector<12x128xf32>
    %c0_82 = arith.constant 0 : index
    %c2_83 = arith.constant 2 : index
    %c0_84 = arith.constant 0 : index
    %77 = vector.load %arg1[%c0_82, %c2_83, %c0_84] : memref<2x14x28xf32, #tpu.memory_space<vmem>>, vector<1x12x28xf32>
    %78 = vector.shape_cast %77 : vector<1x12x28xf32> to vector<12x28xf32>
    %c6_85 = arith.constant 6 : index
    %c0_86 = arith.constant 0 : index
    %c0_87 = arith.constant 0 : index
    %79 = vector.load %arg3[%c6_85, %c0_86, %c0_87] : memref<10x28x128xf32, #tpu.memory_space<vmem>>, vector<1x28x128xf32>
    %80 = vector.shape_cast %79 : vector<1x28x128xf32> to vector<28x128xf32>
    %cst_88 = arith.constant dense<0.000000e+00> : vector<12x128xf32>
    %81 = tpu.matmul %78, %80, %cst_88 {dimension_numbers = #tpu.dot_dimension_numbers<[1], [0], [0], [1], [0, 0, 1, 1], [], []>} : vector<12x28xf32>, vector<28x128xf32>, vector<12x128xf32> -> vector<12x128xf32>
    %82 = arith.addf %76, %81 : vector<12x128xf32>
    %c0_89 = arith.constant 0 : index
    %c2_90 = arith.constant 2 : index
    %c0_91 = arith.constant 0 : index
    %83 = vector.load %arg2[%c0_89, %c2_90, %c0_91] : memref<2x14x28xf32, #tpu.memory_space<vmem>>, vector<1x12x28xf32>
    %84 = vector.shape_cast %83 : vector<1x12x28xf32> to vector<12x28xf32>
    %c8_92 = arith.constant 8 : index
    %c0_93 = arith.constant 0 : index
    %c0_94 = arith.constant 0 : index
    %85 = vector.load %arg3[%c8_92, %c0_93, %c0_94] : memref<10x28x128xf32, #tpu.memory_space<vmem>>, vector<1x28x128xf32>
    %86 = vector.shape_cast %85 : vector<1x28x128xf32> to vector<28x128xf32>
    %cst_95 = arith.constant dense<0.000000e+00> : vector<12x128xf32>
    %87 = tpu.matmul %84, %86, %cst_95 {dimension_numbers = #tpu.dot_dimension_numbers<[1], [0], [0], [1], [0, 0, 1, 1], [], []>} : vector<12x28xf32>, vector<28x128xf32>, vector<12x128xf32> -> vector<12x128xf32>
    %88 = arith.addf %82, %87 : vector<12x128xf32>
    %89 = arith.maximumf %59, %88 : vector<12x128xf32>
    %c0_96 = arith.constant 0 : index
    %c0_97 = arith.constant 0 : index
    %c0_98 = arith.constant 0 : index
    %90 = vector.load %arg2[%c0_96, %c0_97, %c0_98] : memref<2x14x28xf32, #tpu.memory_space<vmem>>, vector<1x12x28xf32>
    %91 = vector.shape_cast %90 : vector<1x12x28xf32> to vector<12x28xf32>
    %c1_99 = arith.constant 1 : index
    %c0_100 = arith.constant 0 : index
    %c0_101 = arith.constant 0 : index
    %92 = vector.load %arg3[%c1_99, %c0_100, %c0_101] : memref<10x28x128xf32, #tpu.memory_space<vmem>>, vector<1x28x128xf32>
    %93 = vector.shape_cast %92 : vector<1x28x128xf32> to vector<28x128xf32>
    %cst_102 = arith.constant dense<0.000000e+00> : vector<12x128xf32>
    %94 = tpu.matmul %91, %93, %cst_102 {dimension_numbers = #tpu.dot_dimension_numbers<[1], [0], [0], [1], [0, 0, 1, 1], [], []>} : vector<12x28xf32>, vector<28x128xf32>, vector<12x128xf32> -> vector<12x128xf32>
    %c0_103 = arith.constant 0 : index
    %c1_104 = arith.constant 1 : index
    %c0_105 = arith.constant 0 : index
    %95 = vector.load %arg1[%c0_103, %c1_104, %c0_105] : memref<2x14x28xf32, #tpu.memory_space<vmem>>, vector<1x12x28xf32>
    %96 = vector.shape_cast %95 : vector<1x12x28xf32> to vector<12x28xf32>
    %c3_106 = arith.constant 3 : index
    %c0_107 = arith.constant 0 : index
    %c0_108 = arith.constant 0 : index
    %97 = vector.load %arg3[%c3_106, %c0_107, %c0_108] : memref<10x28x128xf32, #tpu.memory_space<vmem>>, vector<1x28x128xf32>
    %98 = vector.shape_cast %97 : vector<1x28x128xf32> to vector<28x128xf32>
    %cst_109 = arith.constant dense<0.000000e+00> : vector<12x128xf32>
    %99 = tpu.matmul %96, %98, %cst_109 {dimension_numbers = #tpu.dot_dimension_numbers<[1], [0], [0], [1], [0, 0, 1, 1], [], []>} : vector<12x28xf32>, vector<28x128xf32>, vector<12x128xf32> -> vector<12x128xf32>
    %100 = arith.addf %94, %99 : vector<12x128xf32>
    %c0_110 = arith.constant 0 : index
    %c1_111 = arith.constant 1 : index
    %c0_112 = arith.constant 0 : index
    %101 = vector.load %arg2[%c0_110, %c1_111, %c0_112] : memref<2x14x28xf32, #tpu.memory_space<vmem>>, vector<1x12x28xf32>
    %102 = vector.shape_cast %101 : vector<1x12x28xf32> to vector<12x28xf32>
    %c5_113 = arith.constant 5 : index
    %c0_114 = arith.constant 0 : index
    %c0_115 = arith.constant 0 : index
    %103 = vector.load %arg3[%c5_113, %c0_114, %c0_115] : memref<10x28x128xf32, #tpu.memory_space<vmem>>, vector<1x28x128xf32>
    %104 = vector.shape_cast %103 : vector<1x28x128xf32> to vector<28x128xf32>
    %cst_116 = arith.constant dense<0.000000e+00> : vector<12x128xf32>
    %105 = tpu.matmul %102, %104, %cst_116 {dimension_numbers = #tpu.dot_dimension_numbers<[1], [0], [0], [1], [0, 0, 1, 1], [], []>} : vector<12x28xf32>, vector<28x128xf32>, vector<12x128xf32> -> vector<12x128xf32>
    %106 = arith.addf %100, %105 : vector<12x128xf32>
    %c0_117 = arith.constant 0 : index
    %c2_118 = arith.constant 2 : index
    %c0_119 = arith.constant 0 : index
    %107 = vector.load %arg1[%c0_117, %c2_118, %c0_119] : memref<2x14x28xf32, #tpu.memory_space<vmem>>, vector<1x12x28xf32>
    %108 = vector.shape_cast %107 : vector<1x12x28xf32> to vector<12x28xf32>
    %c7_120 = arith.constant 7 : index
    %c0_121 = arith.constant 0 : index
    %c0_122 = arith.constant 0 : index
    %109 = vector.load %arg3[%c7_120, %c0_121, %c0_122] : memref<10x28x128xf32, #tpu.memory_space<vmem>>, vector<1x28x128xf32>
    %110 = vector.shape_cast %109 : vector<1x28x128xf32> to vector<28x128xf32>
    %cst_123 = arith.constant dense<0.000000e+00> : vector<12x128xf32>
    %111 = tpu.matmul %108, %110, %cst_123 {dimension_numbers = #tpu.dot_dimension_numbers<[1], [0], [0], [1], [0, 0, 1, 1], [], []>} : vector<12x28xf32>, vector<28x128xf32>, vector<12x128xf32> -> vector<12x128xf32>
    %112 = arith.addf %106, %111 : vector<12x128xf32>
    %c0_124 = arith.constant 0 : index
    %c2_125 = arith.constant 2 : index
    %c0_126 = arith.constant 0 : index
    %113 = vector.load %arg2[%c0_124, %c2_125, %c0_126] : memref<2x14x28xf32, #tpu.memory_space<vmem>>, vector<1x12x28xf32>
    %114 = vector.shape_cast %113 : vector<1x12x28xf32> to vector<12x28xf32>
    %c9_127 = arith.constant 9 : index
    %c0_128 = arith.constant 0 : index
    %c0_129 = arith.constant 0 : index
    %115 = vector.load %arg3[%c9_127, %c0_128, %c0_129] : memref<10x28x128xf32, #tpu.memory_space<vmem>>, vector<1x28x128xf32>
    %116 = vector.shape_cast %115 : vector<1x28x128xf32> to vector<28x128xf32>
    %cst_130 = arith.constant dense<0.000000e+00> : vector<12x128xf32>
    %117 = tpu.matmul %114, %116, %cst_130 {dimension_numbers = #tpu.dot_dimension_numbers<[1], [0], [0], [1], [0, 0, 1, 1], [], []>} : vector<12x28xf32>, vector<28x128xf32>, vector<12x128xf32> -> vector<12x128xf32>
    %118 = arith.addf %112, %117 : vector<12x128xf32>
    %119 = arith.maximumf %89, %118 : vector<12x128xf32>
    %120 = vector.broadcast %0 : vector<1x128xf32> to vector<12x128xf32>
    %121 = arith.addf %119, %120 : vector<12x128xf32>
    %cst_131 = arith.constant 0.000000e+00 : f32
    %122 = vector.broadcast %cst_131 : f32 to vector<12x128xf32>
    %123 = arith.maximumf %121, %122 : vector<12x128xf32>
    %c0_132 = arith.constant 0 : index
    %c0_133 = arith.constant 0 : index
    %c0_134 = arith.constant 0 : index
    %124 = vector.load %arg5[%c0_132, %c0_133, %c0_134] : memref<2x12x128xf32, #tpu.memory_space<vmem>>, vector<1x12x128xf32>
    %125 = vector.shape_cast %124 : vector<1x12x128xf32> to vector<12x128xf32>
    %126 = vector.shape_cast %123 : vector<12x128xf32> to vector<1x12x128xf32>
    tpu.vector_store %arg5[%c0_132, %c0_133, %c0_134], %126 {strides = array<i32>} : memref<2x12x128xf32, #tpu.memory_space<vmem>>, vector<1x12x128xf32>,
    %c1_135 = arith.constant 1 : index
    %c0_136 = arith.constant 0 : index
    %c0_137 = arith.constant 0 : index
    %127 = vector.load %arg1[%c1_135, %c0_136, %c0_137] : memref<2x14x28xf32, #tpu.memory_space<vmem>>, vector<1x12x28xf32>
    %128 = vector.shape_cast %127 : vector<1x12x28xf32> to vector<12x28xf32>
    %c0_138 = arith.constant 0 : index
    %c0_139 = arith.constant 0 : index
    %c0_140 = arith.constant 0 : index
    %129 = vector.load %arg3[%c0_138, %c0_139, %c0_140] : memref<10x28x128xf32, #tpu.memory_space<vmem>>, vector<1x28x128xf32>
    %130 = vector.shape_cast %129 : vector<1x28x128xf32> to vector<28x128xf32>
    %cst_141 = arith.constant dense<0.000000e+00> : vector<12x128xf32>
    %131 = tpu.matmul %128, %130, %cst_141 {dimension_numbers = #tpu.dot_dimension_numbers<[1], [0], [0], [1], [0, 0, 1, 1], [], []>} : vector<12x28xf32>, vector<28x128xf32>, vector<12x128xf32> -> vector<12x128xf32>
    %c1_142 = arith.constant 1 : index
    %c0_143 = arith.constant 0 : index
    %c0_144 = arith.constant 0 : index
    %132 = vector.load %arg2[%c1_142, %c0_143, %c0_144] : memref<2x14x28xf32, #tpu.memory_space<vmem>>, vector<1x12x28xf32>
    %133 = vector.shape_cast %132 : vector<1x12x28xf32> to vector<12x28xf32>
    %c2_145 = arith.constant 2 : index
    %c0_146 = arith.constant 0 : index
    %c0_147 = arith.constant 0 : index
    %134 = vector.load %arg3[%c2_145, %c0_146, %c0_147] : memref<10x28x128xf32, #tpu.memory_space<vmem>>, vector<1x28x128xf32>
    %135 = vector.shape_cast %134 : vector<1x28x128xf32> to vector<28x128xf32>
    %cst_148 = arith.constant dense<0.000000e+00> : vector<12x128xf32>
    %136 = tpu.matmul %133, %135, %cst_148 {dimension_numbers = #tpu.dot_dimension_numbers<[1], [0], [0], [1], [0, 0, 1, 1], [], []>} : vector<12x28xf32>, vector<28x128xf32>, vector<12x128xf32> -> vector<12x128xf32>
    %137 = arith.addf %131, %136 : vector<12x128xf32>
    %c1_149 = arith.constant 1 : index
    %c1_150 = arith.constant 1 : index
    %c0_151 = arith.constant 0 : index
    %138 = vector.load %arg1[%c1_149, %c1_150, %c0_151] : memref<2x14x28xf32, #tpu.memory_space<vmem>>, vector<1x12x28xf32>
    %139 = vector.shape_cast %138 : vector<1x12x28xf32> to vector<12x28xf32>
    %c4_152 = arith.constant 4 : index
    %c0_153 = arith.constant 0 : index
    %c0_154 = arith.constant 0 : index
    %140 = vector.load %arg3[%c4_152, %c0_153, %c0_154] : memref<10x28x128xf32, #tpu.memory_space<vmem>>, vector<1x28x128xf32>
    %141 = vector.shape_cast %140 : vector<1x28x128xf32> to vector<28x128xf32>
    %cst_155 = arith.constant dense<0.000000e+00> : vector<12x128xf32>
    %142 = tpu.matmul %139, %141, %cst_155 {dimension_numbers = #tpu.dot_dimension_numbers<[1], [0], [0], [1], [0, 0, 1, 1], [], []>} : vector<12x28xf32>, vector<28x128xf32>, vector<12x128xf32> -> vector<12x128xf32>
    %143 = arith.addf %137, %142 : vector<12x128xf32>
    %c1_156 = arith.constant 1 : index
    %c1_157 = arith.constant 1 : index
    %c0_158 = arith.constant 0 : index
    %144 = vector.load %arg2[%c1_156, %c1_157, %c0_158] : memref<2x14x28xf32, #tpu.memory_space<vmem>>, vector<1x12x28xf32>
    %145 = vector.shape_cast %144 : vector<1x12x28xf32> to vector<12x28xf32>
    %c6_159 = arith.constant 6 : index
    %c0_160 = arith.constant 0 : index
    %c0_161 = arith.constant 0 : index
    %146 = vector.load %arg3[%c6_159, %c0_160, %c0_161] : memref<10x28x128xf32, #tpu.memory_space<vmem>>, vector<1x28x128xf32>
    %147 = vector.shape_cast %146 : vector<1x28x128xf32> to vector<28x128xf32>
    %cst_162 = arith.constant dense<0.000000e+00> : vector<12x128xf32>
    %148 = tpu.matmul %145, %147, %cst_162 {dimension_numbers = #tpu.dot_dimension_numbers<[1], [0], [0], [1], [0, 0, 1, 1], [], []>} : vector<12x28xf32>, vector<28x128xf32>, vector<12x128xf32> -> vector<12x128xf32>
    %149 = arith.addf %143, %148 : vector<12x128xf32>
    %c1_163 = arith.constant 1 : index
    %c2_164 = arith.constant 2 : index
    %c0_165 = arith.constant 0 : index
    %150 = vector.load %arg1[%c1_163, %c2_164, %c0_165] : memref<2x14x28xf32, #tpu.memory_space<vmem>>, vector<1x12x28xf32>
    %151 = vector.shape_cast %150 : vector<1x12x28xf32> to vector<12x28xf32>
    %c8_166 = arith.constant 8 : index
    %c0_167 = arith.constant 0 : index
    %c0_168 = arith.constant 0 : index
    %152 = vector.load %arg3[%c8_166, %c0_167, %c0_168] : memref<10x28x128xf32, #tpu.memory_space<vmem>>, vector<1x28x128xf32>
    %153 = vector.shape_cast %152 : vector<1x28x128xf32> to vector<28x128xf32>
    %cst_169 = arith.constant dense<0.000000e+00> : vector<12x128xf32>
    %154 = tpu.matmul %151, %153, %cst_169 {dimension_numbers = #tpu.dot_dimension_numbers<[1], [0], [0], [1], [0, 0, 1, 1], [], []>} : vector<12x28xf32>, vector<28x128xf32>, vector<12x128xf32> -> vector<12x128xf32>
    %155 = arith.addf %149, %154 : vector<12x128xf32>
    %c1_170 = arith.constant 1 : index
    %c0_171 = arith.constant 0 : index
    %c0_172 = arith.constant 0 : index
    %156 = vector.load %arg1[%c1_170, %c0_171, %c0_172] : memref<2x14x28xf32, #tpu.memory_space<vmem>>, vector<1x12x28xf32>
    %157 = vector.shape_cast %156 : vector<1x12x28xf32> to vector<12x28xf32>
    %c1_173 = arith.constant 1 : index
    %c0_174 = arith.constant 0 : index
    %c0_175 = arith.constant 0 : index
    %158 = vector.load %arg3[%c1_173, %c0_174, %c0_175] : memref<10x28x128xf32, #tpu.memory_space<vmem>>, vector<1x28x128xf32>
    %159 = vector.shape_cast %158 : vector<1x28x128xf32> to vector<28x128xf32>
    %cst_176 = arith.constant dense<0.000000e+00> : vector<12x128xf32>
    %160 = tpu.matmul %157, %159, %cst_176 {dimension_numbers = #tpu.dot_dimension_numbers<[1], [0], [0], [1], [0, 0, 1, 1], [], []>} : vector<12x28xf32>, vector<28x128xf32>, vector<12x128xf32> -> vector<12x128xf32>
    %c1_177 = arith.constant 1 : index
    %c0_178 = arith.constant 0 : index
    %c0_179 = arith.constant 0 : index
    %161 = vector.load %arg2[%c1_177, %c0_178, %c0_179] : memref<2x14x28xf32, #tpu.memory_space<vmem>>, vector<1x12x28xf32>
    %162 = vector.shape_cast %161 : vector<1x12x28xf32> to vector<12x28xf32>
    %c3_180 = arith.constant 3 : index
    %c0_181 = arith.constant 0 : index
    %c0_182 = arith.constant 0 : index
    %163 = vector.load %arg3[%c3_180, %c0_181, %c0_182] : memref<10x28x128xf32, #tpu.memory_space<vmem>>, vector<1x28x128xf32>
    %164 = vector.shape_cast %163 : vector<1x28x128xf32> to vector<28x128xf32>
    %cst_183 = arith.constant dense<0.000000e+00> : vector<12x128xf32>
    %165 = tpu.matmul %162, %164, %cst_183 {dimension_numbers = #tpu.dot_dimension_numbers<[1], [0], [0], [1], [0, 0, 1, 1], [], []>} : vector<12x28xf32>, vector<28x128xf32>, vector<12x128xf32> -> vector<12x128xf32>
    %166 = arith.addf %160, %165 : vector<12x128xf32>
    %c1_184 = arith.constant 1 : index
    %c1_185 = arith.constant 1 : index
    %c0_186 = arith.constant 0 : index
    %167 = vector.load %arg1[%c1_184, %c1_185, %c0_186] : memref<2x14x28xf32, #tpu.memory_space<vmem>>, vector<1x12x28xf32>
    %168 = vector.shape_cast %167 : vector<1x12x28xf32> to vector<12x28xf32>
    %c5_187 = arith.constant 5 : index
    %c0_188 = arith.constant 0 : index
    %c0_189 = arith.constant 0 : index
    %169 = vector.load %arg3[%c5_187, %c0_188, %c0_189] : memref<10x28x128xf32, #tpu.memory_space<vmem>>, vector<1x28x128xf32>
    %170 = vector.shape_cast %169 : vector<1x28x128xf32> to vector<28x128xf32>
    %cst_190 = arith.constant dense<0.000000e+00> : vector<12x128xf32>
    %171 = tpu.matmul %168, %170, %cst_190 {dimension_numbers = #tpu.dot_dimension_numbers<[1], [0], [0], [1], [0, 0, 1, 1], [], []>} : vector<12x28xf32>, vector<28x128xf32>, vector<12x128xf32> -> vector<12x128xf32>
    %172 = arith.addf %166, %171 : vector<12x128xf32>
    %c1_191 = arith.constant 1 : index
    %c1_192 = arith.constant 1 : index
    %c0_193 = arith.constant 0 : index
    %173 = vector.load %arg2[%c1_191, %c1_192, %c0_193] : memref<2x14x28xf32, #tpu.memory_space<vmem>>, vector<1x12x28xf32>
    %174 = vector.shape_cast %173 : vector<1x12x28xf32> to vector<12x28xf32>
    %c7_194 = arith.constant 7 : index
    %c0_195 = arith.constant 0 : index
    %c0_196 = arith.constant 0 : index
    %175 = vector.load %arg3[%c7_194, %c0_195, %c0_196] : memref<10x28x128xf32, #tpu.memory_space<vmem>>, vector<1x28x128xf32>
    %176 = vector.shape_cast %175 : vector<1x28x128xf32> to vector<28x128xf32>
    %cst_197 = arith.constant dense<0.000000e+00> : vector<12x128xf32>
    %177 = tpu.matmul %174, %176, %cst_197 {dimension_numbers = #tpu.dot_dimension_numbers<[1], [0], [0], [1], [0, 0, 1, 1], [], []>} : vector<12x28xf32>, vector<28x128xf32>, vector<12x128xf32> -> vector<12x128xf32>
    %178 = arith.addf %172, %177 : vector<12x128xf32>
    %c1_198 = arith.constant 1 : index
    %c2_199 = arith.constant 2 : index
    %c0_200 = arith.constant 0 : index
    %179 = vector.load %arg1[%c1_198, %c2_199, %c0_200] : memref<2x14x28xf32, #tpu.memory_space<vmem>>, vector<1x12x28xf32>
    %180 = vector.shape_cast %179 : vector<1x12x28xf32> to vector<12x28xf32>
    %c9_201 = arith.constant 9 : index
    %c0_202 = arith.constant 0 : index
    %c0_203 = arith.constant 0 : index
    %181 = vector.load %arg3[%c9_201, %c0_202, %c0_203] : memref<10x28x128xf32, #tpu.memory_space<vmem>>, vector<1x28x128xf32>
    %182 = vector.shape_cast %181 : vector<1x28x128xf32> to vector<28x128xf32>
    %cst_204 = arith.constant dense<0.000000e+00> : vector<12x128xf32>
    %183 = tpu.matmul %180, %182, %cst_204 {dimension_numbers = #tpu.dot_dimension_numbers<[1], [0], [0], [1], [0, 0, 1, 1], [], []>} : vector<12x28xf32>, vector<28x128xf32>, vector<12x128xf32> -> vector<12x128xf32>
    %184 = arith.addf %178, %183 : vector<12x128xf32>
    %185 = arith.maximumf %155, %184 : vector<12x128xf32>
    %c1_205 = arith.constant 1 : index
    %c0_206 = arith.constant 0 : index
    %c0_207 = arith.constant 0 : index
    %186 = vector.load %arg2[%c1_205, %c0_206, %c0_207] : memref<2x14x28xf32, #tpu.memory_space<vmem>>, vector<1x12x28xf32>
    %187 = vector.shape_cast %186 : vector<1x12x28xf32> to vector<12x28xf32>
    %c0_208 = arith.constant 0 : index
    %c0_209 = arith.constant 0 : index
    %c0_210 = arith.constant 0 : index
    %188 = vector.load %arg3[%c0_208, %c0_209, %c0_210] : memref<10x28x128xf32, #tpu.memory_space<vmem>>, vector<1x28x128xf32>
    %189 = vector.shape_cast %188 : vector<1x28x128xf32> to vector<28x128xf32>
    %cst_211 = arith.constant dense<0.000000e+00> : vector<12x128xf32>
    %190 = tpu.matmul %187, %189, %cst_211 {dimension_numbers = #tpu.dot_dimension_numbers<[1], [0], [0], [1], [0, 0, 1, 1], [], []>} : vector<12x28xf32>, vector<28x128xf32>, vector<12x128xf32> -> vector<12x128xf32>
    %c1_212 = arith.constant 1 : index
    %c1_213 = arith.constant 1 : index
    %c0_214 = arith.constant 0 : index
    %191 = vector.load %arg1[%c1_212, %c1_213, %c0_214] : memref<2x14x28xf32, #tpu.memory_space<vmem>>, vector<1x12x28xf32>
    %192 = vector.shape_cast %191 : vector<1x12x28xf32> to vector<12x28xf32>
    %c2_215 = arith.constant 2 : index
    %c0_216 = arith.constant 0 : index
    %c0_217 = arith.constant 0 : index
    %193 = vector.load %arg3[%c2_215, %c0_216, %c0_217] : memref<10x28x128xf32, #tpu.memory_space<vmem>>, vector<1x28x128xf32>
    %194 = vector.shape_cast %193 : vector<1x28x128xf32> to vector<28x128xf32>
    %cst_218 = arith.constant dense<0.000000e+00> : vector<12x128xf32>
    %195 = tpu.matmul %192, %194, %cst_218 {dimension_numbers = #tpu.dot_dimension_numbers<[1], [0], [0], [1], [0, 0, 1, 1], [], []>} : vector<12x28xf32>, vector<28x128xf32>, vector<12x128xf32> -> vector<12x128xf32>
    %196 = arith.addf %190, %195 : vector<12x128xf32>
    %c1_219 = arith.constant 1 : index
    %c1_220 = arith.constant 1 : index
    %c0_221 = arith.constant 0 : index
    %197 = vector.load %arg2[%c1_219, %c1_220, %c0_221] : memref<2x14x28xf32, #tpu.memory_space<vmem>>, vector<1x12x28xf32>
    %198 = vector.shape_cast %197 : vector<1x12x28xf32> to vector<12x28xf32>
    %c4_222 = arith.constant 4 : index
    %c0_223 = arith.constant 0 : index
    %c0_224 = arith.constant 0 : index
    %199 = vector.load %arg3[%c4_222, %c0_223, %c0_224] : memref<10x28x128xf32, #tpu.memory_space<vmem>>, vector<1x28x128xf32>
    %200 = vector.shape_cast %199 : vector<1x28x128xf32> to vector<28x128xf32>
    %cst_225 = arith.constant dense<0.000000e+00> : vector<12x128xf32>
    %201 = tpu.matmul %198, %200, %cst_225 {dimension_numbers = #tpu.dot_dimension_numbers<[1], [0], [0], [1], [0, 0, 1, 1], [], []>} : vector<12x28xf32>, vector<28x128xf32>, vector<12x128xf32> -> vector<12x128xf32>
    %202 = arith.addf %196, %201 : vector<12x128xf32>
    %c1_226 = arith.constant 1 : index
    %c2_227 = arith.constant 2 : index
    %c0_228 = arith.constant 0 : index
    %203 = vector.load %arg1[%c1_226, %c2_227, %c0_228] : memref<2x14x28xf32, #tpu.memory_space<vmem>>, vector<1x12x28xf32>
    %204 = vector.shape_cast %203 : vector<1x12x28xf32> to vector<12x28xf32>
    %c6_229 = arith.constant 6 : index
    %c0_230 = arith.constant 0 : index
    %c0_231 = arith.constant 0 : index
    %205 = vector.load %arg3[%c6_229, %c0_230, %c0_231] : memref<10x28x128xf32, #tpu.memory_space<vmem>>, vector<1x28x128xf32>
    %206 = vector.shape_cast %205 : vector<1x28x128xf32> to vector<28x128xf32>
    %cst_232 = arith.constant dense<0.000000e+00> : vector<12x128xf32>
    %207 = tpu.matmul %204, %206, %cst_232 {dimension_numbers = #tpu.dot_dimension_numbers<[1], [0], [0], [1], [0, 0, 1, 1], [], []>} : vector<12x28xf32>, vector<28x128xf32>, vector<12x128xf32> -> vector<12x128xf32>
    %208 = arith.addf %202, %207 : vector<12x128xf32>
    %c1_233 = arith.constant 1 : index
    %c2_234 = arith.constant 2 : index
    %c0_235 = arith.constant 0 : index
    %209 = vector.load %arg2[%c1_233, %c2_234, %c0_235] : memref<2x14x28xf32, #tpu.memory_space<vmem>>, vector<1x12x28xf32>
    %210 = vector.shape_cast %209 : vector<1x12x28xf32> to vector<12x28xf32>
    %c8_236 = arith.constant 8 : index
    %c0_237 = arith.constant 0 : index
    %c0_238 = arith.constant 0 : index
    %211 = vector.load %arg3[%c8_236, %c0_237, %c0_238] : memref<10x28x128xf32, #tpu.memory_space<vmem>>, vector<1x28x128xf32>
    %212 = vector.shape_cast %211 : vector<1x28x128xf32> to vector<28x128xf32>
    %cst_239 = arith.constant dense<0.000000e+00> : vector<12x128xf32>
    %213 = tpu.matmul %210, %212, %cst_239 {dimension_numbers = #tpu.dot_dimension_numbers<[1], [0], [0], [1], [0, 0, 1, 1], [], []>} : vector<12x28xf32>, vector<28x128xf32>, vector<12x128xf32> -> vector<12x128xf32>
    %214 = arith.addf %208, %213 : vector<12x128xf32>
    %215 = arith.maximumf %185, %214 : vector<12x128xf32>
    %c1_240 = arith.constant 1 : index
    %c0_241 = arith.constant 0 : index
    %c0_242 = arith.constant 0 : index
    %216 = vector.load %arg2[%c1_240, %c0_241, %c0_242] : memref<2x14x28xf32, #tpu.memory_space<vmem>>, vector<1x12x28xf32>
    %217 = vector.shape_cast %216 : vector<1x12x28xf32> to vector<12x28xf32>
    %c1_243 = arith.constant 1 : index
    %c0_244 = arith.constant 0 : index
    %c0_245 = arith.constant 0 : index
    %218 = vector.load %arg3[%c1_243, %c0_244, %c0_245] : memref<10x28x128xf32, #tpu.memory_space<vmem>>, vector<1x28x128xf32>
    %219 = vector.shape_cast %218 : vector<1x28x128xf32> to vector<28x128xf32>
    %cst_246 = arith.constant dense<0.000000e+00> : vector<12x128xf32>
    %220 = tpu.matmul %217, %219, %cst_246 {dimension_numbers = #tpu.dot_dimension_numbers<[1], [0], [0], [1], [0, 0, 1, 1], [], []>} : vector<12x28xf32>, vector<28x128xf32>, vector<12x128xf32> -> vector<12x128xf32>
    %c1_247 = arith.constant 1 : index
    %c1_248 = arith.constant 1 : index
    %c0_249 = arith.constant 0 : index
    %221 = vector.load %arg1[%c1_247, %c1_248, %c0_249] : memref<2x14x28xf32, #tpu.memory_space<vmem>>, vector<1x12x28xf32>
    %222 = vector.shape_cast %221 : vector<1x12x28xf32> to vector<12x28xf32>
    %c3_250 = arith.constant 3 : index
    %c0_251 = arith.constant 0 : index
    %c0_252 = arith.constant 0 : index
    %223 = vector.load %arg3[%c3_250, %c0_251, %c0_252] : memref<10x28x128xf32, #tpu.memory_space<vmem>>, vector<1x28x128xf32>
    %224 = vector.shape_cast %223 : vector<1x28x128xf32> to vector<28x128xf32>
    %cst_253 = arith.constant dense<0.000000e+00> : vector<12x128xf32>
    %225 = tpu.matmul %222, %224, %cst_253 {dimension_numbers = #tpu.dot_dimension_numbers<[1], [0], [0], [1], [0, 0, 1, 1], [], []>} : vector<12x28xf32>, vector<28x128xf32>, vector<12x128xf32> -> vector<12x128xf32>
    %226 = arith.addf %220, %225 : vector<12x128xf32>
    %c1_254 = arith.constant 1 : index
    %c1_255 = arith.constant 1 : index
    %c0_256 = arith.constant 0 : index
    %227 = vector.load %arg2[%c1_254, %c1_255, %c0_256] : memref<2x14x28xf32, #tpu.memory_space<vmem>>, vector<1x12x28xf32>
    %228 = vector.shape_cast %227 : vector<1x12x28xf32> to vector<12x28xf32>
    %c5_257 = arith.constant 5 : index
    %c0_258 = arith.constant 0 : index
    %c0_259 = arith.constant 0 : index
    %229 = vector.load %arg3[%c5_257, %c0_258, %c0_259] : memref<10x28x128xf32, #tpu.memory_space<vmem>>, vector<1x28x128xf32>
    %230 = vector.shape_cast %229 : vector<1x28x128xf32> to vector<28x128xf32>
    %cst_260 = arith.constant dense<0.000000e+00> : vector<12x128xf32>
    %231 = tpu.matmul %228, %230, %cst_260 {dimension_numbers = #tpu.dot_dimension_numbers<[1], [0], [0], [1], [0, 0, 1, 1], [], []>} : vector<12x28xf32>, vector<28x128xf32>, vector<12x128xf32> -> vector<12x128xf32>
    %232 = arith.addf %226, %231 : vector<12x128xf32>
    %c1_261 = arith.constant 1 : index
    %c2_262 = arith.constant 2 : index
    %c0_263 = arith.constant 0 : index
    %233 = vector.load %arg1[%c1_261, %c2_262, %c0_263] : memref<2x14x28xf32, #tpu.memory_space<vmem>>, vector<1x12x28xf32>
    %234 = vector.shape_cast %233 : vector<1x12x28xf32> to vector<12x28xf32>
    %c7_264 = arith.constant 7 : index
    %c0_265 = arith.constant 0 : index
    %c0_266 = arith.constant 0 : index
    %235 = vector.load %arg3[%c7_264, %c0_265, %c0_266] : memref<10x28x128xf32, #tpu.memory_space<vmem>>, vector<1x28x128xf32>
    %236 = vector.shape_cast %235 : vector<1x28x128xf32> to vector<28x128xf32>
    %cst_267 = arith.constant dense<0.000000e+00> : vector<12x128xf32>
    %237 = tpu.matmul %234, %236, %cst_267 {dimension_numbers = #tpu.dot_dimension_numbers<[1], [0], [0], [1], [0, 0, 1, 1], [], []>} : vector<12x28xf32>, vector<28x128xf32>, vector<12x128xf32> -> vector<12x128xf32>
    %238 = arith.addf %232, %237 : vector<12x128xf32>
    %c1_268 = arith.constant 1 : index
    %c2_269 = arith.constant 2 : index
    %c0_270 = arith.constant 0 : index
    %239 = vector.load %arg2[%c1_268, %c2_269, %c0_270] : memref<2x14x28xf32, #tpu.memory_space<vmem>>, vector<1x12x28xf32>
    %240 = vector.shape_cast %239 : vector<1x12x28xf32> to vector<12x28xf32>
    %c9_271 = arith.constant 9 : index
    %c0_272 = arith.constant 0 : index
    %c0_273 = arith.constant 0 : index
    %241 = vector.load %arg3[%c9_271, %c0_272, %c0_273] : memref<10x28x128xf32, #tpu.memory_space<vmem>>, vector<1x28x128xf32>
    %242 = vector.shape_cast %241 : vector<1x28x128xf32> to vector<28x128xf32>
    %cst_274 = arith.constant dense<0.000000e+00> : vector<12x128xf32>
    %243 = tpu.matmul %240, %242, %cst_274 {dimension_numbers = #tpu.dot_dimension_numbers<[1], [0], [0], [1], [0, 0, 1, 1], [], []>} : vector<12x28xf32>, vector<28x128xf32>, vector<12x128xf32> -> vector<12x128xf32>
    %244 = arith.addf %238, %243 : vector<12x128xf32>
    %245 = arith.maximumf %215, %244 : vector<12x128xf32>
    %246 = vector.broadcast %0 : vector<1x128xf32> to vector<12x128xf32>
    %247 = arith.addf %245, %246 : vector<12x128xf32>
    %cst_275 = arith.constant 0.000000e+00 : f32
    %248 = vector.broadcast %cst_275 : f32 to vector<12x128xf32>
    %249 = arith.maximumf %247, %248 : vector<12x128xf32>
    %c1_276 = arith.constant 1 : index
    %c0_277 = arith.constant 0 : index
    %c0_278 = arith.constant 0 : index
    %250 = vector.load %arg5[%c1_276, %c0_277, %c0_278] : memref<2x12x128xf32, #tpu.memory_space<vmem>>, vector<1x12x128xf32>
    %251 = vector.shape_cast %250 : vector<1x12x128xf32> to vector<12x128xf32>
    %252 = vector.shape_cast %249 : vector<12x128xf32> to vector<1x12x128xf32>
    tpu.vector_store %arg5[%c1_276, %c0_277, %c0_278], %252 {strides = array<i32>} : memref<2x12x128xf32, #tpu.memory_space<vmem>>, vector<1x12x128xf32>,
    return
  }
  func.func @transform_0(%arg0: i32) -> (i32, i32, i32) {
    %c0_i32 = arith.constant 0 : i32
    %c0_i32_0 = arith.constant 0 : i32
    %c0_i32_1 = arith.constant 0 : i32
    return %arg0, %c0_i32, %c0_i32_0 : i32, i32, i32
  }
  func.func @transform_1(%arg0: i32) -> (i32, i32, i32) {
    %c0_i32 = arith.constant 0 : i32
    %c0_i32_0 = arith.constant 0 : i32
    %c0_i32_1 = arith.constant 0 : i32
    return %arg0, %c0_i32, %c0_i32_0 : i32, i32, i32
  }
  func.func @transform_2(%arg0: i32) -> (i32, i32, i32) {
    %c0_i32 = arith.constant 0 : i32
    %c0_i32_0 = arith.constant 0 : i32
    %c0_i32_1 = arith.constant 0 : i32
    %c0_i32_2 = arith.constant 0 : i32
    return %c0_i32, %c0_i32_0, %c0_i32_1 : i32, i32, i32
  }
  func.func @transform_3(%arg0: i32) -> (i32, i32) {
    %c0_i32 = arith.constant 0 : i32
    %c0_i32_0 = arith.constant 0 : i32
    %c0_i32_1 = arith.constant 0 : i32
    return %c0_i32, %c0_i32_0 : i32, i32
  }
  func.func @transform_4(%arg0: i32) -> (i32, i32, i32) {
    %c0_i32 = arith.constant 0 : i32
    %c0_i32_0 = arith.constant 0 : i32
    %c0_i32_1 = arith.constant 0 : i32
    return %arg0, %c0_i32, %c0_i32_0 : i32, i32, i32
  }
}

module attributes {stable_mosaic.version = 11 : i64} {
  func.func @_conv_pool_fc_kernel(%arg0: i32, %arg1: memref<2x6x128xf32, #tpu.memory_space<vmem>>, %arg2: memref<2x6x128xf32, #tpu.memory_space<vmem>>, %arg3: memref<10x128x80xf32, #tpu.memory_space<vmem>>, %arg4: memref<1x80xf32, #tpu.memory_space<vmem>>, %arg5: memref<4x80x128xf32, #tpu.memory_space<vmem>>, %arg6: memref<1x128xf32, #tpu.memory_space<vmem>>, %arg7: memref<128x10xf32, #tpu.memory_space<vmem>>, %arg8: memref<1x10xf32, #tpu.memory_space<vmem>>, %arg9: memref<2x10xf32, #tpu.memory_space<vmem>>) attributes {dimension_semantics = [#tpu.dimension_semantics<parallel>], iteration_bounds = array<i64: 1>, scalar_prefetch = 0 : i64, scratch_operands = 0 : i64, tpu.core_type = #tpu.core_type<tc>, window_params = [{transform_indices = @transform_0, window_bounds = array<i64: 2, 6, 128>}, {transform_indices = @transform_1, window_bounds = array<i64: 2, 6, 128>}, {pipeline_mode = #tpu.pipeline_mode<synchronous>, transform_indices = @transform_2, window_bounds = array<i64: 10, 128, 80>}, {pipeline_mode = #tpu.pipeline_mode<synchronous>, transform_indices = @transform_3, window_bounds = array<i64: 1, 80>}, {pipeline_mode = #tpu.pipeline_mode<synchronous>, transform_indices = @transform_4, window_bounds = array<i64: 4, 80, 128>}, {pipeline_mode = #tpu.pipeline_mode<synchronous>, transform_indices = @transform_5, window_bounds = array<i64: 1, 128>}, {pipeline_mode = #tpu.pipeline_mode<synchronous>, transform_indices = @transform_6, window_bounds = array<i64: 128, 10>}, {pipeline_mode = #tpu.pipeline_mode<synchronous>, transform_indices = @transform_7, window_bounds = array<i64: 1, 10>}, {transform_indices = @transform_8, window_bounds = array<i64: 2, 10>}]} {
    %c0 = arith.constant 0 : index
    %c0_0 = arith.constant 0 : index
    %0 = vector.load %arg4[%c0, %c0_0] : memref<1x80xf32, #tpu.memory_space<vmem>>, vector<1x80xf32>
    %c0_1 = arith.constant 0 : index
    %c0_2 = arith.constant 0 : index
    %1 = vector.load %arg6[%c0_1, %c0_2] : memref<1x128xf32, #tpu.memory_space<vmem>>, vector<1x128xf32>
    %c0_3 = arith.constant 0 : index
    %c0_4 = arith.constant 0 : index
    %2 = vector.load %arg8[%c0_3, %c0_4] : memref<1x10xf32, #tpu.memory_space<vmem>>, vector<1x10xf32>
    %c0_5 = arith.constant 0 : index
    %c0_6 = arith.constant 0 : index
    %3 = vector.load %arg7[%c0_5, %c0_6] : memref<128x10xf32, #tpu.memory_space<vmem>>, vector<128x10xf32>
    %c0_7 = arith.constant 0 : index
    %c0_8 = arith.constant 0 : index
    %c0_9 = arith.constant 0 : index
    %4 = vector.load %arg1[%c0_7, %c0_8, %c0_9] : memref<2x6x128xf32, #tpu.memory_space<vmem>>, vector<1x4x128xf32>
    %5 = vector.shape_cast %4 : vector<1x4x128xf32> to vector<4x128xf32>
    %c0_10 = arith.constant 0 : index
    %c0_11 = arith.constant 0 : index
    %c0_12 = arith.constant 0 : index
    %6 = vector.load %arg3[%c0_10, %c0_11, %c0_12] : memref<10x128x80xf32, #tpu.memory_space<vmem>>, vector<1x128x80xf32>
    %7 = vector.shape_cast %6 : vector<1x128x80xf32> to vector<128x80xf32>
    %cst = arith.constant dense<0.000000e+00> : vector<4x80xf32>
    %8 = tpu.matmul %5, %7, %cst {dimension_numbers = #tpu.dot_dimension_numbers<[1], [0], [0], [1], [0, 0, 1, 1], [], []>} : vector<4x128xf32>, vector<128x80xf32>, vector<4x80xf32> -> vector<4x80xf32>
    %c0_13 = arith.constant 0 : index
    %c0_14 = arith.constant 0 : index
    %c0_15 = arith.constant 0 : index
    %9 = vector.load %arg2[%c0_13, %c0_14, %c0_15] : memref<2x6x128xf32, #tpu.memory_space<vmem>>, vector<1x4x128xf32>
    %10 = vector.shape_cast %9 : vector<1x4x128xf32> to vector<4x128xf32>
    %c2 = arith.constant 2 : index
    %c0_16 = arith.constant 0 : index
    %c0_17 = arith.constant 0 : index
    %11 = vector.load %arg3[%c2, %c0_16, %c0_17] : memref<10x128x80xf32, #tpu.memory_space<vmem>>, vector<1x128x80xf32>
    %12 = vector.shape_cast %11 : vector<1x128x80xf32> to vector<128x80xf32>
    %cst_18 = arith.constant dense<0.000000e+00> : vector<4x80xf32>
    %13 = tpu.matmul %10, %12, %cst_18 {dimension_numbers = #tpu.dot_dimension_numbers<[1], [0], [0], [1], [0, 0, 1, 1], [], []>} : vector<4x128xf32>, vector<128x80xf32>, vector<4x80xf32> -> vector<4x80xf32>
    %14 = arith.addf %8, %13 : vector<4x80xf32>
    %c0_19 = arith.constant 0 : index
    %c1 = arith.constant 1 : index
    %c0_20 = arith.constant 0 : index
    %15 = vector.load %arg1[%c0_19, %c1, %c0_20] : memref<2x6x128xf32, #tpu.memory_space<vmem>>, vector<1x4x128xf32>
    %16 = vector.shape_cast %15 : vector<1x4x128xf32> to vector<4x128xf32>
    %c4 = arith.constant 4 : index
    %c0_21 = arith.constant 0 : index
    %c0_22 = arith.constant 0 : index
    %17 = vector.load %arg3[%c4, %c0_21, %c0_22] : memref<10x128x80xf32, #tpu.memory_space<vmem>>, vector<1x128x80xf32>
    %18 = vector.shape_cast %17 : vector<1x128x80xf32> to vector<128x80xf32>
    %cst_23 = arith.constant dense<0.000000e+00> : vector<4x80xf32>
    %19 = tpu.matmul %16, %18, %cst_23 {dimension_numbers = #tpu.dot_dimension_numbers<[1], [0], [0], [1], [0, 0, 1, 1], [], []>} : vector<4x128xf32>, vector<128x80xf32>, vector<4x80xf32> -> vector<4x80xf32>
    %20 = arith.addf %14, %19 : vector<4x80xf32>
    %c0_24 = arith.constant 0 : index
    %c1_25 = arith.constant 1 : index
    %c0_26 = arith.constant 0 : index
    %21 = vector.load %arg2[%c0_24, %c1_25, %c0_26] : memref<2x6x128xf32, #tpu.memory_space<vmem>>, vector<1x4x128xf32>
    %22 = vector.shape_cast %21 : vector<1x4x128xf32> to vector<4x128xf32>
    %c6 = arith.constant 6 : index
    %c0_27 = arith.constant 0 : index
    %c0_28 = arith.constant 0 : index
    %23 = vector.load %arg3[%c6, %c0_27, %c0_28] : memref<10x128x80xf32, #tpu.memory_space<vmem>>, vector<1x128x80xf32>
    %24 = vector.shape_cast %23 : vector<1x128x80xf32> to vector<128x80xf32>
    %cst_29 = arith.constant dense<0.000000e+00> : vector<4x80xf32>
    %25 = tpu.matmul %22, %24, %cst_29 {dimension_numbers = #tpu.dot_dimension_numbers<[1], [0], [0], [1], [0, 0, 1, 1], [], []>} : vector<4x128xf32>, vector<128x80xf32>, vector<4x80xf32> -> vector<4x80xf32>
    %26 = arith.addf %20, %25 : vector<4x80xf32>
    %c0_30 = arith.constant 0 : index
    %c2_31 = arith.constant 2 : index
    %c0_32 = arith.constant 0 : index
    %27 = vector.load %arg1[%c0_30, %c2_31, %c0_32] : memref<2x6x128xf32, #tpu.memory_space<vmem>>, vector<1x4x128xf32>
    %28 = vector.shape_cast %27 : vector<1x4x128xf32> to vector<4x128xf32>
    %c8 = arith.constant 8 : index
    %c0_33 = arith.constant 0 : index
    %c0_34 = arith.constant 0 : index
    %29 = vector.load %arg3[%c8, %c0_33, %c0_34] : memref<10x128x80xf32, #tpu.memory_space<vmem>>, vector<1x128x80xf32>
    %30 = vector.shape_cast %29 : vector<1x128x80xf32> to vector<128x80xf32>
    %cst_35 = arith.constant dense<0.000000e+00> : vector<4x80xf32>
    %31 = tpu.matmul %28, %30, %cst_35 {dimension_numbers = #tpu.dot_dimension_numbers<[1], [0], [0], [1], [0, 0, 1, 1], [], []>} : vector<4x128xf32>, vector<128x80xf32>, vector<4x80xf32> -> vector<4x80xf32>
    %32 = arith.addf %26, %31 : vector<4x80xf32>
    %c0_36 = arith.constant 0 : index
    %c0_37 = arith.constant 0 : index
    %c0_38 = arith.constant 0 : index
    %33 = vector.load %arg1[%c0_36, %c0_37, %c0_38] : memref<2x6x128xf32, #tpu.memory_space<vmem>>, vector<1x4x128xf32>
    %34 = vector.shape_cast %33 : vector<1x4x128xf32> to vector<4x128xf32>
    %c1_39 = arith.constant 1 : index
    %c0_40 = arith.constant 0 : index
    %c0_41 = arith.constant 0 : index
    %35 = vector.load %arg3[%c1_39, %c0_40, %c0_41] : memref<10x128x80xf32, #tpu.memory_space<vmem>>, vector<1x128x80xf32>
    %36 = vector.shape_cast %35 : vector<1x128x80xf32> to vector<128x80xf32>
    %cst_42 = arith.constant dense<0.000000e+00> : vector<4x80xf32>
    %37 = tpu.matmul %34, %36, %cst_42 {dimension_numbers = #tpu.dot_dimension_numbers<[1], [0], [0], [1], [0, 0, 1, 1], [], []>} : vector<4x128xf32>, vector<128x80xf32>, vector<4x80xf32> -> vector<4x80xf32>
    %c0_43 = arith.constant 0 : index
    %c0_44 = arith.constant 0 : index
    %c0_45 = arith.constant 0 : index
    %38 = vector.load %arg2[%c0_43, %c0_44, %c0_45] : memref<2x6x128xf32, #tpu.memory_space<vmem>>, vector<1x4x128xf32>
    %39 = vector.shape_cast %38 : vector<1x4x128xf32> to vector<4x128xf32>
    %c3 = arith.constant 3 : index
    %c0_46 = arith.constant 0 : index
    %c0_47 = arith.constant 0 : index
    %40 = vector.load %arg3[%c3, %c0_46, %c0_47] : memref<10x128x80xf32, #tpu.memory_space<vmem>>, vector<1x128x80xf32>
    %41 = vector.shape_cast %40 : vector<1x128x80xf32> to vector<128x80xf32>
    %cst_48 = arith.constant dense<0.000000e+00> : vector<4x80xf32>
    %42 = tpu.matmul %39, %41, %cst_48 {dimension_numbers = #tpu.dot_dimension_numbers<[1], [0], [0], [1], [0, 0, 1, 1], [], []>} : vector<4x128xf32>, vector<128x80xf32>, vector<4x80xf32> -> vector<4x80xf32>
    %43 = arith.addf %37, %42 : vector<4x80xf32>
    %c0_49 = arith.constant 0 : index
    %c1_50 = arith.constant 1 : index
    %c0_51 = arith.constant 0 : index
    %44 = vector.load %arg1[%c0_49, %c1_50, %c0_51] : memref<2x6x128xf32, #tpu.memory_space<vmem>>, vector<1x4x128xf32>
    %45 = vector.shape_cast %44 : vector<1x4x128xf32> to vector<4x128xf32>
    %c5 = arith.constant 5 : index
    %c0_52 = arith.constant 0 : index
    %c0_53 = arith.constant 0 : index
    %46 = vector.load %arg3[%c5, %c0_52, %c0_53] : memref<10x128x80xf32, #tpu.memory_space<vmem>>, vector<1x128x80xf32>
    %47 = vector.shape_cast %46 : vector<1x128x80xf32> to vector<128x80xf32>
    %cst_54 = arith.constant dense<0.000000e+00> : vector<4x80xf32>
    %48 = tpu.matmul %45, %47, %cst_54 {dimension_numbers = #tpu.dot_dimension_numbers<[1], [0], [0], [1], [0, 0, 1, 1], [], []>} : vector<4x128xf32>, vector<128x80xf32>, vector<4x80xf32> -> vector<4x80xf32>
    %49 = arith.addf %43, %48 : vector<4x80xf32>
    %c0_55 = arith.constant 0 : index
    %c1_56 = arith.constant 1 : index
    %c0_57 = arith.constant 0 : index
    %50 = vector.load %arg2[%c0_55, %c1_56, %c0_57] : memref<2x6x128xf32, #tpu.memory_space<vmem>>, vector<1x4x128xf32>
    %51 = vector.shape_cast %50 : vector<1x4x128xf32> to vector<4x128xf32>
    %c7 = arith.constant 7 : index
    %c0_58 = arith.constant 0 : index
    %c0_59 = arith.constant 0 : index
    %52 = vector.load %arg3[%c7, %c0_58, %c0_59] : memref<10x128x80xf32, #tpu.memory_space<vmem>>, vector<1x128x80xf32>
    %53 = vector.shape_cast %52 : vector<1x128x80xf32> to vector<128x80xf32>
    %cst_60 = arith.constant dense<0.000000e+00> : vector<4x80xf32>
    %54 = tpu.matmul %51, %53, %cst_60 {dimension_numbers = #tpu.dot_dimension_numbers<[1], [0], [0], [1], [0, 0, 1, 1], [], []>} : vector<4x128xf32>, vector<128x80xf32>, vector<4x80xf32> -> vector<4x80xf32>
    %55 = arith.addf %49, %54 : vector<4x80xf32>
    %c0_61 = arith.constant 0 : index
    %c2_62 = arith.constant 2 : index
    %c0_63 = arith.constant 0 : index
    %56 = vector.load %arg1[%c0_61, %c2_62, %c0_63] : memref<2x6x128xf32, #tpu.memory_space<vmem>>, vector<1x4x128xf32>
    %57 = vector.shape_cast %56 : vector<1x4x128xf32> to vector<4x128xf32>
    %c9 = arith.constant 9 : index
    %c0_64 = arith.constant 0 : index
    %c0_65 = arith.constant 0 : index
    %58 = vector.load %arg3[%c9, %c0_64, %c0_65] : memref<10x128x80xf32, #tpu.memory_space<vmem>>, vector<1x128x80xf32>
    %59 = vector.shape_cast %58 : vector<1x128x80xf32> to vector<128x80xf32>
    %cst_66 = arith.constant dense<0.000000e+00> : vector<4x80xf32>
    %60 = tpu.matmul %57, %59, %cst_66 {dimension_numbers = #tpu.dot_dimension_numbers<[1], [0], [0], [1], [0, 0, 1, 1], [], []>} : vector<4x128xf32>, vector<128x80xf32>, vector<4x80xf32> -> vector<4x80xf32>
    %61 = arith.addf %55, %60 : vector<4x80xf32>
    %62 = arith.maximumf %32, %61 : vector<4x80xf32>
    %c0_67 = arith.constant 0 : index
    %c0_68 = arith.constant 0 : index
    %c0_69 = arith.constant 0 : index
    %63 = vector.load %arg2[%c0_67, %c0_68, %c0_69] : memref<2x6x128xf32, #tpu.memory_space<vmem>>, vector<1x4x128xf32>
    %64 = vector.shape_cast %63 : vector<1x4x128xf32> to vector<4x128xf32>
    %c0_70 = arith.constant 0 : index
    %c0_71 = arith.constant 0 : index
    %c0_72 = arith.constant 0 : index
    %65 = vector.load %arg3[%c0_70, %c0_71, %c0_72] : memref<10x128x80xf32, #tpu.memory_space<vmem>>, vector<1x128x80xf32>
    %66 = vector.shape_cast %65 : vector<1x128x80xf32> to vector<128x80xf32>
    %cst_73 = arith.constant dense<0.000000e+00> : vector<4x80xf32>
    %67 = tpu.matmul %64, %66, %cst_73 {dimension_numbers = #tpu.dot_dimension_numbers<[1], [0], [0], [1], [0, 0, 1, 1], [], []>} : vector<4x128xf32>, vector<128x80xf32>, vector<4x80xf32> -> vector<4x80xf32>
    %c0_74 = arith.constant 0 : index
    %c1_75 = arith.constant 1 : index
    %c0_76 = arith.constant 0 : index
    %68 = vector.load %arg1[%c0_74, %c1_75, %c0_76] : memref<2x6x128xf32, #tpu.memory_space<vmem>>, vector<1x4x128xf32>
    %69 = vector.shape_cast %68 : vector<1x4x128xf32> to vector<4x128xf32>
    %c2_77 = arith.constant 2 : index
    %c0_78 = arith.constant 0 : index
    %c0_79 = arith.constant 0 : index
    %70 = vector.load %arg3[%c2_77, %c0_78, %c0_79] : memref<10x128x80xf32, #tpu.memory_space<vmem>>, vector<1x128x80xf32>
    %71 = vector.shape_cast %70 : vector<1x128x80xf32> to vector<128x80xf32>
    %cst_80 = arith.constant dense<0.000000e+00> : vector<4x80xf32>
    %72 = tpu.matmul %69, %71, %cst_80 {dimension_numbers = #tpu.dot_dimension_numbers<[1], [0], [0], [1], [0, 0, 1, 1], [], []>} : vector<4x128xf32>, vector<128x80xf32>, vector<4x80xf32> -> vector<4x80xf32>
    %73 = arith.addf %67, %72 : vector<4x80xf32>
    %c0_81 = arith.constant 0 : index
    %c1_82 = arith.constant 1 : index
    %c0_83 = arith.constant 0 : index
    %74 = vector.load %arg2[%c0_81, %c1_82, %c0_83] : memref<2x6x128xf32, #tpu.memory_space<vmem>>, vector<1x4x128xf32>
    %75 = vector.shape_cast %74 : vector<1x4x128xf32> to vector<4x128xf32>
    %c4_84 = arith.constant 4 : index
    %c0_85 = arith.constant 0 : index
    %c0_86 = arith.constant 0 : index
    %76 = vector.load %arg3[%c4_84, %c0_85, %c0_86] : memref<10x128x80xf32, #tpu.memory_space<vmem>>, vector<1x128x80xf32>
    %77 = vector.shape_cast %76 : vector<1x128x80xf32> to vector<128x80xf32>
    %cst_87 = arith.constant dense<0.000000e+00> : vector<4x80xf32>
    %78 = tpu.matmul %75, %77, %cst_87 {dimension_numbers = #tpu.dot_dimension_numbers<[1], [0], [0], [1], [0, 0, 1, 1], [], []>} : vector<4x128xf32>, vector<128x80xf32>, vector<4x80xf32> -> vector<4x80xf32>
    %79 = arith.addf %73, %78 : vector<4x80xf32>
    %c0_88 = arith.constant 0 : index
    %c2_89 = arith.constant 2 : index
    %c0_90 = arith.constant 0 : index
    %80 = vector.load %arg1[%c0_88, %c2_89, %c0_90] : memref<2x6x128xf32, #tpu.memory_space<vmem>>, vector<1x4x128xf32>
    %81 = vector.shape_cast %80 : vector<1x4x128xf32> to vector<4x128xf32>
    %c6_91 = arith.constant 6 : index
    %c0_92 = arith.constant 0 : index
    %c0_93 = arith.constant 0 : index
    %82 = vector.load %arg3[%c6_91, %c0_92, %c0_93] : memref<10x128x80xf32, #tpu.memory_space<vmem>>, vector<1x128x80xf32>
    %83 = vector.shape_cast %82 : vector<1x128x80xf32> to vector<128x80xf32>
    %cst_94 = arith.constant dense<0.000000e+00> : vector<4x80xf32>
    %84 = tpu.matmul %81, %83, %cst_94 {dimension_numbers = #tpu.dot_dimension_numbers<[1], [0], [0], [1], [0, 0, 1, 1], [], []>} : vector<4x128xf32>, vector<128x80xf32>, vector<4x80xf32> -> vector<4x80xf32>
    %85 = arith.addf %79, %84 : vector<4x80xf32>
    %c0_95 = arith.constant 0 : index
    %c2_96 = arith.constant 2 : index
    %c0_97 = arith.constant 0 : index
    %86 = vector.load %arg2[%c0_95, %c2_96, %c0_97] : memref<2x6x128xf32, #tpu.memory_space<vmem>>, vector<1x4x128xf32>
    %87 = vector.shape_cast %86 : vector<1x4x128xf32> to vector<4x128xf32>
    %c8_98 = arith.constant 8 : index
    %c0_99 = arith.constant 0 : index
    %c0_100 = arith.constant 0 : index
    %88 = vector.load %arg3[%c8_98, %c0_99, %c0_100] : memref<10x128x80xf32, #tpu.memory_space<vmem>>, vector<1x128x80xf32>
    %89 = vector.shape_cast %88 : vector<1x128x80xf32> to vector<128x80xf32>
    %cst_101 = arith.constant dense<0.000000e+00> : vector<4x80xf32>
    %90 = tpu.matmul %87, %89, %cst_101 {dimension_numbers = #tpu.dot_dimension_numbers<[1], [0], [0], [1], [0, 0, 1, 1], [], []>} : vector<4x128xf32>, vector<128x80xf32>, vector<4x80xf32> -> vector<4x80xf32>
    %91 = arith.addf %85, %90 : vector<4x80xf32>
    %92 = arith.maximumf %62, %91 : vector<4x80xf32>
    %c0_102 = arith.constant 0 : index
    %c0_103 = arith.constant 0 : index
    %c0_104 = arith.constant 0 : index
    %93 = vector.load %arg2[%c0_102, %c0_103, %c0_104] : memref<2x6x128xf32, #tpu.memory_space<vmem>>, vector<1x4x128xf32>
    %94 = vector.shape_cast %93 : vector<1x4x128xf32> to vector<4x128xf32>
    %c1_105 = arith.constant 1 : index
    %c0_106 = arith.constant 0 : index
    %c0_107 = arith.constant 0 : index
    %95 = vector.load %arg3[%c1_105, %c0_106, %c0_107] : memref<10x128x80xf32, #tpu.memory_space<vmem>>, vector<1x128x80xf32>
    %96 = vector.shape_cast %95 : vector<1x128x80xf32> to vector<128x80xf32>
    %cst_108 = arith.constant dense<0.000000e+00> : vector<4x80xf32>
    %97 = tpu.matmul %94, %96, %cst_108 {dimension_numbers = #tpu.dot_dimension_numbers<[1], [0], [0], [1], [0, 0, 1, 1], [], []>} : vector<4x128xf32>, vector<128x80xf32>, vector<4x80xf32> -> vector<4x80xf32>
    %c0_109 = arith.constant 0 : index
    %c1_110 = arith.constant 1 : index
    %c0_111 = arith.constant 0 : index
    %98 = vector.load %arg1[%c0_109, %c1_110, %c0_111] : memref<2x6x128xf32, #tpu.memory_space<vmem>>, vector<1x4x128xf32>
    %99 = vector.shape_cast %98 : vector<1x4x128xf32> to vector<4x128xf32>
    %c3_112 = arith.constant 3 : index
    %c0_113 = arith.constant 0 : index
    %c0_114 = arith.constant 0 : index
    %100 = vector.load %arg3[%c3_112, %c0_113, %c0_114] : memref<10x128x80xf32, #tpu.memory_space<vmem>>, vector<1x128x80xf32>
    %101 = vector.shape_cast %100 : vector<1x128x80xf32> to vector<128x80xf32>
    %cst_115 = arith.constant dense<0.000000e+00> : vector<4x80xf32>
    %102 = tpu.matmul %99, %101, %cst_115 {dimension_numbers = #tpu.dot_dimension_numbers<[1], [0], [0], [1], [0, 0, 1, 1], [], []>} : vector<4x128xf32>, vector<128x80xf32>, vector<4x80xf32> -> vector<4x80xf32>
    %103 = arith.addf %97, %102 : vector<4x80xf32>
    %c0_116 = arith.constant 0 : index
    %c1_117 = arith.constant 1 : index
    %c0_118 = arith.constant 0 : index
    %104 = vector.load %arg2[%c0_116, %c1_117, %c0_118] : memref<2x6x128xf32, #tpu.memory_space<vmem>>, vector<1x4x128xf32>
    %105 = vector.shape_cast %104 : vector<1x4x128xf32> to vector<4x128xf32>
    %c5_119 = arith.constant 5 : index
    %c0_120 = arith.constant 0 : index
    %c0_121 = arith.constant 0 : index
    %106 = vector.load %arg3[%c5_119, %c0_120, %c0_121] : memref<10x128x80xf32, #tpu.memory_space<vmem>>, vector<1x128x80xf32>
    %107 = vector.shape_cast %106 : vector<1x128x80xf32> to vector<128x80xf32>
    %cst_122 = arith.constant dense<0.000000e+00> : vector<4x80xf32>
    %108 = tpu.matmul %105, %107, %cst_122 {dimension_numbers = #tpu.dot_dimension_numbers<[1], [0], [0], [1], [0, 0, 1, 1], [], []>} : vector<4x128xf32>, vector<128x80xf32>, vector<4x80xf32> -> vector<4x80xf32>
    %109 = arith.addf %103, %108 : vector<4x80xf32>
    %c0_123 = arith.constant 0 : index
    %c2_124 = arith.constant 2 : index
    %c0_125 = arith.constant 0 : index
    %110 = vector.load %arg1[%c0_123, %c2_124, %c0_125] : memref<2x6x128xf32, #tpu.memory_space<vmem>>, vector<1x4x128xf32>
    %111 = vector.shape_cast %110 : vector<1x4x128xf32> to vector<4x128xf32>
    %c7_126 = arith.constant 7 : index
    %c0_127 = arith.constant 0 : index
    %c0_128 = arith.constant 0 : index
    %112 = vector.load %arg3[%c7_126, %c0_127, %c0_128] : memref<10x128x80xf32, #tpu.memory_space<vmem>>, vector<1x128x80xf32>
    %113 = vector.shape_cast %112 : vector<1x128x80xf32> to vector<128x80xf32>
    %cst_129 = arith.constant dense<0.000000e+00> : vector<4x80xf32>
    %114 = tpu.matmul %111, %113, %cst_129 {dimension_numbers = #tpu.dot_dimension_numbers<[1], [0], [0], [1], [0, 0, 1, 1], [], []>} : vector<4x128xf32>, vector<128x80xf32>, vector<4x80xf32> -> vector<4x80xf32>
    %115 = arith.addf %109, %114 : vector<4x80xf32>
    %c0_130 = arith.constant 0 : index
    %c2_131 = arith.constant 2 : index
    %c0_132 = arith.constant 0 : index
    %116 = vector.load %arg2[%c0_130, %c2_131, %c0_132] : memref<2x6x128xf32, #tpu.memory_space<vmem>>, vector<1x4x128xf32>
    %117 = vector.shape_cast %116 : vector<1x4x128xf32> to vector<4x128xf32>
    %c9_133 = arith.constant 9 : index
    %c0_134 = arith.constant 0 : index
    %c0_135 = arith.constant 0 : index
    %118 = vector.load %arg3[%c9_133, %c0_134, %c0_135] : memref<10x128x80xf32, #tpu.memory_space<vmem>>, vector<1x128x80xf32>
    %119 = vector.shape_cast %118 : vector<1x128x80xf32> to vector<128x80xf32>
    %cst_136 = arith.constant dense<0.000000e+00> : vector<4x80xf32>
    %120 = tpu.matmul %117, %119, %cst_136 {dimension_numbers = #tpu.dot_dimension_numbers<[1], [0], [0], [1], [0, 0, 1, 1], [], []>} : vector<4x128xf32>, vector<128x80xf32>, vector<4x80xf32> -> vector<4x80xf32>
    %121 = arith.addf %115, %120 : vector<4x80xf32>
    %122 = arith.maximumf %92, %121 : vector<4x80xf32>
    %123 = vector.broadcast %0 : vector<1x80xf32> to vector<4x80xf32>
    %124 = arith.addf %122, %123 : vector<4x80xf32>
    %cst_137 = arith.constant 0.000000e+00 : f32
    %125 = vector.broadcast %cst_137 : f32 to vector<4x80xf32>
    %126 = arith.maximumf %124, %125 : vector<4x80xf32>
    %127 = vector.extract_strided_slice %126 {offsets = [0, 0], sizes = [1, 80], strides = [1, 1]} : vector<4x80xf32> to vector<1x80xf32>
    %c0_138 = arith.constant 0 : index
    %c0_139 = arith.constant 0 : index
    %c0_140 = arith.constant 0 : index
    %128 = vector.load %arg5[%c0_138, %c0_139, %c0_140] : memref<4x80x128xf32, #tpu.memory_space<vmem>>, vector<1x80x128xf32>
    %129 = vector.shape_cast %128 : vector<1x80x128xf32> to vector<80x128xf32>
    %cst_141 = arith.constant dense<0.000000e+00> : vector<1x128xf32>
    %130 = tpu.matmul %127, %129, %cst_141 {dimension_numbers = #tpu.dot_dimension_numbers<[1], [0], [0], [1], [0, 0, 1, 1], [], []>} : vector<1x80xf32>, vector<80x128xf32>, vector<1x128xf32> -> vector<1x128xf32>
    %131 = vector.extract_strided_slice %126 {offsets = [1, 0], sizes = [1, 80], strides = [1, 1]} : vector<4x80xf32> to vector<1x80xf32>
    %c1_142 = arith.constant 1 : index
    %c0_143 = arith.constant 0 : index
    %c0_144 = arith.constant 0 : index
    %132 = vector.load %arg5[%c1_142, %c0_143, %c0_144] : memref<4x80x128xf32, #tpu.memory_space<vmem>>, vector<1x80x128xf32>
    %133 = vector.shape_cast %132 : vector<1x80x128xf32> to vector<80x128xf32>
    %cst_145 = arith.constant dense<0.000000e+00> : vector<1x128xf32>
    %134 = tpu.matmul %131, %133, %cst_145 {dimension_numbers = #tpu.dot_dimension_numbers<[1], [0], [0], [1], [0, 0, 1, 1], [], []>} : vector<1x80xf32>, vector<80x128xf32>, vector<1x128xf32> -> vector<1x128xf32>
    %135 = arith.addf %130, %134 : vector<1x128xf32>
    %136 = vector.extract_strided_slice %126 {offsets = [2, 0], sizes = [1, 80], strides = [1, 1]} : vector<4x80xf32> to vector<1x80xf32>
    %c2_146 = arith.constant 2 : index
    %c0_147 = arith.constant 0 : index
    %c0_148 = arith.constant 0 : index
    %137 = vector.load %arg5[%c2_146, %c0_147, %c0_148] : memref<4x80x128xf32, #tpu.memory_space<vmem>>, vector<1x80x128xf32>
    %138 = vector.shape_cast %137 : vector<1x80x128xf32> to vector<80x128xf32>
    %cst_149 = arith.constant dense<0.000000e+00> : vector<1x128xf32>
    %139 = tpu.matmul %136, %138, %cst_149 {dimension_numbers = #tpu.dot_dimension_numbers<[1], [0], [0], [1], [0, 0, 1, 1], [], []>} : vector<1x80xf32>, vector<80x128xf32>, vector<1x128xf32> -> vector<1x128xf32>
    %140 = arith.addf %135, %139 : vector<1x128xf32>
    %141 = vector.extract_strided_slice %126 {offsets = [3, 0], sizes = [1, 80], strides = [1, 1]} : vector<4x80xf32> to vector<1x80xf32>
    %c3_150 = arith.constant 3 : index
    %c0_151 = arith.constant 0 : index
    %c0_152 = arith.constant 0 : index
    %142 = vector.load %arg5[%c3_150, %c0_151, %c0_152] : memref<4x80x128xf32, #tpu.memory_space<vmem>>, vector<1x80x128xf32>
    %143 = vector.shape_cast %142 : vector<1x80x128xf32> to vector<80x128xf32>
    %cst_153 = arith.constant dense<0.000000e+00> : vector<1x128xf32>
    %144 = tpu.matmul %141, %143, %cst_153 {dimension_numbers = #tpu.dot_dimension_numbers<[1], [0], [0], [1], [0, 0, 1, 1], [], []>} : vector<1x80xf32>, vector<80x128xf32>, vector<1x128xf32> -> vector<1x128xf32>
    %145 = arith.addf %140, %144 : vector<1x128xf32>
    %146 = arith.addf %145, %1 : vector<1x128xf32>
    %cst_154 = arith.constant 0.000000e+00 : f32
    %147 = vector.broadcast %cst_154 : f32 to vector<1x128xf32>
    %148 = arith.maximumf %146, %147 : vector<1x128xf32>
    %cst_155 = arith.constant dense<0.000000e+00> : vector<1x10xf32>
    %149 = tpu.matmul %148, %3, %cst_155 {dimension_numbers = #tpu.dot_dimension_numbers<[1], [0], [0], [1], [0, 0, 1, 1], [], []>} : vector<1x128xf32>, vector<128x10xf32>, vector<1x10xf32> -> vector<1x10xf32>
    %150 = arith.addf %149, %2 : vector<1x10xf32>
    %cst_156 = arith.constant dense<0xFF800000> : vector<1xf32>
    %151 = vector.multi_reduction <maximumf>, %150, %cst_156 [1] : vector<1x10xf32> to vector<1xf32>
    %152 = vector.shape_cast %151 : vector<1xf32> to vector<1x1xf32>
    %153 = vector.broadcast %152 : vector<1x1xf32> to vector<1x10xf32>
    %154 = arith.subf %150, %153 : vector<1x10xf32>
    %155 = math.exp %154 : vector<1x10xf32>
    %cst_157 = arith.constant dense<0.000000e+00> : vector<1xf32>
    %156 = vector.multi_reduction <add>, %155, %cst_157 [1] : vector<1x10xf32> to vector<1xf32>
    %157 = vector.shape_cast %156 : vector<1xf32> to vector<1x1xf32>
    %158 = math.log %157 : vector<1x1xf32>
    %159 = vector.broadcast %158 : vector<1x1xf32> to vector<1x10xf32>
    %160 = arith.subf %154, %159 : vector<1x10xf32>
    %c0_158 = arith.constant 0 : index
    %c0_159 = arith.constant 0 : index
    %161 = vector.load %arg9[%c0_158, %c0_159] : memref<2x10xf32, #tpu.memory_space<vmem>>, vector<1x10xf32>
    tpu.vector_store %arg9[%c0_158, %c0_159], %160 {strides = array<i32>} : memref<2x10xf32, #tpu.memory_space<vmem>>, vector<1x10xf32>,
    %c1_160 = arith.constant 1 : index
    %c0_161 = arith.constant 0 : index
    %c0_162 = arith.constant 0 : index
    %162 = vector.load %arg1[%c1_160, %c0_161, %c0_162] : memref<2x6x128xf32, #tpu.memory_space<vmem>>, vector<1x4x128xf32>
    %163 = vector.shape_cast %162 : vector<1x4x128xf32> to vector<4x128xf32>
    %c0_163 = arith.constant 0 : index
    %c0_164 = arith.constant 0 : index
    %c0_165 = arith.constant 0 : index
    %164 = vector.load %arg3[%c0_163, %c0_164, %c0_165] : memref<10x128x80xf32, #tpu.memory_space<vmem>>, vector<1x128x80xf32>
    %165 = vector.shape_cast %164 : vector<1x128x80xf32> to vector<128x80xf32>
    %cst_166 = arith.constant dense<0.000000e+00> : vector<4x80xf32>
    %166 = tpu.matmul %163, %165, %cst_166 {dimension_numbers = #tpu.dot_dimension_numbers<[1], [0], [0], [1], [0, 0, 1, 1], [], []>} : vector<4x128xf32>, vector<128x80xf32>, vector<4x80xf32> -> vector<4x80xf32>
    %c1_167 = arith.constant 1 : index
    %c0_168 = arith.constant 0 : index
    %c0_169 = arith.constant 0 : index
    %167 = vector.load %arg2[%c1_167, %c0_168, %c0_169] : memref<2x6x128xf32, #tpu.memory_space<vmem>>, vector<1x4x128xf32>
    %168 = vector.shape_cast %167 : vector<1x4x128xf32> to vector<4x128xf32>
    %c2_170 = arith.constant 2 : index
    %c0_171 = arith.constant 0 : index
    %c0_172 = arith.constant 0 : index
    %169 = vector.load %arg3[%c2_170, %c0_171, %c0_172] : memref<10x128x80xf32, #tpu.memory_space<vmem>>, vector<1x128x80xf32>
    %170 = vector.shape_cast %169 : vector<1x128x80xf32> to vector<128x80xf32>
    %cst_173 = arith.constant dense<0.000000e+00> : vector<4x80xf32>
    %171 = tpu.matmul %168, %170, %cst_173 {dimension_numbers = #tpu.dot_dimension_numbers<[1], [0], [0], [1], [0, 0, 1, 1], [], []>} : vector<4x128xf32>, vector<128x80xf32>, vector<4x80xf32> -> vector<4x80xf32>
    %172 = arith.addf %166, %171 : vector<4x80xf32>
    %c1_174 = arith.constant 1 : index
    %c1_175 = arith.constant 1 : index
    %c0_176 = arith.constant 0 : index
    %173 = vector.load %arg1[%c1_174, %c1_175, %c0_176] : memref<2x6x128xf32, #tpu.memory_space<vmem>>, vector<1x4x128xf32>
    %174 = vector.shape_cast %173 : vector<1x4x128xf32> to vector<4x128xf32>
    %c4_177 = arith.constant 4 : index
    %c0_178 = arith.constant 0 : index
    %c0_179 = arith.constant 0 : index
    %175 = vector.load %arg3[%c4_177, %c0_178, %c0_179] : memref<10x128x80xf32, #tpu.memory_space<vmem>>, vector<1x128x80xf32>
    %176 = vector.shape_cast %175 : vector<1x128x80xf32> to vector<128x80xf32>
    %cst_180 = arith.constant dense<0.000000e+00> : vector<4x80xf32>
    %177 = tpu.matmul %174, %176, %cst_180 {dimension_numbers = #tpu.dot_dimension_numbers<[1], [0], [0], [1], [0, 0, 1, 1], [], []>} : vector<4x128xf32>, vector<128x80xf32>, vector<4x80xf32> -> vector<4x80xf32>
    %178 = arith.addf %172, %177 : vector<4x80xf32>
    %c1_181 = arith.constant 1 : index
    %c1_182 = arith.constant 1 : index
    %c0_183 = arith.constant 0 : index
    %179 = vector.load %arg2[%c1_181, %c1_182, %c0_183] : memref<2x6x128xf32, #tpu.memory_space<vmem>>, vector<1x4x128xf32>
    %180 = vector.shape_cast %179 : vector<1x4x128xf32> to vector<4x128xf32>
    %c6_184 = arith.constant 6 : index
    %c0_185 = arith.constant 0 : index
    %c0_186 = arith.constant 0 : index
    %181 = vector.load %arg3[%c6_184, %c0_185, %c0_186] : memref<10x128x80xf32, #tpu.memory_space<vmem>>, vector<1x128x80xf32>
    %182 = vector.shape_cast %181 : vector<1x128x80xf32> to vector<128x80xf32>
    %cst_187 = arith.constant dense<0.000000e+00> : vector<4x80xf32>
    %183 = tpu.matmul %180, %182, %cst_187 {dimension_numbers = #tpu.dot_dimension_numbers<[1], [0], [0], [1], [0, 0, 1, 1], [], []>} : vector<4x128xf32>, vector<128x80xf32>, vector<4x80xf32> -> vector<4x80xf32>
    %184 = arith.addf %178, %183 : vector<4x80xf32>
    %c1_188 = arith.constant 1 : index
    %c2_189 = arith.constant 2 : index
    %c0_190 = arith.constant 0 : index
    %185 = vector.load %arg1[%c1_188, %c2_189, %c0_190] : memref<2x6x128xf32, #tpu.memory_space<vmem>>, vector<1x4x128xf32>
    %186 = vector.shape_cast %185 : vector<1x4x128xf32> to vector<4x128xf32>
    %c8_191 = arith.constant 8 : index
    %c0_192 = arith.constant 0 : index
    %c0_193 = arith.constant 0 : index
    %187 = vector.load %arg3[%c8_191, %c0_192, %c0_193] : memref<10x128x80xf32, #tpu.memory_space<vmem>>, vector<1x128x80xf32>
    %188 = vector.shape_cast %187 : vector<1x128x80xf32> to vector<128x80xf32>
    %cst_194 = arith.constant dense<0.000000e+00> : vector<4x80xf32>
    %189 = tpu.matmul %186, %188, %cst_194 {dimension_numbers = #tpu.dot_dimension_numbers<[1], [0], [0], [1], [0, 0, 1, 1], [], []>} : vector<4x128xf32>, vector<128x80xf32>, vector<4x80xf32> -> vector<4x80xf32>
    %190 = arith.addf %184, %189 : vector<4x80xf32>
    %c1_195 = arith.constant 1 : index
    %c0_196 = arith.constant 0 : index
    %c0_197 = arith.constant 0 : index
    %191 = vector.load %arg1[%c1_195, %c0_196, %c0_197] : memref<2x6x128xf32, #tpu.memory_space<vmem>>, vector<1x4x128xf32>
    %192 = vector.shape_cast %191 : vector<1x4x128xf32> to vector<4x128xf32>
    %c1_198 = arith.constant 1 : index
    %c0_199 = arith.constant 0 : index
    %c0_200 = arith.constant 0 : index
    %193 = vector.load %arg3[%c1_198, %c0_199, %c0_200] : memref<10x128x80xf32, #tpu.memory_space<vmem>>, vector<1x128x80xf32>
    %194 = vector.shape_cast %193 : vector<1x128x80xf32> to vector<128x80xf32>
    %cst_201 = arith.constant dense<0.000000e+00> : vector<4x80xf32>
    %195 = tpu.matmul %192, %194, %cst_201 {dimension_numbers = #tpu.dot_dimension_numbers<[1], [0], [0], [1], [0, 0, 1, 1], [], []>} : vector<4x128xf32>, vector<128x80xf32>, vector<4x80xf32> -> vector<4x80xf32>
    %c1_202 = arith.constant 1 : index
    %c0_203 = arith.constant 0 : index
    %c0_204 = arith.constant 0 : index
    %196 = vector.load %arg2[%c1_202, %c0_203, %c0_204] : memref<2x6x128xf32, #tpu.memory_space<vmem>>, vector<1x4x128xf32>
    %197 = vector.shape_cast %196 : vector<1x4x128xf32> to vector<4x128xf32>
    %c3_205 = arith.constant 3 : index
    %c0_206 = arith.constant 0 : index
    %c0_207 = arith.constant 0 : index
    %198 = vector.load %arg3[%c3_205, %c0_206, %c0_207] : memref<10x128x80xf32, #tpu.memory_space<vmem>>, vector<1x128x80xf32>
    %199 = vector.shape_cast %198 : vector<1x128x80xf32> to vector<128x80xf32>
    %cst_208 = arith.constant dense<0.000000e+00> : vector<4x80xf32>
    %200 = tpu.matmul %197, %199, %cst_208 {dimension_numbers = #tpu.dot_dimension_numbers<[1], [0], [0], [1], [0, 0, 1, 1], [], []>} : vector<4x128xf32>, vector<128x80xf32>, vector<4x80xf32> -> vector<4x80xf32>
    %201 = arith.addf %195, %200 : vector<4x80xf32>
    %c1_209 = arith.constant 1 : index
    %c1_210 = arith.constant 1 : index
    %c0_211 = arith.constant 0 : index
    %202 = vector.load %arg1[%c1_209, %c1_210, %c0_211] : memref<2x6x128xf32, #tpu.memory_space<vmem>>, vector<1x4x128xf32>
    %203 = vector.shape_cast %202 : vector<1x4x128xf32> to vector<4x128xf32>
    %c5_212 = arith.constant 5 : index
    %c0_213 = arith.constant 0 : index
    %c0_214 = arith.constant 0 : index
    %204 = vector.load %arg3[%c5_212, %c0_213, %c0_214] : memref<10x128x80xf32, #tpu.memory_space<vmem>>, vector<1x128x80xf32>
    %205 = vector.shape_cast %204 : vector<1x128x80xf32> to vector<128x80xf32>
    %cst_215 = arith.constant dense<0.000000e+00> : vector<4x80xf32>
    %206 = tpu.matmul %203, %205, %cst_215 {dimension_numbers = #tpu.dot_dimension_numbers<[1], [0], [0], [1], [0, 0, 1, 1], [], []>} : vector<4x128xf32>, vector<128x80xf32>, vector<4x80xf32> -> vector<4x80xf32>
    %207 = arith.addf %201, %206 : vector<4x80xf32>
    %c1_216 = arith.constant 1 : index
    %c1_217 = arith.constant 1 : index
    %c0_218 = arith.constant 0 : index
    %208 = vector.load %arg2[%c1_216, %c1_217, %c0_218] : memref<2x6x128xf32, #tpu.memory_space<vmem>>, vector<1x4x128xf32>
    %209 = vector.shape_cast %208 : vector<1x4x128xf32> to vector<4x128xf32>
    %c7_219 = arith.constant 7 : index
    %c0_220 = arith.constant 0 : index
    %c0_221 = arith.constant 0 : index
    %210 = vector.load %arg3[%c7_219, %c0_220, %c0_221] : memref<10x128x80xf32, #tpu.memory_space<vmem>>, vector<1x128x80xf32>
    %211 = vector.shape_cast %210 : vector<1x128x80xf32> to vector<128x80xf32>
    %cst_222 = arith.constant dense<0.000000e+00> : vector<4x80xf32>
    %212 = tpu.matmul %209, %211, %cst_222 {dimension_numbers = #tpu.dot_dimension_numbers<[1], [0], [0], [1], [0, 0, 1, 1], [], []>} : vector<4x128xf32>, vector<128x80xf32>, vector<4x80xf32> -> vector<4x80xf32>
    %213 = arith.addf %207, %212 : vector<4x80xf32>
    %c1_223 = arith.constant 1 : index
    %c2_224 = arith.constant 2 : index
    %c0_225 = arith.constant 0 : index
    %214 = vector.load %arg1[%c1_223, %c2_224, %c0_225] : memref<2x6x128xf32, #tpu.memory_space<vmem>>, vector<1x4x128xf32>
    %215 = vector.shape_cast %214 : vector<1x4x128xf32> to vector<4x128xf32>
    %c9_226 = arith.constant 9 : index
    %c0_227 = arith.constant 0 : index
    %c0_228 = arith.constant 0 : index
    %216 = vector.load %arg3[%c9_226, %c0_227, %c0_228] : memref<10x128x80xf32, #tpu.memory_space<vmem>>, vector<1x128x80xf32>
    %217 = vector.shape_cast %216 : vector<1x128x80xf32> to vector<128x80xf32>
    %cst_229 = arith.constant dense<0.000000e+00> : vector<4x80xf32>
    %218 = tpu.matmul %215, %217, %cst_229 {dimension_numbers = #tpu.dot_dimension_numbers<[1], [0], [0], [1], [0, 0, 1, 1], [], []>} : vector<4x128xf32>, vector<128x80xf32>, vector<4x80xf32> -> vector<4x80xf32>
    %219 = arith.addf %213, %218 : vector<4x80xf32>
    %220 = arith.maximumf %190, %219 : vector<4x80xf32>
    %c1_230 = arith.constant 1 : index
    %c0_231 = arith.constant 0 : index
    %c0_232 = arith.constant 0 : index
    %221 = vector.load %arg2[%c1_230, %c0_231, %c0_232] : memref<2x6x128xf32, #tpu.memory_space<vmem>>, vector<1x4x128xf32>
    %222 = vector.shape_cast %221 : vector<1x4x128xf32> to vector<4x128xf32>
    %c0_233 = arith.constant 0 : index
    %c0_234 = arith.constant 0 : index
    %c0_235 = arith.constant 0 : index
    %223 = vector.load %arg3[%c0_233, %c0_234, %c0_235] : memref<10x128x80xf32, #tpu.memory_space<vmem>>, vector<1x128x80xf32>
    %224 = vector.shape_cast %223 : vector<1x128x80xf32> to vector<128x80xf32>
    %cst_236 = arith.constant dense<0.000000e+00> : vector<4x80xf32>
    %225 = tpu.matmul %222, %224, %cst_236 {dimension_numbers = #tpu.dot_dimension_numbers<[1], [0], [0], [1], [0, 0, 1, 1], [], []>} : vector<4x128xf32>, vector<128x80xf32>, vector<4x80xf32> -> vector<4x80xf32>
    %c1_237 = arith.constant 1 : index
    %c1_238 = arith.constant 1 : index
    %c0_239 = arith.constant 0 : index
    %226 = vector.load %arg1[%c1_237, %c1_238, %c0_239] : memref<2x6x128xf32, #tpu.memory_space<vmem>>, vector<1x4x128xf32>
    %227 = vector.shape_cast %226 : vector<1x4x128xf32> to vector<4x128xf32>
    %c2_240 = arith.constant 2 : index
    %c0_241 = arith.constant 0 : index
    %c0_242 = arith.constant 0 : index
    %228 = vector.load %arg3[%c2_240, %c0_241, %c0_242] : memref<10x128x80xf32, #tpu.memory_space<vmem>>, vector<1x128x80xf32>
    %229 = vector.shape_cast %228 : vector<1x128x80xf32> to vector<128x80xf32>
    %cst_243 = arith.constant dense<0.000000e+00> : vector<4x80xf32>
    %230 = tpu.matmul %227, %229, %cst_243 {dimension_numbers = #tpu.dot_dimension_numbers<[1], [0], [0], [1], [0, 0, 1, 1], [], []>} : vector<4x128xf32>, vector<128x80xf32>, vector<4x80xf32> -> vector<4x80xf32>
    %231 = arith.addf %225, %230 : vector<4x80xf32>
    %c1_244 = arith.constant 1 : index
    %c1_245 = arith.constant 1 : index
    %c0_246 = arith.constant 0 : index
    %232 = vector.load %arg2[%c1_244, %c1_245, %c0_246] : memref<2x6x128xf32, #tpu.memory_space<vmem>>, vector<1x4x128xf32>
    %233 = vector.shape_cast %232 : vector<1x4x128xf32> to vector<4x128xf32>
    %c4_247 = arith.constant 4 : index
    %c0_248 = arith.constant 0 : index
    %c0_249 = arith.constant 0 : index
    %234 = vector.load %arg3[%c4_247, %c0_248, %c0_249] : memref<10x128x80xf32, #tpu.memory_space<vmem>>, vector<1x128x80xf32>
    %235 = vector.shape_cast %234 : vector<1x128x80xf32> to vector<128x80xf32>
    %cst_250 = arith.constant dense<0.000000e+00> : vector<4x80xf32>
    %236 = tpu.matmul %233, %235, %cst_250 {dimension_numbers = #tpu.dot_dimension_numbers<[1], [0], [0], [1], [0, 0, 1, 1], [], []>} : vector<4x128xf32>, vector<128x80xf32>, vector<4x80xf32> -> vector<4x80xf32>
    %237 = arith.addf %231, %236 : vector<4x80xf32>
    %c1_251 = arith.constant 1 : index
    %c2_252 = arith.constant 2 : index
    %c0_253 = arith.constant 0 : index
    %238 = vector.load %arg1[%c1_251, %c2_252, %c0_253] : memref<2x6x128xf32, #tpu.memory_space<vmem>>, vector<1x4x128xf32>
    %239 = vector.shape_cast %238 : vector<1x4x128xf32> to vector<4x128xf32>
    %c6_254 = arith.constant 6 : index
    %c0_255 = arith.constant 0 : index
    %c0_256 = arith.constant 0 : index
    %240 = vector.load %arg3[%c6_254, %c0_255, %c0_256] : memref<10x128x80xf32, #tpu.memory_space<vmem>>, vector<1x128x80xf32>
    %241 = vector.shape_cast %240 : vector<1x128x80xf32> to vector<128x80xf32>
    %cst_257 = arith.constant dense<0.000000e+00> : vector<4x80xf32>
    %242 = tpu.matmul %239, %241, %cst_257 {dimension_numbers = #tpu.dot_dimension_numbers<[1], [0], [0], [1], [0, 0, 1, 1], [], []>} : vector<4x128xf32>, vector<128x80xf32>, vector<4x80xf32> -> vector<4x80xf32>
    %243 = arith.addf %237, %242 : vector<4x80xf32>
    %c1_258 = arith.constant 1 : index
    %c2_259 = arith.constant 2 : index
    %c0_260 = arith.constant 0 : index
    %244 = vector.load %arg2[%c1_258, %c2_259, %c0_260] : memref<2x6x128xf32, #tpu.memory_space<vmem>>, vector<1x4x128xf32>
    %245 = vector.shape_cast %244 : vector<1x4x128xf32> to vector<4x128xf32>
    %c8_261 = arith.constant 8 : index
    %c0_262 = arith.constant 0 : index
    %c0_263 = arith.constant 0 : index
    %246 = vector.load %arg3[%c8_261, %c0_262, %c0_263] : memref<10x128x80xf32, #tpu.memory_space<vmem>>, vector<1x128x80xf32>
    %247 = vector.shape_cast %246 : vector<1x128x80xf32> to vector<128x80xf32>
    %cst_264 = arith.constant dense<0.000000e+00> : vector<4x80xf32>
    %248 = tpu.matmul %245, %247, %cst_264 {dimension_numbers = #tpu.dot_dimension_numbers<[1], [0], [0], [1], [0, 0, 1, 1], [], []>} : vector<4x128xf32>, vector<128x80xf32>, vector<4x80xf32> -> vector<4x80xf32>
    %249 = arith.addf %243, %248 : vector<4x80xf32>
    %250 = arith.maximumf %220, %249 : vector<4x80xf32>
    %c1_265 = arith.constant 1 : index
    %c0_266 = arith.constant 0 : index
    %c0_267 = arith.constant 0 : index
    %251 = vector.load %arg2[%c1_265, %c0_266, %c0_267] : memref<2x6x128xf32, #tpu.memory_space<vmem>>, vector<1x4x128xf32>
    %252 = vector.shape_cast %251 : vector<1x4x128xf32> to vector<4x128xf32>
    %c1_268 = arith.constant 1 : index
    %c0_269 = arith.constant 0 : index
    %c0_270 = arith.constant 0 : index
    %253 = vector.load %arg3[%c1_268, %c0_269, %c0_270] : memref<10x128x80xf32, #tpu.memory_space<vmem>>, vector<1x128x80xf32>
    %254 = vector.shape_cast %253 : vector<1x128x80xf32> to vector<128x80xf32>
    %cst_271 = arith.constant dense<0.000000e+00> : vector<4x80xf32>
    %255 = tpu.matmul %252, %254, %cst_271 {dimension_numbers = #tpu.dot_dimension_numbers<[1], [0], [0], [1], [0, 0, 1, 1], [], []>} : vector<4x128xf32>, vector<128x80xf32>, vector<4x80xf32> -> vector<4x80xf32>
    %c1_272 = arith.constant 1 : index
    %c1_273 = arith.constant 1 : index
    %c0_274 = arith.constant 0 : index
    %256 = vector.load %arg1[%c1_272, %c1_273, %c0_274] : memref<2x6x128xf32, #tpu.memory_space<vmem>>, vector<1x4x128xf32>
    %257 = vector.shape_cast %256 : vector<1x4x128xf32> to vector<4x128xf32>
    %c3_275 = arith.constant 3 : index
    %c0_276 = arith.constant 0 : index
    %c0_277 = arith.constant 0 : index
    %258 = vector.load %arg3[%c3_275, %c0_276, %c0_277] : memref<10x128x80xf32, #tpu.memory_space<vmem>>, vector<1x128x80xf32>
    %259 = vector.shape_cast %258 : vector<1x128x80xf32> to vector<128x80xf32>
    %cst_278 = arith.constant dense<0.000000e+00> : vector<4x80xf32>
    %260 = tpu.matmul %257, %259, %cst_278 {dimension_numbers = #tpu.dot_dimension_numbers<[1], [0], [0], [1], [0, 0, 1, 1], [], []>} : vector<4x128xf32>, vector<128x80xf32>, vector<4x80xf32> -> vector<4x80xf32>
    %261 = arith.addf %255, %260 : vector<4x80xf32>
    %c1_279 = arith.constant 1 : index
    %c1_280 = arith.constant 1 : index
    %c0_281 = arith.constant 0 : index
    %262 = vector.load %arg2[%c1_279, %c1_280, %c0_281] : memref<2x6x128xf32, #tpu.memory_space<vmem>>, vector<1x4x128xf32>
    %263 = vector.shape_cast %262 : vector<1x4x128xf32> to vector<4x128xf32>
    %c5_282 = arith.constant 5 : index
    %c0_283 = arith.constant 0 : index
    %c0_284 = arith.constant 0 : index
    %264 = vector.load %arg3[%c5_282, %c0_283, %c0_284] : memref<10x128x80xf32, #tpu.memory_space<vmem>>, vector<1x128x80xf32>
    %265 = vector.shape_cast %264 : vector<1x128x80xf32> to vector<128x80xf32>
    %cst_285 = arith.constant dense<0.000000e+00> : vector<4x80xf32>
    %266 = tpu.matmul %263, %265, %cst_285 {dimension_numbers = #tpu.dot_dimension_numbers<[1], [0], [0], [1], [0, 0, 1, 1], [], []>} : vector<4x128xf32>, vector<128x80xf32>, vector<4x80xf32> -> vector<4x80xf32>
    %267 = arith.addf %261, %266 : vector<4x80xf32>
    %c1_286 = arith.constant 1 : index
    %c2_287 = arith.constant 2 : index
    %c0_288 = arith.constant 0 : index
    %268 = vector.load %arg1[%c1_286, %c2_287, %c0_288] : memref<2x6x128xf32, #tpu.memory_space<vmem>>, vector<1x4x128xf32>
    %269 = vector.shape_cast %268 : vector<1x4x128xf32> to vector<4x128xf32>
    %c7_289 = arith.constant 7 : index
    %c0_290 = arith.constant 0 : index
    %c0_291 = arith.constant 0 : index
    %270 = vector.load %arg3[%c7_289, %c0_290, %c0_291] : memref<10x128x80xf32, #tpu.memory_space<vmem>>, vector<1x128x80xf32>
    %271 = vector.shape_cast %270 : vector<1x128x80xf32> to vector<128x80xf32>
    %cst_292 = arith.constant dense<0.000000e+00> : vector<4x80xf32>
    %272 = tpu.matmul %269, %271, %cst_292 {dimension_numbers = #tpu.dot_dimension_numbers<[1], [0], [0], [1], [0, 0, 1, 1], [], []>} : vector<4x128xf32>, vector<128x80xf32>, vector<4x80xf32> -> vector<4x80xf32>
    %273 = arith.addf %267, %272 : vector<4x80xf32>
    %c1_293 = arith.constant 1 : index
    %c2_294 = arith.constant 2 : index
    %c0_295 = arith.constant 0 : index
    %274 = vector.load %arg2[%c1_293, %c2_294, %c0_295] : memref<2x6x128xf32, #tpu.memory_space<vmem>>, vector<1x4x128xf32>
    %275 = vector.shape_cast %274 : vector<1x4x128xf32> to vector<4x128xf32>
    %c9_296 = arith.constant 9 : index
    %c0_297 = arith.constant 0 : index
    %c0_298 = arith.constant 0 : index
    %276 = vector.load %arg3[%c9_296, %c0_297, %c0_298] : memref<10x128x80xf32, #tpu.memory_space<vmem>>, vector<1x128x80xf32>
    %277 = vector.shape_cast %276 : vector<1x128x80xf32> to vector<128x80xf32>
    %cst_299 = arith.constant dense<0.000000e+00> : vector<4x80xf32>
    %278 = tpu.matmul %275, %277, %cst_299 {dimension_numbers = #tpu.dot_dimension_numbers<[1], [0], [0], [1], [0, 0, 1, 1], [], []>} : vector<4x128xf32>, vector<128x80xf32>, vector<4x80xf32> -> vector<4x80xf32>
    %279 = arith.addf %273, %278 : vector<4x80xf32>
    %280 = arith.maximumf %250, %279 : vector<4x80xf32>
    %281 = vector.broadcast %0 : vector<1x80xf32> to vector<4x80xf32>
    %282 = arith.addf %280, %281 : vector<4x80xf32>
    %cst_300 = arith.constant 0.000000e+00 : f32
    %283 = vector.broadcast %cst_300 : f32 to vector<4x80xf32>
    %284 = arith.maximumf %282, %283 : vector<4x80xf32>
    %285 = vector.extract_strided_slice %284 {offsets = [0, 0], sizes = [1, 80], strides = [1, 1]} : vector<4x80xf32> to vector<1x80xf32>
    %c0_301 = arith.constant 0 : index
    %c0_302 = arith.constant 0 : index
    %c0_303 = arith.constant 0 : index
    %286 = vector.load %arg5[%c0_301, %c0_302, %c0_303] : memref<4x80x128xf32, #tpu.memory_space<vmem>>, vector<1x80x128xf32>
    %287 = vector.shape_cast %286 : vector<1x80x128xf32> to vector<80x128xf32>
    %cst_304 = arith.constant dense<0.000000e+00> : vector<1x128xf32>
    %288 = tpu.matmul %285, %287, %cst_304 {dimension_numbers = #tpu.dot_dimension_numbers<[1], [0], [0], [1], [0, 0, 1, 1], [], []>} : vector<1x80xf32>, vector<80x128xf32>, vector<1x128xf32> -> vector<1x128xf32>
    %289 = vector.extract_strided_slice %284 {offsets = [1, 0], sizes = [1, 80], strides = [1, 1]} : vector<4x80xf32> to vector<1x80xf32>
    %c1_305 = arith.constant 1 : index
    %c0_306 = arith.constant 0 : index
    %c0_307 = arith.constant 0 : index
    %290 = vector.load %arg5[%c1_305, %c0_306, %c0_307] : memref<4x80x128xf32, #tpu.memory_space<vmem>>, vector<1x80x128xf32>
    %291 = vector.shape_cast %290 : vector<1x80x128xf32> to vector<80x128xf32>
    %cst_308 = arith.constant dense<0.000000e+00> : vector<1x128xf32>
    %292 = tpu.matmul %289, %291, %cst_308 {dimension_numbers = #tpu.dot_dimension_numbers<[1], [0], [0], [1], [0, 0, 1, 1], [], []>} : vector<1x80xf32>, vector<80x128xf32>, vector<1x128xf32> -> vector<1x128xf32>
    %293 = arith.addf %288, %292 : vector<1x128xf32>
    %294 = vector.extract_strided_slice %284 {offsets = [2, 0], sizes = [1, 80], strides = [1, 1]} : vector<4x80xf32> to vector<1x80xf32>
    %c2_309 = arith.constant 2 : index
    %c0_310 = arith.constant 0 : index
    %c0_311 = arith.constant 0 : index
    %295 = vector.load %arg5[%c2_309, %c0_310, %c0_311] : memref<4x80x128xf32, #tpu.memory_space<vmem>>, vector<1x80x128xf32>
    %296 = vector.shape_cast %295 : vector<1x80x128xf32> to vector<80x128xf32>
    %cst_312 = arith.constant dense<0.000000e+00> : vector<1x128xf32>
    %297 = tpu.matmul %294, %296, %cst_312 {dimension_numbers = #tpu.dot_dimension_numbers<[1], [0], [0], [1], [0, 0, 1, 1], [], []>} : vector<1x80xf32>, vector<80x128xf32>, vector<1x128xf32> -> vector<1x128xf32>
    %298 = arith.addf %293, %297 : vector<1x128xf32>
    %299 = vector.extract_strided_slice %284 {offsets = [3, 0], sizes = [1, 80], strides = [1, 1]} : vector<4x80xf32> to vector<1x80xf32>
    %c3_313 = arith.constant 3 : index
    %c0_314 = arith.constant 0 : index
    %c0_315 = arith.constant 0 : index
    %300 = vector.load %arg5[%c3_313, %c0_314, %c0_315] : memref<4x80x128xf32, #tpu.memory_space<vmem>>, vector<1x80x128xf32>
    %301 = vector.shape_cast %300 : vector<1x80x128xf32> to vector<80x128xf32>
    %cst_316 = arith.constant dense<0.000000e+00> : vector<1x128xf32>
    %302 = tpu.matmul %299, %301, %cst_316 {dimension_numbers = #tpu.dot_dimension_numbers<[1], [0], [0], [1], [0, 0, 1, 1], [], []>} : vector<1x80xf32>, vector<80x128xf32>, vector<1x128xf32> -> vector<1x128xf32>
    %303 = arith.addf %298, %302 : vector<1x128xf32>
    %304 = arith.addf %303, %1 : vector<1x128xf32>
    %cst_317 = arith.constant 0.000000e+00 : f32
    %305 = vector.broadcast %cst_317 : f32 to vector<1x128xf32>
    %306 = arith.maximumf %304, %305 : vector<1x128xf32>
    %cst_318 = arith.constant dense<0.000000e+00> : vector<1x10xf32>
    %307 = tpu.matmul %306, %3, %cst_318 {dimension_numbers = #tpu.dot_dimension_numbers<[1], [0], [0], [1], [0, 0, 1, 1], [], []>} : vector<1x128xf32>, vector<128x10xf32>, vector<1x10xf32> -> vector<1x10xf32>
    %308 = arith.addf %307, %2 : vector<1x10xf32>
    %cst_319 = arith.constant dense<0xFF800000> : vector<1xf32>
    %309 = vector.multi_reduction <maximumf>, %308, %cst_319 [1] : vector<1x10xf32> to vector<1xf32>
    %310 = vector.shape_cast %309 : vector<1xf32> to vector<1x1xf32>
    %311 = vector.broadcast %310 : vector<1x1xf32> to vector<1x10xf32>
    %312 = arith.subf %308, %311 : vector<1x10xf32>
    %313 = math.exp %312 : vector<1x10xf32>
    %cst_320 = arith.constant dense<0.000000e+00> : vector<1xf32>
    %314 = vector.multi_reduction <add>, %313, %cst_320 [1] : vector<1x10xf32> to vector<1xf32>
    %315 = vector.shape_cast %314 : vector<1xf32> to vector<1x1xf32>
    %316 = math.log %315 : vector<1x1xf32>
    %317 = vector.broadcast %316 : vector<1x1xf32> to vector<1x10xf32>
    %318 = arith.subf %312, %317 : vector<1x10xf32>
    %c1_321 = arith.constant 1 : index
    %c0_322 = arith.constant 0 : index
    %319 = vector.load %arg9[%c1_321, %c0_322] : memref<2x10xf32, #tpu.memory_space<vmem>>, vector<1x10xf32>
    tpu.vector_store %arg9[%c1_321, %c0_322], %318 {strides = array<i32>} : memref<2x10xf32, #tpu.memory_space<vmem>>, vector<1x10xf32>,
    return
  }
  func.func @transform_0(%arg0: i32) -> (i32, i32, i32) {
    %c0_i32 = arith.constant 0 : i32
    %c0_i32_0 = arith.constant 0 : i32
    %c0_i32_1 = arith.constant 0 : i32
    return %arg0, %c0_i32, %c0_i32_0 : i32, i32, i32
  }
  func.func @transform_1(%arg0: i32) -> (i32, i32, i32) {
    %c0_i32 = arith.constant 0 : i32
    %c0_i32_0 = arith.constant 0 : i32
    %c0_i32_1 = arith.constant 0 : i32
    return %arg0, %c0_i32, %c0_i32_0 : i32, i32, i32
  }
  func.func @transform_2(%arg0: i32) -> (i32, i32, i32) {
    %c0_i32 = arith.constant 0 : i32
    %c0_i32_0 = arith.constant 0 : i32
    %c0_i32_1 = arith.constant 0 : i32
    %c0_i32_2 = arith.constant 0 : i32
    return %c0_i32, %c0_i32_0, %c0_i32_1 : i32, i32, i32
  }
  func.func @transform_3(%arg0: i32) -> (i32, i32) {
    %c0_i32 = arith.constant 0 : i32
    %c0_i32_0 = arith.constant 0 : i32
    %c0_i32_1 = arith.constant 0 : i32
    return %c0_i32, %c0_i32_0 : i32, i32
  }
  func.func @transform_4(%arg0: i32) -> (i32, i32, i32) {
    %c0_i32 = arith.constant 0 : i32
    %c0_i32_0 = arith.constant 0 : i32
    %c0_i32_1 = arith.constant 0 : i32
    %c0_i32_2 = arith.constant 0 : i32
    return %c0_i32, %c0_i32_0, %c0_i32_1 : i32, i32, i32
  }
  func.func @transform_5(%arg0: i32) -> (i32, i32) {
    %c0_i32 = arith.constant 0 : i32
    %c0_i32_0 = arith.constant 0 : i32
    %c0_i32_1 = arith.constant 0 : i32
    return %c0_i32, %c0_i32_0 : i32, i32
  }
  func.func @transform_6(%arg0: i32) -> (i32, i32) {
    %c0_i32 = arith.constant 0 : i32
    %c0_i32_0 = arith.constant 0 : i32
    %c0_i32_1 = arith.constant 0 : i32
    return %c0_i32, %c0_i32_0 : i32, i32
  }
  func.func @transform_7(%arg0: i32) -> (i32, i32) {
    %c0_i32 = arith.constant 0 : i32
    %c0_i32_0 = arith.constant 0 : i32
    %c0_i32_1 = arith.constant 0 : i32
    return %c0_i32, %c0_i32_0 : i32, i32
  }
  func.func @transform_8(%arg0: i32) -> (i32, i32) {
    %c0_i32 = arith.constant 0 : i32
    %c0_i32_0 = arith.constant 0 : i32
    return %arg0, %c0_i32 : i32, i32
  }
}

</mosaic_0001>

<llo_original>
// kernel: convnet_forward.2
$region0: #{convnet_forward.2}
  #allocation0 [shape = 'u32[]', space=smem, size = 0x4, offset = 0x4, fixed_abs, tag = 'smem constant byte address 0x4 - core index']
  #allocation1 [shape = 'u32[144,128]{1,0:T(1,128)}', space=vmem, size = 0x12000, scoped, tag = 'internal scratch']
  %s0 = inlined_call_operand.vmem [shape: f32[2,14,28], index: 0, kind: input, shape index: {}]
  %s1 = inlined_call_operand.vmem [shape: f32[2,14,28], index: 1, kind: input, shape index: {}]
  %s2 = inlined_call_operand.hbm [shape: f32[10,28,128], index: 2, kind: input, shape index: {}]
  %s3 = inlined_call_operand.hbm [shape: f32[1,128], index: 3, kind: input, shape index: {}]
  %s4 = inlined_call_operand.vmem [shape: f32[2,12,128], index: 4, kind: output, shape index: {}]
  %s5 = sld [smem:[#allocation0]]
  $region34: #{convnet_forward.2} parent=0
    _
  %s7 = ssub.s32 1, %s5
  %s8 = scalar_select 0, %s7, %s5
  $region1: #{convnet_forward.2} parent=0
    #allocation2 [shape = 'u8[163840]{0}', space=vmem, size = 0x28000, scoped, tag = 'input window, operand 2, single buffered']
    #allocation3 [shape = 's32[1]{0}', space=sflag, size = 0x4, scoped, tag = 'scoped memory for convnet_forward.2']
    #allocation4 [shape = 'u8[512]{0}', space=vmem, size = 0x400, scoped, tag = 'input window, operand 3, single buffered']
    #allocation5 [shape = 's32[1]{0}', space=sflag, size = 0x4, scoped, tag = 'scoped memory for convnet_forward.2']
    %9 = vsyncpa [#allocation3], 0
    %10 = vsyncpa [#allocation5], 0
    // Predicated region
    $region2: #{convnet_forward.2} parent=1 // pred_check
      _
    $region3: #{convnet_forward.2} parent=1 // pred_check_branch
      %12 = sbr.rel (0) target = $region5
    $region4: #{convnet_forward.2} parent=1 // pred_region
      _
    $region5: #{convnet_forward.2} parent=1 // pred_fallthru
      _
    // Predicated region
    $region6: #{convnet_forward.2} parent=1 // pred_check
      _
    $region7: #{convnet_forward.2} parent=1 // pred_check_branch
      %14 = sbr.rel (0) target = $region9
    $region8: #{convnet_forward.2} parent=1 // pred_region
      _
    $region9: #{convnet_forward.2} parent=1 // pred_fallthru
      _
    // Predicated region
    $region10: #{convnet_forward.2} parent=1 // pred_check
      _
    $region11: #{convnet_forward.2} parent=1 // pred_check_branch
      %16 = sbr.rel (0) target = $region13
    $region12: #{convnet_forward.2} parent=1 // pred_region
      %s18 = ssub.s32 5120, 5120
      %19 = vsyncadd [#allocation3], %s18
      %s20 = sshll.u32 [#allocation2], 4
      %s21 = int_to_ptr.vmem [resolvable:$true] %s20
      %26 = dma.hbm_to_vmem [thread:$0]  %s2, 5120, %s21, [#allocation3], 128, 128, 8
    $region13: #{convnet_forward.2} parent=1 // pred_fallthru
      _
    // Predicated region
    $region14: #{convnet_forward.2} parent=1 // pred_check
      _
    $region15: #{convnet_forward.2} parent=1 // pred_check_branch
      %28 = sbr.rel (0) target = $region17
    $region16: #{convnet_forward.2} parent=1 // pred_region
      %s30 = ssub.s32 16, 16
      %31 = vsyncadd [#allocation5], %s30
      %s33 = sshll.u32 [#allocation4], 4
      %s34 = int_to_ptr.vmem [resolvable:$true] %s33
      %36 = dma.hbm_to_vmem [thread:$0]  %s3, 16, %s34, [#allocation5]
    $region17: #{convnet_forward.2} parent=1 // pred_fallthru
      _
    // Predicated region
    $region18: #{convnet_forward.2} parent=1 // pred_check
      _
    $region19: #{convnet_forward.2} parent=1 // pred_check_branch
      %38 = sbr.rel (0) target = $region21
    $region20: #{convnet_forward.2} parent=1 // pred_region
      %39 = dma.done [#allocation3], 5120
    $region21: #{convnet_forward.2} parent=1 // pred_fallthru
      _
    // Predicated region
    $region22: #{convnet_forward.2} parent=1 // pred_check
      _
    $region23: #{convnet_forward.2} parent=1 // pred_check_branch
      %41 = sbr.rel (0) target = $region25
    $region24: #{convnet_forward.2} parent=1 // pred_region
      %42 = dma.done [#allocation5], 16
    $region25: #{convnet_forward.2} parent=1 // pred_fallthru
      _
    %v43 = vld [vmem:[#allocation4] sm:$0x1]
    %v44 = vld [vmem:[%s0] sm:$0xff]
    %v45 = vld [vmem:[%s0 + $0x8] sm:$0xf]
    %v46 = vld [vmem:[#allocation2] sm:$0xff]
    %v47 = vld [vmem:[#allocation2 + $0x8] sm:$0xff]
    %v48 = vld [vmem:[#allocation2 + $0x10] sm:$0xff]
    %v49 = vld [vmem:[#allocation2 + $0x18] sm:$0xf]
    %v50 = vld [vmem:[%s1] sm:$0xff]
    %v51 = vld [vmem:[%s1 + $0x8] sm:$0xf]
    %s52 = scalar_lea.vmem [#allocation2], 64
    %v53 = vld [vmem:[%s52] sm:$0xff]
    %v54 = vld [vmem:[%s52 + $0x8] sm:$0xff]
    %v55 = vld [vmem:[%s52 + $0x10] sm:$0xff]
    %v56 = vld [vmem:[%s52 + $0x18] sm:$0xf]
    %vm57 = vcmask 228352
    %v59 = vsel %vm57, %v50, 0
    %v62 = vsel %vm57, %v51, 0
    %vm64 = vcmask 1043456
    %v66 = vsel %vm64, %v56, 0
    %68 = vmatprep.subr.mxu0 0.0
    %69 = vmatpush1.msra.mxu0 %v53
    %70 = vmatprep.subr.mxu0 0.0
    %71 = vmatpush1.msra.mxu0 %v54
    %72 = vmatprep.subr.mxu0 0.0
    %73 = vmatpush1.msra.mxu0 %v55
    %74 = vmatprep.subr.mxu0 0.0
    %75 = vmatpush1.msra.mxu0 %v66
    %76 = vmatprep.subr.mxu0 0.0
    %77 = vmatpush1.msra.mxu0 0.0
    %78 = vmatprep.subr.mxu0 0.0
    %79 = vmatpush1.msra.mxu0 0.0
    %80 = vmatprep.subr.mxu0 0.0
    %81 = vmatpush1.msra.mxu0 0.0
    %82 = vmatprep.subr.mxu0 0.0
    %83 = vmatpush1.msra.mxu0 0.0
    %84 = vmatprep.subr.mxu0 0.0
    %85 = vmatpush1.msra.mxu0 0.0
    %86 = vmatprep.subr.mxu0 0.0
    %87 = vmatpush1.msra.mxu0 0.0
    %88 = vmatprep.subr.mxu0 0.0
    %89 = vmatpush1.msra.mxu0 0.0
    %90 = vmatprep.subr.mxu0 0.0
    %91 = vmatpush1.msra.mxu0 0.0
    %92 = vmatprep.subr.mxu0 0.0
    %93 = vmatpush1.msra.mxu0 0.0
    %94 = vmatprep.subr.mxu0 0.0
    %95 = vmatpush1.msra.mxu0 0.0
    %96 = vmatprep.subr.mxu0 0.0
    %97 = vmatpush1.msra.mxu0 0.0
    %98 = vmatprep.subr.mxu0 0.0
    %99 = vmatpush1.msra.mxu0 0.0
    %100 = vmatprep.subr.mxu0 0.0
    %101 = vmatpush1.msra.mxu0 0.0
    %102 = vmatprep.subr.mxu0 0.0
    %103 = vmatpush1.msra.mxu0 0.0
    %104 = vmatprep.subr.mxu0 0.0
    %105 = vmatpush1.msra.mxu0 0.0
    %106 = vmatprep.subr.mxu0 0.0
    %107 = vmatpush1.msra.mxu0 0.0
    %108 = vmatprep.subr.mxu0 0.0
    %109 = vmatpush1.msra.mxu0 0.0
    %110 = vmatprep.subr.mxu0 0.0
    %111 = vmatpush1.msra.mxu0 0.0
    %112 = vmatprep.subr.mxu0 0.0
    %113 = vmatpush1.msra.mxu0 0.0
    %114 = vmatprep.subr.mxu0 0.0
    %115 = vmatpush1.msra.mxu0 0.0
    %116 = vmatprep.subr.mxu0 0.0
    %117 = vmatpush1.msra.mxu0 0.0
    %118 = vmatprep.subr.mxu0 0.0
    %119 = vmatpush1.msra.mxu0 0.0
    %120 = vmatprep.subr.mxu0 0.0
    %121 = vmatpush1.msra.mxu0 0.0
    %122 = vmatprep.subr.mxu0 0.0
    %123 = vmatpush1.msra.mxu0 0.0
    %124 = vmatprep.subr.mxu0 0.0
    %125 = vmatpush1.msra.mxu0 0.0
    %126 = vmatprep.subr.mxu0 0.0
    %127 = vmatpush1.msra.mxu0 0.0
    %128 = vmatprep.subr.mxu0 0.0
    %129 = vmatpush1.msra.mxu0 0.0
    %130 = vmatprep.subr.mxu0 0.0
    %131 = vmatpush1.msra.mxu0 0.0
    %132 = vmatprep.mubr.f32.mxu0 0.0
    %133 = vmatmul.mubr.f32.gmra.mrb[0].mxu0 %v59
    %v134 = vpop.f32.mrb[0].mxu0
    %v135 = vadd.f32 0.0, %v134
    %v136 = vpop.f32.mrb[0].mxu0
    %137 = vmatprep.mubr.f32.mxu0 0.0
    %138 = vmatmul.mubr.f32.gmra.mrb[0].mxu0 %v62
    %v139 = vpop.f32.mrb[0].mxu0
    %v140 = vadd.f32 0.0, %v139
    %v141 = vpop.f32.mrb[0].mxu0
    %142 = vdwg.mxu0
    %v144 = vsel %vm57, %v44, 0
    %v147 = vsel %vm57, %v45, 0
    %v150 = vsel %vm64, %v49, 0
    %152 = vmatprep.subr.mxu0 0.0
    %153 = vmatpush1.msra.mxu0 %v46
    %154 = vmatprep.subr.mxu0 0.0
    %155 = vmatpush1.msra.mxu0 %v47
    %156 = vmatprep.subr.mxu0 0.0
    %157 = vmatpush1.msra.mxu0 %v48
    %158 = vmatprep.subr.mxu0 0.0
    %159 = vmatpush1.msra.mxu0 %v150
    %160 = vmatprep.subr.mxu0 0.0
    %161 = vmatpush1.msra.mxu0 0.0
    %162 = vmatprep.subr.mxu0 0.0
    %163 = vmatpush1.msra.mxu0 0.0
    %164 = vmatprep.subr.mxu0 0.0
    %165 = vmatpush1.msra.mxu0 0.0
    %166 = vmatprep.subr.mxu0 0.0
    %167 = vmatpush1.msra.mxu0 0.0
    %168 = vmatprep.subr.mxu0 0.0
    %169 = vmatpush1.msra.mxu0 0.0
    %170 = vmatprep.subr.mxu0 0.0
    %171 = vmatpush1.msra.mxu0 0.0
    %172 = vmatprep.subr.mxu0 0.0
    %173 = vmatpush1.msra.mxu0 0.0
    %174 = vmatprep.subr.mxu0 0.0
    %175 = vmatpush1.msra.mxu0 0.0
    %176 = vmatprep.subr.mxu0 0.0
    %177 = vmatpush1.msra.mxu0 0.0
    %178 = vmatprep.subr.mxu0 0.0
    %179 = vmatpush1.msra.mxu0 0.0
    %180 = vmatprep.subr.mxu0 0.0
    %181 = vmatpush1.msra.mxu0 0.0
    %182 = vmatprep.subr.mxu0 0.0
    %183 = vmatpush1.msra.mxu0 0.0
    %184 = vmatprep.subr.mxu0 0.0
    %185 = vmatpush1.msra.mxu0 0.0
    %186 = vmatprep.subr.mxu0 0.0
    %187 = vmatpush1.msra.mxu0 0.0
    %188 = vmatprep.subr.mxu0 0.0
    %189 = vmatpush1.msra.mxu0 0.0
    %190 = vmatprep.subr.mxu0 0.0
    %191 = vmatpush1.msra.mxu0 0.0
    %192 = vmatprep.subr.mxu0 0.0
    %193 = vmatpush1.msra.mxu0 0.0
    %194 = vmatprep.subr.mxu0 0.0
    %195 = vmatpush1.msra.mxu0 0.0
    %196 = vmatprep.subr.mxu0 0.0
    %197 = vmatpush1.msra.mxu0 0.0
    %198 = vmatprep.subr.mxu0 0.0
    %199 = vmatpush1.msra.mxu0 0.0
    %200 = vmatprep.subr.mxu0 0.0
    %201 = vmatpush1.msra.mxu0 0.0
    %202 = vmatprep.subr.mxu0 0.0
    %203 = vmatpush1.msra.mxu0 0.0
    %204 = vmatprep.subr.mxu0 0.0
    %205 = vmatpush1.msra.mxu0 0.0
    %206 = vmatprep.subr.mxu0 0.0
    %207 = vmatpush1.msra.mxu0 0.0
    %208 = vmatprep.subr.mxu0 0.0
    %209 = vmatpush1.msra.mxu0 0.0
    %210 = vmatprep.subr.mxu0 0.0
    %211 = vmatpush1.msra.mxu0 0.0
    %212 = vmatprep.subr.mxu0 0.0
    %213 = vmatpush1.msra.mxu0 0.0
    %214 = vmatprep.subr.mxu0 0.0
    %215 = vmatpush1.msra.mxu0 0.0
    %216 = vmatprep.mubr.f32.mxu0 0.0
    %217 = vmatmul.mubr.f32.gmra.mrb[0].mxu0 %v144
    %v218 = vpop.f32.mrb[0].mxu0
    %v219 = vadd.f32 %v135, %v218
    %v220 = vpop.f32.mrb[0].mxu0
    %221 = vmatprep.mubr.f32.mxu0 0.0
    %222 = vmatmul.mubr.f32.gmra.mrb[0].mxu0 %v147
    %v223 = vpop.f32.mrb[0].mxu0
    %v224 = vadd.f32 %v140, %v223
    %v225 = vpop.f32.mrb[0].mxu0
    %226 = vdwg.mxu0
    %v227 = vld [vmem:[%s0 + $0x1] sm:$0xff]
    %v228 = vld [vmem:[%s0 + $0x9] sm:$0xf]
    %s229 = scalar_lea.vmem [#allocation2], 128
    %v230 = vld [vmem:[%s229] sm:$0xff]
    %v231 = vld [vmem:[%s229 + $0x8] sm:$0xff]
    %v232 = vld [vmem:[%s229 + $0x10] sm:$0xff]
    %v233 = vld [vmem:[%s229 + $0x18] sm:$0xf]
    %v235 = vsel %vm57, %v227, 0
    %v238 = vsel %vm57, %v228, 0
    %v241 = vsel %vm64, %v233, 0
    %243 = vmatprep.subr.mxu0 0.0
    %244 = vmatpush1.msra.mxu0 %v230
    %245 = vmatprep.subr.mxu0 0.0
    %246 = vmatpush1.msra.mxu0 %v231
    %247 = vmatprep.subr.mxu0 0.0
    %248 = vmatpush1.msra.mxu0 %v232
    %249 = vmatprep.subr.mxu0 0.0
    %250 = vmatpush1.msra.mxu0 %v241
    %251 = vmatprep.subr.mxu0 0.0
    %252 = vmatpush1.msra.mxu0 0.0
    %253 = vmatprep.subr.mxu0 0.0
    %254 = vmatpush1.msra.mxu0 0.0
    %255 = vmatprep.subr.mxu0 0.0
    %256 = vmatpush1.msra.mxu0 0.0
    %257 = vmatprep.subr.mxu0 0.0
    %258 = vmatpush1.msra.mxu0 0.0
    %259 = vmatprep.subr.mxu0 0.0
    %260 = vmatpush1.msra.mxu0 0.0
    %261 = vmatprep.subr.mxu0 0.0
    %262 = vmatpush1.msra.mxu0 0.0
    %263 = vmatprep.subr.mxu0 0.0
    %264 = vmatpush1.msra.mxu0 0.0
    %265 = vmatprep.subr.mxu0 0.0
    %266 = vmatpush1.msra.mxu0 0.0
    %267 = vmatprep.subr.mxu0 0.0
    %268 = vmatpush1.msra.mxu0 0.0
    %269 = vmatprep.subr.mxu0 0.0
    %270 = vmatpush1.msra.mxu0 0.0
    %271 = vmatprep.subr.mxu0 0.0
    %272 = vmatpush1.msra.mxu0 0.0
    %273 = vmatprep.subr.mxu0 0.0
    %274 = vmatpush1.msra.mxu0 0.0
    %275 = vmatprep.subr.mxu0 0.0
    %276 = vmatpush1.msra.mxu0 0.0
    %277 = vmatprep.subr.mxu0 0.0
    %278 = vmatpush1.msra.mxu0 0.0
    %279 = vmatprep.subr.mxu0 0.0
    %280 = vmatpush1.msra.mxu0 0.0
    %281 = vmatprep.subr.mxu0 0.0
    %282 = vmatpush1.msra.mxu0 0.0
    %283 = vmatprep.subr.mxu0 0.0
    %284 = vmatpush1.msra.mxu0 0.0
    %285 = vmatprep.subr.mxu0 0.0
    %286 = vmatpush1.msra.mxu0 0.0
    %287 = vmatprep.subr.mxu0 0.0
    %288 = vmatpush1.msra.mxu0 0.0
    %289 = vmatprep.subr.mxu0 0.0
    %290 = vmatpush1.msra.mxu0 0.0
    %291 = vmatprep.subr.mxu0 0.0
    %292 = vmatpush1.msra.mxu0 0.0
    %293 = vmatprep.subr.mxu0 0.0
    %294 = vmatpush1.msra.mxu0 0.0
    %295 = vmatprep.subr.mxu0 0.0
    %296 = vmatpush1.msra.mxu0 0.0
    %297 = vmatprep.subr.mxu0 0.0
    %298 = vmatpush1.msra.mxu0 0.0
    %299 = vmatprep.subr.mxu0 0.0
    %300 = vmatpush1.msra.mxu0 0.0
    %301 = vmatprep.subr.mxu0 0.0
    %302 = vmatpush1.msra.mxu0 0.0
    %303 = vmatprep.subr.mxu0 0.0
    %304 = vmatpush1.msra.mxu0 0.0
    %305 = vmatprep.subr.mxu0 0.0
    %306 = vmatpush1.msra.mxu0 0.0
    %307 = vmatprep.mubr.f32.mxu0 0.0
    %308 = vmatmul.mubr.f32.gmra.mrb[0].mxu0 %v235
    %v309 = vpop.f32.mrb[0].mxu0
    %v310 = vadd.f32 0.0, %v309
    %v311 = vpop.f32.mrb[0].mxu0
    %312 = vmatprep.mubr.f32.mxu0 0.0
    %313 = vmatmul.mubr.f32.gmra.mrb[0].mxu0 %v238
    %v314 = vpop.f32.mrb[0].mxu0
    %v315 = vadd.f32 0.0, %v314
    %v316 = vpop.f32.mrb[0].mxu0
    %317 = vdwg.mxu0
    %v318 = vadd.f32 %v219, %v310
    %v319 = vadd.f32 %v224, %v315
    %v320 = vld [vmem:[%s1 + $0x1] sm:$0xff]
    %v321 = vld [vmem:[%s1 + $0x9] sm:$0xf]
    %s322 = scalar_lea.vmem [#allocation2], 192
    %v323 = vld [vmem:[%s322] sm:$0xff]
    %v324 = vld [vmem:[%s322 + $0x8] sm:$0xff]
    %v325 = vld [vmem:[%s322 + $0x10] sm:$0xff]
    %v326 = vld [vmem:[%s322 + $0x18] sm:$0xf]
    %v328 = vsel %vm57, %v320, 0
    %v331 = vsel %vm57, %v321, 0
    %v334 = vsel %vm64, %v326, 0
    %336 = vmatprep.subr.mxu0 0.0
    %337 = vmatpush1.msra.mxu0 %v323
    %338 = vmatprep.subr.mxu0 0.0
    %339 = vmatpush1.msra.mxu0 %v324
    %340 = vmatprep.subr.mxu0 0.0
    %341 = vmatpush1.msra.mxu0 %v325
    %342 = vmatprep.subr.mxu0 0.0
    %343 = vmatpush1.msra.mxu0 %v334
    %344 = vmatprep.subr.mxu0 0.0
    %345 = vmatpush1.msra.mxu0 0.0
    %346 = vmatprep.subr.mxu0 0.0
    %347 = vmatpush1.msra.mxu0 0.0
    %348 = vmatprep.subr.mxu0 0.0
    %349 = vmatpush1.msra.mxu0 0.0
    %350 = vmatprep.subr.mxu0 0.0
    %351 = vmatpush1.msra.mxu0 0.0
    %352 = vmatprep.subr.mxu0 0.0
    %353 = vmatpush1.msra.mxu0 0.0
    %354 = vmatprep.subr.mxu0 0.0
    %355 = vmatpush1.msra.mxu0 0.0
    %356 = vmatprep.subr.mxu0 0.0
    %357 = vmatpush1.msra.mxu0 0.0
    %358 = vmatprep.subr.mxu0 0.0
    %359 = vmatpush1.msra.mxu0 0.0
    %360 = vmatprep.subr.mxu0 0.0
    %361 = vmatpush1.msra.mxu0 0.0
    %362 = vmatprep.subr.mxu0 0.0
    %363 = vmatpush1.msra.mxu0 0.0
    %364 = vmatprep.subr.mxu0 0.0
    %365 = vmatpush1.msra.mxu0 0.0
    %366 = vmatprep.subr.mxu0 0.0
    %367 = vmatpush1.msra.mxu0 0.0
    %368 = vmatprep.subr.mxu0 0.0
    %369 = vmatpush1.msra.mxu0 0.0
    %370 = vmatprep.subr.mxu0 0.0
    %371 = vmatpush1.msra.mxu0 0.0
    %372 = vmatprep.subr.mxu0 0.0
    %373 = vmatpush1.msra.mxu0 0.0
    %374 = vmatprep.subr.mxu0 0.0
    %375 = vmatpush1.msra.mxu0 0.0
    %376 = vmatprep.subr.mxu0 0.0
    %377 = vmatpush1.msra.mxu0 0.0
    %378 = vmatprep.subr.mxu0 0.0
    %379 = vmatpush1.msra.mxu0 0.0
    %380 = vmatprep.subr.mxu0 0.0
    %381 = vmatpush1.msra.mxu0 0.0
    %382 = vmatprep.subr.mxu0 0.0
    %383 = vmatpush1.msra.mxu0 0.0
    %384 = vmatprep.subr.mxu0 0.0
    %385 = vmatpush1.msra.mxu0 0.0
    %386 = vmatprep.subr.mxu0 0.0
    %387 = vmatpush1.msra.mxu0 0.0
    %388 = vmatprep.subr.mxu0 0.0
    %389 = vmatpush1.msra.mxu0 0.0
    %390 = vmatprep.subr.mxu0 0.0
    %391 = vmatpush1.msra.mxu0 0.0
    %392 = vmatprep.subr.mxu0 0.0
    %393 = vmatpush1.msra.mxu0 0.0
    %394 = vmatprep.subr.mxu0 0.0
    %395 = vmatpush1.msra.mxu0 0.0
    %396 = vmatprep.subr.mxu0 0.0
    %397 = vmatpush1.msra.mxu0 0.0
    %398 = vmatprep.subr.mxu0 0.0
    %399 = vmatpush1.msra.mxu0 0.0
    %400 = vmatprep.mubr.f32.mxu0 0.0
    %401 = vmatmul.mubr.f32.gmra.mrb[0].mxu0 %v328
    %v402 = vpop.f32.mrb[0].mxu0
    %v403 = vadd.f32 0.0, %v402
    %v404 = vpop.f32.mrb[0].mxu0
    %405 = vmatprep.mubr.f32.mxu0 0.0
    %406 = vmatmul.mubr.f32.gmra.mrb[0].mxu0 %v331
    %v407 = vpop.f32.mrb[0].mxu0
    %v408 = vadd.f32 0.0, %v407
    %v409 = vpop.f32.mrb[0].mxu0
    %410 = vdwg.mxu0
    %v411 = vadd.f32 %v318, %v403
    %v412 = vadd.f32 %v319, %v408
    %v413 = vld [vmem:[%s0 + $0x2] sm:$0xff]
    %v414 = vld [vmem:[%s0 + $0xa] sm:$0xf]
    %s415 = scalar_lea.vmem [#allocation2], 256
    %v416 = vld [vmem:[%s415] sm:$0xff]
    %v417 = vld [vmem:[%s415 + $0x8] sm:$0xff]
    %v418 = vld [vmem:[%s415 + $0x10] sm:$0xff]
    %v419 = vld [vmem:[%s415 + $0x18] sm:$0xf]
    %v421 = vsel %vm57, %v413, 0
    %v424 = vsel %vm57, %v414, 0
    %v427 = vsel %vm64, %v419, 0
    %429 = vmatprep.subr.mxu0 0.0
    %430 = vmatpush1.msra.mxu0 %v416
    %431 = vmatprep.subr.mxu0 0.0
    %432 = vmatpush1.msra.mxu0 %v417
    %433 = vmatprep.subr.mxu0 0.0
    %434 = vmatpush1.msra.mxu0 %v418
    %435 = vmatprep.subr.mxu0 0.0
    %436 = vmatpush1.msra.mxu0 %v427
    %437 = vmatprep.subr.mxu0 0.0
    %438 = vmatpush1.msra.mxu0 0.0
    %439 = vmatprep.subr.mxu0 0.0
    %440 = vmatpush1.msra.mxu0 0.0
    %441 = vmatprep.subr.mxu0 0.0
    %442 = vmatpush1.msra.mxu0 0.0
    %443 = vmatprep.subr.mxu0 0.0
    %444 = vmatpush1.msra.mxu0 0.0
    %445 = vmatprep.subr.mxu0 0.0
    %446 = vmatpush1.msra.mxu0 0.0
    %447 = vmatprep.subr.mxu0 0.0
    %448 = vmatpush1.msra.mxu0 0.0
    %449 = vmatprep.subr.mxu0 0.0
    %450 = vmatpush1.msra.mxu0 0.0
    %451 = vmatprep.subr.mxu0 0.0
    %452 = vmatpush1.msra.mxu0 0.0
    %453 = vmatprep.subr.mxu0 0.0
    %454 = vmatpush1.msra.mxu0 0.0
    %455 = vmatprep.subr.mxu0 0.0
    %456 = vmatpush1.msra.mxu0 0.0
    %457 = vmatprep.subr.mxu0 0.0
    %458 = vmatpush1.msra.mxu0 0.0
    %459 = vmatprep.subr.mxu0 0.0
    %460 = vmatpush1.msra.mxu0 0.0
    %461 = vmatprep.subr.mxu0 0.0
    %462 = vmatpush1.msra.mxu0 0.0
    %463 = vmatprep.subr.mxu0 0.0
    %464 = vmatpush1.msra.mxu0 0.0
    %465 = vmatprep.subr.mxu0 0.0
    %466 = vmatpush1.msra.mxu0 0.0
    %467 = vmatprep.subr.mxu0 0.0
    %468 = vmatpush1.msra.mxu0 0.0
    %469 = vmatprep.subr.mxu0 0.0
    %470 = vmatpush1.msra.mxu0 0.0
    %471 = vmatprep.subr.mxu0 0.0
    %472 = vmatpush1.msra.mxu0 0.0
    %473 = vmatprep.subr.mxu0 0.0
    %474 = vmatpush1.msra.mxu0 0.0
    %475 = vmatprep.subr.mxu0 0.0
    %476 = vmatpush1.msra.mxu0 0.0
    %477 = vmatprep.subr.mxu0 0.0
    %478 = vmatpush1.msra.mxu0 0.0
    %479 = vmatprep.subr.mxu0 0.0
    %480 = vmatpush1.msra.mxu0 0.0
    %481 = vmatprep.subr.mxu0 0.0
    %482 = vmatpush1.msra.mxu0 0.0
    %483 = vmatprep.subr.mxu0 0.0
    %484 = vmatpush1.msra.mxu0 0.0
    %485 = vmatprep.subr.mxu0 0.0
    %486 = vmatpush1.msra.mxu0 0.0
    %487 = vmatprep.subr.mxu0 0.0
    %488 = vmatpush1.msra.mxu0 0.0
    %489 = vmatprep.subr.mxu0 0.0
    %490 = vmatpush1.msra.mxu0 0.0
    %491 = vmatprep.subr.mxu0 0.0
    %492 = vmatpush1.msra.mxu0 0.0
    %493 = vmatprep.mubr.f32.mxu0 0.0
    %494 = vmatmul.mubr.f32.gmra.mrb[0].mxu0 %v421
    %v495 = vpop.f32.mrb[0].mxu0
    %v496 = vadd.f32 0.0, %v495
    %v497 = vpop.f32.mrb[0].mxu0
    %498 = vmatprep.mubr.f32.mxu0 0.0
    %499 = vmatmul.mubr.f32.gmra.mrb[0].mxu0 %v424
    %v500 = vpop.f32.mrb[0].mxu0
    %v501 = vadd.f32 0.0, %v500
    %v502 = vpop.f32.mrb[0].mxu0
    %503 = vdwg.mxu0
    %v504 = vadd.f32 %v411, %v496
    %v505 = vadd.f32 %v412, %v501
    %s506 = scalar_lea.vmem [#allocation2], 32
    %v507 = vld [vmem:[%s506] sm:$0xff]
    %v508 = vld [vmem:[%s506 + $0x8] sm:$0xff]
    %v509 = vld [vmem:[%s506 + $0x10] sm:$0xff]
    %v510 = vld [vmem:[%s506 + $0x18] sm:$0xf]
    %s511 = scalar_lea.vmem [#allocation2], 96
    %v512 = vld [vmem:[%s511] sm:$0xff]
    %v513 = vld [vmem:[%s511 + $0x8] sm:$0xff]
    %v514 = vld [vmem:[%s511 + $0x10] sm:$0xff]
    %v515 = vld [vmem:[%s511 + $0x18] sm:$0xf]
    %v517 = vsel %vm64, %v515, 0
    %519 = vmatprep.subr.mxu0 0.0
    %520 = vmatpush1.msra.mxu0 %v512
    %521 = vmatprep.subr.mxu0 0.0
    %522 = vmatpush1.msra.mxu0 %v513
    %523 = vmatprep.subr.mxu0 0.0
    %524 = vmatpush1.msra.mxu0 %v514
    %525 = vmatprep.subr.mxu0 0.0
    %526 = vmatpush1.msra.mxu0 %v517
    %527 = vmatprep.subr.mxu0 0.0
    %528 = vmatpush1.msra.mxu0 0.0
    %529 = vmatprep.subr.mxu0 0.0
    %530 = vmatpush1.msra.mxu0 0.0
    %531 = vmatprep.subr.mxu0 0.0
    %532 = vmatpush1.msra.mxu0 0.0
    %533 = vmatprep.subr.mxu0 0.0
    %534 = vmatpush1.msra.mxu0 0.0
    %535 = vmatprep.subr.mxu0 0.0
    %536 = vmatpush1.msra.mxu0 0.0
    %537 = vmatprep.subr.mxu0 0.0
    %538 = vmatpush1.msra.mxu0 0.0
    %539 = vmatprep.subr.mxu0 0.0
    %540 = vmatpush1.msra.mxu0 0.0
    %541 = vmatprep.subr.mxu0 0.0
    %542 = vmatpush1.msra.mxu0 0.0
    %543 = vmatprep.subr.mxu0 0.0
    %544 = vmatpush1.msra.mxu0 0.0
    %545 = vmatprep.subr.mxu0 0.0
    %546 = vmatpush1.msra.mxu0 0.0
    %547 = vmatprep.subr.mxu0 0.0
    %548 = vmatpush1.msra.mxu0 0.0
    %549 = vmatprep.subr.mxu0 0.0
    %550 = vmatpush1.msra.mxu0 0.0
    %551 = vmatprep.subr.mxu0 0.0
    %552 = vmatpush1.msra.mxu0 0.0
    %553 = vmatprep.subr.mxu0 0.0
    %554 = vmatpush1.msra.mxu0 0.0
    %555 = vmatprep.subr.mxu0 0.0
    %556 = vmatpush1.msra.mxu0 0.0
    %557 = vmatprep.subr.mxu0 0.0
    %558 = vmatpush1.msra.mxu0 0.0
    %559 = vmatprep.subr.mxu0 0.0
    %560 = vmatpush1.msra.mxu0 0.0
    %561 = vmatprep.subr.mxu0 0.0
    %562 = vmatpush1.msra.mxu0 0.0
    %563 = vmatprep.subr.mxu0 0.0
    %564 = vmatpush1.msra.mxu0 0.0
    %565 = vmatprep.subr.mxu0 0.0
    %566 = vmatpush1.msra.mxu0 0.0
    %567 = vmatprep.subr.mxu0 0.0
    %568 = vmatpush1.msra.mxu0 0.0
    %569 = vmatprep.subr.mxu0 0.0
    %570 = vmatpush1.msra.mxu0 0.0
    %571 = vmatprep.subr.mxu0 0.0
    %572 = vmatpush1.msra.mxu0 0.0
    %573 = vmatprep.subr.mxu0 0.0
    %574 = vmatpush1.msra.mxu0 0.0
    %575 = vmatprep.subr.mxu0 0.0
    %576 = vmatpush1.msra.mxu0 0.0
    %577 = vmatprep.subr.mxu0 0.0
    %578 = vmatpush1.msra.mxu0 0.0
    %579 = vmatprep.subr.mxu0 0.0
    %580 = vmatpush1.msra.mxu0 0.0
    %581 = vmatprep.subr.mxu0 0.0
    %582 = vmatpush1.msra.mxu0 0.0
    %583 = vmatprep.mubr.f32.mxu0 0.0
    %584 = vmatmul.mubr.f32.gmra.mrb[0].mxu0 %v59
    %v585 = vpop.f32.mrb[0].mxu0
    %v586 = vadd.f32 0.0, %v585
    %v587 = vpop.f32.mrb[0].mxu0
    %588 = vmatprep.mubr.f32.mxu0 0.0
    %589 = vmatmul.mubr.f32.gmra.mrb[0].mxu0 %v62
    %v590 = vpop.f32.mrb[0].mxu0
    %v591 = vadd.f32 0.0, %v590
    %v592 = vpop.f32.mrb[0].mxu0
    %593 = vdwg.mxu0
    %v595 = vsel %vm64, %v510, 0
    %597 = vmatprep.subr.mxu0 0.0
    %598 = vmatpush1.msra.mxu0 %v507
    %599 = vmatprep.subr.mxu0 0.0
    %600 = vmatpush1.msra.mxu0 %v508
    %601 = vmatprep.subr.mxu0 0.0
    %602 = vmatpush1.msra.mxu0 %v509
    %603 = vmatprep.subr.mxu0 0.0
    %604 = vmatpush1.msra.mxu0 %v595
    %605 = vmatprep.subr.mxu0 0.0
    %606 = vmatpush1.msra.mxu0 0.0
    %607 = vmatprep.subr.mxu0 0.0
    %608 = vmatpush1.msra.mxu0 0.0
    %609 = vmatprep.subr.mxu0 0.0
    %610 = vmatpush1.msra.mxu0 0.0
    %611 = vmatprep.subr.mxu0 0.0
    %612 = vmatpush1.msra.mxu0 0.0
    %613 = vmatprep.subr.mxu0 0.0
    %614 = vmatpush1.msra.mxu0 0.0
    %615 = vmatprep.subr.mxu0 0.0
    %616 = vmatpush1.msra.mxu0 0.0
    %617 = vmatprep.subr.mxu0 0.0
    %618 = vmatpush1.msra.mxu0 0.0
    %619 = vmatprep.subr.mxu0 0.0
    %620 = vmatpush1.msra.mxu0 0.0
    %621 = vmatprep.subr.mxu0 0.0
    %622 = vmatpush1.msra.mxu0 0.0
    %623 = vmatprep.subr.mxu0 0.0
    %624 = vmatpush1.msra.mxu0 0.0
    %625 = vmatprep.subr.mxu0 0.0
    %626 = vmatpush1.msra.mxu0 0.0
    %627 = vmatprep.subr.mxu0 0.0
    %628 = vmatpush1.msra.mxu0 0.0
    %629 = vmatprep.subr.mxu0 0.0
    %630 = vmatpush1.msra.mxu0 0.0
    %631 = vmatprep.subr.mxu0 0.0
    %632 = vmatpush1.msra.mxu0 0.0
    %633 = vmatprep.subr.mxu0 0.0
    %634 = vmatpush1.msra.mxu0 0.0
    %635 = vmatprep.subr.mxu0 0.0
    %636 = vmatpush1.msra.mxu0 0.0
    %637 = vmatprep.subr.mxu0 0.0
    %638 = vmatpush1.msra.mxu0 0.0
    %639 = vmatprep.subr.mxu0 0.0
    %640 = vmatpush1.msra.mxu0 0.0
    %641 = vmatprep.subr.mxu0 0.0
    %642 = vmatpush1.msra.mxu0 0.0
    %643 = vmatprep.subr.mxu0 0.0
    %644 = vmatpush1.msra.mxu0 0.0
    %645 = vmatprep.subr.mxu0 0.0
    %646 = vmatpush1.msra.mxu0 0.0
    %647 = vmatprep.subr.mxu0 0.0
    %648 = vmatpush1.msra.mxu0 0.0
    %649 = vmatprep.subr.mxu0 0.0
    %650 = vmatpush1.msra.mxu0 0.0
    %651 = vmatprep.subr.mxu0 0.0
    %652 = vmatpush1.msra.mxu0 0.0
    %653 = vmatprep.subr.mxu0 0.0
    %654 = vmatpush1.msra.mxu0 0.0
    %655 = vmatprep.subr.mxu0 0.0
    %656 = vmatpush1.msra.mxu0 0.0
    %657 = vmatprep.subr.mxu0 0.0
    %658 = vmatpush1.msra.mxu0 0.0
    %659 = vmatprep.subr.mxu0 0.0
    %660 = vmatpush1.msra.mxu0 0.0
    %661 = vmatprep.mubr.f32.mxu0 0.0
    %662 = vmatmul.mubr.f32.gmra.mrb[0].mxu0 %v144
    %v663 = vpop.f32.mrb[0].mxu0
    %v664 = vadd.f32 %v586, %v663
    %v665 = vpop.f32.mrb[0].mxu0
    %666 = vmatprep.mubr.f32.mxu0 0.0
    %667 = vmatmul.mubr.f32.gmra.mrb[0].mxu0 %v147
    %v668 = vpop.f32.mrb[0].mxu0
    %v669 = vadd.f32 %v591, %v668
    %v670 = vpop.f32.mrb[0].mxu0
    %671 = vdwg.mxu0
    %s672 = scalar_lea.vmem [#allocation2], 160
    %v673 = vld [vmem:[%s672] sm:$0xff]
    %v674 = vld [vmem:[%s672 + $0x8] sm:$0xff]
    %v675 = vld [vmem:[%s672 + $0x10] sm:$0xff]
    %v676 = vld [vmem:[%s672 + $0x18] sm:$0xf]
    %v678 = vsel %vm64, %v676, 0
    %680 = vmatprep.subr.mxu0 0.0
    %681 = vmatpush1.msra.mxu0 %v673
    %682 = vmatprep.subr.mxu0 0.0
    %683 = vmatpush1.msra.mxu0 %v674
    %684 = vmatprep.subr.mxu0 0.0
    %685 = vmatpush1.msra.mxu0 %v675
    %686 = vmatprep.subr.mxu0 0.0
    %687 = vmatpush1.msra.mxu0 %v678
    %688 = vmatprep.subr.mxu0 0.0
    %689 = vmatpush1.msra.mxu0 0.0
    %690 = vmatprep.subr.mxu0 0.0
    %691 = vmatpush1.msra.mxu0 0.0
    %692 = vmatprep.subr.mxu0 0.0
    %693 = vmatpush1.msra.mxu0 0.0
    %694 = vmatprep.subr.mxu0 0.0
    %695 = vmatpush1.msra.mxu0 0.0
    %696 = vmatprep.subr.mxu0 0.0
    %697 = vmatpush1.msra.mxu0 0.0
    %698 = vmatprep.subr.mxu0 0.0
    %699 = vmatpush1.msra.mxu0 0.0
    %700 = vmatprep.subr.mxu0 0.0
    %701 = vmatpush1.msra.mxu0 0.0
    %702 = vmatprep.subr.mxu0 0.0
    %703 = vmatpush1.msra.mxu0 0.0
    %704 = vmatprep.subr.mxu0 0.0
    %705 = vmatpush1.msra.mxu0 0.0
    %706 = vmatprep.subr.mxu0 0.0
    %707 = vmatpush1.msra.mxu0 0.0
    %708 = vmatprep.subr.mxu0 0.0
    %709 = vmatpush1.msra.mxu0 0.0
    %710 = vmatprep.subr.mxu0 0.0
    %711 = vmatpush1.msra.mxu0 0.0
    %712 = vmatprep.subr.mxu0 0.0
    %713 = vmatpush1.msra.mxu0 0.0
    %714 = vmatprep.subr.mxu0 0.0
    %715 = vmatpush1.msra.mxu0 0.0
    %716 = vmatprep.subr.mxu0 0.0
    %717 = vmatpush1.msra.mxu0 0.0
    %718 = vmatprep.subr.mxu0 0.0
    %719 = vmatpush1.msra.mxu0 0.0
    %720 = vmatprep.subr.mxu0 0.0
    %721 = vmatpush1.msra.mxu0 0.0
    %722 = vmatprep.subr.mxu0 0.0
    %723 = vmatpush1.msra.mxu0 0.0
    %724 = vmatprep.subr.mxu0 0.0
    %725 = vmatpush1.msra.mxu0 0.0
    %726 = vmatprep.subr.mxu0 0.0
    %727 = vmatpush1.msra.mxu0 0.0
    %728 = vmatprep.subr.mxu0 0.0
    %729 = vmatpush1.msra.mxu0 0.0
    %730 = vmatprep.subr.mxu0 0.0
    %731 = vmatpush1.msra.mxu0 0.0
    %732 = vmatprep.subr.mxu0 0.0
    %733 = vmatpush1.msra.mxu0 0.0
    %734 = vmatprep.subr.mxu0 0.0
    %735 = vmatpush1.msra.mxu0 0.0
    %736 = vmatprep.subr.mxu0 0.0
    %737 = vmatpush1.msra.mxu0 0.0
    %738 = vmatprep.subr.mxu0 0.0
    %739 = vmatpush1.msra.mxu0 0.0
    %740 = vmatprep.subr.mxu0 0.0
    %741 = vmatpush1.msra.mxu0 0.0
    %742 = vmatprep.subr.mxu0 0.0
    %743 = vmatpush1.msra.mxu0 0.0
    %744 = vmatprep.mubr.f32.mxu0 0.0
    %745 = vmatmul.mubr.f32.gmra.mrb[0].mxu0 %v235
    %v746 = vpop.f32.mrb[0].mxu0
    %v747 = vadd.f32 0.0, %v746
    %v748 = vpop.f32.mrb[0].mxu0
    %749 = vmatprep.mubr.f32.mxu0 0.0
    %750 = vmatmul.mubr.f32.gmra.mrb[0].mxu0 %v238
    %v751 = vpop.f32.mrb[0].mxu0
    %v752 = vadd.f32 0.0, %v751
    %v753 = vpop.f32.mrb[0].mxu0
    %754 = vdwg.mxu0
    %v755 = vadd.f32 %v664, %v747
    %v756 = vadd.f32 %v669, %v752
    %s757 = scalar_lea.vmem [#allocation2], 224
    %v758 = vld [vmem:[%s757] sm:$0xff]
    %v759 = vld [vmem:[%s757 + $0x8] sm:$0xff]
    %v760 = vld [vmem:[%s757 + $0x10] sm:$0xff]
    %v761 = vld [vmem:[%s757 + $0x18] sm:$0xf]
    %v763 = vsel %vm64, %v761, 0
    %765 = vmatprep.subr.mxu0 0.0
    %766 = vmatpush1.msra.mxu0 %v758
    %767 = vmatprep.subr.mxu0 0.0
    %768 = vmatpush1.msra.mxu0 %v759
    %769 = vmatprep.subr.mxu0 0.0
    %770 = vmatpush1.msra.mxu0 %v760
    %771 = vmatprep.subr.mxu0 0.0
    %772 = vmatpush1.msra.mxu0 %v763
    %773 = vmatprep.subr.mxu0 0.0
    %774 = vmatpush1.msra.mxu0 0.0
    %775 = vmatprep.subr.mxu0 0.0
    %776 = vmatpush1.msra.mxu0 0.0
    %777 = vmatprep.subr.mxu0 0.0
    %778 = vmatpush1.msra.mxu0 0.0
    %779 = vmatprep.subr.mxu0 0.0
    %780 = vmatpush1.msra.mxu0 0.0
    %781 = vmatprep.subr.mxu0 0.0
    %782 = vmatpush1.msra.mxu0 0.0
    %783 = vmatprep.subr.mxu0 0.0
    %784 = vmatpush1.msra.mxu0 0.0
    %785 = vmatprep.subr.mxu0 0.0
    %786 = vmatpush1.msra.mxu0 0.0
    %787 = vmatprep.subr.mxu0 0.0
    %788 = vmatpush1.msra.mxu0 0.0
    %789 = vmatprep.subr.mxu0 0.0
    %790 = vmatpush1.msra.mxu0 0.0
    %791 = vmatprep.subr.mxu0 0.0
    %792 = vmatpush1.msra.mxu0 0.0
    %793 = vmatprep.subr.mxu0 0.0
    %794 = vmatpush1.msra.mxu0 0.0
    %795 = vmatprep.subr.mxu0 0.0
    %796 = vmatpush1.msra.mxu0 0.0
    %797 = vmatprep.subr.mxu0 0.0
    %798 = vmatpush1.msra.mxu0 0.0
    %799 = vmatprep.subr.mxu0 0.0
    %800 = vmatpush1.msra.mxu0 0.0
    %801 = vmatprep.subr.mxu0 0.0
    %802 = vmatpush1.msra.mxu0 0.0
    %803 = vmatprep.subr.mxu0 0.0
    %804 = vmatpush1.msra.mxu0 0.0
    %805 = vmatprep.subr.mxu0 0.0
    %806 = vmatpush1.msra.mxu0 0.0
    %807 = vmatprep.subr.mxu0 0.0
    %808 = vmatpush1.msra.mxu0 0.0
    %809 = vmatprep.subr.mxu0 0.0
    %810 = vmatpush1.msra.mxu0 0.0
    %811 = vmatprep.subr.mxu0 0.0
    %812 = vmatpush1.msra.mxu0 0.0
    %813 = vmatprep.subr.mxu0 0.0
    %814 = vmatpush1.msra.mxu0 0.0
    %815 = vmatprep.subr.mxu0 0.0
    %816 = vmatpush1.msra.mxu0 0.0
    %817 = vmatprep.subr.mxu0 0.0
    %818 = vmatpush1.msra.mxu0 0.0
    %819 = vmatprep.subr.mxu0 0.0
    %820 = vmatpush1.msra.mxu0 0.0
    %821 = vmatprep.subr.mxu0 0.0
    %822 = vmatpush1.msra.mxu0 0.0
    %823 = vmatprep.subr.mxu0 0.0
    %824 = vmatpush1.msra.mxu0 0.0
    %825 = vmatprep.subr.mxu0 0.0
    %826 = vmatpush1.msra.mxu0 0.0
    %827 = vmatprep.subr.mxu0 0.0
    %828 = vmatpush1.msra.mxu0 0.0
    %829 = vmatprep.mubr.f32.mxu0 0.0
    %830 = vmatmul.mubr.f32.gmra.mrb[0].mxu0 %v328
    %v831 = vpop.f32.mrb[0].mxu0
    %v832 = vadd.f32 0.0, %v831
    %v833 = vpop.f32.mrb[0].mxu0
    %834 = vmatprep.mubr.f32.mxu0 0.0
    %835 = vmatmul.mubr.f32.gmra.mrb[0].mxu0 %v331
    %v836 = vpop.f32.mrb[0].mxu0
    %v837 = vadd.f32 0.0, %v836
    %v838 = vpop.f32.mrb[0].mxu0
    %839 = vdwg.mxu0
    %v840 = vadd.f32 %v755, %v832
    %v841 = vadd.f32 %v756, %v837
    %s842 = scalar_lea.vmem [#allocation2], 288
    %v843 = vld [vmem:[%s842] sm:$0xff]
    %v844 = vld [vmem:[%s842 + $0x8] sm:$0xff]
    %v845 = vld [vmem:[%s842 + $0x10] sm:$0xff]
    %v846 = vld [vmem:[%s842 + $0x18] sm:$0xf]
    %v848 = vsel %vm64, %v846, 0
    %850 = vmatprep.subr.mxu0 0.0
    %851 = vmatpush1.msra.mxu0 %v843
    %852 = vmatprep.subr.mxu0 0.0
    %853 = vmatpush1.msra.mxu0 %v844
    %854 = vmatprep.subr.mxu0 0.0
    %855 = vmatpush1.msra.mxu0 %v845
    %856 = vmatprep.subr.mxu0 0.0
    %857 = vmatpush1.msra.mxu0 %v848
    %858 = vmatprep.subr.mxu0 0.0
    %859 = vmatpush1.msra.mxu0 0.0
    %860 = vmatprep.subr.mxu0 0.0
    %861 = vmatpush1.msra.mxu0 0.0
    %862 = vmatprep.subr.mxu0 0.0
    %863 = vmatpush1.msra.mxu0 0.0
    %864 = vmatprep.subr.mxu0 0.0
    %865 = vmatpush1.msra.mxu0 0.0
    %866 = vmatprep.subr.mxu0 0.0
    %867 = vmatpush1.msra.mxu0 0.0
    %868 = vmatprep.subr.mxu0 0.0
    %869 = vmatpush1.msra.mxu0 0.0
    %870 = vmatprep.subr.mxu0 0.0
    %871 = vmatpush1.msra.mxu0 0.0
    %872 = vmatprep.subr.mxu0 0.0
    %873 = vmatpush1.msra.mxu0 0.0
    %874 = vmatprep.subr.mxu0 0.0
    %875 = vmatpush1.msra.mxu0 0.0
    %876 = vmatprep.subr.mxu0 0.0
    %877 = vmatpush1.msra.mxu0 0.0
    %878 = vmatprep.subr.mxu0 0.0
    %879 = vmatpush1.msra.mxu0 0.0
    %880 = vmatprep.subr.mxu0 0.0
    %881 = vmatpush1.msra.mxu0 0.0
    %882 = vmatprep.subr.mxu0 0.0
    %883 = vmatpush1.msra.mxu0 0.0
    %884 = vmatprep.subr.mxu0 0.0
    %885 = vmatpush1.msra.mxu0 0.0
    %886 = vmatprep.subr.mxu0 0.0
    %887 = vmatpush1.msra.mxu0 0.0
    %888 = vmatprep.subr.mxu0 0.0
    %889 = vmatpush1.msra.mxu0 0.0
    %890 = vmatprep.subr.mxu0 0.0
    %891 = vmatpush1.msra.mxu0 0.0
    %892 = vmatprep.subr.mxu0 0.0
    %893 = vmatpush1.msra.mxu0 0.0
    %894 = vmatprep.subr.mxu0 0.0
    %895 = vmatpush1.msra.mxu0 0.0
    %896 = vmatprep.subr.mxu0 0.0
    %897 = vmatpush1.msra.mxu0 0.0
    %898 = vmatprep.subr.mxu0 0.0
    %899 = vmatpush1.msra.mxu0 0.0
    %900 = vmatprep.subr.mxu0 0.0
    %901 = vmatpush1.msra.mxu0 0.0
    %902 = vmatprep.subr.mxu0 0.0
    %903 = vmatpush1.msra.mxu0 0.0
    %904 = vmatprep.subr.mxu0 0.0
    %905 = vmatpush1.msra.mxu0 0.0
    %906 = vmatprep.subr.mxu0 0.0
    %907 = vmatpush1.msra.mxu0 0.0
    %908 = vmatprep.subr.mxu0 0.0
    %909 = vmatpush1.msra.mxu0 0.0
    %910 = vmatprep.subr.mxu0 0.0
    %911 = vmatpush1.msra.mxu0 0.0
    %912 = vmatprep.subr.mxu0 0.0
    %913 = vmatpush1.msra.mxu0 0.0
    %914 = vmatprep.mubr.f32.mxu0 0.0
    %915 = vmatmul.mubr.f32.gmra.mrb[0].mxu0 %v421
    %v916 = vpop.f32.mrb[0].mxu0
    %v917 = vadd.f32 0.0, %v916
    %v918 = vpop.f32.mrb[0].mxu0
    %919 = vmatprep.mubr.f32.mxu0 0.0
    %920 = vmatmul.mubr.f32.gmra.mrb[0].mxu0 %v424
    %v921 = vpop.f32.mrb[0].mxu0
    %v922 = vadd.f32 0.0, %v921
    %v923 = vpop.f32.mrb[0].mxu0
    %924 = vdwg.mxu0
    %v925 = vadd.f32 %v840, %v917
    %v926 = vadd.f32 %v841, %v922
    %v927 = vmax.f32 %v504, %v925
    %v928 = vmax.f32 %v505, %v926
    %929 = vmatprep.subr.mxu0 0.0
    %930 = vmatpush1.msra.mxu0 %v53
    %931 = vmatprep.subr.mxu0 0.0
    %932 = vmatpush1.msra.mxu0 %v54
    %933 = vmatprep.subr.mxu0 0.0
    %934 = vmatpush1.msra.mxu0 %v55
    %935 = vmatprep.subr.mxu0 0.0
    %936 = vmatpush1.msra.mxu0 %v66
    %937 = vmatprep.subr.mxu0 0.0
    %938 = vmatpush1.msra.mxu0 0.0
    %939 = vmatprep.subr.mxu0 0.0
    %940 = vmatpush1.msra.mxu0 0.0
    %941 = vmatprep.subr.mxu0 0.0
    %942 = vmatpush1.msra.mxu0 0.0
    %943 = vmatprep.subr.mxu0 0.0
    %944 = vmatpush1.msra.mxu0 0.0
    %945 = vmatprep.subr.mxu0 0.0
    %946 = vmatpush1.msra.mxu0 0.0
    %947 = vmatprep.subr.mxu0 0.0
    %948 = vmatpush1.msra.mxu0 0.0
    %949 = vmatprep.subr.mxu0 0.0
    %950 = vmatpush1.msra.mxu0 0.0
    %951 = vmatprep.subr.mxu0 0.0
    %952 = vmatpush1.msra.mxu0 0.0
    %953 = vmatprep.subr.mxu0 0.0
    %954 = vmatpush1.msra.mxu0 0.0
    %955 = vmatprep.subr.mxu0 0.0
    %956 = vmatpush1.msra.mxu0 0.0
    %957 = vmatprep.subr.mxu0 0.0
    %958 = vmatpush1.msra.mxu0 0.0
    %959 = vmatprep.subr.mxu0 0.0
    %960 = vmatpush1.msra.mxu0 0.0
    %961 = vmatprep.subr.mxu0 0.0
    %962 = vmatpush1.msra.mxu0 0.0
    %963 = vmatprep.subr.mxu0 0.0
    %964 = vmatpush1.msra.mxu0 0.0
    %965 = vmatprep.subr.mxu0 0.0
    %966 = vmatpush1.msra.mxu0 0.0
    %967 = vmatprep.subr.mxu0 0.0
    %968 = vmatpush1.msra.mxu0 0.0
    %969 = vmatprep.subr.mxu0 0.0
    %970 = vmatpush1.msra.mxu0 0.0
    %971 = vmatprep.subr.mxu0 0.0
    %972 = vmatpush1.msra.mxu0 0.0
    %973 = vmatprep.subr.mxu0 0.0
    %974 = vmatpush1.msra.mxu0 0.0
    %975 = vmatprep.subr.mxu0 0.0
    %976 = vmatpush1.msra.mxu0 0.0
    %977 = vmatprep.subr.mxu0 0.0
    %978 = vmatpush1.msra.mxu0 0.0
    %979 = vmatprep.subr.mxu0 0.0
    %980 = vmatpush1.msra.mxu0 0.0
    %981 = vmatprep.subr.mxu0 0.0
    %982 = vmatpush1.msra.mxu0 0.0
    %983 = vmatprep.subr.mxu0 0.0
    %984 = vmatpush1.msra.mxu0 0.0
    %985 = vmatprep.subr.mxu0 0.0
    %986 = vmatpush1.msra.mxu0 0.0
    %987 = vmatprep.subr.mxu0 0.0
    %988 = vmatpush1.msra.mxu0 0.0
    %989 = vmatprep.subr.mxu0 0.0
    %990 = vmatpush1.msra.mxu0 0.0
    %991 = vmatprep.subr.mxu0 0.0
    %992 = vmatpush1.msra.mxu0 0.0
    %993 = vmatprep.mubr.f32.mxu0 0.0
    %994 = vmatmul.mubr.f32.gmra.mrb[0].mxu0 %v235
    %v995 = vpop.f32.mrb[0].mxu0
    %v996 = vadd.f32 0.0, %v995
    %v997 = vpop.f32.mrb[0].mxu0
    %998 = vmatprep.mubr.f32.mxu0 0.0
    %999 = vmatmul.mubr.f32.gmra.mrb[0].mxu0 %v238
    %v1000 = vpop.f32.mrb[0].mxu0
    %v1001 = vadd.f32 0.0, %v1000
    %v1002 = vpop.f32.mrb[0].mxu0
    %1003 = vdwg.mxu0
    %1004 = vmatprep.subr.mxu0 0.0
    %1005 = vmatpush1.msra.mxu0 %v46
    %1006 = vmatprep.subr.mxu0 0.0
    %1007 = vmatpush1.msra.mxu0 %v47
    %1008 = vmatprep.subr.mxu0 0.0
    %1009 = vmatpush1.msra.mxu0 %v48
    %1010 = vmatprep.subr.mxu0 0.0
    %1011 = vmatpush1.msra.mxu0 %v150
    %1012 = vmatprep.subr.mxu0 0.0
    %1013 = vmatpush1.msra.mxu0 0.0
    %1014 = vmatprep.subr.mxu0 0.0
    %1015 = vmatpush1.msra.mxu0 0.0
    %1016 = vmatprep.subr.mxu0 0.0
    %1017 = vmatpush1.msra.mxu0 0.0
    %1018 = vmatprep.subr.mxu0 0.0
    %1019 = vmatpush1.msra.mxu0 0.0
    %1020 = vmatprep.subr.mxu0 0.0
    %1021 = vmatpush1.msra.mxu0 0.0
    %1022 = vmatprep.subr.mxu0 0.0
    %1023 = vmatpush1.msra.mxu0 0.0
    %1024 = vmatprep.subr.mxu0 0.0
    %1025 = vmatpush1.msra.mxu0 0.0
    %1026 = vmatprep.subr.mxu0 0.0
    %1027 = vmatpush1.msra.mxu0 0.0
    %1028 = vmatprep.subr.mxu0 0.0
    %1029 = vmatpush1.msra.mxu0 0.0
    %1030 = vmatprep.subr.mxu0 0.0
    %1031 = vmatpush1.msra.mxu0 0.0
    %1032 = vmatprep.subr.mxu0 0.0
    %1033 = vmatpush1.msra.mxu0 0.0
    %1034 = vmatprep.subr.mxu0 0.0
    %1035 = vmatpush1.msra.mxu0 0.0
    %1036 = vmatprep.subr.mxu0 0.0
    %1037 = vmatpush1.msra.mxu0 0.0
    %1038 = vmatprep.subr.mxu0 0.0
    %1039 = vmatpush1.msra.mxu0 0.0
    %1040 = vmatprep.subr.mxu0 0.0
    %1041 = vmatpush1.msra.mxu0 0.0
    %1042 = vmatprep.subr.mxu0 0.0
    %1043 = vmatpush1.msra.mxu0 0.0
    %1044 = vmatprep.subr.mxu0 0.0
    %1045 = vmatpush1.msra.mxu0 0.0
    %1046 = vmatprep.subr.mxu0 0.0
    %1047 = vmatpush1.msra.mxu0 0.0
    %1048 = vmatprep.subr.mxu0 0.0
    %1049 = vmatpush1.msra.mxu0 0.0
    %1050 = vmatprep.subr.mxu0 0.0
    %1051 = vmatpush1.msra.mxu0 0.0
    %1052 = vmatprep.subr.mxu0 0.0
    %1053 = vmatpush1.msra.mxu0 0.0
    %1054 = vmatprep.subr.mxu0 0.0
    %1055 = vmatpush1.msra.mxu0 0.0
    %1056 = vmatprep.subr.mxu0 0.0
    %1057 = vmatpush1.msra.mxu0 0.0
    %1058 = vmatprep.subr.mxu0 0.0
    %1059 = vmatpush1.msra.mxu0 0.0
    %1060 = vmatprep.subr.mxu0 0.0
    %1061 = vmatpush1.msra.mxu0 0.0
    %1062 = vmatprep.subr.mxu0 0.0
    %1063 = vmatpush1.msra.mxu0 0.0
    %1064 = vmatprep.subr.mxu0 0.0
    %1065 = vmatpush1.msra.mxu0 0.0
    %1066 = vmatprep.subr.mxu0 0.0
    %1067 = vmatpush1.msra.mxu0 0.0
    %1068 = vmatprep.mubr.f32.mxu0 0.0
    %1069 = vmatmul.mubr.f32.gmra.mrb[0].mxu0 %v59
    %v1070 = vpop.f32.mrb[0].mxu0
    %v1071 = vadd.f32 %v996, %v1070
    %v1072 = vpop.f32.mrb[0].mxu0
    %1073 = vmatprep.mubr.f32.mxu0 0.0
    %1074 = vmatmul.mubr.f32.gmra.mrb[0].mxu0 %v62
    %v1075 = vpop.f32.mrb[0].mxu0
    %v1076 = vadd.f32 %v1001, %v1075
    %v1077 = vpop.f32.mrb[0].mxu0
    %1078 = vdwg.mxu0
    %1079 = vmatprep.subr.mxu0 0.0
    %1080 = vmatpush1.msra.mxu0 %v230
    %1081 = vmatprep.subr.mxu0 0.0
    %1082 = vmatpush1.msra.mxu0 %v231
    %1083 = vmatprep.subr.mxu0 0.0
    %1084 = vmatpush1.msra.mxu0 %v232
    %1085 = vmatprep.subr.mxu0 0.0
    %1086 = vmatpush1.msra.mxu0 %v241
    %1087 = vmatprep.subr.mxu0 0.0
    %1088 = vmatpush1.msra.mxu0 0.0
    %1089 = vmatprep.subr.mxu0 0.0
    %1090 = vmatpush1.msra.mxu0 0.0
    %1091 = vmatprep.subr.mxu0 0.0
    %1092 = vmatpush1.msra.mxu0 0.0
    %1093 = vmatprep.subr.mxu0 0.0
    %1094 = vmatpush1.msra.mxu0 0.0
    %1095 = vmatprep.subr.mxu0 0.0
    %1096 = vmatpush1.msra.mxu0 0.0
    %1097 = vmatprep.subr.mxu0 0.0
    %1098 = vmatpush1.msra.mxu0 0.0
    %1099 = vmatprep.subr.mxu0 0.0
    %1100 = vmatpush1.msra.mxu0 0.0
    %1101 = vmatprep.subr.mxu0 0.0
    %1102 = vmatpush1.msra.mxu0 0.0
    %1103 = vmatprep.subr.mxu0 0.0
    %1104 = vmatpush1.msra.mxu0 0.0
    %1105 = vmatprep.subr.mxu0 0.0
    %1106 = vmatpush1.msra.mxu0 0.0
    %1107 = vmatprep.subr.mxu0 0.0
    %1108 = vmatpush1.msra.mxu0 0.0
    %1109 = vmatprep.subr.mxu0 0.0
    %1110 = vmatpush1.msra.mxu0 0.0
    %1111 = vmatprep.subr.mxu0 0.0
    %1112 = vmatpush1.msra.mxu0 0.0
    %1113 = vmatprep.subr.mxu0 0.0
    %1114 = vmatpush1.msra.mxu0 0.0
    %1115 = vmatprep.subr.mxu0 0.0
    %1116 = vmatpush1.msra.mxu0 0.0
    %1117 = vmatprep.subr.mxu0 0.0
    %1118 = vmatpush1.msra.mxu0 0.0
    %1119 = vmatprep.subr.mxu0 0.0
    %1120 = vmatpush1.msra.mxu0 0.0
    %1121 = vmatprep.subr.mxu0 0.0
    %1122 = vmatpush1.msra.mxu0 0.0
    %1123 = vmatprep.subr.mxu0 0.0
    %1124 = vmatpush1.msra.mxu0 0.0
    %1125 = vmatprep.subr.mxu0 0.0
    %1126 = vmatpush1.msra.mxu0 0.0
    %1127 = vmatprep.subr.mxu0 0.0
    %1128 = vmatpush1.msra.mxu0 0.0
    %1129 = vmatprep.subr.mxu0 0.0
    %1130 = vmatpush1.msra.mxu0 0.0
    %1131 = vmatprep.subr.mxu0 0.0
    %1132 = vmatpush1.msra.mxu0 0.0
    %1133 = vmatprep.subr.mxu0 0.0
    %1134 = vmatpush1.msra.mxu0 0.0
    %1135 = vmatprep.subr.mxu0 0.0
    %1136 = vmatpush1.msra.mxu0 0.0
    %1137 = vmatprep.subr.mxu0 0.0
    %1138 = vmatpush1.msra.mxu0 0.0
    %1139 = vmatprep.subr.mxu0 0.0
    %1140 = vmatpush1.msra.mxu0 0.0
    %1141 = vmatprep.subr.mxu0 0.0
    %1142 = vmatpush1.msra.mxu0 0.0
    %1143 = vmatprep.mubr.f32.mxu0 0.0
    %1144 = vmatmul.mubr.f32.gmra.mrb[0].mxu0 %v328
    %v1145 = vpop.f32.mrb[0].mxu0
    %v1146 = vadd.f32 0.0, %v1145
    %v1147 = vpop.f32.mrb[0].mxu0
    %1148 = vmatprep.mubr.f32.mxu0 0.0
    %1149 = vmatmul.mubr.f32.gmra.mrb[0].mxu0 %v331
    %v1150 = vpop.f32.mrb[0].mxu0
    %v1151 = vadd.f32 0.0, %v1150
    %v1152 = vpop.f32.mrb[0].mxu0
    %1153 = vdwg.mxu0
    %v1154 = vadd.f32 %v1071, %v1146
    %v1155 = vadd.f32 %v1076, %v1151
    %1156 = vmatprep.subr.mxu0 0.0
    %1157 = vmatpush1.msra.mxu0 %v323
    %1158 = vmatprep.subr.mxu0 0.0
    %1159 = vmatpush1.msra.mxu0 %v324
    %1160 = vmatprep.subr.mxu0 0.0
    %1161 = vmatpush1.msra.mxu0 %v325
    %1162 = vmatprep.subr.mxu0 0.0
    %1163 = vmatpush1.msra.mxu0 %v334
    %1164 = vmatprep.subr.mxu0 0.0
    %1165 = vmatpush1.msra.mxu0 0.0
    %1166 = vmatprep.subr.mxu0 0.0
    %1167 = vmatpush1.msra.mxu0 0.0
    %1168 = vmatprep.subr.mxu0 0.0
    %1169 = vmatpush1.msra.mxu0 0.0
    %1170 = vmatprep.subr.mxu0 0.0
    %1171 = vmatpush1.msra.mxu0 0.0
    %1172 = vmatprep.subr.mxu0 0.0
    %1173 = vmatpush1.msra.mxu0 0.0
    %1174 = vmatprep.subr.mxu0 0.0
    %1175 = vmatpush1.msra.mxu0 0.0
    %1176 = vmatprep.subr.mxu0 0.0
    %1177 = vmatpush1.msra.mxu0 0.0
    %1178 = vmatprep.subr.mxu0 0.0
    %1179 = vmatpush1.msra.mxu0 0.0
    %1180 = vmatprep.subr.mxu0 0.0
    %1181 = vmatpush1.msra.mxu0 0.0
    %1182 = vmatprep.subr.mxu0 0.0
    %1183 = vmatpush1.msra.mxu0 0.0
    %1184 = vmatprep.subr.mxu0 0.0
    %1185 = vmatpush1.msra.mxu0 0.0
    %1186 = vmatprep.subr.mxu0 0.0
    %1187 = vmatpush1.msra.mxu0 0.0
    %1188 = vmatprep.subr.mxu0 0.0
    %1189 = vmatpush1.msra.mxu0 0.0
    %1190 = vmatprep.subr.mxu0 0.0
    %1191 = vmatpush1.msra.mxu0 0.0
    %1192 = vmatprep.subr.mxu0 0.0
    %1193 = vmatpush1.msra.mxu0 0.0
    %1194 = vmatprep.subr.mxu0 0.0
    %1195 = vmatpush1.msra.mxu0 0.0
    %1196 = vmatprep.subr.mxu0 0.0
    %1197 = vmatpush1.msra.mxu0 0.0
    %1198 = vmatprep.subr.mxu0 0.0
    %1199 = vmatpush1.msra.mxu0 0.0
    %1200 = vmatprep.subr.mxu0 0.0
    %1201 = vmatpush1.msra.mxu0 0.0
    %1202 = vmatprep.subr.mxu0 0.0
    %1203 = vmatpush1.msra.mxu0 0.0
    %1204 = vmatprep.subr.mxu0 0.0
    %1205 = vmatpush1.msra.mxu0 0.0
    %1206 = vmatprep.subr.mxu0 0.0
    %1207 = vmatpush1.msra.mxu0 0.0
    %1208 = vmatprep.subr.mxu0 0.0
    %1209 = vmatpush1.msra.mxu0 0.0
    %1210 = vmatprep.subr.mxu0 0.0
    %1211 = vmatpush1.msra.mxu0 0.0
    %1212 = vmatprep.subr.mxu0 0.0
    %1213 = vmatpush1.msra.mxu0 0.0
    %1214 = vmatprep.subr.mxu0 0.0
    %1215 = vmatpush1.msra.mxu0 0.0
    %1216 = vmatprep.subr.mxu0 0.0
    %1217 = vmatpush1.msra.mxu0 0.0
    %1218 = vmatprep.subr.mxu0 0.0
    %1219 = vmatpush1.msra.mxu0 0.0
    %1220 = vmatprep.mubr.f32.mxu0 0.0
    %1221 = vmatmul.mubr.f32.gmra.mrb[0].mxu0 %v421
    %v1222 = vpop.f32.mrb[0].mxu0
    %v1223 = vadd.f32 0.0, %v1222
    %v1224 = vpop.f32.mrb[0].mxu0
    %1225 = vmatprep.mubr.f32.mxu0 0.0
    %1226 = vmatmul.mubr.f32.gmra.mrb[0].mxu0 %v424
    %v1227 = vpop.f32.mrb[0].mxu0
    %v1228 = vadd.f32 0.0, %v1227
    %v1229 = vpop.f32.mrb[0].mxu0
    %1230 = vdwg.mxu0
    %v1231 = vadd.f32 %v1154, %v1223
    %v1232 = vadd.f32 %v1155, %v1228
    %v1233 = vld [vmem:[%s1 + $0x2] sm:$0xff]
    %v1234 = vld [vmem:[%s1 + $0xa] sm:$0xf]
    %v1236 = vsel %vm57, %v1233, 0
    %v1239 = vsel %vm57, %v1234, 0
    %1241 = vmatprep.subr.mxu0 0.0
    %1242 = vmatpush1.msra.mxu0 %v416
    %1243 = vmatprep.subr.mxu0 0.0
    %1244 = vmatpush1.msra.mxu0 %v417
    %1245 = vmatprep.subr.mxu0 0.0
    %1246 = vmatpush1.msra.mxu0 %v418
    %1247 = vmatprep.subr.mxu0 0.0
    %1248 = vmatpush1.msra.mxu0 %v427
    %1249 = vmatprep.subr.mxu0 0.0
    %1250 = vmatpush1.msra.mxu0 0.0
    %1251 = vmatprep.subr.mxu0 0.0
    %1252 = vmatpush1.msra.mxu0 0.0
    %1253 = vmatprep.subr.mxu0 0.0
    %1254 = vmatpush1.msra.mxu0 0.0
    %1255 = vmatprep.subr.mxu0 0.0
    %1256 = vmatpush1.msra.mxu0 0.0
    %1257 = vmatprep.subr.mxu0 0.0
    %1258 = vmatpush1.msra.mxu0 0.0
    %1259 = vmatprep.subr.mxu0 0.0
    %1260 = vmatpush1.msra.mxu0 0.0
    %1261 = vmatprep.subr.mxu0 0.0
    %1262 = vmatpush1.msra.mxu0 0.0
    %1263 = vmatprep.subr.mxu0 0.0
    %1264 = vmatpush1.msra.mxu0 0.0
    %1265 = vmatprep.subr.mxu0 0.0
    %1266 = vmatpush1.msra.mxu0 0.0
    %1267 = vmatprep.subr.mxu0 0.0
    %1268 = vmatpush1.msra.mxu0 0.0
    %1269 = vmatprep.subr.mxu0 0.0
    %1270 = vmatpush1.msra.mxu0 0.0
    %1271 = vmatprep.subr.mxu0 0.0
    %1272 = vmatpush1.msra.mxu0 0.0
    %1273 = vmatprep.subr.mxu0 0.0
    %1274 = vmatpush1.msra.mxu0 0.0
    %1275 = vmatprep.subr.mxu0 0.0
    %1276 = vmatpush1.msra.mxu0 0.0
    %1277 = vmatprep.subr.mxu0 0.0
    %1278 = vmatpush1.msra.mxu0 0.0
    %1279 = vmatprep.subr.mxu0 0.0
    %1280 = vmatpush1.msra.mxu0 0.0
    %1281 = vmatprep.subr.mxu0 0.0
    %1282 = vmatpush1.msra.mxu0 0.0
    %1283 = vmatprep.subr.mxu0 0.0
    %1284 = vmatpush1.msra.mxu0 0.0
    %1285 = vmatprep.subr.mxu0 0.0
    %1286 = vmatpush1.msra.mxu0 0.0
    %1287 = vmatprep.subr.mxu0 0.0
    %1288 = vmatpush1.msra.mxu0 0.0
    %1289 = vmatprep.subr.mxu0 0.0
    %1290 = vmatpush1.msra.mxu0 0.0
    %1291 = vmatprep.subr.mxu0 0.0
    %1292 = vmatpush1.msra.mxu0 0.0
    %1293 = vmatprep.subr.mxu0 0.0
    %1294 = vmatpush1.msra.mxu0 0.0
    %1295 = vmatprep.subr.mxu0 0.0
    %1296 = vmatpush1.msra.mxu0 0.0
    %1297 = vmatprep.subr.mxu0 0.0
    %1298 = vmatpush1.msra.mxu0 0.0
    %1299 = vmatprep.subr.mxu0 0.0
    %1300 = vmatpush1.msra.mxu0 0.0
    %1301 = vmatprep.subr.mxu0 0.0
    %1302 = vmatpush1.msra.mxu0 0.0
    %1303 = vmatprep.subr.mxu0 0.0
    %1304 = vmatpush1.msra.mxu0 0.0
    %1305 = vmatprep.mubr.f32.mxu0 0.0
    %1306 = vmatmul.mubr.f32.gmra.mrb[0].mxu0 %v1236
    %v1307 = vpop.f32.mrb[0].mxu0
    %v1308 = vadd.f32 0.0, %v1307
    %v1309 = vpop.f32.mrb[0].mxu0
    %1310 = vmatprep.mubr.f32.mxu0 0.0
    %1311 = vmatmul.mubr.f32.gmra.mrb[0].mxu0 %v1239
    %v1312 = vpop.f32.mrb[0].mxu0
    %v1313 = vadd.f32 0.0, %v1312
    %v1314 = vpop.f32.mrb[0].mxu0
    %1315 = vdwg.mxu0
    %v1316 = vadd.f32 %v1231, %v1308
    %v1317 = vadd.f32 %v1232, %v1313
    %v1318 = vmax.f32 %v927, %v1316
    %v1319 = vmax.f32 %v928, %v1317
    %1320 = vmatprep.subr.mxu0 0.0
    %1321 = vmatpush1.msra.mxu0 %v512
    %1322 = vmatprep.subr.mxu0 0.0
    %1323 = vmatpush1.msra.mxu0 %v513
    %1324 = vmatprep.subr.mxu0 0.0
    %1325 = vmatpush1.msra.mxu0 %v514
    %1326 = vmatprep.subr.mxu0 0.0
    %1327 = vmatpush1.msra.mxu0 %v517
    %1328 = vmatprep.subr.mxu0 0.0
    %1329 = vmatpush1.msra.mxu0 0.0
    %1330 = vmatprep.subr.mxu0 0.0
    %1331 = vmatpush1.msra.mxu0 0.0
    %1332 = vmatprep.subr.mxu0 0.0
    %1333 = vmatpush1.msra.mxu0 0.0
    %1334 = vmatprep.subr.mxu0 0.0
    %1335 = vmatpush1.msra.mxu0 0.0
    %1336 = vmatprep.subr.mxu0 0.0
    %1337 = vmatpush1.msra.mxu0 0.0
    %1338 = vmatprep.subr.mxu0 0.0
    %1339 = vmatpush1.msra.mxu0 0.0
    %1340 = vmatprep.subr.mxu0 0.0
    %1341 = vmatpush1.msra.mxu0 0.0
    %1342 = vmatprep.subr.mxu0 0.0
    %1343 = vmatpush1.msra.mxu0 0.0
    %1344 = vmatprep.subr.mxu0 0.0
    %1345 = vmatpush1.msra.mxu0 0.0
    %1346 = vmatprep.subr.mxu0 0.0
    %1347 = vmatpush1.msra.mxu0 0.0
    %1348 = vmatprep.subr.mxu0 0.0
    %1349 = vmatpush1.msra.mxu0 0.0
    %1350 = vmatprep.subr.mxu0 0.0
    %1351 = vmatpush1.msra.mxu0 0.0
    %1352 = vmatprep.subr.mxu0 0.0
    %1353 = vmatpush1.msra.mxu0 0.0
    %1354 = vmatprep.subr.mxu0 0.0
    %1355 = vmatpush1.msra.mxu0 0.0
    %1356 = vmatprep.subr.mxu0 0.0
    %1357 = vmatpush1.msra.mxu0 0.0
    %1358 = vmatprep.subr.mxu0 0.0
    %1359 = vmatpush1.msra.mxu0 0.0
    %1360 = vmatprep.subr.mxu0 0.0
    %1361 = vmatpush1.msra.mxu0 0.0
    %1362 = vmatprep.subr.mxu0 0.0
    %1363 = vmatpush1.msra.mxu0 0.0
    %1364 = vmatprep.subr.mxu0 0.0
    %1365 = vmatpush1.msra.mxu0 0.0
    %1366 = vmatprep.subr.mxu0 0.0
    %1367 = vmatpush1.msra.mxu0 0.0
    %1368 = vmatprep.subr.mxu0 0.0
    %1369 = vmatpush1.msra.mxu0 0.0
    %1370 = vmatprep.subr.mxu0 0.0
    %1371 = vmatpush1.msra.mxu0 0.0
    %1372 = vmatprep.subr.mxu0 0.0
    %1373 = vmatpush1.msra.mxu0 0.0
    %1374 = vmatprep.subr.mxu0 0.0
    %1375 = vmatpush1.msra.mxu0 0.0
    %1376 = vmatprep.subr.mxu0 0.0
    %1377 = vmatpush1.msra.mxu0 0.0
    %1378 = vmatprep.subr.mxu0 0.0
    %1379 = vmatpush1.msra.mxu0 0.0
    %1380 = vmatprep.subr.mxu0 0.0
    %1381 = vmatpush1.msra.mxu0 0.0
    %1382 = vmatprep.subr.mxu0 0.0
    %1383 = vmatpush1.msra.mxu0 0.0
    %1384 = vmatprep.mubr.f32.mxu0 0.0
    %1385 = vmatmul.mubr.f32.gmra.mrb[0].mxu0 %v235
    %v1386 = vpop.f32.mrb[0].mxu0
    %v1387 = vadd.f32 0.0, %v1386
    %v1388 = vpop.f32.mrb[0].mxu0
    %1389 = vmatprep.mubr.f32.mxu0 0.0
    %1390 = vmatmul.mubr.f32.gmra.mrb[0].mxu0 %v238
    %v1391 = vpop.f32.mrb[0].mxu0
    %v1392 = vadd.f32 0.0, %v1391
    %v1393 = vpop.f32.mrb[0].mxu0
    %1394 = vdwg.mxu0
    %1395 = vmatprep.subr.mxu0 0.0
    %1396 = vmatpush1.msra.mxu0 %v507
    %1397 = vmatprep.subr.mxu0 0.0
    %1398 = vmatpush1.msra.mxu0 %v508
    %1399 = vmatprep.subr.mxu0 0.0
    %1400 = vmatpush1.msra.mxu0 %v509
    %1401 = vmatprep.subr.mxu0 0.0
    %1402 = vmatpush1.msra.mxu0 %v595
    %1403 = vmatprep.subr.mxu0 0.0
    %1404 = vmatpush1.msra.mxu0 0.0
    %1405 = vmatprep.subr.mxu0 0.0
    %1406 = vmatpush1.msra.mxu0 0.0
    %1407 = vmatprep.subr.mxu0 0.0
    %1408 = vmatpush1.msra.mxu0 0.0
    %1409 = vmatprep.subr.mxu0 0.0
    %1410 = vmatpush1.msra.mxu0 0.0
    %1411 = vmatprep.subr.mxu0 0.0
    %1412 = vmatpush1.msra.mxu0 0.0
    %1413 = vmatprep.subr.mxu0 0.0
    %1414 = vmatpush1.msra.mxu0 0.0
    %1415 = vmatprep.subr.mxu0 0.0
    %1416 = vmatpush1.msra.mxu0 0.0
    %1417 = vmatprep.subr.mxu0 0.0
    %1418 = vmatpush1.msra.mxu0 0.0
    %1419 = vmatprep.subr.mxu0 0.0
    %1420 = vmatpush1.msra.mxu0 0.0
    %1421 = vmatprep.subr.mxu0 0.0
    %1422 = vmatpush1.msra.mxu0 0.0
    %1423 = vmatprep.subr.mxu0 0.0
    %1424 = vmatpush1.msra.mxu0 0.0
    %1425 = vmatprep.subr.mxu0 0.0
    %1426 = vmatpush1.msra.mxu0 0.0
    %1427 = vmatprep.subr.mxu0 0.0
    %1428 = vmatpush1.msra.mxu0 0.0
    %1429 = vmatprep.subr.mxu0 0.0
    %1430 = vmatpush1.msra.mxu0 0.0
    %1431 = vmatprep.subr.mxu0 0.0
    %1432 = vmatpush1.msra.mxu0 0.0
    %1433 = vmatprep.subr.mxu0 0.0
    %1434 = vmatpush1.msra.mxu0 0.0
    %1435 = vmatprep.subr.mxu0 0.0
    %1436 = vmatpush1.msra.mxu0 0.0
    %1437 = vmatprep.subr.mxu0 0.0
    %1438 = vmatpush1.msra.mxu0 0.0
    %1439 = vmatprep.subr.mxu0 0.0
    %1440 = vmatpush1.msra.mxu0 0.0
    %1441 = vmatprep.subr.mxu0 0.0
    %1442 = vmatpush1.msra.mxu0 0.0
    %1443 = vmatprep.subr.mxu0 0.0
    %1444 = vmatpush1.msra.mxu0 0.0
    %1445 = vmatprep.subr.mxu0 0.0
    %1446 = vmatpush1.msra.mxu0 0.0
    %1447 = vmatprep.subr.mxu0 0.0
    %1448 = vmatpush1.msra.mxu0 0.0
    %1449 = vmatprep.subr.mxu0 0.0
    %1450 = vmatpush1.msra.mxu0 0.0
    %1451 = vmatprep.subr.mxu0 0.0
    %1452 = vmatpush1.msra.mxu0 0.0
    %1453 = vmatprep.subr.mxu0 0.0
    %1454 = vmatpush1.msra.mxu0 0.0
    %1455 = vmatprep.subr.mxu0 0.0
    %1456 = vmatpush1.msra.mxu0 0.0
    %1457 = vmatprep.subr.mxu0 0.0
    %1458 = vmatpush1.msra.mxu0 0.0
    %1459 = vmatprep.mubr.f32.mxu0 0.0
    %1460 = vmatmul.mubr.f32.gmra.mrb[0].mxu0 %v59
    %v1461 = vpop.f32.mrb[0].mxu0
    %v1462 = vadd.f32 %v1387, %v1461
    %v1463 = vpop.f32.mrb[0].mxu0
    %1464 = vmatprep.mubr.f32.mxu0 0.0
    %1465 = vmatmul.mubr.f32.gmra.mrb[0].mxu0 %v62
    %v1466 = vpop.f32.mrb[0].mxu0
    %v1467 = vadd.f32 %v1392, %v1466
    %v1468 = vpop.f32.mrb[0].mxu0
    %1469 = vdwg.mxu0
    %1470 = vmatprep.subr.mxu0 0.0
    %1471 = vmatpush1.msra.mxu0 %v673
    %1472 = vmatprep.subr.mxu0 0.0
    %1473 = vmatpush1.msra.mxu0 %v674
    %1474 = vmatprep.subr.mxu0 0.0
    %1475 = vmatpush1.msra.mxu0 %v675
    %1476 = vmatprep.subr.mxu0 0.0
    %1477 = vmatpush1.msra.mxu0 %v678
    %1478 = vmatprep.subr.mxu0 0.0
    %1479 = vmatpush1.msra.mxu0 0.0
    %1480 = vmatprep.subr.mxu0 0.0
    %1481 = vmatpush1.msra.mxu0 0.0
    %1482 = vmatprep.subr.mxu0 0.0
    %1483 = vmatpush1.msra.mxu0 0.0
    %1484 = vmatprep.subr.mxu0 0.0
    %1485 = vmatpush1.msra.mxu0 0.0
    %1486 = vmatprep.subr.mxu0 0.0
    %1487 = vmatpush1.msra.mxu0 0.0
    %1488 = vmatprep.subr.mxu0 0.0
    %1489 = vmatpush1.msra.mxu0 0.0
    %1490 = vmatprep.subr.mxu0 0.0
    %1491 = vmatpush1.msra.mxu0 0.0
    %1492 = vmatprep.subr.mxu0 0.0
    %1493 = vmatpush1.msra.mxu0 0.0
    %1494 = vmatprep.subr.mxu0 0.0
    %1495 = vmatpush1.msra.mxu0 0.0
    %1496 = vmatprep.subr.mxu0 0.0
    %1497 = vmatpush1.msra.mxu0 0.0
    %1498 = vmatprep.subr.mxu0 0.0
    %1499 = vmatpush1.msra.mxu0 0.0
    %1500 = vmatprep.subr.mxu0 0.0
    %1501 = vmatpush1.msra.mxu0 0.0
    %1502 = vmatprep.subr.mxu0 0.0
    %1503 = vmatpush1.msra.mxu0 0.0
    %1504 = vmatprep.subr.mxu0 0.0
    %1505 = vmatpush1.msra.mxu0 0.0
    %1506 = vmatprep.subr.mxu0 0.0
    %1507 = vmatpush1.msra.mxu0 0.0
    %1508 = vmatprep.subr.mxu0 0.0
    %1509 = vmatpush1.msra.mxu0 0.0
    %1510 = vmatprep.subr.mxu0 0.0
    %1511 = vmatpush1.msra.mxu0 0.0
    %1512 = vmatprep.subr.mxu0 0.0
    %1513 = vmatpush1.msra.mxu0 0.0
    %1514 = vmatprep.subr.mxu0 0.0
    %1515 = vmatpush1.msra.mxu0 0.0
    %1516 = vmatprep.subr.mxu0 0.0
    %1517 = vmatpush1.msra.mxu0 0.0
    %1518 = vmatprep.subr.mxu0 0.0
    %1519 = vmatpush1.msra.mxu0 0.0
    %1520 = vmatprep.subr.mxu0 0.0
    %1521 = vmatpush1.msra.mxu0 0.0
    %1522 = vmatprep.subr.mxu0 0.0
    %1523 = vmatpush1.msra.mxu0 0.0
    %1524 = vmatprep.subr.mxu0 0.0
    %1525 = vmatpush1.msra.mxu0 0.0
    %1526 = vmatprep.subr.mxu0 0.0
    %1527 = vmatpush1.msra.mxu0 0.0
    %1528 = vmatprep.subr.mxu0 0.0
    %1529 = vmatpush1.msra.mxu0 0.0
    %1530 = vmatprep.subr.mxu0 0.0
    %1531 = vmatpush1.msra.mxu0 0.0
    %1532 = vmatprep.subr.mxu0 0.0
    %1533 = vmatpush1.msra.mxu0 0.0
    %1534 = vmatprep.mubr.f32.mxu0 0.0
    %1535 = vmatmul.mubr.f32.gmra.mrb[0].mxu0 %v328
    %v1536 = vpop.f32.mrb[0].mxu0
    %v1537 = vadd.f32 0.0, %v1536
    %v1538 = vpop.f32.mrb[0].mxu0
    %1539 = vmatprep.mubr.f32.mxu0 0.0
    %1540 = vmatmul.mubr.f32.gmra.mrb[0].mxu0 %v331
    %v1541 = vpop.f32.mrb[0].mxu0
    %v1542 = vadd.f32 0.0, %v1541
    %v1543 = vpop.f32.mrb[0].mxu0
    %1544 = vdwg.mxu0
    %v1545 = vadd.f32 %v1462, %v1537
    %v1546 = vadd.f32 %v1467, %v1542
    %1547 = vmatprep.subr.mxu0 0.0
    %1548 = vmatpush1.msra.mxu0 %v758
    %1549 = vmatprep.subr.mxu0 0.0
    %1550 = vmatpush1.msra.mxu0 %v759
    %1551 = vmatprep.subr.mxu0 0.0
    %1552 = vmatpush1.msra.mxu0 %v760
    %1553 = vmatprep.subr.mxu0 0.0
    %1554 = vmatpush1.msra.mxu0 %v763
    %1555 = vmatprep.subr.mxu0 0.0
    %1556 = vmatpush1.msra.mxu0 0.0
    %1557 = vmatprep.subr.mxu0 0.0
    %1558 = vmatpush1.msra.mxu0 0.0
    %1559 = vmatprep.subr.mxu0 0.0
    %1560 = vmatpush1.msra.mxu0 0.0
    %1561 = vmatprep.subr.mxu0 0.0
    %1562 = vmatpush1.msra.mxu0 0.0
    %1563 = vmatprep.subr.mxu0 0.0
    %1564 = vmatpush1.msra.mxu0 0.0
    %1565 = vmatprep.subr.mxu0 0.0
    %1566 = vmatpush1.msra.mxu0 0.0
    %1567 = vmatprep.subr.mxu0 0.0
    %1568 = vmatpush1.msra.mxu0 0.0
    %1569 = vmatprep.subr.mxu0 0.0
    %1570 = vmatpush1.msra.mxu0 0.0
    %1571 = vmatprep.subr.mxu0 0.0
    %1572 = vmatpush1.msra.mxu0 0.0
    %1573 = vmatprep.subr.mxu0 0.0
    %1574 = vmatpush1.msra.mxu0 0.0
    %1575 = vmatprep.subr.mxu0 0.0
    %1576 = vmatpush1.msra.mxu0 0.0
    %1577 = vmatprep.subr.mxu0 0.0
    %1578 = vmatpush1.msra.mxu0 0.0
    %1579 = vmatprep.subr.mxu0 0.0
    %1580 = vmatpush1.msra.mxu0 0.0
    %1581 = vmatprep.subr.mxu0 0.0
    %1582 = vmatpush1.msra.mxu0 0.0
    %1583 = vmatprep.subr.mxu0 0.0
    %1584 = vmatpush1.msra.mxu0 0.0
    %1585 = vmatprep.subr.mxu0 0.0
    %1586 = vmatpush1.msra.mxu0 0.0
    %1587 = vmatprep.subr.mxu0 0.0
    %1588 = vmatpush1.msra.mxu0 0.0
    %1589 = vmatprep.subr.mxu0 0.0
    %1590 = vmatpush1.msra.mxu0 0.0
    %1591 = vmatprep.subr.mxu0 0.0
    %1592 = vmatpush1.msra.mxu0 0.0
    %1593 = vmatprep.subr.mxu0 0.0
    %1594 = vmatpush1.msra.mxu0 0.0
    %1595 = vmatprep.subr.mxu0 0.0
    %1596 = vmatpush1.msra.mxu0 0.0
    %1597 = vmatprep.subr.mxu0 0.0
    %1598 = vmatpush1.msra.mxu0 0.0
    %1599 = vmatprep.subr.mxu0 0.0
    %1600 = vmatpush1.msra.mxu0 0.0
    %1601 = vmatprep.subr.mxu0 0.0
    %1602 = vmatpush1.msra.mxu0 0.0
    %1603 = vmatprep.subr.mxu0 0.0
    %1604 = vmatpush1.msra.mxu0 0.0
    %1605 = vmatprep.subr.mxu0 0.0
    %1606 = vmatpush1.msra.mxu0 0.0
    %1607 = vmatprep.subr.mxu0 0.0
    %1608 = vmatpush1.msra.mxu0 0.0
    %1609 = vmatprep.subr.mxu0 0.0
    %1610 = vmatpush1.msra.mxu0 0.0
    %1611 = vmatprep.mubr.f32.mxu0 0.0
    %1612 = vmatmul.mubr.f32.gmra.mrb[0].mxu0 %v421
    %v1613 = vpop.f32.mrb[0].mxu0
    %v1614 = vadd.f32 0.0, %v1613
    %v1615 = vpop.f32.mrb[0].mxu0
    %1616 = vmatprep.mubr.f32.mxu0 0.0
    %1617 = vmatmul.mubr.f32.gmra.mrb[0].mxu0 %v424
    %v1618 = vpop.f32.mrb[0].mxu0
    %v1619 = vadd.f32 0.0, %v1618
    %v1620 = vpop.f32.mrb[0].mxu0
    %1621 = vdwg.mxu0
    %v1622 = vadd.f32 %v1545, %v1614
    %v1623 = vadd.f32 %v1546, %v1619
    %1624 = vmatprep.subr.mxu0 0.0
    %1625 = vmatpush1.msra.mxu0 %v843
    %1626 = vmatprep.subr.mxu0 0.0
    %1627 = vmatpush1.msra.mxu0 %v844
    %1628 = vmatprep.subr.mxu0 0.0
    %1629 = vmatpush1.msra.mxu0 %v845
    %1630 = vmatprep.subr.mxu0 0.0
    %1631 = vmatpush1.msra.mxu0 %v848
    %1632 = vmatprep.subr.mxu0 0.0
    %1633 = vmatpush1.msra.mxu0 0.0
    %1634 = vmatprep.subr.mxu0 0.0
    %1635 = vmatpush1.msra.mxu0 0.0
    %1636 = vmatprep.subr.mxu0 0.0
    %1637 = vmatpush1.msra.mxu0 0.0
    %1638 = vmatprep.subr.mxu0 0.0
    %1639 = vmatpush1.msra.mxu0 0.0
    %1640 = vmatprep.subr.mxu0 0.0
    %1641 = vmatpush1.msra.mxu0 0.0
    %1642 = vmatprep.subr.mxu0 0.0
    %1643 = vmatpush1.msra.mxu0 0.0
    %1644 = vmatprep.subr.mxu0 0.0
    %1645 = vmatpush1.msra.mxu0 0.0
    %1646 = vmatprep.subr.mxu0 0.0
    %1647 = vmatpush1.msra.mxu0 0.0
    %1648 = vmatprep.subr.mxu0 0.0
    %1649 = vmatpush1.msra.mxu0 0.0
    %1650 = vmatprep.subr.mxu0 0.0
    %1651 = vmatpush1.msra.mxu0 0.0
    %1652 = vmatprep.subr.mxu0 0.0
    %1653 = vmatpush1.msra.mxu0 0.0
    %1654 = vmatprep.subr.mxu0 0.0
    %1655 = vmatpush1.msra.mxu0 0.0
    %1656 = vmatprep.subr.mxu0 0.0
    %1657 = vmatpush1.msra.mxu0 0.0
    %1658 = vmatprep.subr.mxu0 0.0
    %1659 = vmatpush1.msra.mxu0 0.0
    %1660 = vmatprep.subr.mxu0 0.0
    %1661 = vmatpush1.msra.mxu0 0.0
    %1662 = vmatprep.subr.mxu0 0.0
    %1663 = vmatpush1.msra.mxu0 0.0
    %1664 = vmatprep.subr.mxu0 0.0
    %1665 = vmatpush1.msra.mxu0 0.0
    %1666 = vmatprep.subr.mxu0 0.0
    %1667 = vmatpush1.msra.mxu0 0.0
    %1668 = vmatprep.subr.mxu0 0.0
    %1669 = vmatpush1.msra.mxu0 0.0
    %1670 = vmatprep.subr.mxu0 0.0
    %1671 = vmatpush1.msra.mxu0 0.0
    %1672 = vmatprep.subr.mxu0 0.0
    %1673 = vmatpush1.msra.mxu0 0.0
    %1674 = vmatprep.subr.mxu0 0.0
    %1675 = vmatpush1.msra.mxu0 0.0
    %1676 = vmatprep.subr.mxu0 0.0
    %1677 = vmatpush1.msra.mxu0 0.0
    %1678 = vmatprep.subr.mxu0 0.0
    %1679 = vmatpush1.msra.mxu0 0.0
    %1680 = vmatprep.subr.mxu0 0.0
    %1681 = vmatpush1.msra.mxu0 0.0
    %1682 = vmatprep.subr.mxu0 0.0
    %1683 = vmatpush1.msra.mxu0 0.0
    %1684 = vmatprep.subr.mxu0 0.0
    %1685 = vmatpush1.msra.mxu0 0.0
    %1686 = vmatprep.subr.mxu0 0.0
    %1687 = vmatpush1.msra.mxu0 0.0
    %1688 = vmatprep.mubr.f32.mxu0 0.0
    %1689 = vmatmul.mubr.f32.gmra.mrb[0].mxu0 %v1236
    %v1690 = vpop.f32.mrb[0].mxu0
    %v1691 = vadd.f32 0.0, %v1690
    %v1692 = vpop.f32.mrb[0].mxu0
    %1693 = vmatprep.mubr.f32.mxu0 0.0
    %1694 = vmatmul.mubr.f32.gmra.mrb[0].mxu0 %v1239
    %v1695 = vpop.f32.mrb[0].mxu0
    %v1696 = vadd.f32 0.0, %v1695
    %v1697 = vpop.f32.mrb[0].mxu0
    %1698 = vdwg.mxu0
    %v1699 = vadd.f32 %v1622, %v1691
    %v1700 = vadd.f32 %v1623, %v1696
    %v1701 = vmax.f32 %v1318, %v1699
    %v1702 = vmax.f32 %v1319, %v1700
    %v1704 = vlaneseq
    %v1705 = vshrl.u32 %v1704, 7
    %v1706 = vsub.s32 0, %v1705
    %v1707 = vrot.slane %v43, %v1706
    %v1709 = vadd.f32 %v1701, %v1707
    %v1710 = vadd.f32 %v1702, %v1707
    %v1711 = vmax.f32 %v1709, 0.0
    %v1712 = vmax.f32 %v1710, 0.0
    %1713 = vst [vmem:[%s4] sm:$0xff] %v1711
    %1714 = vst [vmem:[%s4 + $0x8] sm:$0xf] %v1712
    %s1715 = scalar_lea.vmem %s0, 16
    %v1716 = vld [vmem:[%s1715] sm:$0xff]
    %v1717 = vld [vmem:[%s1715 + $0x8] sm:$0xf]
    %v1718 = vld [vmem:[#allocation2] sm:$0xff]
    %v1719 = vld [vmem:[#allocation2 + $0x8] sm:$0xff]
    %v1720 = vld [vmem:[#allocation2 + $0x10] sm:$0xff]
    %v1721 = vld [vmem:[#allocation2 + $0x18] sm:$0xf]
    %s1722 = scalar_lea.vmem %s1, 16
    %v1723 = vld [vmem:[%s1722] sm:$0xff]
    %v1724 = vld [vmem:[%s1722 + $0x8] sm:$0xf]
    %v1725 = vld [vmem:[%s52] sm:$0xff]
    %v1726 = vld [vmem:[%s52 + $0x8] sm:$0xff]
    %v1727 = vld [vmem:[%s52 + $0x10] sm:$0xff]
    %v1728 = vld [vmem:[%s52 + $0x18] sm:$0xf]
    %v1730 = vsel %vm57, %v1723, 0
    %v1733 = vsel %vm57, %v1724, 0
    %v1736 = vsel %vm64, %v1728, 0
    %1738 = vmatprep.subr.mxu0 0.0
    %1739 = vmatpush1.msra.mxu0 %v1725
    %1740 = vmatprep.subr.mxu0 0.0
    %1741 = vmatpush1.msra.mxu0 %v1726
    %1742 = vmatprep.subr.mxu0 0.0
    %1743 = vmatpush1.msra.mxu0 %v1727
    %1744 = vmatprep.subr.mxu0 0.0
    %1745 = vmatpush1.msra.mxu0 %v1736
    %1746 = vmatprep.subr.mxu0 0.0
    %1747 = vmatpush1.msra.mxu0 0.0
    %1748 = vmatprep.subr.mxu0 0.0
    %1749 = vmatpush1.msra.mxu0 0.0
    %1750 = vmatprep.subr.mxu0 0.0
    %1751 = vmatpush1.msra.mxu0 0.0
    %1752 = vmatprep.subr.mxu0 0.0
    %1753 = vmatpush1.msra.mxu0 0.0
    %1754 = vmatprep.subr.mxu0 0.0
    %1755 = vmatpush1.msra.mxu0 0.0
    %1756 = vmatprep.subr.mxu0 0.0
    %1757 = vmatpush1.msra.mxu0 0.0
    %1758 = vmatprep.subr.mxu0 0.0
    %1759 = vmatpush1.msra.mxu0 0.0
    %1760 = vmatprep.subr.mxu0 0.0
    %1761 = vmatpush1.msra.mxu0 0.0
    %1762 = vmatprep.subr.mxu0 0.0
    %1763 = vmatpush1.msra.mxu0 0.0
    %1764 = vmatprep.subr.mxu0 0.0
    %1765 = vmatpush1.msra.mxu0 0.0
    %1766 = vmatprep.subr.mxu0 0.0
    %1767 = vmatpush1.msra.mxu0 0.0
    %1768 = vmatprep.subr.mxu0 0.0
    %1769 = vmatpush1.msra.mxu0 0.0
    %1770 = vmatprep.subr.mxu0 0.0
    %1771 = vmatpush1.msra.mxu0 0.0
    %1772 = vmatprep.subr.mxu0 0.0
    %1773 = vmatpush1.msra.mxu0 0.0
    %1774 = vmatprep.subr.mxu0 0.0
    %1775 = vmatpush1.msra.mxu0 0.0
    %1776 = vmatprep.subr.mxu0 0.0
    %1777 = vmatpush1.msra.mxu0 0.0
    %1778 = vmatprep.subr.mxu0 0.0
    %1779 = vmatpush1.msra.mxu0 0.0
    %1780 = vmatprep.subr.mxu0 0.0
    %1781 = vmatpush1.msra.mxu0 0.0
    %1782 = vmatprep.subr.mxu0 0.0
    %1783 = vmatpush1.msra.mxu0 0.0
    %1784 = vmatprep.subr.mxu0 0.0
    %1785 = vmatpush1.msra.mxu0 0.0
    %1786 = vmatprep.subr.mxu0 0.0
    %1787 = vmatpush1.msra.mxu0 0.0
    %1788 = vmatprep.subr.mxu0 0.0
    %1789 = vmatpush1.msra.mxu0 0.0
    %1790 = vmatprep.subr.mxu0 0.0
    %1791 = vmatpush1.msra.mxu0 0.0
    %1792 = vmatprep.subr.mxu0 0.0
    %1793 = vmatpush1.msra.mxu0 0.0
    %1794 = vmatprep.subr.mxu0 0.0
    %1795 = vmatpush1.msra.mxu0 0.0
    %1796 = vmatprep.subr.mxu0 0.0
    %1797 = vmatpush1.msra.mxu0 0.0
    %1798 = vmatprep.subr.mxu0 0.0
    %1799 = vmatpush1.msra.mxu0 0.0
    %1800 = vmatprep.subr.mxu0 0.0
    %1801 = vmatpush1.msra.mxu0 0.0
    %1802 = vmatprep.mubr.f32.mxu0 0.0
    %1803 = vmatmul.mubr.f32.gmra.mrb[0].mxu0 %v1730
    %v1804 = vpop.f32.mrb[0].mxu0
    %v1805 = vadd.f32 0.0, %v1804
    %v1806 = vpop.f32.mrb[0].mxu0
    %1807 = vmatprep.mubr.f32.mxu0 0.0
    %1808 = vmatmul.mubr.f32.gmra.mrb[0].mxu0 %v1733
    %v1809 = vpop.f32.mrb[0].mxu0
    %v1810 = vadd.f32 0.0, %v1809
    %v1811 = vpop.f32.mrb[0].mxu0
    %1812 = vdwg.mxu0
    %v1814 = vsel %vm57, %v1716, 0
    %v1817 = vsel %vm57, %v1717, 0
    %v1820 = vsel %vm64, %v1721, 0
    %1822 = vmatprep.subr.mxu0 0.0
    %1823 = vmatpush1.msra.mxu0 %v1718
    %1824 = vmatprep.subr.mxu0 0.0
    %1825 = vmatpush1.msra.mxu0 %v1719
    %1826 = vmatprep.subr.mxu0 0.0
    %1827 = vmatpush1.msra.mxu0 %v1720
    %1828 = vmatprep.subr.mxu0 0.0
    %1829 = vmatpush1.msra.mxu0 %v1820
    %1830 = vmatprep.subr.mxu0 0.0
    %1831 = vmatpush1.msra.mxu0 0.0
    %1832 = vmatprep.subr.mxu0 0.0
    %1833 = vmatpush1.msra.mxu0 0.0
    %1834 = vmatprep.subr.mxu0 0.0
    %1835 = vmatpush1.msra.mxu0 0.0
    %1836 = vmatprep.subr.mxu0 0.0
    %1837 = vmatpush1.msra.mxu0 0.0
    %1838 = vmatprep.subr.mxu0 0.0
    %1839 = vmatpush1.msra.mxu0 0.0
    %1840 = vmatprep.subr.mxu0 0.0
    %1841 = vmatpush1.msra.mxu0 0.0
    %1842 = vmatprep.subr.mxu0 0.0
    %1843 = vmatpush1.msra.mxu0 0.0
    %1844 = vmatprep.subr.mxu0 0.0
    %1845 = vmatpush1.msra.mxu0 0.0
    %1846 = vmatprep.subr.mxu0 0.0
    %1847 = vmatpush1.msra.mxu0 0.0
    %1848 = vmatprep.subr.mxu0 0.0
    %1849 = vmatpush1.msra.mxu0 0.0
    %1850 = vmatprep.subr.mxu0 0.0
    %1851 = vmatpush1.msra.mxu0 0.0
    %1852 = vmatprep.subr.mxu0 0.0
    %1853 = vmatpush1.msra.mxu0 0.0
    %1854 = vmatprep.subr.mxu0 0.0
    %1855 = vmatpush1.msra.mxu0 0.0
    %1856 = vmatprep.subr.mxu0 0.0
    %1857 = vmatpush1.msra.mxu0 0.0
    %1858 = vmatprep.subr.mxu0 0.0
    %1859 = vmatpush1.msra.mxu0 0.0
    %1860 = vmatprep.subr.mxu0 0.0
    %1861 = vmatpush1.msra.mxu0 0.0
    %1862 = vmatprep.subr.mxu0 0.0
    %1863 = vmatpush1.msra.mxu0 0.0
    %1864 = vmatprep.subr.mxu0 0.0
    %1865 = vmatpush1.msra.mxu0 0.0
    %1866 = vmatprep.subr.mxu0 0.0
    %1867 = vmatpush1.msra.mxu0 0.0
    %1868 = vmatprep.subr.mxu0 0.0
    %1869 = vmatpush1.msra.mxu0 0.0
    %1870 = vmatprep.subr.mxu0 0.0
    %1871 = vmatpush1.msra.mxu0 0.0
    %1872 = vmatprep.subr.mxu0 0.0
    %1873 = vmatpush1.msra.mxu0 0.0
    %1874 = vmatprep.subr.mxu0 0.0
    %1875 = vmatpush1.msra.mxu0 0.0
    %1876 = vmatprep.subr.mxu0 0.0
    %1877 = vmatpush1.msra.mxu0 0.0
    %1878 = vmatprep.subr.mxu0 0.0
    %1879 = vmatpush1.msra.mxu0 0.0
    %1880 = vmatprep.subr.mxu0 0.0
    %1881 = vmatpush1.msra.mxu0 0.0
    %1882 = vmatprep.subr.mxu0 0.0
    %1883 = vmatpush1.msra.mxu0 0.0
    %1884 = vmatprep.subr.mxu0 0.0
    %1885 = vmatpush1.msra.mxu0 0.0
    %1886 = vmatprep.mubr.f32.mxu0 0.0
    %1887 = vmatmul.mubr.f32.gmra.mrb[0].mxu0 %v1814
    %v1888 = vpop.f32.mrb[0].mxu0
    %v1889 = vadd.f32 %v1805, %v1888
    %v1890 = vpop.f32.mrb[0].mxu0
    %1891 = vmatprep.mubr.f32.mxu0 0.0
    %1892 = vmatmul.mubr.f32.gmra.mrb[0].mxu0 %v1817
    %v1893 = vpop.f32.mrb[0].mxu0
    %v1894 = vadd.f32 %v1810, %v1893
    %v1895 = vpop.f32.mrb[0].mxu0
    %1896 = vdwg.mxu0
    %v1897 = vld [vmem:[%s1715 + $0x1] sm:$0xff]
    %v1898 = vld [vmem:[%s1715 + $0x9] sm:$0xf]
    %v1899 = vld [vmem:[%s229] sm:$0xff]
    %v1900 = vld [vmem:[%s229 + $0x8] sm:$0xff]
    %v1901 = vld [vmem:[%s229 + $0x10] sm:$0xff]
    %v1902 = vld [vmem:[%s229 + $0x18] sm:$0xf]
    %v1904 = vsel %vm57, %v1897, 0
    %v1907 = vsel %vm57, %v1898, 0
    %v1910 = vsel %vm64, %v1902, 0
    %1912 = vmatprep.subr.mxu0 0.0
    %1913 = vmatpush1.msra.mxu0 %v1899
    %1914 = vmatprep.subr.mxu0 0.0
    %1915 = vmatpush1.msra.mxu0 %v1900
    %1916 = vmatprep.subr.mxu0 0.0
    %1917 = vmatpush1.msra.mxu0 %v1901
    %1918 = vmatprep.subr.mxu0 0.0
    %1919 = vmatpush1.msra.mxu0 %v1910
    %1920 = vmatprep.subr.mxu0 0.0
    %1921 = vmatpush1.msra.mxu0 0.0
    %1922 = vmatprep.subr.mxu0 0.0
    %1923 = vmatpush1.msra.mxu0 0.0
    %1924 = vmatprep.subr.mxu0 0.0
    %1925 = vmatpush1.msra.mxu0 0.0
    %1926 = vmatprep.subr.mxu0 0.0
    %1927 = vmatpush1.msra.mxu0 0.0
    %1928 = vmatprep.subr.mxu0 0.0
    %1929 = vmatpush1.msra.mxu0 0.0
    %1930 = vmatprep.subr.mxu0 0.0
    %1931 = vmatpush1.msra.mxu0 0.0
    %1932 = vmatprep.subr.mxu0 0.0
    %1933 = vmatpush1.msra.mxu0 0.0
    %1934 = vmatprep.subr.mxu0 0.0
    %1935 = vmatpush1.msra.mxu0 0.0
    %1936 = vmatprep.subr.mxu0 0.0
    %1937 = vmatpush1.msra.mxu0 0.0
    %1938 = vmatprep.subr.mxu0 0.0
    %1939 = vmatpush1.msra.mxu0 0.0
    %1940 = vmatprep.subr.mxu0 0.0
    %1941 = vmatpush1.msra.mxu0 0.0
    %1942 = vmatprep.subr.mxu0 0.0
    %1943 = vmatpush1.msra.mxu0 0.0
    %1944 = vmatprep.subr.mxu0 0.0
    %1945 = vmatpush1.msra.mxu0 0.0
    %1946 = vmatprep.subr.mxu0 0.0
    %1947 = vmatpush1.msra.mxu0 0.0
    %1948 = vmatprep.subr.mxu0 0.0
    %1949 = vmatpush1.msra.mxu0 0.0
    %1950 = vmatprep.subr.mxu0 0.0
    %1951 = vmatpush1.msra.mxu0 0.0
    %1952 = vmatprep.subr.mxu0 0.0
    %1953 = vmatpush1.msra.mxu0 0.0
    %1954 = vmatprep.subr.mxu0 0.0
    %1955 = vmatpush1.msra.mxu0 0.0
    %1956 = vmatprep.subr.mxu0 0.0
    %1957 = vmatpush1.msra.mxu0 0.0
    %1958 = vmatprep.subr.mxu0 0.0
    %1959 = vmatpush1.msra.mxu0 0.0
    %1960 = vmatprep.subr.mxu0 0.0
    %1961 = vmatpush1.msra.mxu0 0.0
    %1962 = vmatprep.subr.mxu0 0.0
    %1963 = vmatpush1.msra.mxu0 0.0
    %1964 = vmatprep.subr.mxu0 0.0
    %1965 = vmatpush1.msra.mxu0 0.0
    %1966 = vmatprep.subr.mxu0 0.0
    %1967 = vmatpush1.msra.mxu0 0.0
    %1968 = vmatprep.subr.mxu0 0.0
    %1969 = vmatpush1.msra.mxu0 0.0
    %1970 = vmatprep.subr.mxu0 0.0
    %1971 = vmatpush1.msra.mxu0 0.0
    %1972 = vmatprep.subr.mxu0 0.0
    %1973 = vmatpush1.msra.mxu0 0.0
    %1974 = vmatprep.subr.mxu0 0.0
    %1975 = vmatpush1.msra.mxu0 0.0
    %1976 = vmatprep.mubr.f32.mxu0 0.0
    %1977 = vmatmul.mubr.f32.gmra.mrb[0].mxu0 %v1904
    %v1978 = vpop.f32.mrb[0].mxu0
    %v1979 = vadd.f32 0.0, %v1978
    %v1980 = vpop.f32.mrb[0].mxu0
    %1981 = vmatprep.mubr.f32.mxu0 0.0
    %1982 = vmatmul.mubr.f32.gmra.mrb[0].mxu0 %v1907
    %v1983 = vpop.f32.mrb[0].mxu0
    %v1984 = vadd.f32 0.0, %v1983
    %v1985 = vpop.f32.mrb[0].mxu0
    %1986 = vdwg.mxu0
    %v1987 = vadd.f32 %v1889, %v1979
    %v1988 = vadd.f32 %v1894, %v1984
    %v1989 = vld [vmem:[%s1722 + $0x1] sm:$0xff]
    %v1990 = vld [vmem:[%s1722 + $0x9] sm:$0xf]
    %v1991 = vld [vmem:[%s322] sm:$0xff]
    %v1992 = vld [vmem:[%s322 + $0x8] sm:$0xff]
    %v1993 = vld [vmem:[%s322 + $0x10] sm:$0xff]
    %v1994 = vld [vmem:[%s322 + $0x18] sm:$0xf]
    %v1996 = vsel %vm57, %v1989, 0
    %v1999 = vsel %vm57, %v1990, 0
    %v2002 = vsel %vm64, %v1994, 0
    %2004 = vmatprep.subr.mxu0 0.0
    %2005 = vmatpush1.msra.mxu0 %v1991
    %2006 = vmatprep.subr.mxu0 0.0
    %2007 = vmatpush1.msra.mxu0 %v1992
    %2008 = vmatprep.subr.mxu0 0.0
    %2009 = vmatpush1.msra.mxu0 %v1993
    %2010 = vmatprep.subr.mxu0 0.0
    %2011 = vmatpush1.msra.mxu0 %v2002
    %2012 = vmatprep.subr.mxu0 0.0
    %2013 = vmatpush1.msra.mxu0 0.0
    %2014 = vmatprep.subr.mxu0 0.0
    %2015 = vmatpush1.msra.mxu0 0.0
    %2016 = vmatprep.subr.mxu0 0.0
    %2017 = vmatpush1.msra.mxu0 0.0
    %2018 = vmatprep.subr.mxu0 0.0
    %2019 = vmatpush1.msra.mxu0 0.0
    %2020 = vmatprep.subr.mxu0 0.0
    %2021 = vmatpush1.msra.mxu0 0.0
    %2022 = vmatprep.subr.mxu0 0.0
    %2023 = vmatpush1.msra.mxu0 0.0
    %2024 = vmatprep.subr.mxu0 0.0
    %2025 = vmatpush1.msra.mxu0 0.0
    %2026 = vmatprep.subr.mxu0 0.0
    %2027 = vmatpush1.msra.mxu0 0.0
    %2028 = vmatprep.subr.mxu0 0.0
    %2029 = vmatpush1.msra.mxu0 0.0
    %2030 = vmatprep.subr.mxu0 0.0
    %2031 = vmatpush1.msra.mxu0 0.0
    %2032 = vmatprep.subr.mxu0 0.0
    %2033 = vmatpush1.msra.mxu0 0.0
    %2034 = vmatprep.subr.mxu0 0.0
    %2035 = vmatpush1.msra.mxu0 0.0
    %2036 = vmatprep.subr.mxu0 0.0
    %2037 = vmatpush1.msra.mxu0 0.0
    %2038 = vmatprep.subr.mxu0 0.0
    %2039 = vmatpush1.msra.mxu0 0.0
    %2040 = vmatprep.subr.mxu0 0.0
    %2041 = vmatpush1.msra.mxu0 0.0
    %2042 = vmatprep.subr.mxu0 0.0
    %2043 = vmatpush1.msra.mxu0 0.0
    %2044 = vmatprep.subr.mxu0 0.0
    %2045 = vmatpush1.msra.mxu0 0.0
    %2046 = vmatprep.subr.mxu0 0.0
    %2047 = vmatpush1.msra.mxu0 0.0
    %2048 = vmatprep.subr.mxu0 0.0
    %2049 = vmatpush1.msra.mxu0 0.0
    %2050 = vmatprep.subr.mxu0 0.0
    %2051 = vmatpush1.msra.mxu0 0.0
    %2052 = vmatprep.subr.mxu0 0.0
    %2053 = vmatpush1.msra.mxu0 0.0
    %2054 = vmatprep.subr.mxu0 0.0
    %2055 = vmatpush1.msra.mxu0 0.0
    %2056 = vmatprep.subr.mxu0 0.0
    %2057 = vmatpush1.msra.mxu0 0.0
    %2058 = vmatprep.subr.mxu0 0.0
    %2059 = vmatpush1.msra.mxu0 0.0
    %2060 = vmatprep.subr.mxu0 0.0
    %2061 = vmatpush1.msra.mxu0 0.0
    %2062 = vmatprep.subr.mxu0 0.0
    %2063 = vmatpush1.msra.mxu0 0.0
    %2064 = vmatprep.subr.mxu0 0.0
    %2065 = vmatpush1.msra.mxu0 0.0
    %2066 = vmatprep.subr.mxu0 0.0
    %2067 = vmatpush1.msra.mxu0 0.0
    %2068 = vmatprep.mubr.f32.mxu0 0.0
    %2069 = vmatmul.mubr.f32.gmra.mrb[0].mxu0 %v1996
    %v2070 = vpop.f32.mrb[0].mxu0
    %v2071 = vadd.f32 0.0, %v2070
    %v2072 = vpop.f32.mrb[0].mxu0
    %2073 = vmatprep.mubr.f32.mxu0 0.0
    %2074 = vmatmul.mubr.f32.gmra.mrb[0].mxu0 %v1999
    %v2075 = vpop.f32.mrb[0].mxu0
    %v2076 = vadd.f32 0.0, %v2075
    %v2077 = vpop.f32.mrb[0].mxu0
    %2078 = vdwg.mxu0
    %v2079 = vadd.f32 %v1987, %v2071
    %v2080 = vadd.f32 %v1988, %v2076
    %v2081 = vld [vmem:[%s1715 + $0x2] sm:$0xff]
    %v2082 = vld [vmem:[%s1715 + $0xa] sm:$0xf]
    %v2083 = vld [vmem:[%s415] sm:$0xff]
    %v2084 = vld [vmem:[%s415 + $0x8] sm:$0xff]
    %v2085 = vld [vmem:[%s415 + $0x10] sm:$0xff]
    %v2086 = vld [vmem:[%s415 + $0x18] sm:$0xf]
    %v2088 = vsel %vm57, %v2081, 0
    %v2091 = vsel %vm57, %v2082, 0
    %v2094 = vsel %vm64, %v2086, 0
    %2096 = vmatprep.subr.mxu0 0.0
    %2097 = vmatpush1.msra.mxu0 %v2083
    %2098 = vmatprep.subr.mxu0 0.0
    %2099 = vmatpush1.msra.mxu0 %v2084
    %2100 = vmatprep.subr.mxu0 0.0
    %2101 = vmatpush1.msra.mxu0 %v2085
    %2102 = vmatprep.subr.mxu0 0.0
    %2103 = vmatpush1.msra.mxu0 %v2094
    %2104 = vmatprep.subr.mxu0 0.0
    %2105 = vmatpush1.msra.mxu0 0.0
    %2106 = vmatprep.subr.mxu0 0.0
    %2107 = vmatpush1.msra.mxu0 0.0
    %2108 = vmatprep.subr.mxu0 0.0
    %2109 = vmatpush1.msra.mxu0 0.0
    %2110 = vmatprep.subr.mxu0 0.0
    %2111 = vmatpush1.msra.mxu0 0.0
    %2112 = vmatprep.subr.mxu0 0.0
    %2113 = vmatpush1.msra.mxu0 0.0
    %2114 = vmatprep.subr.mxu0 0.0
    %2115 = vmatpush1.msra.mxu0 0.0
    %2116 = vmatprep.subr.mxu0 0.0
    %2117 = vmatpush1.msra.mxu0 0.0
    %2118 = vmatprep.subr.mxu0 0.0
    %2119 = vmatpush1.msra.mxu0 0.0
    %2120 = vmatprep.subr.mxu0 0.0
    %2121 = vmatpush1.msra.mxu0 0.0
    %2122 = vmatprep.subr.mxu0 0.0
    %2123 = vmatpush1.msra.mxu0 0.0
    %2124 = vmatprep.subr.mxu0 0.0
    %2125 = vmatpush1.msra.mxu0 0.0
    %2126 = vmatprep.subr.mxu0 0.0
    %2127 = vmatpush1.msra.mxu0 0.0
    %2128 = vmatprep.subr.mxu0 0.0
    %2129 = vmatpush1.msra.mxu0 0.0
    %2130 = vmatprep.subr.mxu0 0.0
    %2131 = vmatpush1.msra.mxu0 0.0
    %2132 = vmatprep.subr.mxu0 0.0
    %2133 = vmatpush1.msra.mxu0 0.0
    %2134 = vmatprep.subr.mxu0 0.0
    %2135 = vmatpush1.msra.mxu0 0.0
    %2136 = vmatprep.subr.mxu0 0.0
    %2137 = vmatpush1.msra.mxu0 0.0
    %2138 = vmatprep.subr.mxu0 0.0
    %2139 = vmatpush1.msra.mxu0 0.0
    %2140 = vmatprep.subr.mxu0 0.0
    %2141 = vmatpush1.msra.mxu0 0.0
    %2142 = vmatprep.subr.mxu0 0.0
    %2143 = vmatpush1.msra.mxu0 0.0
    %2144 = vmatprep.subr.mxu0 0.0
    %2145 = vmatpush1.msra.mxu0 0.0
    %2146 = vmatprep.subr.mxu0 0.0
    %2147 = vmatpush1.msra.mxu0 0.0
    %2148 = vmatprep.subr.mxu0 0.0
    %2149 = vmatpush1.msra.mxu0 0.0
    %2150 = vmatprep.subr.mxu0 0.0
    %2151 = vmatpush1.msra.mxu0 0.0
    %2152 = vmatprep.subr.mxu0 0.0
    %2153 = vmatpush1.msra.mxu0 0.0
    %2154 = vmatprep.subr.mxu0 0.0
    %2155 = vmatpush1.msra.mxu0 0.0
    %2156 = vmatprep.subr.mxu0 0.0
    %2157 = vmatpush1.msra.mxu0 0.0
    %2158 = vmatprep.subr.mxu0 0.0
    %2159 = vmatpush1.msra.mxu0 0.0
    %2160 = vmatprep.mubr.f32.mxu0 0.0
    %2161 = vmatmul.mubr.f32.gmra.mrb[0].mxu0 %v2088
    %v2162 = vpop.f32.mrb[0].mxu0
    %v2163 = vadd.f32 0.0, %v2162
    %v2164 = vpop.f32.mrb[0].mxu0
    %2165 = vmatprep.mubr.f32.mxu0 0.0
    %2166 = vmatmul.mubr.f32.gmra.mrb[0].mxu0 %v2091
    %v2167 = vpop.f32.mrb[0].mxu0
    %v2168 = vadd.f32 0.0, %v2167
    %v2169 = vpop.f32.mrb[0].mxu0
    %2170 = vdwg.mxu0
    %v2171 = vadd.f32 %v2079, %v2163
    %v2172 = vadd.f32 %v2080, %v2168
    %v2173 = vld [vmem:[%s506] sm:$0xff]
    %v2174 = vld [vmem:[%s506 + $0x8] sm:$0xff]
    %v2175 = vld [vmem:[%s506 + $0x10] sm:$0xff]
    %v2176 = vld [vmem:[%s506 + $0x18] sm:$0xf]
    %v2177 = vld [vmem:[%s511] sm:$0xff]
    %v2178 = vld [vmem:[%s511 + $0x8] sm:$0xff]
    %v2179 = vld [vmem:[%s511 + $0x10] sm:$0xff]
    %v2180 = vld [vmem:[%s511 + $0x18] sm:$0xf]
    %v2182 = vsel %vm64, %v2180, 0
    %2184 = vmatprep.subr.mxu0 0.0
    %2185 = vmatpush1.msra.mxu0 %v2177
    %2186 = vmatprep.subr.mxu0 0.0
    %2187 = vmatpush1.msra.mxu0 %v2178
    %2188 = vmatprep.subr.mxu0 0.0
    %2189 = vmatpush1.msra.mxu0 %v2179
    %2190 = vmatprep.subr.mxu0 0.0
    %2191 = vmatpush1.msra.mxu0 %v2182
    %2192 = vmatprep.subr.mxu0 0.0
    %2193 = vmatpush1.msra.mxu0 0.0
    %2194 = vmatprep.subr.mxu0 0.0
    %2195 = vmatpush1.msra.mxu0 0.0
    %2196 = vmatprep.subr.mxu0 0.0
    %2197 = vmatpush1.msra.mxu0 0.0
    %2198 = vmatprep.subr.mxu0 0.0
    %2199 = vmatpush1.msra.mxu0 0.0
    %2200 = vmatprep.subr.mxu0 0.0
    %2201 = vmatpush1.msra.mxu0 0.0
    %2202 = vmatprep.subr.mxu0 0.0
    %2203 = vmatpush1.msra.mxu0 0.0
    %2204 = vmatprep.subr.mxu0 0.0
    %2205 = vmatpush1.msra.mxu0 0.0
    %2206 = vmatprep.subr.mxu0 0.0
    %2207 = vmatpush1.msra.mxu0 0.0
    %2208 = vmatprep.subr.mxu0 0.0
    %2209 = vmatpush1.msra.mxu0 0.0
    %2210 = vmatprep.subr.mxu0 0.0
    %2211 = vmatpush1.msra.mxu0 0.0
    %2212 = vmatprep.subr.mxu0 0.0
    %2213 = vmatpush1.msra.mxu0 0.0
    %2214 = vmatprep.subr.mxu0 0.0
    %2215 = vmatpush1.msra.mxu0 0.0
    %2216 = vmatprep.subr.mxu0 0.0
    %2217 = vmatpush1.msra.mxu0 0.0
    %2218 = vmatprep.subr.mxu0 0.0
    %2219 = vmatpush1.msra.mxu0 0.0
    %2220 = vmatprep.subr.mxu0 0.0
    %2221 = vmatpush1.msra.mxu0 0.0
    %2222 = vmatprep.subr.mxu0 0.0
    %2223 = vmatpush1.msra.mxu0 0.0
    %2224 = vmatprep.subr.mxu0 0.0
    %2225 = vmatpush1.msra.mxu0 0.0
    %2226 = vmatprep.subr.mxu0 0.0
    %2227 = vmatpush1.msra.mxu0 0.0
    %2228 = vmatprep.subr.mxu0 0.0
    %2229 = vmatpush1.msra.mxu0 0.0
    %2230 = vmatprep.subr.mxu0 0.0
    %2231 = vmatpush1.msra.mxu0 0.0
    %2232 = vmatprep.subr.mxu0 0.0
    %2233 = vmatpush1.msra.mxu0 0.0
    %2234 = vmatprep.subr.mxu0 0.0
    %2235 = vmatpush1.msra.mxu0 0.0
    %2236 = vmatprep.subr.mxu0 0.0
    %2237 = vmatpush1.msra.mxu0 0.0
    %2238 = vmatprep.subr.mxu0 0.0
    %2239 = vmatpush1.msra.mxu0 0.0
    %2240 = vmatprep.subr.mxu0 0.0
    %2241 = vmatpush1.msra.mxu0 0.0
    %2242 = vmatprep.subr.mxu0 0.0
    %2243 = vmatpush1.msra.mxu0 0.0
    %2244 = vmatprep.subr.mxu0 0.0
    %2245 = vmatpush1.msra.mxu0 0.0
    %2246 = vmatprep.subr.mxu0 0.0
    %2247 = vmatpush1.msra.mxu0 0.0
    %2248 = vmatprep.mubr.f32.mxu0 0.0
    %2249 = vmatmul.mubr.f32.gmra.mrb[0].mxu0 %v1730
    %v2250 = vpop.f32.mrb[0].mxu0
    %v2251 = vadd.f32 0.0, %v2250
    %v2252 = vpop.f32.mrb[0].mxu0
    %2253 = vmatprep.mubr.f32.mxu0 0.0
    %2254 = vmatmul.mubr.f32.gmra.mrb[0].mxu0 %v1733
    %v2255 = vpop.f32.mrb[0].mxu0
    %v2256 = vadd.f32 0.0, %v2255
    %v2257 = vpop.f32.mrb[0].mxu0
    %2258 = vdwg.mxu0
    %v2260 = vsel %vm64, %v2176, 0
    %2262 = vmatprep.subr.mxu0 0.0
    %2263 = vmatpush1.msra.mxu0 %v2173
    %2264 = vmatprep.subr.mxu0 0.0
    %2265 = vmatpush1.msra.mxu0 %v2174
    %2266 = vmatprep.subr.mxu0 0.0
    %2267 = vmatpush1.msra.mxu0 %v2175
    %2268 = vmatprep.subr.mxu0 0.0
    %2269 = vmatpush1.msra.mxu0 %v2260
    %2270 = vmatprep.subr.mxu0 0.0
    %2271 = vmatpush1.msra.mxu0 0.0
    %2272 = vmatprep.subr.mxu0 0.0
    %2273 = vmatpush1.msra.mxu0 0.0
    %2274 = vmatprep.subr.mxu0 0.0
    %2275 = vmatpush1.msra.mxu0 0.0
    %2276 = vmatprep.subr.mxu0 0.0
    %2277 = vmatpush1.msra.mxu0 0.0
    %2278 = vmatprep.subr.mxu0 0.0
    %2279 = vmatpush1.msra.mxu0 0.0
    %2280 = vmatprep.subr.mxu0 0.0
    %2281 = vmatpush1.msra.mxu0 0.0
    %2282 = vmatprep.subr.mxu0 0.0
    %2283 = vmatpush1.msra.mxu0 0.0
    %2284 = vmatprep.subr.mxu0 0.0
    %2285 = vmatpush1.msra.mxu0 0.0
    %2286 = vmatprep.subr.mxu0 0.0
    %2287 = vmatpush1.msra.mxu0 0.0
    %2288 = vmatprep.subr.mxu0 0.0
    %2289 = vmatpush1.msra.mxu0 0.0
    %2290 = vmatprep.subr.mxu0 0.0
    %2291 = vmatpush1.msra.mxu0 0.0
    %2292 = vmatprep.subr.mxu0 0.0
    %2293 = vmatpush1.msra.mxu0 0.0
    %2294 = vmatprep.subr.mxu0 0.0
    %2295 = vmatpush1.msra.mxu0 0.0
    %2296 = vmatprep.subr.mxu0 0.0
    %2297 = vmatpush1.msra.mxu0 0.0
    %2298 = vmatprep.subr.mxu0 0.0
    %2299 = vmatpush1.msra.mxu0 0.0
    %2300 = vmatprep.subr.mxu0 0.0
    %2301 = vmatpush1.msra.mxu0 0.0
    %2302 = vmatprep.subr.mxu0 0.0
    %2303 = vmatpush1.msra.mxu0 0.0
    %2304 = vmatprep.subr.mxu0 0.0
    %2305 = vmatpush1.msra.mxu0 0.0
    %2306 = vmatprep.subr.mxu0 0.0
    %2307 = vmatpush1.msra.mxu0 0.0
    %2308 = vmatprep.subr.mxu0 0.0
    %2309 = vmatpush1.msra.mxu0 0.0
    %2310 = vmatprep.subr.mxu0 0.0
    %2311 = vmatpush1.msra.mxu0 0.0
    %2312 = vmatprep.subr.mxu0 0.0
    %2313 = vmatpush1.msra.mxu0 0.0
    %2314 = vmatprep.subr.mxu0 0.0
    %2315 = vmatpush1.msra.mxu0 0.0
    %2316 = vmatprep.subr.mxu0 0.0
    %2317 = vmatpush1.msra.mxu0 0.0
    %2318 = vmatprep.subr.mxu0 0.0
    %2319 = vmatpush1.msra.mxu0 0.0
    %2320 = vmatprep.subr.mxu0 0.0
    %2321 = vmatpush1.msra.mxu0 0.0
    %2322 = vmatprep.subr.mxu0 0.0
    %2323 = vmatpush1.msra.mxu0 0.0
    %2324 = vmatprep.subr.mxu0 0.0
    %2325 = vmatpush1.msra.mxu0 0.0
    %2326 = vmatprep.mubr.f32.mxu0 0.0
    %2327 = vmatmul.mubr.f32.gmra.mrb[0].mxu0 %v1814
    %v2328 = vpop.f32.mrb[0].mxu0
    %v2329 = vadd.f32 %v2251, %v2328
    %v2330 = vpop.f32.mrb[0].mxu0
    %2331 = vmatprep.mubr.f32.mxu0 0.0
    %2332 = vmatmul.mubr.f32.gmra.mrb[0].mxu0 %v1817
    %v2333 = vpop.f32.mrb[0].mxu0
    %v2334 = vadd.f32 %v2256, %v2333
    %v2335 = vpop.f32.mrb[0].mxu0
    %2336 = vdwg.mxu0
    %v2337 = vld [vmem:[%s672] sm:$0xff]
    %v2338 = vld [vmem:[%s672 + $0x8] sm:$0xff]
    %v2339 = vld [vmem:[%s672 + $0x10] sm:$0xff]
    %v2340 = vld [vmem:[%s672 + $0x18] sm:$0xf]
    %v2342 = vsel %vm64, %v2340, 0
    %2344 = vmatprep.subr.mxu0 0.0
    %2345 = vmatpush1.msra.mxu0 %v2337
    %2346 = vmatprep.subr.mxu0 0.0
    %2347 = vmatpush1.msra.mxu0 %v2338
    %2348 = vmatprep.subr.mxu0 0.0
    %2349 = vmatpush1.msra.mxu0 %v2339
    %2350 = vmatprep.subr.mxu0 0.0
    %2351 = vmatpush1.msra.mxu0 %v2342
    %2352 = vmatprep.subr.mxu0 0.0
    %2353 = vmatpush1.msra.mxu0 0.0
    %2354 = vmatprep.subr.mxu0 0.0
    %2355 = vmatpush1.msra.mxu0 0.0
    %2356 = vmatprep.subr.mxu0 0.0
    %2357 = vmatpush1.msra.mxu0 0.0
    %2358 = vmatprep.subr.mxu0 0.0
    %2359 = vmatpush1.msra.mxu0 0.0
    %2360 = vmatprep.subr.mxu0 0.0
    %2361 = vmatpush1.msra.mxu0 0.0
    %2362 = vmatprep.subr.mxu0 0.0
    %2363 = vmatpush1.msra.mxu0 0.0
    %2364 = vmatprep.subr.mxu0 0.0
    %2365 = vmatpush1.msra.mxu0 0.0
    %2366 = vmatprep.subr.mxu0 0.0
    %2367 = vmatpush1.msra.mxu0 0.0
    %2368 = vmatprep.subr.mxu0 0.0
    %2369 = vmatpush1.msra.mxu0 0.0
    %2370 = vmatprep.subr.mxu0 0.0
    %2371 = vmatpush1.msra.mxu0 0.0
    %2372 = vmatprep.subr.mxu0 0.0
    %2373 = vmatpush1.msra.mxu0 0.0
    %2374 = vmatprep.subr.mxu0 0.0
    %2375 = vmatpush1.msra.mxu0 0.0
    %2376 = vmatprep.subr.mxu0 0.0
    %2377 = vmatpush1.msra.mxu0 0.0
    %2378 = vmatprep.subr.mxu0 0.0
    %2379 = vmatpush1.msra.mxu0 0.0
    %2380 = vmatprep.subr.mxu0 0.0
    %2381 = vmatpush1.msra.mxu0 0.0
    %2382 = vmatprep.subr.mxu0 0.0
    %2383 = vmatpush1.msra.mxu0 0.0
    %2384 = vmatprep.subr.mxu0 0.0
    %2385 = vmatpush1.msra.mxu0 0.0
    %2386 = vmatprep.subr.mxu0 0.0
    %2387 = vmatpush1.msra.mxu0 0.0
    %2388 = vmatprep.subr.mxu0 0.0
    %2389 = vmatpush1.msra.mxu0 0.0
    %2390 = vmatprep.subr.mxu0 0.0
    %2391 = vmatpush1.msra.mxu0 0.0
    %2392 = vmatprep.subr.mxu0 0.0
    %2393 = vmatpush1.msra.mxu0 0.0
    %2394 = vmatprep.subr.mxu0 0.0
    %2395 = vmatpush1.msra.mxu0 0.0
    %2396 = vmatprep.subr.mxu0 0.0
    %2397 = vmatpush1.msra.mxu0 0.0
    %2398 = vmatprep.subr.mxu0 0.0
    %2399 = vmatpush1.msra.mxu0 0.0
    %2400 = vmatprep.subr.mxu0 0.0
    %2401 = vmatpush1.msra.mxu0 0.0
    %2402 = vmatprep.subr.mxu0 0.0
    %2403 = vmatpush1.msra.mxu0 0.0
    %2404 = vmatprep.subr.mxu0 0.0
    %2405 = vmatpush1.msra.mxu0 0.0
    %2406 = vmatprep.subr.mxu0 0.0
    %2407 = vmatpush1.msra.mxu0 0.0
    %2408 = vmatprep.mubr.f32.mxu0 0.0
    %2409 = vmatmul.mubr.f32.gmra.mrb[0].mxu0 %v1904
    %v2410 = vpop.f32.mrb[0].mxu0
    %v2411 = vadd.f32 0.0, %v2410
    %v2412 = vpop.f32.mrb[0].mxu0
    %2413 = vmatprep.mubr.f32.mxu0 0.0
    %2414 = vmatmul.mubr.f32.gmra.mrb[0].mxu0 %v1907
    %v2415 = vpop.f32.mrb[0].mxu0
    %v2416 = vadd.f32 0.0, %v2415
    %v2417 = vpop.f32.mrb[0].mxu0
    %2418 = vdwg.mxu0
    %v2419 = vadd.f32 %v2329, %v2411
    %v2420 = vadd.f32 %v2334, %v2416
    %v2421 = vld [vmem:[%s757] sm:$0xff]
    %v2422 = vld [vmem:[%s757 + $0x8] sm:$0xff]
    %v2423 = vld [vmem:[%s757 + $0x10] sm:$0xff]
    %v2424 = vld [vmem:[%s757 + $0x18] sm:$0xf]
    %v2426 = vsel %vm64, %v2424, 0
    %2428 = vmatprep.subr.mxu0 0.0
    %2429 = vmatpush1.msra.mxu0 %v2421
    %2430 = vmatprep.subr.mxu0 0.0
    %2431 = vmatpush1.msra.mxu0 %v2422
    %2432 = vmatprep.subr.mxu0 0.0
    %2433 = vmatpush1.msra.mxu0 %v2423
    %2434 = vmatprep.subr.mxu0 0.0
    %2435 = vmatpush1.msra.mxu0 %v2426
    %2436 = vmatprep.subr.mxu0 0.0
    %2437 = vmatpush1.msra.mxu0 0.0
    %2438 = vmatprep.subr.mxu0 0.0
    %2439 = vmatpush1.msra.mxu0 0.0
    %2440 = vmatprep.subr.mxu0 0.0
    %2441 = vmatpush1.msra.mxu0 0.0
    %2442 = vmatprep.subr.mxu0 0.0
    %2443 = vmatpush1.msra.mxu0 0.0
    %2444 = vmatprep.subr.mxu0 0.0
    %2445 = vmatpush1.msra.mxu0 0.0
    %2446 = vmatprep.subr.mxu0 0.0
    %2447 = vmatpush1.msra.mxu0 0.0
    %2448 = vmatprep.subr.mxu0 0.0
    %2449 = vmatpush1.msra.mxu0 0.0
    %2450 = vmatprep.subr.mxu0 0.0
    %2451 = vmatpush1.msra.mxu0 0.0
    %2452 = vmatprep.subr.mxu0 0.0
    %2453 = vmatpush1.msra.mxu0 0.0
    %2454 = vmatprep.subr.mxu0 0.0
    %2455 = vmatpush1.msra.mxu0 0.0
    %2456 = vmatprep.subr.mxu0 0.0
    %2457 = vmatpush1.msra.mxu0 0.0
    %2458 = vmatprep.subr.mxu0 0.0
    %2459 = vmatpush1.msra.mxu0 0.0
    %2460 = vmatprep.subr.mxu0 0.0
    %2461 = vmatpush1.msra.mxu0 0.0
    %2462 = vmatprep.subr.mxu0 0.0
    %2463 = vmatpush1.msra.mxu0 0.0
    %2464 = vmatprep.subr.mxu0 0.0
    %2465 = vmatpush1.msra.mxu0 0.0
    %2466 = vmatprep.subr.mxu0 0.0
    %2467 = vmatpush1.msra.mxu0 0.0
    %2468 = vmatprep.subr.mxu0 0.0
    %2469 = vmatpush1.msra.mxu0 0.0
    %2470 = vmatprep.subr.mxu0 0.0
    %2471 = vmatpush1.msra.mxu0 0.0
    %2472 = vmatprep.subr.mxu0 0.0
    %2473 = vmatpush1.msra.mxu0 0.0
    %2474 = vmatprep.subr.mxu0 0.0
    %2475 = vmatpush1.msra.mxu0 0.0
    %2476 = vmatprep.subr.mxu0 0.0
    %2477 = vmatpush1.msra.mxu0 0.0
    %2478 = vmatprep.subr.mxu0 0.0
    %2479 = vmatpush1.msra.mxu0 0.0
    %2480 = vmatprep.subr.mxu0 0.0
    %2481 = vmatpush1.msra.mxu0 0.0
    %2482 = vmatprep.subr.mxu0 0.0
    %2483 = vmatpush1.msra.mxu0 0.0
    %2484 = vmatprep.subr.mxu0 0.0
    %2485 = vmatpush1.msra.mxu0 0.0
    %2486 = vmatprep.subr.mxu0 0.0
    %2487 = vmatpush1.msra.mxu0 0.0
    %2488 = vmatprep.subr.mxu0 0.0
    %2489 = vmatpush1.msra.mxu0 0.0
    %2490 = vmatprep.subr.mxu0 0.0
    %2491 = vmatpush1.msra.mxu0 0.0
    %2492 = vmatprep.mubr.f32.mxu0 0.0
    %2493 = vmatmul.mubr.f32.gmra.mrb[0].mxu0 %v1996
    %v2494 = vpop.f32.mrb[0].mxu0
    %v2495 = vadd.f32 0.0, %v2494
    %v2496 = vpop.f32.mrb[0].mxu0
    %2497 = vmatprep.mubr.f32.mxu0 0.0
    %2498 = vmatmul.mubr.f32.gmra.mrb[0].mxu0 %v1999
    %v2499 = vpop.f32.mrb[0].mxu0
    %v2500 = vadd.f32 0.0, %v2499
    %v2501 = vpop.f32.mrb[0].mxu0
    %2502 = vdwg.mxu0
    %v2503 = vadd.f32 %v2419, %v2495
    %v2504 = vadd.f32 %v2420, %v2500
    %v2505 = vld [vmem:[%s842] sm:$0xff]
    %v2506 = vld [vmem:[%s842 + $0x8] sm:$0xff]
    %v2507 = vld [vmem:[%s842 + $0x10] sm:$0xff]
    %v2508 = vld [vmem:[%s842 + $0x18] sm:$0xf]
    %v2510 = vsel %vm64, %v2508, 0
    %2512 = vmatprep.subr.mxu0 0.0
    %2513 = vmatpush1.msra.mxu0 %v2505
    %2514 = vmatprep.subr.mxu0 0.0
    %2515 = vmatpush1.msra.mxu0 %v2506
    %2516 = vmatprep.subr.mxu0 0.0
    %2517 = vmatpush1.msra.mxu0 %v2507
    %2518 = vmatprep.subr.mxu0 0.0
    %2519 = vmatpush1.msra.mxu0 %v2510
    %2520 = vmatprep.subr.mxu0 0.0
    %2521 = vmatpush1.msra.mxu0 0.0
    %2522 = vmatprep.subr.mxu0 0.0
    %2523 = vmatpush1.msra.mxu0 0.0
    %2524 = vmatprep.subr.mxu0 0.0
    %2525 = vmatpush1.msra.mxu0 0.0
    %2526 = vmatprep.subr.mxu0 0.0
    %2527 = vmatpush1.msra.mxu0 0.0
    %2528 = vmatprep.subr.mxu0 0.0
    %2529 = vmatpush1.msra.mxu0 0.0
    %2530 = vmatprep.subr.mxu0 0.0
    %2531 = vmatpush1.msra.mxu0 0.0
    %2532 = vmatprep.subr.mxu0 0.0
    %2533 = vmatpush1.msra.mxu0 0.0
    %2534 = vmatprep.subr.mxu0 0.0
    %2535 = vmatpush1.msra.mxu0 0.0
    %2536 = vmatprep.subr.mxu0 0.0
    %2537 = vmatpush1.msra.mxu0 0.0
    %2538 = vmatprep.subr.mxu0 0.0
    %2539 = vmatpush1.msra.mxu0 0.0
    %2540 = vmatprep.subr.mxu0 0.0
    %2541 = vmatpush1.msra.mxu0 0.0
    %2542 = vmatprep.subr.mxu0 0.0
    %2543 = vmatpush1.msra.mxu0 0.0
    %2544 = vmatprep.subr.mxu0 0.0
    %2545 = vmatpush1.msra.mxu0 0.0
    %2546 = vmatprep.subr.mxu0 0.0
    %2547 = vmatpush1.msra.mxu0 0.0
    %2548 = vmatprep.subr.mxu0 0.0
    %2549 = vmatpush1.msra.mxu0 0.0
    %2550 = vmatprep.subr.mxu0 0.0
    %2551 = vmatpush1.msra.mxu0 0.0
    %2552 = vmatprep.subr.mxu0 0.0
    %2553 = vmatpush1.msra.mxu0 0.0
    %2554 = vmatprep.subr.mxu0 0.0
    %2555 = vmatpush1.msra.mxu0 0.0
    %2556 = vmatprep.subr.mxu0 0.0
    %2557 = vmatpush1.msra.mxu0 0.0
    %2558 = vmatprep.subr.mxu0 0.0
    %2559 = vmatpush1.msra.mxu0 0.0
    %2560 = vmatprep.subr.mxu0 0.0
    %2561 = vmatpush1.msra.mxu0 0.0
    %2562 = vmatprep.subr.mxu0 0.0
    %2563 = vmatpush1.msra.mxu0 0.0
    %2564 = vmatprep.subr.mxu0 0.0
    %2565 = vmatpush1.msra.mxu0 0.0
    %2566 = vmatprep.subr.mxu0 0.0
    %2567 = vmatpush1.msra.mxu0 0.0
    %2568 = vmatprep.subr.mxu0 0.0
    %2569 = vmatpush1.msra.mxu0 0.0
    %2570 = vmatprep.subr.mxu0 0.0
    %2571 = vmatpush1.msra.mxu0 0.0
    %2572 = vmatprep.subr.mxu0 0.0
    %2573 = vmatpush1.msra.mxu0 0.0
    %2574 = vmatprep.subr.mxu0 0.0
    %2575 = vmatpush1.msra.mxu0 0.0
    %2576 = vmatprep.mubr.f32.mxu0 0.0
    %2577 = vmatmul.mubr.f32.gmra.mrb[0].mxu0 %v2088
    %v2578 = vpop.f32.mrb[0].mxu0
    %v2579 = vadd.f32 0.0, %v2578
    %v2580 = vpop.f32.mrb[0].mxu0
    %2581 = vmatprep.mubr.f32.mxu0 0.0
    %2582 = vmatmul.mubr.f32.gmra.mrb[0].mxu0 %v2091
    %v2583 = vpop.f32.mrb[0].mxu0
    %v2584 = vadd.f32 0.0, %v2583
    %v2585 = vpop.f32.mrb[0].mxu0
    %2586 = vdwg.mxu0
    %v2587 = vadd.f32 %v2503, %v2579
    %v2588 = vadd.f32 %v2504, %v2584
    %v2589 = vmax.f32 %v2171, %v2587
    %v2590 = vmax.f32 %v2172, %v2588
    %2591 = vmatprep.subr.mxu0 0.0
    %2592 = vmatpush1.msra.mxu0 %v1725
    %2593 = vmatprep.subr.mxu0 0.0
    %2594 = vmatpush1.msra.mxu0 %v1726
    %2595 = vmatprep.subr.mxu0 0.0
    %2596 = vmatpush1.msra.mxu0 %v1727
    %2597 = vmatprep.subr.mxu0 0.0
    %2598 = vmatpush1.msra.mxu0 %v1736
    %2599 = vmatprep.subr.mxu0 0.0
    %2600 = vmatpush1.msra.mxu0 0.0
    %2601 = vmatprep.subr.mxu0 0.0
    %2602 = vmatpush1.msra.mxu0 0.0
    %2603 = vmatprep.subr.mxu0 0.0
    %2604 = vmatpush1.msra.mxu0 0.0
    %2605 = vmatprep.subr.mxu0 0.0
    %2606 = vmatpush1.msra.mxu0 0.0
    %2607 = vmatprep.subr.mxu0 0.0
    %2608 = vmatpush1.msra.mxu0 0.0
    %2609 = vmatprep.subr.mxu0 0.0
    %2610 = vmatpush1.msra.mxu0 0.0
    %2611 = vmatprep.subr.mxu0 0.0
    %2612 = vmatpush1.msra.mxu0 0.0
    %2613 = vmatprep.subr.mxu0 0.0
    %2614 = vmatpush1.msra.mxu0 0.0
    %2615 = vmatprep.subr.mxu0 0.0
    %2616 = vmatpush1.msra.mxu0 0.0
    %2617 = vmatprep.subr.mxu0 0.0
    %2618 = vmatpush1.msra.mxu0 0.0
    %2619 = vmatprep.subr.mxu0 0.0
    %2620 = vmatpush1.msra.mxu0 0.0
    %2621 = vmatprep.subr.mxu0 0.0
    %2622 = vmatpush1.msra.mxu0 0.0
    %2623 = vmatprep.subr.mxu0 0.0
    %2624 = vmatpush1.msra.mxu0 0.0
    %2625 = vmatprep.subr.mxu0 0.0
    %2626 = vmatpush1.msra.mxu0 0.0
    %2627 = vmatprep.subr.mxu0 0.0
    %2628 = vmatpush1.msra.mxu0 0.0
    %2629 = vmatprep.subr.mxu0 0.0
    %2630 = vmatpush1.msra.mxu0 0.0
    %2631 = vmatprep.subr.mxu0 0.0
    %2632 = vmatpush1.msra.mxu0 0.0
    %2633 = vmatprep.subr.mxu0 0.0
    %2634 = vmatpush1.msra.mxu0 0.0
    %2635 = vmatprep.subr.mxu0 0.0
    %2636 = vmatpush1.msra.mxu0 0.0
    %2637 = vmatprep.subr.mxu0 0.0
    %2638 = vmatpush1.msra.mxu0 0.0
    %2639 = vmatprep.subr.mxu0 0.0
    %2640 = vmatpush1.msra.mxu0 0.0
    %2641 = vmatprep.subr.mxu0 0.0
    %2642 = vmatpush1.msra.mxu0 0.0
    %2643 = vmatprep.subr.mxu0 0.0
    %2644 = vmatpush1.msra.mxu0 0.0
    %2645 = vmatprep.subr.mxu0 0.0
    %2646 = vmatpush1.msra.mxu0 0.0
    %2647 = vmatprep.subr.mxu0 0.0
    %2648 = vmatpush1.msra.mxu0 0.0
    %2649 = vmatprep.subr.mxu0 0.0
    %2650 = vmatpush1.msra.mxu0 0.0
    %2651 = vmatprep.subr.mxu0 0.0
    %2652 = vmatpush1.msra.mxu0 0.0
    %2653 = vmatprep.subr.mxu0 0.0
    %2654 = vmatpush1.msra.mxu0 0.0
    %2655 = vmatprep.mubr.f32.mxu0 0.0
    %2656 = vmatmul.mubr.f32.gmra.mrb[0].mxu0 %v1904
    %v2657 = vpop.f32.mrb[0].mxu0
    %v2658 = vadd.f32 0.0, %v2657
    %v2659 = vpop.f32.mrb[0].mxu0
    %2660 = vmatprep.mubr.f32.mxu0 0.0
    %2661 = vmatmul.mubr.f32.gmra.mrb[0].mxu0 %v1907
    %v2662 = vpop.f32.mrb[0].mxu0
    %v2663 = vadd.f32 0.0, %v2662
    %v2664 = vpop.f32.mrb[0].mxu0
    %2665 = vdwg.mxu0
    %2666 = vmatprep.subr.mxu0 0.0
    %2667 = vmatpush1.msra.mxu0 %v1718
    %2668 = vmatprep.subr.mxu0 0.0
    %2669 = vmatpush1.msra.mxu0 %v1719
    %2670 = vmatprep.subr.mxu0 0.0
    %2671 = vmatpush1.msra.mxu0 %v1720
    %2672 = vmatprep.subr.mxu0 0.0
    %2673 = vmatpush1.msra.mxu0 %v1820
    %2674 = vmatprep.subr.mxu0 0.0
    %2675 = vmatpush1.msra.mxu0 0.0
    %2676 = vmatprep.subr.mxu0 0.0
    %2677 = vmatpush1.msra.mxu0 0.0
    %2678 = vmatprep.subr.mxu0 0.0
    %2679 = vmatpush1.msra.mxu0 0.0
    %2680 = vmatprep.subr.mxu0 0.0
    %2681 = vmatpush1.msra.mxu0 0.0
    %2682 = vmatprep.subr.mxu0 0.0
    %2683 = vmatpush1.msra.mxu0 0.0
    %2684 = vmatprep.subr.mxu0 0.0
    %2685 = vmatpush1.msra.mxu0 0.0
    %2686 = vmatprep.subr.mxu0 0.0
    %2687 = vmatpush1.msra.mxu0 0.0
    %2688 = vmatprep.subr.mxu0 0.0
    %2689 = vmatpush1.msra.mxu0 0.0
    %2690 = vmatprep.subr.mxu0 0.0
    %2691 = vmatpush1.msra.mxu0 0.0
    %2692 = vmatprep.subr.mxu0 0.0
    %2693 = vmatpush1.msra.mxu0 0.0
    %2694 = vmatprep.subr.mxu0 0.0
    %2695 = vmatpush1.msra.mxu0 0.0
    %2696 = vmatprep.subr.mxu0 0.0
    %2697 = vmatpush1.msra.mxu0 0.0
    %2698 = vmatprep.subr.mxu0 0.0
    %2699 = vmatpush1.msra.mxu0 0.0
    %2700 = vmatprep.subr.mxu0 0.0
    %2701 = vmatpush1.msra.mxu0 0.0
    %2702 = vmatprep.subr.mxu0 0.0
    %2703 = vmatpush1.msra.mxu0 0.0
    %2704 = vmatprep.subr.mxu0 0.0
    %2705 = vmatpush1.msra.mxu0 0.0
    %2706 = vmatprep.subr.mxu0 0.0
    %2707 = vmatpush1.msra.mxu0 0.0
    %2708 = vmatprep.subr.mxu0 0.0
    %2709 = vmatpush1.msra.mxu0 0.0
    %2710 = vmatprep.subr.mxu0 0.0
    %2711 = vmatpush1.msra.mxu0 0.0
    %2712 = vmatprep.subr.mxu0 0.0
    %2713 = vmatpush1.msra.mxu0 0.0
    %2714 = vmatprep.subr.mxu0 0.0
    %2715 = vmatpush1.msra.mxu0 0.0
    %2716 = vmatprep.subr.mxu0 0.0
    %2717 = vmatpush1.msra.mxu0 0.0
    %2718 = vmatprep.subr.mxu0 0.0
    %2719 = vmatpush1.msra.mxu0 0.0
    %2720 = vmatprep.subr.mxu0 0.0
    %2721 = vmatpush1.msra.mxu0 0.0
    %2722 = vmatprep.subr.mxu0 0.0
    %2723 = vmatpush1.msra.mxu0 0.0
    %2724 = vmatprep.subr.mxu0 0.0
    %2725 = vmatpush1.msra.mxu0 0.0
    %2726 = vmatprep.subr.mxu0 0.0
    %2727 = vmatpush1.msra.mxu0 0.0
    %2728 = vmatprep.subr.mxu0 0.0
    %2729 = vmatpush1.msra.mxu0 0.0
    %2730 = vmatprep.mubr.f32.mxu0 0.0
    %2731 = vmatmul.mubr.f32.gmra.mrb[0].mxu0 %v1730
    %v2732 = vpop.f32.mrb[0].mxu0
    %v2733 = vadd.f32 %v2658, %v2732
    %v2734 = vpop.f32.mrb[0].mxu0
    %2735 = vmatprep.mubr.f32.mxu0 0.0
    %2736 = vmatmul.mubr.f32.gmra.mrb[0].mxu0 %v1733
    %v2737 = vpop.f32.mrb[0].mxu0
    %v2738 = vadd.f32 %v2663, %v2737
    %v2739 = vpop.f32.mrb[0].mxu0
    %2740 = vdwg.mxu0
    %2741 = vmatprep.subr.mxu0 0.0
    %2742 = vmatpush1.msra.mxu0 %v1899
    %2743 = vmatprep.subr.mxu0 0.0
    %2744 = vmatpush1.msra.mxu0 %v1900
    %2745 = vmatprep.subr.mxu0 0.0
    %2746 = vmatpush1.msra.mxu0 %v1901
    %2747 = vmatprep.subr.mxu0 0.0
    %2748 = vmatpush1.msra.mxu0 %v1910
    %2749 = vmatprep.subr.mxu0 0.0
    %2750 = vmatpush1.msra.mxu0 0.0
    %2751 = vmatprep.subr.mxu0 0.0
    %2752 = vmatpush1.msra.mxu0 0.0
    %2753 = vmatprep.subr.mxu0 0.0
    %2754 = vmatpush1.msra.mxu0 0.0
    %2755 = vmatprep.subr.mxu0 0.0
    %2756 = vmatpush1.msra.mxu0 0.0
    %2757 = vmatprep.subr.mxu0 0.0
    %2758 = vmatpush1.msra.mxu0 0.0
    %2759 = vmatprep.subr.mxu0 0.0
    %2760 = vmatpush1.msra.mxu0 0.0
    %2761 = vmatprep.subr.mxu0 0.0
    %2762 = vmatpush1.msra.mxu0 0.0
    %2763 = vmatprep.subr.mxu0 0.0
    %2764 = vmatpush1.msra.mxu0 0.0
    %2765 = vmatprep.subr.mxu0 0.0
    %2766 = vmatpush1.msra.mxu0 0.0
    %2767 = vmatprep.subr.mxu0 0.0
    %2768 = vmatpush1.msra.mxu0 0.0
    %2769 = vmatprep.subr.mxu0 0.0
    %2770 = vmatpush1.msra.mxu0 0.0
    %2771 = vmatprep.subr.mxu0 0.0
    %2772 = vmatpush1.msra.mxu0 0.0
    %2773 = vmatprep.subr.mxu0 0.0
    %2774 = vmatpush1.msra.mxu0 0.0
    %2775 = vmatprep.subr.mxu0 0.0
    %2776 = vmatpush1.msra.mxu0 0.0
    %2777 = vmatprep.subr.mxu0 0.0
    %2778 = vmatpush1.msra.mxu0 0.0
    %2779 = vmatprep.subr.mxu0 0.0
    %2780 = vmatpush1.msra.mxu0 0.0
    %2781 = vmatprep.subr.mxu0 0.0
    %2782 = vmatpush1.msra.mxu0 0.0
    %2783 = vmatprep.subr.mxu0 0.0
    %2784 = vmatpush1.msra.mxu0 0.0
    %2785 = vmatprep.subr.mxu0 0.0
    %2786 = vmatpush1.msra.mxu0 0.0
    %2787 = vmatprep.subr.mxu0 0.0
    %2788 = vmatpush1.msra.mxu0 0.0
    %2789 = vmatprep.subr.mxu0 0.0
    %2790 = vmatpush1.msra.mxu0 0.0
    %2791 = vmatprep.subr.mxu0 0.0
    %2792 = vmatpush1.msra.mxu0 0.0
    %2793 = vmatprep.subr.mxu0 0.0
    %2794 = vmatpush1.msra.mxu0 0.0
    %2795 = vmatprep.subr.mxu0 0.0
    %2796 = vmatpush1.msra.mxu0 0.0
    %2797 = vmatprep.subr.mxu0 0.0
    %2798 = vmatpush1.msra.mxu0 0.0
    %2799 = vmatprep.subr.mxu0 0.0
    %2800 = vmatpush1.msra.mxu0 0.0
    %2801 = vmatprep.subr.mxu0 0.0
    %2802 = vmatpush1.msra.mxu0 0.0
    %2803 = vmatprep.subr.mxu0 0.0
    %2804 = vmatpush1.msra.mxu0 0.0
    %2805 = vmatprep.mubr.f32.mxu0 0.0
    %2806 = vmatmul.mubr.f32.gmra.mrb[0].mxu0 %v1996
    %v2807 = vpop.f32.mrb[0].mxu0
    %v2808 = vadd.f32 0.0, %v2807
    %v2809 = vpop.f32.mrb[0].mxu0
    %2810 = vmatprep.mubr.f32.mxu0 0.0
    %2811 = vmatmul.mubr.f32.gmra.mrb[0].mxu0 %v1999
    %v2812 = vpop.f32.mrb[0].mxu0
    %v2813 = vadd.f32 0.0, %v2812
    %v2814 = vpop.f32.mrb[0].mxu0
    %2815 = vdwg.mxu0
    %v2816 = vadd.f32 %v2733, %v2808
    %v2817 = vadd.f32 %v2738, %v2813
    %2818 = vmatprep.subr.mxu0 0.0
    %2819 = vmatpush1.msra.mxu0 %v1991
    %2820 = vmatprep.subr.mxu0 0.0
    %2821 = vmatpush1.msra.mxu0 %v1992
    %2822 = vmatprep.subr.mxu0 0.0
    %2823 = vmatpush1.msra.mxu0 %v1993
    %2824 = vmatprep.subr.mxu0 0.0
    %2825 = vmatpush1.msra.mxu0 %v2002
    %2826 = vmatprep.subr.mxu0 0.0
    %2827 = vmatpush1.msra.mxu0 0.0
    %2828 = vmatprep.subr.mxu0 0.0
    %2829 = vmatpush1.msra.mxu0 0.0
    %2830 = vmatprep.subr.mxu0 0.0
    %2831 = vmatpush1.msra.mxu0 0.0
    %2832 = vmatprep.subr.mxu0 0.0
    %2833 = vmatpush1.msra.mxu0 0.0
    %2834 = vmatprep.subr.mxu0 0.0
    %2835 = vmatpush1.msra.mxu0 0.0
    %2836 = vmatprep.subr.mxu0 0.0
    %2837 = vmatpush1.msra.mxu0 0.0
    %2838 = vmatprep.subr.mxu0 0.0
    %2839 = vmatpush1.msra.mxu0 0.0
    %2840 = vmatprep.subr.mxu0 0.0
    %2841 = vmatpush1.msra.mxu0 0.0
    %2842 = vmatprep.subr.mxu0 0.0
    %2843 = vmatpush1.msra.mxu0 0.0
    %2844 = vmatprep.subr.mxu0 0.0
    %2845 = vmatpush1.msra.mxu0 0.0
    %2846 = vmatprep.subr.mxu0 0.0
    %2847 = vmatpush1.msra.mxu0 0.0
    %2848 = vmatprep.subr.mxu0 0.0
    %2849 = vmatpush1.msra.mxu0 0.0
    %2850 = vmatprep.subr.mxu0 0.0
    %2851 = vmatpush1.msra.mxu0 0.0
    %2852 = vmatprep.subr.mxu0 0.0
    %2853 = vmatpush1.msra.mxu0 0.0
    %2854 = vmatprep.subr.mxu0 0.0
    %2855 = vmatpush1.msra.mxu0 0.0
    %2856 = vmatprep.subr.mxu0 0.0
    %2857 = vmatpush1.msra.mxu0 0.0
    %2858 = vmatprep.subr.mxu0 0.0
    %2859 = vmatpush1.msra.mxu0 0.0
    %2860 = vmatprep.subr.mxu0 0.0
    %2861 = vmatpush1.msra.mxu0 0.0
    %2862 = vmatprep.subr.mxu0 0.0
    %2863 = vmatpush1.msra.mxu0 0.0
    %2864 = vmatprep.subr.mxu0 0.0
    %2865 = vmatpush1.msra.mxu0 0.0
    %2866 = vmatprep.subr.mxu0 0.0
    %2867 = vmatpush1.msra.mxu0 0.0
    %2868 = vmatprep.subr.mxu0 0.0
    %2869 = vmatpush1.msra.mxu0 0.0
    %2870 = vmatprep.subr.mxu0 0.0
    %2871 = vmatpush1.msra.mxu0 0.0
    %2872 = vmatprep.subr.mxu0 0.0
    %2873 = vmatpush1.msra.mxu0 0.0
    %2874 = vmatprep.subr.mxu0 0.0
    %2875 = vmatpush1.msra.mxu0 0.0
    %2876 = vmatprep.subr.mxu0 0.0
    %2877 = vmatpush1.msra.mxu0 0.0
    %2878 = vmatprep.subr.mxu0 0.0
    %2879 = vmatpush1.msra.mxu0 0.0
    %2880 = vmatprep.subr.mxu0 0.0
    %2881 = vmatpush1.msra.mxu0 0.0
    %2882 = vmatprep.mubr.f32.mxu0 0.0
    %2883 = vmatmul.mubr.f32.gmra.mrb[0].mxu0 %v2088
    %v2884 = vpop.f32.mrb[0].mxu0
    %v2885 = vadd.f32 0.0, %v2884
    %v2886 = vpop.f32.mrb[0].mxu0
    %2887 = vmatprep.mubr.f32.mxu0 0.0
    %2888 = vmatmul.mubr.f32.gmra.mrb[0].mxu0 %v2091
    %v2889 = vpop.f32.mrb[0].mxu0
    %v2890 = vadd.f32 0.0, %v2889
    %v2891 = vpop.f32.mrb[0].mxu0
    %2892 = vdwg.mxu0
    %v2893 = vadd.f32 %v2816, %v2885
    %v2894 = vadd.f32 %v2817, %v2890
    %v2895 = vld [vmem:[%s1722 + $0x2] sm:$0xff]
    %v2896 = vld [vmem:[%s1722 + $0xa] sm:$0xf]
    %v2898 = vsel %vm57, %v2895, 0
    %v2901 = vsel %vm57, %v2896, 0
    %2903 = vmatprep.subr.mxu0 0.0
    %2904 = vmatpush1.msra.mxu0 %v2083
    %2905 = vmatprep.subr.mxu0 0.0
    %2906 = vmatpush1.msra.mxu0 %v2084
    %2907 = vmatprep.subr.mxu0 0.0
    %2908 = vmatpush1.msra.mxu0 %v2085
    %2909 = vmatprep.subr.mxu0 0.0
    %2910 = vmatpush1.msra.mxu0 %v2094
    %2911 = vmatprep.subr.mxu0 0.0
    %2912 = vmatpush1.msra.mxu0 0.0
    %2913 = vmatprep.subr.mxu0 0.0
    %2914 = vmatpush1.msra.mxu0 0.0
    %2915 = vmatprep.subr.mxu0 0.0
    %2916 = vmatpush1.msra.mxu0 0.0
    %2917 = vmatprep.subr.mxu0 0.0
    %2918 = vmatpush1.msra.mxu0 0.0
    %2919 = vmatprep.subr.mxu0 0.0
    %2920 = vmatpush1.msra.mxu0 0.0
    %2921 = vmatprep.subr.mxu0 0.0
    %2922 = vmatpush1.msra.mxu0 0.0
    %2923 = vmatprep.subr.mxu0 0.0
    %2924 = vmatpush1.msra.mxu0 0.0
    %2925 = vmatprep.subr.mxu0 0.0
    %2926 = vmatpush1.msra.mxu0 0.0
    %2927 = vmatprep.subr.mxu0 0.0
    %2928 = vmatpush1.msra.mxu0 0.0
    %2929 = vmatprep.subr.mxu0 0.0
    %2930 = vmatpush1.msra.mxu0 0.0
    %2931 = vmatprep.subr.mxu0 0.0
    %2932 = vmatpush1.msra.mxu0 0.0
    %2933 = vmatprep.subr.mxu0 0.0
    %2934 = vmatpush1.msra.mxu0 0.0
    %2935 = vmatprep.subr.mxu0 0.0
    %2936 = vmatpush1.msra.mxu0 0.0
    %2937 = vmatprep.subr.mxu0 0.0
    %2938 = vmatpush1.msra.mxu0 0.0
    %2939 = vmatprep.subr.mxu0 0.0
    %2940 = vmatpush1.msra.mxu0 0.0
    %2941 = vmatprep.subr.mxu0 0.0
    %2942 = vmatpush1.msra.mxu0 0.0
    %2943 = vmatprep.subr.mxu0 0.0
    %2944 = vmatpush1.msra.mxu0 0.0
    %2945 = vmatprep.subr.mxu0 0.0
    %2946 = vmatpush1.msra.mxu0 0.0
    %2947 = vmatprep.subr.mxu0 0.0
    %2948 = vmatpush1.msra.mxu0 0.0
    %2949 = vmatprep.subr.mxu0 0.0
    %2950 = vmatpush1.msra.mxu0 0.0
    %2951 = vmatprep.subr.mxu0 0.0
    %2952 = vmatpush1.msra.mxu0 0.0
    %2953 = vmatprep.subr.mxu0 0.0
    %2954 = vmatpush1.msra.mxu0 0.0
    %2955 = vmatprep.subr.mxu0 0.0
    %2956 = vmatpush1.msra.mxu0 0.0
    %2957 = vmatprep.subr.mxu0 0.0
    %2958 = vmatpush1.msra.mxu0 0.0
    %2959 = vmatprep.subr.mxu0 0.0
    %2960 = vmatpush1.msra.mxu0 0.0
    %2961 = vmatprep.subr.mxu0 0.0
    %2962 = vmatpush1.msra.mxu0 0.0
    %2963 = vmatprep.subr.mxu0 0.0
    %2964 = vmatpush1.msra.mxu0 0.0
    %2965 = vmatprep.subr.mxu0 0.0
    %2966 = vmatpush1.msra.mxu0 0.0
    %2967 = vmatprep.mubr.f32.mxu0 0.0
    %2968 = vmatmul.mubr.f32.gmra.mrb[0].mxu0 %v2898
    %v2969 = vpop.f32.mrb[0].mxu0
    %v2970 = vadd.f32 0.0, %v2969
    %v2971 = vpop.f32.mrb[0].mxu0
    %2972 = vmatprep.mubr.f32.mxu0 0.0
    %2973 = vmatmul.mubr.f32.gmra.mrb[0].mxu0 %v2901
    %v2974 = vpop.f32.mrb[0].mxu0
    %v2975 = vadd.f32 0.0, %v2974
    %v2976 = vpop.f32.mrb[0].mxu0
    %2977 = vdwg.mxu0
    %v2978 = vadd.f32 %v2893, %v2970
    %v2979 = vadd.f32 %v2894, %v2975
    %v2980 = vmax.f32 %v2589, %v2978
    %v2981 = vmax.f32 %v2590, %v2979
    %2982 = vmatprep.subr.mxu0 0.0
    %2983 = vmatpush1.msra.mxu0 %v2177
    %2984 = vmatprep.subr.mxu0 0.0
    %2985 = vmatpush1.msra.mxu0 %v2178
    %2986 = vmatprep.subr.mxu0 0.0
    %2987 = vmatpush1.msra.mxu0 %v2179
    %2988 = vmatprep.subr.mxu0 0.0
    %2989 = vmatpush1.msra.mxu0 %v2182
    %2990 = vmatprep.subr.mxu0 0.0
    %2991 = vmatpush1.msra.mxu0 0.0
    %2992 = vmatprep.subr.mxu0 0.0
    %2993 = vmatpush1.msra.mxu0 0.0
    %2994 = vmatprep.subr.mxu0 0.0
    %2995 = vmatpush1.msra.mxu0 0.0
    %2996 = vmatprep.subr.mxu0 0.0
    %2997 = vmatpush1.msra.mxu0 0.0
    %2998 = vmatprep.subr.mxu0 0.0
    %2999 = vmatpush1.msra.mxu0 0.0
    %3000 = vmatprep.subr.mxu0 0.0
    %3001 = vmatpush1.msra.mxu0 0.0
    %3002 = vmatprep.subr.mxu0 0.0
    %3003 = vmatpush1.msra.mxu0 0.0
    %3004 = vmatprep.subr.mxu0 0.0
    %3005 = vmatpush1.msra.mxu0 0.0
    %3006 = vmatprep.subr.mxu0 0.0
    %3007 = vmatpush1.msra.mxu0 0.0
    %3008 = vmatprep.subr.mxu0 0.0
    %3009 = vmatpush1.msra.mxu0 0.0
    %3010 = vmatprep.subr.mxu0 0.0
    %3011 = vmatpush1.msra.mxu0 0.0
    %3012 = vmatprep.subr.mxu0 0.0
    %3013 = vmatpush1.msra.mxu0 0.0
    %3014 = vmatprep.subr.mxu0 0.0
    %3015 = vmatpush1.msra.mxu0 0.0
    %3016 = vmatprep.subr.mxu0 0.0
    %3017 = vmatpush1.msra.mxu0 0.0
    %3018 = vmatprep.subr.mxu0 0.0
    %3019 = vmatpush1.msra.mxu0 0.0
    %3020 = vmatprep.subr.mxu0 0.0
    %3021 = vmatpush1.msra.mxu0 0.0
    %3022 = vmatprep.subr.mxu0 0.0
    %3023 = vmatpush1.msra.mxu0 0.0
    %3024 = vmatprep.subr.mxu0 0.0
    %3025 = vmatpush1.msra.mxu0 0.0
    %3026 = vmatprep.subr.mxu0 0.0
    %3027 = vmatpush1.msra.mxu0 0.0
    %3028 = vmatprep.subr.mxu0 0.0
    %3029 = vmatpush1.msra.mxu0 0.0
    %3030 = vmatprep.subr.mxu0 0.0
    %3031 = vmatpush1.msra.mxu0 0.0
    %3032 = vmatprep.subr.mxu0 0.0
    %3033 = vmatpush1.msra.mxu0 0.0
    %3034 = vmatprep.subr.mxu0 0.0
    %3035 = vmatpush1.msra.mxu0 0.0
    %3036 = vmatprep.subr.mxu0 0.0
    %3037 = vmatpush1.msra.mxu0 0.0
    %3038 = vmatprep.subr.mxu0 0.0
    %3039 = vmatpush1.msra.mxu0 0.0
    %3040 = vmatprep.subr.mxu0 0.0
    %3041 = vmatpush1.msra.mxu0 0.0
    %3042 = vmatprep.subr.mxu0 0.0
    %3043 = vmatpush1.msra.mxu0 0.0
    %3044 = vmatprep.subr.mxu0 0.0
    %3045 = vmatpush1.msra.mxu0 0.0
    %3046 = vmatprep.mubr.f32.mxu0 0.0
    %3047 = vmatmul.mubr.f32.gmra.mrb[0].mxu0 %v1904
    %v3048 = vpop.f32.mrb[0].mxu0
    %v3049 = vadd.f32 0.0, %v3048
    %v3050 = vpop.f32.mrb[0].mxu0
    %3051 = vmatprep.mubr.f32.mxu0 0.0
    %3052 = vmatmul.mubr.f32.gmra.mrb[0].mxu0 %v1907
    %v3053 = vpop.f32.mrb[0].mxu0
    %v3054 = vadd.f32 0.0, %v3053
    %v3055 = vpop.f32.mrb[0].mxu0
    %3056 = vdwg.mxu0
    %3057 = vmatprep.subr.mxu0 0.0
    %3058 = vmatpush1.msra.mxu0 %v2173
    %3059 = vmatprep.subr.mxu0 0.0
    %3060 = vmatpush1.msra.mxu0 %v2174
    %3061 = vmatprep.subr.mxu0 0.0
    %3062 = vmatpush1.msra.mxu0 %v2175
    %3063 = vmatprep.subr.mxu0 0.0
    %3064 = vmatpush1.msra.mxu0 %v2260
    %3065 = vmatprep.subr.mxu0 0.0
    %3066 = vmatpush1.msra.mxu0 0.0
    %3067 = vmatprep.subr.mxu0 0.0
    %3068 = vmatpush1.msra.mxu0 0.0
    %3069 = vmatprep.subr.mxu0 0.0
    %3070 = vmatpush1.msra.mxu0 0.0
    %3071 = vmatprep.subr.mxu0 0.0
    %3072 = vmatpush1.msra.mxu0 0.0
    %3073 = vmatprep.subr.mxu0 0.0
    %3074 = vmatpush1.msra.mxu0 0.0
    %3075 = vmatprep.subr.mxu0 0.0
    %3076 = vmatpush1.msra.mxu0 0.0
    %3077 = vmatprep.subr.mxu0 0.0
    %3078 = vmatpush1.msra.mxu0 0.0
    %3079 = vmatprep.subr.mxu0 0.0
    %3080 = vmatpush1.msra.mxu0 0.0
    %3081 = vmatprep.subr.mxu0 0.0
    %3082 = vmatpush1.msra.mxu0 0.0
    %3083 = vmatprep.subr.mxu0 0.0
    %3084 = vmatpush1.msra.mxu0 0.0
    %3085 = vmatprep.subr.mxu0 0.0
    %3086 = vmatpush1.msra.mxu0 0.0
    %3087 = vmatprep.subr.mxu0 0.0
    %3088 = vmatpush1.msra.mxu0 0.0
    %3089 = vmatprep.subr.mxu0 0.0
    %3090 = vmatpush1.msra.mxu0 0.0
    %3091 = vmatprep.subr.mxu0 0.0
    %3092 = vmatpush1.msra.mxu0 0.0
    %3093 = vmatprep.subr.mxu0 0.0
    %3094 = vmatpush1.msra.mxu0 0.0
    %3095 = vmatprep.subr.mxu0 0.0
    %3096 = vmatpush1.msra.mxu0 0.0
    %3097 = vmatprep.subr.mxu0 0.0
    %3098 = vmatpush1.msra.mxu0 0.0
    %3099 = vmatprep.subr.mxu0 0.0
    %3100 = vmatpush1.msra.mxu0 0.0
    %3101 = vmatprep.subr.mxu0 0.0
    %3102 = vmatpush1.msra.mxu0 0.0
    %3103 = vmatprep.subr.mxu0 0.0
    %3104 = vmatpush1.msra.mxu0 0.0
    %3105 = vmatprep.subr.mxu0 0.0
    %3106 = vmatpush1.msra.mxu0 0.0
    %3107 = vmatprep.subr.mxu0 0.0
    %3108 = vmatpush1.msra.mxu0 0.0
    %3109 = vmatprep.subr.mxu0 0.0
    %3110 = vmatpush1.msra.mxu0 0.0
    %3111 = vmatprep.subr.mxu0 0.0
    %3112 = vmatpush1.msra.mxu0 0.0
    %3113 = vmatprep.subr.mxu0 0.0
    %3114 = vmatpush1.msra.mxu0 0.0
    %3115 = vmatprep.subr.mxu0 0.0
    %3116 = vmatpush1.msra.mxu0 0.0
    %3117 = vmatprep.subr.mxu0 0.0
    %3118 = vmatpush1.msra.mxu0 0.0
    %3119 = vmatprep.subr.mxu0 0.0
    %3120 = vmatpush1.msra.mxu0 0.0
    %3121 = vmatprep.mubr.f32.mxu0 0.0
    %3122 = vmatmul.mubr.f32.gmra.mrb[0].mxu0 %v1730
    %v3123 = vpop.f32.mrb[0].mxu0
    %v3124 = vadd.f32 %v3049, %v3123
    %v3125 = vpop.f32.mrb[0].mxu0
    %3126 = vmatprep.mubr.f32.mxu0 0.0
    %3127 = vmatmul.mubr.f32.gmra.mrb[0].mxu0 %v1733
    %v3128 = vpop.f32.mrb[0].mxu0
    %v3129 = vadd.f32 %v3054, %v3128
    %v3130 = vpop.f32.mrb[0].mxu0
    %3131 = vdwg.mxu0
    %3132 = vmatprep.subr.mxu0 0.0
    %3133 = vmatpush1.msra.mxu0 %v2337
    %3134 = vmatprep.subr.mxu0 0.0
    %3135 = vmatpush1.msra.mxu0 %v2338
    %3136 = vmatprep.subr.mxu0 0.0
    %3137 = vmatpush1.msra.mxu0 %v2339
    %3138 = vmatprep.subr.mxu0 0.0
    %3139 = vmatpush1.msra.mxu0 %v2342
    %3140 = vmatprep.subr.mxu0 0.0
    %3141 = vmatpush1.msra.mxu0 0.0
    %3142 = vmatprep.subr.mxu0 0.0
    %3143 = vmatpush1.msra.mxu0 0.0
    %3144 = vmatprep.subr.mxu0 0.0
    %3145 = vmatpush1.msra.mxu0 0.0
    %3146 = vmatprep.subr.mxu0 0.0
    %3147 = vmatpush1.msra.mxu0 0.0
    %3148 = vmatprep.subr.mxu0 0.0
    %3149 = vmatpush1.msra.mxu0 0.0
    %3150 = vmatprep.subr.mxu0 0.0
    %3151 = vmatpush1.msra.mxu0 0.0
    %3152 = vmatprep.subr.mxu0 0.0
    %3153 = vmatpush1.msra.mxu0 0.0
    %3154 = vmatprep.subr.mxu0 0.0
    %3155 = vmatpush1.msra.mxu0 0.0
    %3156 = vmatprep.subr.mxu0 0.0
    %3157 = vmatpush1.msra.mxu0 0.0
    %3158 = vmatprep.subr.mxu0 0.0
    %3159 = vmatpush1.msra.mxu0 0.0
    %3160 = vmatprep.subr.mxu0 0.0
    %3161 = vmatpush1.msra.mxu0 0.0
    %3162 = vmatprep.subr.mxu0 0.0
    %3163 = vmatpush1.msra.mxu0 0.0
    %3164 = vmatprep.subr.mxu0 0.0
    %3165 = vmatpush1.msra.mxu0 0.0
    %3166 = vmatprep.subr.mxu0 0.0
    %3167 = vmatpush1.msra.mxu0 0.0
    %3168 = vmatprep.subr.mxu0 0.0
    %3169 = vmatpush1.msra.mxu0 0.0
    %3170 = vmatprep.subr.mxu0 0.0
    %3171 = vmatpush1.msra.mxu0 0.0
    %3172 = vmatprep.subr.mxu0 0.0
    %3173 = vmatpush1.msra.mxu0 0.0
    %3174 = vmatprep.subr.mxu0 0.0
    %3175 = vmatpush1.msra.mxu0 0.0
    %3176 = vmatprep.subr.mxu0 0.0
    %3177 = vmatpush1.msra.mxu0 0.0
    %3178 = vmatprep.subr.mxu0 0.0
    %3179 = vmatpush1.msra.mxu0 0.0
    %3180 = vmatprep.subr.mxu0 0.0
    %3181 = vmatpush1.msra.mxu0 0.0
    %3182 = vmatprep.subr.mxu0 0.0
    %3183 = vmatpush1.msra.mxu0 0.0
    %3184 = vmatprep.subr.mxu0 0.0
    %3185 = vmatpush1.msra.mxu0 0.0
    %3186 = vmatprep.subr.mxu0 0.0
    %3187 = vmatpush1.msra.mxu0 0.0
    %3188 = vmatprep.subr.mxu0 0.0
    %3189 = vmatpush1.msra.mxu0 0.0
    %3190 = vmatprep.subr.mxu0 0.0
    %3191 = vmatpush1.msra.mxu0 0.0
    %3192 = vmatprep.subr.mxu0 0.0
    %3193 = vmatpush1.msra.mxu0 0.0
    %3194 = vmatprep.subr.mxu0 0.0
    %3195 = vmatpush1.msra.mxu0 0.0
    %3196 = vmatprep.mubr.f32.mxu0 0.0
    %3197 = vmatmul.mubr.f32.gmra.mrb[0].mxu0 %v1996
    %v3198 = vpop.f32.mrb[0].mxu0
    %v3199 = vadd.f32 0.0, %v3198
    %v3200 = vpop.f32.mrb[0].mxu0
    %3201 = vmatprep.mubr.f32.mxu0 0.0
    %3202 = vmatmul.mubr.f32.gmra.mrb[0].mxu0 %v1999
    %v3203 = vpop.f32.mrb[0].mxu0
    %v3204 = vadd.f32 0.0, %v3203
    %v3205 = vpop.f32.mrb[0].mxu0
    %3206 = vdwg.mxu0
    %v3207 = vadd.f32 %v3124, %v3199
    %v3208 = vadd.f32 %v3129, %v3204
    %3209 = vmatprep.subr.mxu0 0.0
    %3210 = vmatpush1.msra.mxu0 %v2421
    %3211 = vmatprep.subr.mxu0 0.0
    %3212 = vmatpush1.msra.mxu0 %v2422
    %3213 = vmatprep.subr.mxu0 0.0
    %3214 = vmatpush1.msra.mxu0 %v2423
    %3215 = vmatprep.subr.mxu0 0.0
    %3216 = vmatpush1.msra.mxu0 %v2426
    %3217 = vmatprep.subr.mxu0 0.0
    %3218 = vmatpush1.msra.mxu0 0.0
    %3219 = vmatprep.subr.mxu0 0.0
    %3220 = vmatpush1.msra.mxu0 0.0
    %3221 = vmatprep.subr.mxu0 0.0
    %3222 = vmatpush1.msra.mxu0 0.0
    %3223 = vmatprep.subr.mxu0 0.0
    %3224 = vmatpush1.msra.mxu0 0.0
    %3225 = vmatprep.subr.mxu0 0.0
    %3226 = vmatpush1.msra.mxu0 0.0
    %3227 = vmatprep.subr.mxu0 0.0
    %3228 = vmatpush1.msra.mxu0 0.0
    %3229 = vmatprep.subr.mxu0 0.0
    %3230 = vmatpush1.msra.mxu0 0.0
    %3231 = vmatprep.subr.mxu0 0.0
    %3232 = vmatpush1.msra.mxu0 0.0
    %3233 = vmatprep.subr.mxu0 0.0
    %3234 = vmatpush1.msra.mxu0 0.0
    %3235 = vmatprep.subr.mxu0 0.0
    %3236 = vmatpush1.msra.mxu0 0.0
    %3237 = vmatprep.subr.mxu0 0.0
    %3238 = vmatpush1.msra.mxu0 0.0
    %3239 = vmatprep.subr.mxu0 0.0
    %3240 = vmatpush1.msra.mxu0 0.0
    %3241 = vmatprep.subr.mxu0 0.0
    %3242 = vmatpush1.msra.mxu0 0.0
    %3243 = vmatprep.subr.mxu0 0.0
    %3244 = vmatpush1.msra.mxu0 0.0
    %3245 = vmatprep.subr.mxu0 0.0
    %3246 = vmatpush1.msra.mxu0 0.0
    %3247 = vmatprep.subr.mxu0 0.0
    %3248 = vmatpush1.msra.mxu0 0.0
    %3249 = vmatprep.subr.mxu0 0.0
    %3250 = vmatpush1.msra.mxu0 0.0
    %3251 = vmatprep.subr.mxu0 0.0
    %3252 = vmatpush1.msra.mxu0 0.0
    %3253 = vmatprep.subr.mxu0 0.0
    %3254 = vmatpush1.msra.mxu0 0.0
    %3255 = vmatprep.subr.mxu0 0.0
    %3256 = vmatpush1.msra.mxu0 0.0
    %3257 = vmatprep.subr.mxu0 0.0
    %3258 = vmatpush1.msra.mxu0 0.0
    %3259 = vmatprep.subr.mxu0 0.0
    %3260 = vmatpush1.msra.mxu0 0.0
    %3261 = vmatprep.subr.mxu0 0.0
    %3262 = vmatpush1.msra.mxu0 0.0
    %3263 = vmatprep.subr.mxu0 0.0
    %3264 = vmatpush1.msra.mxu0 0.0
    %3265 = vmatprep.subr.mxu0 0.0
    %3266 = vmatpush1.msra.mxu0 0.0
    %3267 = vmatprep.subr.mxu0 0.0
    %3268 = vmatpush1.msra.mxu0 0.0
    %3269 = vmatprep.subr.mxu0 0.0
    %3270 = vmatpush1.msra.mxu0 0.0
    %3271 = vmatprep.subr.mxu0 0.0
    %3272 = vmatpush1.msra.mxu0 0.0
    %3273 = vmatprep.mubr.f32.mxu0 0.0
    %3274 = vmatmul.mubr.f32.gmra.mrb[0].mxu0 %v2088
    %v3275 = vpop.f32.mrb[0].mxu0
    %v3276 = vadd.f32 0.0, %v3275
    %v3277 = vpop.f32.mrb[0].mxu0
    %3278 = vmatprep.mubr.f32.mxu0 0.0
    %3279 = vmatmul.mubr.f32.gmra.mrb[0].mxu0 %v2091
    %v3280 = vpop.f32.mrb[0].mxu0
    %v3281 = vadd.f32 0.0, %v3280
    %v3282 = vpop.f32.mrb[0].mxu0
    %3283 = vdwg.mxu0
    %v3284 = vadd.f32 %v3207, %v3276
    %v3285 = vadd.f32 %v3208, %v3281
    %3286 = vmatprep.subr.mxu0 0.0
    %3287 = vmatpush1.msra.mxu0 %v2505
    %3288 = vmatprep.subr.mxu0 0.0
    %3289 = vmatpush1.msra.mxu0 %v2506
    %3290 = vmatprep.subr.mxu0 0.0
    %3291 = vmatpush1.msra.mxu0 %v2507
    %3292 = vmatprep.subr.mxu0 0.0
    %3293 = vmatpush1.msra.mxu0 %v2510
    %3294 = vmatprep.subr.mxu0 0.0
    %3295 = vmatpush1.msra.mxu0 0.0
    %3296 = vmatprep.subr.mxu0 0.0
    %3297 = vmatpush1.msra.mxu0 0.0
    %3298 = vmatprep.subr.mxu0 0.0
    %3299 = vmatpush1.msra.mxu0 0.0
    %3300 = vmatprep.subr.mxu0 0.0
    %3301 = vmatpush1.msra.mxu0 0.0
    %3302 = vmatprep.subr.mxu0 0.0
    %3303 = vmatpush1.msra.mxu0 0.0
    %3304 = vmatprep.subr.mxu0 0.0
    %3305 = vmatpush1.msra.mxu0 0.0
    %3306 = vmatprep.subr.mxu0 0.0
    %3307 = vmatpush1.msra.mxu0 0.0
    %3308 = vmatprep.subr.mxu0 0.0
    %3309 = vmatpush1.msra.mxu0 0.0
    %3310 = vmatprep.subr.mxu0 0.0
    %3311 = vmatpush1.msra.mxu0 0.0
    %3312 = vmatprep.subr.mxu0 0.0
    %3313 = vmatpush1.msra.mxu0 0.0
    %3314 = vmatprep.subr.mxu0 0.0
    %3315 = vmatpush1.msra.mxu0 0.0
    %3316 = vmatprep.subr.mxu0 0.0
    %3317 = vmatpush1.msra.mxu0 0.0
    %3318 = vmatprep.subr.mxu0 0.0
    %3319 = vmatpush1.msra.mxu0 0.0
    %3320 = vmatprep.subr.mxu0 0.0
    %3321 = vmatpush1.msra.mxu0 0.0
    %3322 = vmatprep.subr.mxu0 0.0
    %3323 = vmatpush1.msra.mxu0 0.0
    %3324 = vmatprep.subr.mxu0 0.0
    %3325 = vmatpush1.msra.mxu0 0.0
    %3326 = vmatprep.subr.mxu0 0.0
    %3327 = vmatpush1.msra.mxu0 0.0
    %3328 = vmatprep.subr.mxu0 0.0
    %3329 = vmatpush1.msra.mxu0 0.0
    %3330 = vmatprep.subr.mxu0 0.0
    %3331 = vmatpush1.msra.mxu0 0.0
    %3332 = vmatprep.subr.mxu0 0.0
    %3333 = vmatpush1.msra.mxu0 0.0
    %3334 = vmatprep.subr.mxu0 0.0
    %3335 = vmatpush1.msra.mxu0 0.0
    %3336 = vmatprep.subr.mxu0 0.0
    %3337 = vmatpush1.msra.mxu0 0.0
    %3338 = vmatprep.subr.mxu0 0.0
    %3339 = vmatpush1.msra.mxu0 0.0
    %3340 = vmatprep.subr.mxu0 0.0
    %3341 = vmatpush1.msra.mxu0 0.0
    %3342 = vmatprep.subr.mxu0 0.0
    %3343 = vmatpush1.msra.mxu0 0.0
    %3344 = vmatprep.subr.mxu0 0.0
    %3345 = vmatpush1.msra.mxu0 0.0
    %3346 = vmatprep.subr.mxu0 0.0
    %3347 = vmatpush1.msra.mxu0 0.0
    %3348 = vmatprep.subr.mxu0 0.0
    %3349 = vmatpush1.msra.mxu0 0.0
    %3350 = vmatprep.mubr.f32.mxu0 0.0
    %3351 = vmatmul.mubr.f32.gmra.mrb[0].mxu0 %v2898
    %v3352 = vpop.f32.mrb[0].mxu0
    %v3353 = vadd.f32 0.0, %v3352
    %v3354 = vpop.f32.mrb[0].mxu0
    %3355 = vmatprep.mubr.f32.mxu0 0.0
    %3356 = vmatmul.mubr.f32.gmra.mrb[0].mxu0 %v2901
    %v3357 = vpop.f32.mrb[0].mxu0
    %v3358 = vadd.f32 0.0, %v3357
    %v3359 = vpop.f32.mrb[0].mxu0
    %3360 = vdwg.mxu0
    %v3361 = vadd.f32 %v3284, %v3353
    %v3362 = vadd.f32 %v3285, %v3358
    %v3363 = vmax.f32 %v2980, %v3361
    %v3364 = vmax.f32 %v2981, %v3362
    %v3365 = vadd.f32 %v3363, %v1707
    %v3366 = vadd.f32 %v3364, %v1707
    %v3367 = vmax.f32 %v3365, 0.0
    %v3368 = vmax.f32 %v3366, 0.0
    %s3369 = scalar_lea.vmem %s4, 16
    %3370 = vst [vmem:[%s3369] sm:$0xff] %v3367
    %3371 = vst [vmem:[%s3369 + $0x8] sm:$0xf] %v3368
    // Predicated region
    $region26: #{convnet_forward.2} parent=1 // pred_check
      _
    $region27: #{convnet_forward.2} parent=1 // pred_check_branch
      %3373 = sbr.rel (0) target = $region29
    $region28: #{convnet_forward.2} parent=1 // pred_region
      _
    $region29: #{convnet_forward.2} parent=1 // pred_fallthru
      _
    // Predicated region
    $region30: #{convnet_forward.2} parent=1 // pred_check
      _
    $region31: #{convnet_forward.2} parent=1 // pred_check_branch
      %3375 = sbr.rel (0) target = $region33
    $region32: #{convnet_forward.2} parent=1 // pred_region
      _
    $region33: #{convnet_forward.2} parent=1 // pred_fallthru
      _
    %3376 = vsyncpa [#allocation3], 1
    %3377 = vsyncpa [#allocation5], 1

// kernel: convnet_forward.3
$region0: #{convnet_forward.3}
  #allocation0 [shape = 'u32[]', space=smem, size = 0x4, offset = 0x4, fixed_abs, tag = 'smem constant byte address 0x4 - core index']
  #allocation1 [shape = 'u32[144,128]{1,0:T(1,128)}', space=vmem, size = 0x12000, scoped, tag = 'internal scratch']
  %s0 = inlined_call_operand.vmem [shape: f32[2,6,128], index: 0, kind: input, shape index: {}]
  %s1 = inlined_call_operand.vmem [shape: f32[2,6,128], index: 1, kind: input, shape index: {}]
  %s2 = inlined_call_operand.vmem [shape: f32[10,128,80], index: 2, kind: input, shape index: {}]
  %s3 = inlined_call_operand.vmem [shape: f32[1,80], index: 3, kind: input, shape index: {}]
  %s4 = inlined_call_operand.vmem [shape: f32[4,80,128], index: 4, kind: input, shape index: {}]
  %s5 = inlined_call_operand.vmem [shape: f32[1,128], index: 5, kind: input, shape index: {}]
  %s6 = inlined_call_operand.vmem [shape: f32[128,10], index: 6, kind: input, shape index: {}]
  %s7 = inlined_call_operand.vmem [shape: f32[1,10], index: 7, kind: input, shape index: {}]
  %s8 = inlined_call_operand.hbm [shape: f32[2,10], index: 8, kind: output, shape index: {}]
  %s9 = sld [smem:[#allocation0]]
  $region42: #{convnet_forward.3} parent=0
    _
  %s11 = ssub.s32 1, %s9
  %s12 = scalar_select 0, %s11, %s9
  $region1: #{convnet_forward.3} parent=0
    #allocation2 [shape = 'u8[1024]{0}', space=vmem, size = 0x400, scoped, tag = 'output window, operand 0, single buffered']
    #allocation3 [shape = 's32[1]{0}', space=sflag, size = 0x4, scoped, tag = 'scoped memory for convnet_forward.3']
    %13 = vsyncpa [#allocation3], 0
    // Predicated region
    $region2: #{convnet_forward.3} parent=1 // pred_check
      _
    $region3: #{convnet_forward.3} parent=1 // pred_check_branch
      %15 = sbr.rel (0) target = $region5
    $region4: #{convnet_forward.3} parent=1 // pred_region
      _
    $region5: #{convnet_forward.3} parent=1 // pred_fallthru
      _
    // Predicated region
    $region6: #{convnet_forward.3} parent=1 // pred_check
      _
    $region7: #{convnet_forward.3} parent=1 // pred_check_branch
      %17 = sbr.rel (0) target = $region9
    $region8: #{convnet_forward.3} parent=1 // pred_region
      _
    $region9: #{convnet_forward.3} parent=1 // pred_fallthru
      _
    // Predicated region
    $region10: #{convnet_forward.3} parent=1 // pred_check
      _
    $region11: #{convnet_forward.3} parent=1 // pred_check_branch
      %19 = sbr.rel (0) target = $region13
    $region12: #{convnet_forward.3} parent=1 // pred_region
      _
    $region13: #{convnet_forward.3} parent=1 // pred_fallthru
      _
    // Predicated region
    $region14: #{convnet_forward.3} parent=1 // pred_check
      _
    $region15: #{convnet_forward.3} parent=1 // pred_check_branch
      %21 = sbr.rel (0) target = $region17
    $region16: #{convnet_forward.3} parent=1 // pred_region
      _
    $region17: #{convnet_forward.3} parent=1 // pred_fallthru
      _
    // Predicated region
    $region18: #{convnet_forward.3} parent=1 // pred_check
      _
    $region19: #{convnet_forward.3} parent=1 // pred_check_branch
      %23 = sbr.rel (0) target = $region21
    $region20: #{convnet_forward.3} parent=1 // pred_region
      _
    $region21: #{convnet_forward.3} parent=1 // pred_fallthru
      _
    // Predicated region
    $region22: #{convnet_forward.3} parent=1 // pred_check
      _
    $region23: #{convnet_forward.3} parent=1 // pred_check_branch
      %25 = sbr.rel (0) target = $region25
    $region24: #{convnet_forward.3} parent=1 // pred_region
      _
    $region25: #{convnet_forward.3} parent=1 // pred_fallthru
      _
    // Predicated region
    $region26: #{convnet_forward.3} parent=1 // pred_check
      _
    $region27: #{convnet_forward.3} parent=1 // pred_check_branch
      %27 = sbr.rel (0) target = $region29
    $region28: #{convnet_forward.3} parent=1 // pred_region
      _
    $region29: #{convnet_forward.3} parent=1 // pred_fallthru
      _
    // Predicated region
    $region30: #{convnet_forward.3} parent=1 // pred_check
      _
    $region31: #{convnet_forward.3} parent=1 // pred_check_branch
      %29 = sbr.rel (0) target = $region33
    $region32: #{convnet_forward.3} parent=1 // pred_region
      _
    $region33: #{convnet_forward.3} parent=1 // pred_fallthru
      _
    %v30 = vld [vmem:[%s3] sm:$0x1]
    %v31 = vld [vmem:[%s5] sm:$0x1]
    %v32 = vld [vmem:[%s7] sm:$0x1]
    %v33 = vld [vmem:[%s6] sm:$0xff]
    %v34 = vld [vmem:[%s6 + $0x8] sm:$0xff]
    %v35 = vld [vmem:[%s6 + $0x10] sm:$0xff]
    %v36 = vld [vmem:[%s6 + $0x18] sm:$0xff]
    %v37 = vld [vmem:[%s6 + $0x20] sm:$0xff]
    %v38 = vld [vmem:[%s6 + $0x28] sm:$0xff]
    %v39 = vld [vmem:[%s6 + $0x30] sm:$0xff]
    %v40 = vld [vmem:[%s6 + $0x38] sm:$0xff]
    %v41 = vld [vmem:[%s6 + $0x40] sm:$0xff]
    %v42 = vld [vmem:[%s6 + $0x48] sm:$0xff]
    %v43 = vld [vmem:[%s6 + $0x50] sm:$0xff]
    %v44 = vld [vmem:[%s6 + $0x58] sm:$0xff]
    %v45 = vld [vmem:[%s6 + $0x60] sm:$0xff]
    %v46 = vld [vmem:[%s6 + $0x68] sm:$0xff]
    %v47 = vld [vmem:[%s6 + $0x70] sm:$0xff]
    %v48 = vld [vmem:[%s6 + $0x78] sm:$0xff]
    %v49 = vld [vmem:[%s0] sm:$0xf]
    %v50 = vld [vmem:[%s2] sm:$0xff]
    %v51 = vld [vmem:[%s2 + $0x8] sm:$0xff]
    %v52 = vld [vmem:[%s2 + $0x10] sm:$0xff]
    %v53 = vld [vmem:[%s2 + $0x18] sm:$0xff]
    %v54 = vld [vmem:[%s2 + $0x20] sm:$0xff]
    %v55 = vld [vmem:[%s2 + $0x28] sm:$0xff]
    %v56 = vld [vmem:[%s2 + $0x30] sm:$0xff]
    %v57 = vld [vmem:[%s2 + $0x38] sm:$0xff]
    %v58 = vld [vmem:[%s2 + $0x40] sm:$0xff]
    %v59 = vld [vmem:[%s2 + $0x48] sm:$0xff]
    %v60 = vld [vmem:[%s2 + $0x50] sm:$0xff]
    %v61 = vld [vmem:[%s2 + $0x58] sm:$0xff]
    %v62 = vld [vmem:[%s2 + $0x60] sm:$0xff]
    %v63 = vld [vmem:[%s2 + $0x68] sm:$0xff]
    %v64 = vld [vmem:[%s2 + $0x70] sm:$0xff]
    %v65 = vld [vmem:[%s2 + $0x78] sm:$0xff]
    %v66 = vld [vmem:[%s1] sm:$0xf]
    %s67 = scalar_lea.vmem %s2, 256
    %v68 = vld [vmem:[%s67] sm:$0xff]
    %v69 = vld [vmem:[%s67 + $0x8] sm:$0xff]
    %v70 = vld [vmem:[%s67 + $0x10] sm:$0xff]
    %v71 = vld [vmem:[%s67 + $0x18] sm:$0xff]
    %v72 = vld [vmem:[%s67 + $0x20] sm:$0xff]
    %v73 = vld [vmem:[%s67 + $0x28] sm:$0xff]
    %v74 = vld [vmem:[%s67 + $0x30] sm:$0xff]
    %v75 = vld [vmem:[%s67 + $0x38] sm:$0xff]
    %v76 = vld [vmem:[%s67 + $0x40] sm:$0xff]
    %v77 = vld [vmem:[%s67 + $0x48] sm:$0xff]
    %v78 = vld [vmem:[%s67 + $0x50] sm:$0xff]
    %v79 = vld [vmem:[%s67 + $0x58] sm:$0xff]
    %v80 = vld [vmem:[%s67 + $0x60] sm:$0xff]
    %v81 = vld [vmem:[%s67 + $0x68] sm:$0xff]
    %v82 = vld [vmem:[%s67 + $0x70] sm:$0xff]
    %v83 = vld [vmem:[%s67 + $0x78] sm:$0xff]
    %84 = vmatprep.subr.mxu0 0.0
    %85 = vmatpush1.msra.mxu0 %v68
    %86 = vmatprep.subr.mxu0 0.0
    %87 = vmatpush1.msra.mxu0 %v69
    %88 = vmatprep.subr.mxu0 0.0
    %89 = vmatpush1.msra.mxu0 %v70
    %90 = vmatprep.subr.mxu0 0.0
    %91 = vmatpush1.msra.mxu0 %v71
    %92 = vmatprep.subr.mxu0 0.0
    %93 = vmatpush1.msra.mxu0 %v72
    %94 = vmatprep.subr.mxu0 0.0
    %95 = vmatpush1.msra.mxu0 %v73
    %96 = vmatprep.subr.mxu0 0.0
    %97 = vmatpush1.msra.mxu0 %v74
    %98 = vmatprep.subr.mxu0 0.0
    %99 = vmatpush1.msra.mxu0 %v75
    %100 = vmatprep.subr.mxu0 0.0
    %101 = vmatpush1.msra.mxu0 %v76
    %102 = vmatprep.subr.mxu0 0.0
    %103 = vmatpush1.msra.mxu0 %v77
    %104 = vmatprep.subr.mxu0 0.0
    %105 = vmatpush1.msra.mxu0 %v78
    %106 = vmatprep.subr.mxu0 0.0
    %107 = vmatpush1.msra.mxu0 %v79
    %108 = vmatprep.subr.mxu0 0.0
    %109 = vmatpush1.msra.mxu0 %v80
    %110 = vmatprep.subr.mxu0 0.0
    %111 = vmatpush1.msra.mxu0 %v81
    %112 = vmatprep.subr.mxu0 0.0
    %113 = vmatpush1.msra.mxu0 %v82
    %114 = vmatprep.subr.mxu0 0.0
    %115 = vmatpush1.msra.mxu0 %v83
    %116 = vmatprep.subr.mxu0 0.0
    %117 = vmatpush1.msra.mxu0 0.0
    %118 = vmatprep.subr.mxu0 0.0
    %119 = vmatpush1.msra.mxu0 0.0
    %120 = vmatprep.subr.mxu0 0.0
    %121 = vmatpush1.msra.mxu0 0.0
    %122 = vmatprep.subr.mxu0 0.0
    %123 = vmatpush1.msra.mxu0 0.0
    %124 = vmatprep.subr.mxu0 0.0
    %125 = vmatpush1.msra.mxu0 0.0
    %126 = vmatprep.subr.mxu0 0.0
    %127 = vmatpush1.msra.mxu0 0.0
    %128 = vmatprep.subr.mxu0 0.0
    %129 = vmatpush1.msra.mxu0 0.0
    %130 = vmatprep.subr.mxu0 0.0
    %131 = vmatpush1.msra.mxu0 0.0
    %132 = vmatprep.subr.mxu0 0.0
    %133 = vmatpush1.msra.mxu0 0.0
    %134 = vmatprep.subr.mxu0 0.0
    %135 = vmatpush1.msra.mxu0 0.0
    %136 = vmatprep.subr.mxu0 0.0
    %137 = vmatpush1.msra.mxu0 0.0
    %138 = vmatprep.subr.mxu0 0.0
    %139 = vmatpush1.msra.mxu0 0.0
    %140 = vmatprep.subr.mxu0 0.0
    %141 = vmatpush1.msra.mxu0 0.0
    %142 = vmatprep.subr.mxu0 0.0
    %143 = vmatpush1.msra.mxu0 0.0
    %144 = vmatprep.subr.mxu0 0.0
    %145 = vmatpush1.msra.mxu0 0.0
    %146 = vmatprep.subr.mxu0 0.0
    %147 = vmatpush1.msra.mxu0 0.0
    %148 = vmatprep.mubr.f32.mxu0 0.0
    %149 = vmatmul.mubr.f32.gmra.mrb[0].mxu0 %v66
    %v150 = vpop.f32.mrb[0].mxu0
    %v151 = vadd.f32 0.0, %v150
    %v152 = vpop.f32.mrb[0].mxu0
    %153 = vdwg.mxu0
    %154 = vmatprep.subr.mxu0 0.0
    %155 = vmatpush1.msra.mxu0 %v50
    %156 = vmatprep.subr.mxu0 0.0
    %157 = vmatpush1.msra.mxu0 %v51
    %158 = vmatprep.subr.mxu0 0.0
    %159 = vmatpush1.msra.mxu0 %v52
    %160 = vmatprep.subr.mxu0 0.0
    %161 = vmatpush1.msra.mxu0 %v53
    %162 = vmatprep.subr.mxu0 0.0
    %163 = vmatpush1.msra.mxu0 %v54
    %164 = vmatprep.subr.mxu0 0.0
    %165 = vmatpush1.msra.mxu0 %v55
    %166 = vmatprep.subr.mxu0 0.0
    %167 = vmatpush1.msra.mxu0 %v56
    %168 = vmatprep.subr.mxu0 0.0
    %169 = vmatpush1.msra.mxu0 %v57
    %170 = vmatprep.subr.mxu0 0.0
    %171 = vmatpush1.msra.mxu0 %v58
    %172 = vmatprep.subr.mxu0 0.0
    %173 = vmatpush1.msra.mxu0 %v59
    %174 = vmatprep.subr.mxu0 0.0
    %175 = vmatpush1.msra.mxu0 %v60
    %176 = vmatprep.subr.mxu0 0.0
    %177 = vmatpush1.msra.mxu0 %v61
    %178 = vmatprep.subr.mxu0 0.0
    %179 = vmatpush1.msra.mxu0 %v62
    %180 = vmatprep.subr.mxu0 0.0
    %181 = vmatpush1.msra.mxu0 %v63
    %182 = vmatprep.subr.mxu0 0.0
    %183 = vmatpush1.msra.mxu0 %v64
    %184 = vmatprep.subr.mxu0 0.0
    %185 = vmatpush1.msra.mxu0 %v65
    %186 = vmatprep.subr.mxu0 0.0
    %187 = vmatpush1.msra.mxu0 0.0
    %188 = vmatprep.subr.mxu0 0.0
    %189 = vmatpush1.msra.mxu0 0.0
    %190 = vmatprep.subr.mxu0 0.0
    %191 = vmatpush1.msra.mxu0 0.0
    %192 = vmatprep.subr.mxu0 0.0
    %193 = vmatpush1.msra.mxu0 0.0
    %194 = vmatprep.subr.mxu0 0.0
    %195 = vmatpush1.msra.mxu0 0.0
    %196 = vmatprep.subr.mxu0 0.0
    %197 = vmatpush1.msra.mxu0 0.0
    %198 = vmatprep.subr.mxu0 0.0
    %199 = vmatpush1.msra.mxu0 0.0
    %200 = vmatprep.subr.mxu0 0.0
    %201 = vmatpush1.msra.mxu0 0.0
    %202 = vmatprep.subr.mxu0 0.0
    %203 = vmatpush1.msra.mxu0 0.0
    %204 = vmatprep.subr.mxu0 0.0
    %205 = vmatpush1.msra.mxu0 0.0
    %206 = vmatprep.subr.mxu0 0.0
    %207 = vmatpush1.msra.mxu0 0.0
    %208 = vmatprep.subr.mxu0 0.0
    %209 = vmatpush1.msra.mxu0 0.0
    %210 = vmatprep.subr.mxu0 0.0
    %211 = vmatpush1.msra.mxu0 0.0
    %212 = vmatprep.subr.mxu0 0.0
    %213 = vmatpush1.msra.mxu0 0.0
    %214 = vmatprep.subr.mxu0 0.0
    %215 = vmatpush1.msra.mxu0 0.0
    %216 = vmatprep.subr.mxu0 0.0
    %217 = vmatpush1.msra.mxu0 0.0
    %218 = vmatprep.mubr.f32.mxu0 0.0
    %219 = vmatmul.mubr.f32.gmra.mrb[0].mxu0 %v49
    %v220 = vpop.f32.mrb[0].mxu0
    %v221 = vadd.f32 %v151, %v220
    %v222 = vpop.f32.mrb[0].mxu0
    %223 = vdwg.mxu0
    %v224 = vld [vmem:[%s0 + $0x1] sm:$0xf]
    %s225 = scalar_lea.vmem %s2, 512
    %v226 = vld [vmem:[%s225] sm:$0xff]
    %v227 = vld [vmem:[%s225 + $0x8] sm:$0xff]
    %v228 = vld [vmem:[%s225 + $0x10] sm:$0xff]
    %v229 = vld [vmem:[%s225 + $0x18] sm:$0xff]
    %v230 = vld [vmem:[%s225 + $0x20] sm:$0xff]
    %v231 = vld [vmem:[%s225 + $0x28] sm:$0xff]
    %v232 = vld [vmem:[%s225 + $0x30] sm:$0xff]
    %v233 = vld [vmem:[%s225 + $0x38] sm:$0xff]
    %v234 = vld [vmem:[%s225 + $0x40] sm:$0xff]
    %v235 = vld [vmem:[%s225 + $0x48] sm:$0xff]
    %v236 = vld [vmem:[%s225 + $0x50] sm:$0xff]
    %v237 = vld [vmem:[%s225 + $0x58] sm:$0xff]
    %v238 = vld [vmem:[%s225 + $0x60] sm:$0xff]
    %v239 = vld [vmem:[%s225 + $0x68] sm:$0xff]
    %v240 = vld [vmem:[%s225 + $0x70] sm:$0xff]
    %v241 = vld [vmem:[%s225 + $0x78] sm:$0xff]
    %242 = vmatprep.subr.mxu0 0.0
    %243 = vmatpush1.msra.mxu0 %v226
    %244 = vmatprep.subr.mxu0 0.0
    %245 = vmatpush1.msra.mxu0 %v227
    %246 = vmatprep.subr.mxu0 0.0
    %247 = vmatpush1.msra.mxu0 %v228
    %248 = vmatprep.subr.mxu0 0.0
    %249 = vmatpush1.msra.mxu0 %v229
    %250 = vmatprep.subr.mxu0 0.0
    %251 = vmatpush1.msra.mxu0 %v230
    %252 = vmatprep.subr.mxu0 0.0
    %253 = vmatpush1.msra.mxu0 %v231
    %254 = vmatprep.subr.mxu0 0.0
    %255 = vmatpush1.msra.mxu0 %v232
    %256 = vmatprep.subr.mxu0 0.0
    %257 = vmatpush1.msra.mxu0 %v233
    %258 = vmatprep.subr.mxu0 0.0
    %259 = vmatpush1.msra.mxu0 %v234
    %260 = vmatprep.subr.mxu0 0.0
    %261 = vmatpush1.msra.mxu0 %v235
    %262 = vmatprep.subr.mxu0 0.0
    %263 = vmatpush1.msra.mxu0 %v236
    %264 = vmatprep.subr.mxu0 0.0
    %265 = vmatpush1.msra.mxu0 %v237
    %266 = vmatprep.subr.mxu0 0.0
    %267 = vmatpush1.msra.mxu0 %v238
    %268 = vmatprep.subr.mxu0 0.0
    %269 = vmatpush1.msra.mxu0 %v239
    %270 = vmatprep.subr.mxu0 0.0
    %271 = vmatpush1.msra.mxu0 %v240
    %272 = vmatprep.subr.mxu0 0.0
    %273 = vmatpush1.msra.mxu0 %v241
    %274 = vmatprep.subr.mxu0 0.0
    %275 = vmatpush1.msra.mxu0 0.0
    %276 = vmatprep.subr.mxu0 0.0
    %277 = vmatpush1.msra.mxu0 0.0
    %278 = vmatprep.subr.mxu0 0.0
    %279 = vmatpush1.msra.mxu0 0.0
    %280 = vmatprep.subr.mxu0 0.0
    %281 = vmatpush1.msra.mxu0 0.0
    %282 = vmatprep.subr.mxu0 0.0
    %283 = vmatpush1.msra.mxu0 0.0
    %284 = vmatprep.subr.mxu0 0.0
    %285 = vmatpush1.msra.mxu0 0.0
    %286 = vmatprep.subr.mxu0 0.0
    %287 = vmatpush1.msra.mxu0 0.0
    %288 = vmatprep.subr.mxu0 0.0
    %289 = vmatpush1.msra.mxu0 0.0
    %290 = vmatprep.subr.mxu0 0.0
    %291 = vmatpush1.msra.mxu0 0.0
    %292 = vmatprep.subr.mxu0 0.0
    %293 = vmatpush1.msra.mxu0 0.0
    %294 = vmatprep.subr.mxu0 0.0
    %295 = vmatpush1.msra.mxu0 0.0
    %296 = vmatprep.subr.mxu0 0.0
    %297 = vmatpush1.msra.mxu0 0.0
    %298 = vmatprep.subr.mxu0 0.0
    %299 = vmatpush1.msra.mxu0 0.0
    %300 = vmatprep.subr.mxu0 0.0
    %301 = vmatpush1.msra.mxu0 0.0
    %302 = vmatprep.subr.mxu0 0.0
    %303 = vmatpush1.msra.mxu0 0.0
    %304 = vmatprep.subr.mxu0 0.0
    %305 = vmatpush1.msra.mxu0 0.0
    %306 = vmatprep.mubr.f32.mxu0 0.0
    %307 = vmatmul.mubr.f32.gmra.mrb[0].mxu0 %v224
    %v308 = vpop.f32.mrb[0].mxu0
    %v309 = vadd.f32 0.0, %v308
    %v310 = vpop.f32.mrb[0].mxu0
    %311 = vdwg.mxu0
    %v312 = vadd.f32 %v221, %v309
    %v313 = vld [vmem:[%s1 + $0x1] sm:$0xf]
    %s314 = scalar_lea.vmem %s2, 768
    %v315 = vld [vmem:[%s314] sm:$0xff]
    %v316 = vld [vmem:[%s314 + $0x8] sm:$0xff]
    %v317 = vld [vmem:[%s314 + $0x10] sm:$0xff]
    %v318 = vld [vmem:[%s314 + $0x18] sm:$0xff]
    %v319 = vld [vmem:[%s314 + $0x20] sm:$0xff]
    %v320 = vld [vmem:[%s314 + $0x28] sm:$0xff]
    %v321 = vld [vmem:[%s314 + $0x30] sm:$0xff]
    %v322 = vld [vmem:[%s314 + $0x38] sm:$0xff]
    %v323 = vld [vmem:[%s314 + $0x40] sm:$0xff]
    %v324 = vld [vmem:[%s314 + $0x48] sm:$0xff]
    %v325 = vld [vmem:[%s314 + $0x50] sm:$0xff]
    %v326 = vld [vmem:[%s314 + $0x58] sm:$0xff]
    %v327 = vld [vmem:[%s314 + $0x60] sm:$0xff]
    %v328 = vld [vmem:[%s314 + $0x68] sm:$0xff]
    %v329 = vld [vmem:[%s314 + $0x70] sm:$0xff]
    %v330 = vld [vmem:[%s314 + $0x78] sm:$0xff]
    %331 = vmatprep.subr.mxu0 0.0
    %332 = vmatpush1.msra.mxu0 %v315
    %333 = vmatprep.subr.mxu0 0.0
    %334 = vmatpush1.msra.mxu0 %v316
    %335 = vmatprep.subr.mxu0 0.0
    %336 = vmatpush1.msra.mxu0 %v317
    %337 = vmatprep.subr.mxu0 0.0
    %338 = vmatpush1.msra.mxu0 %v318
    %339 = vmatprep.subr.mxu0 0.0
    %340 = vmatpush1.msra.mxu0 %v319
    %341 = vmatprep.subr.mxu0 0.0
    %342 = vmatpush1.msra.mxu0 %v320
    %343 = vmatprep.subr.mxu0 0.0
    %344 = vmatpush1.msra.mxu0 %v321
    %345 = vmatprep.subr.mxu0 0.0
    %346 = vmatpush1.msra.mxu0 %v322
    %347 = vmatprep.subr.mxu0 0.0
    %348 = vmatpush1.msra.mxu0 %v323
    %349 = vmatprep.subr.mxu0 0.0
    %350 = vmatpush1.msra.mxu0 %v324
    %351 = vmatprep.subr.mxu0 0.0
    %352 = vmatpush1.msra.mxu0 %v325
    %353 = vmatprep.subr.mxu0 0.0
    %354 = vmatpush1.msra.mxu0 %v326
    %355 = vmatprep.subr.mxu0 0.0
    %356 = vmatpush1.msra.mxu0 %v327
    %357 = vmatprep.subr.mxu0 0.0
    %358 = vmatpush1.msra.mxu0 %v328
    %359 = vmatprep.subr.mxu0 0.0
    %360 = vmatpush1.msra.mxu0 %v329
    %361 = vmatprep.subr.mxu0 0.0
    %362 = vmatpush1.msra.mxu0 %v330
    %363 = vmatprep.subr.mxu0 0.0
    %364 = vmatpush1.msra.mxu0 0.0
    %365 = vmatprep.subr.mxu0 0.0
    %366 = vmatpush1.msra.mxu0 0.0
    %367 = vmatprep.subr.mxu0 0.0
    %368 = vmatpush1.msra.mxu0 0.0
    %369 = vmatprep.subr.mxu0 0.0
    %370 = vmatpush1.msra.mxu0 0.0
    %371 = vmatprep.subr.mxu0 0.0
    %372 = vmatpush1.msra.mxu0 0.0
    %373 = vmatprep.subr.mxu0 0.0
    %374 = vmatpush1.msra.mxu0 0.0
    %375 = vmatprep.subr.mxu0 0.0
    %376 = vmatpush1.msra.mxu0 0.0
    %377 = vmatprep.subr.mxu0 0.0
    %378 = vmatpush1.msra.mxu0 0.0
    %379 = vmatprep.subr.mxu0 0.0
    %380 = vmatpush1.msra.mxu0 0.0
    %381 = vmatprep.subr.mxu0 0.0
    %382 = vmatpush1.msra.mxu0 0.0
    %383 = vmatprep.subr.mxu0 0.0
    %384 = vmatpush1.msra.mxu0 0.0
    %385 = vmatprep.subr.mxu0 0.0
    %386 = vmatpush1.msra.mxu0 0.0
    %387 = vmatprep.subr.mxu0 0.0
    %388 = vmatpush1.msra.mxu0 0.0
    %389 = vmatprep.subr.mxu0 0.0
    %390 = vmatpush1.msra.mxu0 0.0
    %391 = vmatprep.subr.mxu0 0.0
    %392 = vmatpush1.msra.mxu0 0.0
    %393 = vmatprep.subr.mxu0 0.0
    %394 = vmatpush1.msra.mxu0 0.0
    %395 = vmatprep.mubr.f32.mxu0 0.0
    %396 = vmatmul.mubr.f32.gmra.mrb[0].mxu0 %v313
    %v397 = vpop.f32.mrb[0].mxu0
    %v398 = vadd.f32 0.0, %v397
    %v399 = vpop.f32.mrb[0].mxu0
    %400 = vdwg.mxu0
    %v401 = vadd.f32 %v312, %v398
    %v402 = vld [vmem:[%s0 + $0x2] sm:$0xf]
    %s403 = scalar_lea.vmem %s2, 1024
    %v404 = vld [vmem:[%s403] sm:$0xff]
    %v405 = vld [vmem:[%s403 + $0x8] sm:$0xff]
    %v406 = vld [vmem:[%s403 + $0x10] sm:$0xff]
    %v407 = vld [vmem:[%s403 + $0x18] sm:$0xff]
    %v408 = vld [vmem:[%s403 + $0x20] sm:$0xff]
    %v409 = vld [vmem:[%s403 + $0x28] sm:$0xff]
    %v410 = vld [vmem:[%s403 + $0x30] sm:$0xff]
    %v411 = vld [vmem:[%s403 + $0x38] sm:$0xff]
    %v412 = vld [vmem:[%s403 + $0x40] sm:$0xff]
    %v413 = vld [vmem:[%s403 + $0x48] sm:$0xff]
    %v414 = vld [vmem:[%s403 + $0x50] sm:$0xff]
    %v415 = vld [vmem:[%s403 + $0x58] sm:$0xff]
    %v416 = vld [vmem:[%s403 + $0x60] sm:$0xff]
    %v417 = vld [vmem:[%s403 + $0x68] sm:$0xff]
    %v418 = vld [vmem:[%s403 + $0x70] sm:$0xff]
    %v419 = vld [vmem:[%s403 + $0x78] sm:$0xff]
    %420 = vmatprep.subr.mxu0 0.0
    %421 = vmatpush1.msra.mxu0 %v404
    %422 = vmatprep.subr.mxu0 0.0
    %423 = vmatpush1.msra.mxu0 %v405
    %424 = vmatprep.subr.mxu0 0.0
    %425 = vmatpush1.msra.mxu0 %v406
    %426 = vmatprep.subr.mxu0 0.0
    %427 = vmatpush1.msra.mxu0 %v407
    %428 = vmatprep.subr.mxu0 0.0
    %429 = vmatpush1.msra.mxu0 %v408
    %430 = vmatprep.subr.mxu0 0.0
    %431 = vmatpush1.msra.mxu0 %v409
    %432 = vmatprep.subr.mxu0 0.0
    %433 = vmatpush1.msra.mxu0 %v410
    %434 = vmatprep.subr.mxu0 0.0
    %435 = vmatpush1.msra.mxu0 %v411
    %436 = vmatprep.subr.mxu0 0.0
    %437 = vmatpush1.msra.mxu0 %v412
    %438 = vmatprep.subr.mxu0 0.0
    %439 = vmatpush1.msra.mxu0 %v413
    %440 = vmatprep.subr.mxu0 0.0
    %441 = vmatpush1.msra.mxu0 %v414
    %442 = vmatprep.subr.mxu0 0.0
    %443 = vmatpush1.msra.mxu0 %v415
    %444 = vmatprep.subr.mxu0 0.0
    %445 = vmatpush1.msra.mxu0 %v416
    %446 = vmatprep.subr.mxu0 0.0
    %447 = vmatpush1.msra.mxu0 %v417
    %448 = vmatprep.subr.mxu0 0.0
    %449 = vmatpush1.msra.mxu0 %v418
    %450 = vmatprep.subr.mxu0 0.0
    %451 = vmatpush1.msra.mxu0 %v419
    %452 = vmatprep.subr.mxu0 0.0
    %453 = vmatpush1.msra.mxu0 0.0
    %454 = vmatprep.subr.mxu0 0.0
    %455 = vmatpush1.msra.mxu0 0.0
    %456 = vmatprep.subr.mxu0 0.0
    %457 = vmatpush1.msra.mxu0 0.0
    %458 = vmatprep.subr.mxu0 0.0
    %459 = vmatpush1.msra.mxu0 0.0
    %460 = vmatprep.subr.mxu0 0.0
    %461 = vmatpush1.msra.mxu0 0.0
    %462 = vmatprep.subr.mxu0 0.0
    %463 = vmatpush1.msra.mxu0 0.0
    %464 = vmatprep.subr.mxu0 0.0
    %465 = vmatpush1.msra.mxu0 0.0
    %466 = vmatprep.subr.mxu0 0.0
    %467 = vmatpush1.msra.mxu0 0.0
    %468 = vmatprep.subr.mxu0 0.0
    %469 = vmatpush1.msra.mxu0 0.0
    %470 = vmatprep.subr.mxu0 0.0
    %471 = vmatpush1.msra.mxu0 0.0
    %472 = vmatprep.subr.mxu0 0.0
    %473 = vmatpush1.msra.mxu0 0.0
    %474 = vmatprep.subr.mxu0 0.0
    %475 = vmatpush1.msra.mxu0 0.0
    %476 = vmatprep.subr.mxu0 0.0
    %477 = vmatpush1.msra.mxu0 0.0
    %478 = vmatprep.subr.mxu0 0.0
    %479 = vmatpush1.msra.mxu0 0.0
    %480 = vmatprep.subr.mxu0 0.0
    %481 = vmatpush1.msra.mxu0 0.0
    %482 = vmatprep.subr.mxu0 0.0
    %483 = vmatpush1.msra.mxu0 0.0
    %484 = vmatprep.mubr.f32.mxu0 0.0
    %485 = vmatmul.mubr.f32.gmra.mrb[0].mxu0 %v402
    %v486 = vpop.f32.mrb[0].mxu0
    %v487 = vadd.f32 0.0, %v486
    %v488 = vpop.f32.mrb[0].mxu0
    %489 = vdwg.mxu0
    %v490 = vadd.f32 %v401, %v487
    %s491 = scalar_lea.vmem %s2, 128
    %v492 = vld [vmem:[%s491] sm:$0xff]
    %v493 = vld [vmem:[%s491 + $0x8] sm:$0xff]
    %v494 = vld [vmem:[%s491 + $0x10] sm:$0xff]
    %v495 = vld [vmem:[%s491 + $0x18] sm:$0xff]
    %v496 = vld [vmem:[%s491 + $0x20] sm:$0xff]
    %v497 = vld [vmem:[%s491 + $0x28] sm:$0xff]
    %v498 = vld [vmem:[%s491 + $0x30] sm:$0xff]
    %v499 = vld [vmem:[%s491 + $0x38] sm:$0xff]
    %v500 = vld [vmem:[%s491 + $0x40] sm:$0xff]
    %v501 = vld [vmem:[%s491 + $0x48] sm:$0xff]
    %v502 = vld [vmem:[%s491 + $0x50] sm:$0xff]
    %v503 = vld [vmem:[%s491 + $0x58] sm:$0xff]
    %v504 = vld [vmem:[%s491 + $0x60] sm:$0xff]
    %v505 = vld [vmem:[%s491 + $0x68] sm:$0xff]
    %v506 = vld [vmem:[%s491 + $0x70] sm:$0xff]
    %v507 = vld [vmem:[%s491 + $0x78] sm:$0xff]
    %s508 = scalar_lea.vmem %s2, 384
    %v509 = vld [vmem:[%s508] sm:$0xff]
    %v510 = vld [vmem:[%s508 + $0x8] sm:$0xff]
    %v511 = vld [vmem:[%s508 + $0x10] sm:$0xff]
    %v512 = vld [vmem:[%s508 + $0x18] sm:$0xff]
    %v513 = vld [vmem:[%s508 + $0x20] sm:$0xff]
    %v514 = vld [vmem:[%s508 + $0x28] sm:$0xff]
    %v515 = vld [vmem:[%s508 + $0x30] sm:$0xff]
    %v516 = vld [vmem:[%s508 + $0x38] sm:$0xff]
    %v517 = vld [vmem:[%s508 + $0x40] sm:$0xff]
    %v518 = vld [vmem:[%s508 + $0x48] sm:$0xff]
    %v519 = vld [vmem:[%s508 + $0x50] sm:$0xff]
    %v520 = vld [vmem:[%s508 + $0x58] sm:$0xff]
    %v521 = vld [vmem:[%s508 + $0x60] sm:$0xff]
    %v522 = vld [vmem:[%s508 + $0x68] sm:$0xff]
    %v523 = vld [vmem:[%s508 + $0x70] sm:$0xff]
    %v524 = vld [vmem:[%s508 + $0x78] sm:$0xff]
    %525 = vmatprep.subr.mxu0 0.0
    %526 = vmatpush1.msra.mxu0 %v509
    %527 = vmatprep.subr.mxu0 0.0
    %528 = vmatpush1.msra.mxu0 %v510
    %529 = vmatprep.subr.mxu0 0.0
    %530 = vmatpush1.msra.mxu0 %v511
    %531 = vmatprep.subr.mxu0 0.0
    %532 = vmatpush1.msra.mxu0 %v512
    %533 = vmatprep.subr.mxu0 0.0
    %534 = vmatpush1.msra.mxu0 %v513
    %535 = vmatprep.subr.mxu0 0.0
    %536 = vmatpush1.msra.mxu0 %v514
    %537 = vmatprep.subr.mxu0 0.0
    %538 = vmatpush1.msra.mxu0 %v515
    %539 = vmatprep.subr.mxu0 0.0
    %540 = vmatpush1.msra.mxu0 %v516
    %541 = vmatprep.subr.mxu0 0.0
    %542 = vmatpush1.msra.mxu0 %v517
    %543 = vmatprep.subr.mxu0 0.0
    %544 = vmatpush1.msra.mxu0 %v518
    %545 = vmatprep.subr.mxu0 0.0
    %546 = vmatpush1.msra.mxu0 %v519
    %547 = vmatprep.subr.mxu0 0.0
    %548 = vmatpush1.msra.mxu0 %v520
    %549 = vmatprep.subr.mxu0 0.0
    %550 = vmatpush1.msra.mxu0 %v521
    %551 = vmatprep.subr.mxu0 0.0
    %552 = vmatpush1.msra.mxu0 %v522
    %553 = vmatprep.subr.mxu0 0.0
    %554 = vmatpush1.msra.mxu0 %v523
    %555 = vmatprep.subr.mxu0 0.0
    %556 = vmatpush1.msra.mxu0 %v524
    %557 = vmatprep.subr.mxu0 0.0
    %558 = vmatpush1.msra.mxu0 0.0
    %559 = vmatprep.subr.mxu0 0.0
    %560 = vmatpush1.msra.mxu0 0.0
    %561 = vmatprep.subr.mxu0 0.0
    %562 = vmatpush1.msra.mxu0 0.0
    %563 = vmatprep.subr.mxu0 0.0
    %564 = vmatpush1.msra.mxu0 0.0
    %565 = vmatprep.subr.mxu0 0.0
    %566 = vmatpush1.msra.mxu0 0.0
    %567 = vmatprep.subr.mxu0 0.0
    %568 = vmatpush1.msra.mxu0 0.0
    %569 = vmatprep.subr.mxu0 0.0
    %570 = vmatpush1.msra.mxu0 0.0
    %571 = vmatprep.subr.mxu0 0.0
    %572 = vmatpush1.msra.mxu0 0.0
    %573 = vmatprep.subr.mxu0 0.0
    %574 = vmatpush1.msra.mxu0 0.0
    %575 = vmatprep.subr.mxu0 0.0
    %576 = vmatpush1.msra.mxu0 0.0
    %577 = vmatprep.subr.mxu0 0.0
    %578 = vmatpush1.msra.mxu0 0.0
    %579 = vmatprep.subr.mxu0 0.0
    %580 = vmatpush1.msra.mxu0 0.0
    %581 = vmatprep.subr.mxu0 0.0
    %582 = vmatpush1.msra.mxu0 0.0
    %583 = vmatprep.subr.mxu0 0.0
    %584 = vmatpush1.msra.mxu0 0.0
    %585 = vmatprep.subr.mxu0 0.0
    %586 = vmatpush1.msra.mxu0 0.0
    %587 = vmatprep.subr.mxu0 0.0
    %588 = vmatpush1.msra.mxu0 0.0
    %589 = vmatprep.mubr.f32.mxu0 0.0
    %590 = vmatmul.mubr.f32.gmra.mrb[0].mxu0 %v66
    %v591 = vpop.f32.mrb[0].mxu0
    %v592 = vadd.f32 0.0, %v591
    %v593 = vpop.f32.mrb[0].mxu0
    %594 = vdwg.mxu0
    %595 = vmatprep.subr.mxu0 0.0
    %596 = vmatpush1.msra.mxu0 %v492
    %597 = vmatprep.subr.mxu0 0.0
    %598 = vmatpush1.msra.mxu0 %v493
    %599 = vmatprep.subr.mxu0 0.0
    %600 = vmatpush1.msra.mxu0 %v494
    %601 = vmatprep.subr.mxu0 0.0
    %602 = vmatpush1.msra.mxu0 %v495
    %603 = vmatprep.subr.mxu0 0.0
    %604 = vmatpush1.msra.mxu0 %v496
    %605 = vmatprep.subr.mxu0 0.0
    %606 = vmatpush1.msra.mxu0 %v497
    %607 = vmatprep.subr.mxu0 0.0
    %608 = vmatpush1.msra.mxu0 %v498
    %609 = vmatprep.subr.mxu0 0.0
    %610 = vmatpush1.msra.mxu0 %v499
    %611 = vmatprep.subr.mxu0 0.0
    %612 = vmatpush1.msra.mxu0 %v500
    %613 = vmatprep.subr.mxu0 0.0
    %614 = vmatpush1.msra.mxu0 %v501
    %615 = vmatprep.subr.mxu0 0.0
    %616 = vmatpush1.msra.mxu0 %v502
    %617 = vmatprep.subr.mxu0 0.0
    %618 = vmatpush1.msra.mxu0 %v503
    %619 = vmatprep.subr.mxu0 0.0
    %620 = vmatpush1.msra.mxu0 %v504
    %621 = vmatprep.subr.mxu0 0.0
    %622 = vmatpush1.msra.mxu0 %v505
    %623 = vmatprep.subr.mxu0 0.0
    %624 = vmatpush1.msra.mxu0 %v506
    %625 = vmatprep.subr.mxu0 0.0
    %626 = vmatpush1.msra.mxu0 %v507
    %627 = vmatprep.subr.mxu0 0.0
    %628 = vmatpush1.msra.mxu0 0.0
    %629 = vmatprep.subr.mxu0 0.0
    %630 = vmatpush1.msra.mxu0 0.0
    %631 = vmatprep.subr.mxu0 0.0
    %632 = vmatpush1.msra.mxu0 0.0
    %633 = vmatprep.subr.mxu0 0.0
    %634 = vmatpush1.msra.mxu0 0.0
    %635 = vmatprep.subr.mxu0 0.0
    %636 = vmatpush1.msra.mxu0 0.0
    %637 = vmatprep.subr.mxu0 0.0
    %638 = vmatpush1.msra.mxu0 0.0
    %639 = vmatprep.subr.mxu0 0.0
    %640 = vmatpush1.msra.mxu0 0.0
    %641 = vmatprep.subr.mxu0 0.0
    %642 = vmatpush1.msra.mxu0 0.0
    %643 = vmatprep.subr.mxu0 0.0
    %644 = vmatpush1.msra.mxu0 0.0
    %645 = vmatprep.subr.mxu0 0.0
    %646 = vmatpush1.msra.mxu0 0.0
    %647 = vmatprep.subr.mxu0 0.0
    %648 = vmatpush1.msra.mxu0 0.0
    %649 = vmatprep.subr.mxu0 0.0
    %650 = vmatpush1.msra.mxu0 0.0
    %651 = vmatprep.subr.mxu0 0.0
    %652 = vmatpush1.msra.mxu0 0.0
    %653 = vmatprep.subr.mxu0 0.0
    %654 = vmatpush1.msra.mxu0 0.0
    %655 = vmatprep.subr.mxu0 0.0
    %656 = vmatpush1.msra.mxu0 0.0
    %657 = vmatprep.subr.mxu0 0.0
    %658 = vmatpush1.msra.mxu0 0.0
    %659 = vmatprep.mubr.f32.mxu0 0.0
    %660 = vmatmul.mubr.f32.gmra.mrb[0].mxu0 %v49
    %v661 = vpop.f32.mrb[0].mxu0
    %v662 = vadd.f32 %v592, %v661
    %v663 = vpop.f32.mrb[0].mxu0
    %664 = vdwg.mxu0
    %s665 = scalar_lea.vmem %s2, 640
    %v666 = vld [vmem:[%s665] sm:$0xff]
    %v667 = vld [vmem:[%s665 + $0x8] sm:$0xff]
    %v668 = vld [vmem:[%s665 + $0x10] sm:$0xff]
    %v669 = vld [vmem:[%s665 + $0x18] sm:$0xff]
    %v670 = vld [vmem:[%s665 + $0x20] sm:$0xff]
    %v671 = vld [vmem:[%s665 + $0x28] sm:$0xff]
    %v672 = vld [vmem:[%s665 + $0x30] sm:$0xff]
    %v673 = vld [vmem:[%s665 + $0x38] sm:$0xff]
    %v674 = vld [vmem:[%s665 + $0x40] sm:$0xff]
    %v675 = vld [vmem:[%s665 + $0x48] sm:$0xff]
    %v676 = vld [vmem:[%s665 + $0x50] sm:$0xff]
    %v677 = vld [vmem:[%s665 + $0x58] sm:$0xff]
    %v678 = vld [vmem:[%s665 + $0x60] sm:$0xff]
    %v679 = vld [vmem:[%s665 + $0x68] sm:$0xff]
    %v680 = vld [vmem:[%s665 + $0x70] sm:$0xff]
    %v681 = vld [vmem:[%s665 + $0x78] sm:$0xff]
    %682 = vmatprep.subr.mxu0 0.0
    %683 = vmatpush1.msra.mxu0 %v666
    %684 = vmatprep.subr.mxu0 0.0
    %685 = vmatpush1.msra.mxu0 %v667
    %686 = vmatprep.subr.mxu0 0.0
    %687 = vmatpush1.msra.mxu0 %v668
    %688 = vmatprep.subr.mxu0 0.0
    %689 = vmatpush1.msra.mxu0 %v669
    %690 = vmatprep.subr.mxu0 0.0
    %691 = vmatpush1.msra.mxu0 %v670
    %692 = vmatprep.subr.mxu0 0.0
    %693 = vmatpush1.msra.mxu0 %v671
    %694 = vmatprep.subr.mxu0 0.0
    %695 = vmatpush1.msra.mxu0 %v672
    %696 = vmatprep.subr.mxu0 0.0
    %697 = vmatpush1.msra.mxu0 %v673
    %698 = vmatprep.subr.mxu0 0.0
    %699 = vmatpush1.msra.mxu0 %v674
    %700 = vmatprep.subr.mxu0 0.0
    %701 = vmatpush1.msra.mxu0 %v675
    %702 = vmatprep.subr.mxu0 0.0
    %703 = vmatpush1.msra.mxu0 %v676
    %704 = vmatprep.subr.mxu0 0.0
    %705 = vmatpush1.msra.mxu0 %v677
    %706 = vmatprep.subr.mxu0 0.0
    %707 = vmatpush1.msra.mxu0 %v678
    %708 = vmatprep.subr.mxu0 0.0
    %709 = vmatpush1.msra.mxu0 %v679
    %710 = vmatprep.subr.mxu0 0.0
    %711 = vmatpush1.msra.mxu0 %v680
    %712 = vmatprep.subr.mxu0 0.0
    %713 = vmatpush1.msra.mxu0 %v681
    %714 = vmatprep.subr.mxu0 0.0
    %715 = vmatpush1.msra.mxu0 0.0
    %716 = vmatprep.subr.mxu0 0.0
    %717 = vmatpush1.msra.mxu0 0.0
    %718 = vmatprep.subr.mxu0 0.0
    %719 = vmatpush1.msra.mxu0 0.0
    %720 = vmatprep.subr.mxu0 0.0
    %721 = vmatpush1.msra.mxu0 0.0
    %722 = vmatprep.subr.mxu0 0.0
    %723 = vmatpush1.msra.mxu0 0.0
    %724 = vmatprep.subr.mxu0 0.0
    %725 = vmatpush1.msra.mxu0 0.0
    %726 = vmatprep.subr.mxu0 0.0
    %727 = vmatpush1.msra.mxu0 0.0
    %728 = vmatprep.subr.mxu0 0.0
    %729 = vmatpush1.msra.mxu0 0.0
    %730 = vmatprep.subr.mxu0 0.0
    %731 = vmatpush1.msra.mxu0 0.0
    %732 = vmatprep.subr.mxu0 0.0
    %733 = vmatpush1.msra.mxu0 0.0
    %734 = vmatprep.subr.mxu0 0.0
    %735 = vmatpush1.msra.mxu0 0.0
    %736 = vmatprep.subr.mxu0 0.0
    %737 = vmatpush1.msra.mxu0 0.0
    %738 = vmatprep.subr.mxu0 0.0
    %739 = vmatpush1.msra.mxu0 0.0
    %740 = vmatprep.subr.mxu0 0.0
    %741 = vmatpush1.msra.mxu0 0.0
    %742 = vmatprep.subr.mxu0 0.0
    %743 = vmatpush1.msra.mxu0 0.0
    %744 = vmatprep.subr.mxu0 0.0
    %745 = vmatpush1.msra.mxu0 0.0
    %746 = vmatprep.mubr.f32.mxu0 0.0
    %747 = vmatmul.mubr.f32.gmra.mrb[0].mxu0 %v224
    %v748 = vpop.f32.mrb[0].mxu0
    %v749 = vadd.f32 0.0, %v748
    %v750 = vpop.f32.mrb[0].mxu0
    %751 = vdwg.mxu0
    %v752 = vadd.f32 %v662, %v749
    %s753 = scalar_lea.vmem %s2, 896
    %v754 = vld [vmem:[%s753] sm:$0xff]
    %v755 = vld [vmem:[%s753 + $0x8] sm:$0xff]
    %v756 = vld [vmem:[%s753 + $0x10] sm:$0xff]
    %v757 = vld [vmem:[%s753 + $0x18] sm:$0xff]
    %v758 = vld [vmem:[%s753 + $0x20] sm:$0xff]
    %v759 = vld [vmem:[%s753 + $0x28] sm:$0xff]
    %v760 = vld [vmem:[%s753 + $0x30] sm:$0xff]
    %v761 = vld [vmem:[%s753 + $0x38] sm:$0xff]
    %v762 = vld [vmem:[%s753 + $0x40] sm:$0xff]
    %v763 = vld [vmem:[%s753 + $0x48] sm:$0xff]
    %v764 = vld [vmem:[%s753 + $0x50] sm:$0xff]
    %v765 = vld [vmem:[%s753 + $0x58] sm:$0xff]
    %v766 = vld [vmem:[%s753 + $0x60] sm:$0xff]
    %v767 = vld [vmem:[%s753 + $0x68] sm:$0xff]
    %v768 = vld [vmem:[%s753 + $0x70] sm:$0xff]
    %v769 = vld [vmem:[%s753 + $0x78] sm:$0xff]
    %770 = vmatprep.subr.mxu0 0.0
    %771 = vmatpush1.msra.mxu0 %v754
    %772 = vmatprep.subr.mxu0 0.0
    %773 = vmatpush1.msra.mxu0 %v755
    %774 = vmatprep.subr.mxu0 0.0
    %775 = vmatpush1.msra.mxu0 %v756
    %776 = vmatprep.subr.mxu0 0.0
    %777 = vmatpush1.msra.mxu0 %v757
    %778 = vmatprep.subr.mxu0 0.0
    %779 = vmatpush1.msra.mxu0 %v758
    %780 = vmatprep.subr.mxu0 0.0
    %781 = vmatpush1.msra.mxu0 %v759
    %782 = vmatprep.subr.mxu0 0.0
    %783 = vmatpush1.msra.mxu0 %v760
    %784 = vmatprep.subr.mxu0 0.0
    %785 = vmatpush1.msra.mxu0 %v761
    %786 = vmatprep.subr.mxu0 0.0
    %787 = vmatpush1.msra.mxu0 %v762
    %788 = vmatprep.subr.mxu0 0.0
    %789 = vmatpush1.msra.mxu0 %v763
    %790 = vmatprep.subr.mxu0 0.0
    %791 = vmatpush1.msra.mxu0 %v764
    %792 = vmatprep.subr.mxu0 0.0
    %793 = vmatpush1.msra.mxu0 %v765
    %794 = vmatprep.subr.mxu0 0.0
    %795 = vmatpush1.msra.mxu0 %v766
    %796 = vmatprep.subr.mxu0 0.0
    %797 = vmatpush1.msra.mxu0 %v767
    %798 = vmatprep.subr.mxu0 0.0
    %799 = vmatpush1.msra.mxu0 %v768
    %800 = vmatprep.subr.mxu0 0.0
    %801 = vmatpush1.msra.mxu0 %v769
    %802 = vmatprep.subr.mxu0 0.0
    %803 = vmatpush1.msra.mxu0 0.0
    %804 = vmatprep.subr.mxu0 0.0
    %805 = vmatpush1.msra.mxu0 0.0
    %806 = vmatprep.subr.mxu0 0.0
    %807 = vmatpush1.msra.mxu0 0.0
    %808 = vmatprep.subr.mxu0 0.0
    %809 = vmatpush1.msra.mxu0 0.0
    %810 = vmatprep.subr.mxu0 0.0
    %811 = vmatpush1.msra.mxu0 0.0
    %812 = vmatprep.subr.mxu0 0.0
    %813 = vmatpush1.msra.mxu0 0.0
    %814 = vmatprep.subr.mxu0 0.0
    %815 = vmatpush1.msra.mxu0 0.0
    %816 = vmatprep.subr.mxu0 0.0
    %817 = vmatpush1.msra.mxu0 0.0
    %818 = vmatprep.subr.mxu0 0.0
    %819 = vmatpush1.msra.mxu0 0.0
    %820 = vmatprep.subr.mxu0 0.0
    %821 = vmatpush1.msra.mxu0 0.0
    %822 = vmatprep.subr.mxu0 0.0
    %823 = vmatpush1.msra.mxu0 0.0
    %824 = vmatprep.subr.mxu0 0.0
    %825 = vmatpush1.msra.mxu0 0.0
    %826 = vmatprep.subr.mxu0 0.0
    %827 = vmatpush1.msra.mxu0 0.0
    %828 = vmatprep.subr.mxu0 0.0
    %829 = vmatpush1.msra.mxu0 0.0
    %830 = vmatprep.subr.mxu0 0.0
    %831 = vmatpush1.msra.mxu0 0.0
    %832 = vmatprep.subr.mxu0 0.0
    %833 = vmatpush1.msra.mxu0 0.0
    %834 = vmatprep.mubr.f32.mxu0 0.0
    %835 = vmatmul.mubr.f32.gmra.mrb[0].mxu0 %v313
    %v836 = vpop.f32.mrb[0].mxu0
    %v837 = vadd.f32 0.0, %v836
    %v838 = vpop.f32.mrb[0].mxu0
    %839 = vdwg.mxu0
    %v840 = vadd.f32 %v752, %v837
    %s841 = scalar_lea.vmem %s2, 1152
    %v842 = vld [vmem:[%s841] sm:$0xff]
    %v843 = vld [vmem:[%s841 + $0x8] sm:$0xff]
    %v844 = vld [vmem:[%s841 + $0x10] sm:$0xff]
    %v845 = vld [vmem:[%s841 + $0x18] sm:$0xff]
    %v846 = vld [vmem:[%s841 + $0x20] sm:$0xff]
    %v847 = vld [vmem:[%s841 + $0x28] sm:$0xff]
    %v848 = vld [vmem:[%s841 + $0x30] sm:$0xff]
    %v849 = vld [vmem:[%s841 + $0x38] sm:$0xff]
    %v850 = vld [vmem:[%s841 + $0x40] sm:$0xff]
    %v851 = vld [vmem:[%s841 + $0x48] sm:$0xff]
    %v852 = vld [vmem:[%s841 + $0x50] sm:$0xff]
    %v853 = vld [vmem:[%s841 + $0x58] sm:$0xff]
    %v854 = vld [vmem:[%s841 + $0x60] sm:$0xff]
    %v855 = vld [vmem:[%s841 + $0x68] sm:$0xff]
    %v856 = vld [vmem:[%s841 + $0x70] sm:$0xff]
    %v857 = vld [vmem:[%s841 + $0x78] sm:$0xff]
    %858 = vmatprep.subr.mxu0 0.0
    %859 = vmatpush1.msra.mxu0 %v842
    %860 = vmatprep.subr.mxu0 0.0
    %861 = vmatpush1.msra.mxu0 %v843
    %862 = vmatprep.subr.mxu0 0.0
    %863 = vmatpush1.msra.mxu0 %v844
    %864 = vmatprep.subr.mxu0 0.0
    %865 = vmatpush1.msra.mxu0 %v845
    %866 = vmatprep.subr.mxu0 0.0
    %867 = vmatpush1.msra.mxu0 %v846
    %868 = vmatprep.subr.mxu0 0.0
    %869 = vmatpush1.msra.mxu0 %v847
    %870 = vmatprep.subr.mxu0 0.0
    %871 = vmatpush1.msra.mxu0 %v848
    %872 = vmatprep.subr.mxu0 0.0
    %873 = vmatpush1.msra.mxu0 %v849
    %874 = vmatprep.subr.mxu0 0.0
    %875 = vmatpush1.msra.mxu0 %v850
    %876 = vmatprep.subr.mxu0 0.0
    %877 = vmatpush1.msra.mxu0 %v851
    %878 = vmatprep.subr.mxu0 0.0
    %879 = vmatpush1.msra.mxu0 %v852
    %880 = vmatprep.subr.mxu0 0.0
    %881 = vmatpush1.msra.mxu0 %v853
    %882 = vmatprep.subr.mxu0 0.0
    %883 = vmatpush1.msra.mxu0 %v854
    %884 = vmatprep.subr.mxu0 0.0
    %885 = vmatpush1.msra.mxu0 %v855
    %886 = vmatprep.subr.mxu0 0.0
    %887 = vmatpush1.msra.mxu0 %v856
    %888 = vmatprep.subr.mxu0 0.0
    %889 = vmatpush1.msra.mxu0 %v857
    %890 = vmatprep.subr.mxu0 0.0
    %891 = vmatpush1.msra.mxu0 0.0
    %892 = vmatprep.subr.mxu0 0.0
    %893 = vmatpush1.msra.mxu0 0.0
    %894 = vmatprep.subr.mxu0 0.0
    %895 = vmatpush1.msra.mxu0 0.0
    %896 = vmatprep.subr.mxu0 0.0
    %897 = vmatpush1.msra.mxu0 0.0
    %898 = vmatprep.subr.mxu0 0.0
    %899 = vmatpush1.msra.mxu0 0.0
    %900 = vmatprep.subr.mxu0 0.0
    %901 = vmatpush1.msra.mxu0 0.0
    %902 = vmatprep.subr.mxu0 0.0
    %903 = vmatpush1.msra.mxu0 0.0
    %904 = vmatprep.subr.mxu0 0.0
    %905 = vmatpush1.msra.mxu0 0.0
    %906 = vmatprep.subr.mxu0 0.0
    %907 = vmatpush1.msra.mxu0 0.0
    %908 = vmatprep.subr.mxu0 0.0
    %909 = vmatpush1.msra.mxu0 0.0
    %910 = vmatprep.subr.mxu0 0.0
    %911 = vmatpush1.msra.mxu0 0.0
    %912 = vmatprep.subr.mxu0 0.0
    %913 = vmatpush1.msra.mxu0 0.0
    %914 = vmatprep.subr.mxu0 0.0
    %915 = vmatpush1.msra.mxu0 0.0
    %916 = vmatprep.subr.mxu0 0.0
    %917 = vmatpush1.msra.mxu0 0.0
    %918 = vmatprep.subr.mxu0 0.0
    %919 = vmatpush1.msra.mxu0 0.0
    %920 = vmatprep.subr.mxu0 0.0
    %921 = vmatpush1.msra.mxu0 0.0
    %922 = vmatprep.mubr.f32.mxu0 0.0
    %923 = vmatmul.mubr.f32.gmra.mrb[0].mxu0 %v402
    %v924 = vpop.f32.mrb[0].mxu0
    %v925 = vadd.f32 0.0, %v924
    %v926 = vpop.f32.mrb[0].mxu0
    %927 = vdwg.mxu0
    %v928 = vadd.f32 %v840, %v925
    %v929 = vmax.f32 %v490, %v928
    %930 = vmatprep.subr.mxu0 0.0
    %931 = vmatpush1.msra.mxu0 %v68
    %932 = vmatprep.subr.mxu0 0.0
    %933 = vmatpush1.msra.mxu0 %v69
    %934 = vmatprep.subr.mxu0 0.0
    %935 = vmatpush1.msra.mxu0 %v70
    %936 = vmatprep.subr.mxu0 0.0
    %937 = vmatpush1.msra.mxu0 %v71
    %938 = vmatprep.subr.mxu0 0.0
    %939 = vmatpush1.msra.mxu0 %v72
    %940 = vmatprep.subr.mxu0 0.0
    %941 = vmatpush1.msra.mxu0 %v73
    %942 = vmatprep.subr.mxu0 0.0
    %943 = vmatpush1.msra.mxu0 %v74
    %944 = vmatprep.subr.mxu0 0.0
    %945 = vmatpush1.msra.mxu0 %v75
    %946 = vmatprep.subr.mxu0 0.0
    %947 = vmatpush1.msra.mxu0 %v76
    %948 = vmatprep.subr.mxu0 0.0
    %949 = vmatpush1.msra.mxu0 %v77
    %950 = vmatprep.subr.mxu0 0.0
    %951 = vmatpush1.msra.mxu0 %v78
    %952 = vmatprep.subr.mxu0 0.0
    %953 = vmatpush1.msra.mxu0 %v79
    %954 = vmatprep.subr.mxu0 0.0
    %955 = vmatpush1.msra.mxu0 %v80
    %956 = vmatprep.subr.mxu0 0.0
    %957 = vmatpush1.msra.mxu0 %v81
    %958 = vmatprep.subr.mxu0 0.0
    %959 = vmatpush1.msra.mxu0 %v82
    %960 = vmatprep.subr.mxu0 0.0
    %961 = vmatpush1.msra.mxu0 %v83
    %962 = vmatprep.subr.mxu0 0.0
    %963 = vmatpush1.msra.mxu0 0.0
    %964 = vmatprep.subr.mxu0 0.0
    %965 = vmatpush1.msra.mxu0 0.0
    %966 = vmatprep.subr.mxu0 0.0
    %967 = vmatpush1.msra.mxu0 0.0
    %968 = vmatprep.subr.mxu0 0.0
    %969 = vmatpush1.msra.mxu0 0.0
    %970 = vmatprep.subr.mxu0 0.0
    %971 = vmatpush1.msra.mxu0 0.0
    %972 = vmatprep.subr.mxu0 0.0
    %973 = vmatpush1.msra.mxu0 0.0
    %974 = vmatprep.subr.mxu0 0.0
    %975 = vmatpush1.msra.mxu0 0.0
    %976 = vmatprep.subr.mxu0 0.0
    %977 = vmatpush1.msra.mxu0 0.0
    %978 = vmatprep.subr.mxu0 0.0
    %979 = vmatpush1.msra.mxu0 0.0
    %980 = vmatprep.subr.mxu0 0.0
    %981 = vmatpush1.msra.mxu0 0.0
    %982 = vmatprep.subr.mxu0 0.0
    %983 = vmatpush1.msra.mxu0 0.0
    %984 = vmatprep.subr.mxu0 0.0
    %985 = vmatpush1.msra.mxu0 0.0
    %986 = vmatprep.subr.mxu0 0.0
    %987 = vmatpush1.msra.mxu0 0.0
    %988 = vmatprep.subr.mxu0 0.0
    %989 = vmatpush1.msra.mxu0 0.0
    %990 = vmatprep.subr.mxu0 0.0
    %991 = vmatpush1.msra.mxu0 0.0
    %992 = vmatprep.subr.mxu0 0.0
    %993 = vmatpush1.msra.mxu0 0.0
    %994 = vmatprep.mubr.f32.mxu0 0.0
    %995 = vmatmul.mubr.f32.gmra.mrb[0].mxu0 %v224
    %v996 = vpop.f32.mrb[0].mxu0
    %v997 = vadd.f32 0.0, %v996
    %v998 = vpop.f32.mrb[0].mxu0
    %999 = vdwg.mxu0
    %1000 = vmatprep.subr.mxu0 0.0
    %1001 = vmatpush1.msra.mxu0 %v50
    %1002 = vmatprep.subr.mxu0 0.0
    %1003 = vmatpush1.msra.mxu0 %v51
    %1004 = vmatprep.subr.mxu0 0.0
    %1005 = vmatpush1.msra.mxu0 %v52
    %1006 = vmatprep.subr.mxu0 0.0
    %1007 = vmatpush1.msra.mxu0 %v53
    %1008 = vmatprep.subr.mxu0 0.0
    %1009 = vmatpush1.msra.mxu0 %v54
    %1010 = vmatprep.subr.mxu0 0.0
    %1011 = vmatpush1.msra.mxu0 %v55
    %1012 = vmatprep.subr.mxu0 0.0
    %1013 = vmatpush1.msra.mxu0 %v56
    %1014 = vmatprep.subr.mxu0 0.0
    %1015 = vmatpush1.msra.mxu0 %v57
    %1016 = vmatprep.subr.mxu0 0.0
    %1017 = vmatpush1.msra.mxu0 %v58
    %1018 = vmatprep.subr.mxu0 0.0
    %1019 = vmatpush1.msra.mxu0 %v59
    %1020 = vmatprep.subr.mxu0 0.0
    %1021 = vmatpush1.msra.mxu0 %v60
    %1022 = vmatprep.subr.mxu0 0.0
    %1023 = vmatpush1.msra.mxu0 %v61
    %1024 = vmatprep.subr.mxu0 0.0
    %1025 = vmatpush1.msra.mxu0 %v62
    %1026 = vmatprep.subr.mxu0 0.0
    %1027 = vmatpush1.msra.mxu0 %v63
    %1028 = vmatprep.subr.mxu0 0.0
    %1029 = vmatpush1.msra.mxu0 %v64
    %1030 = vmatprep.subr.mxu0 0.0
    %1031 = vmatpush1.msra.mxu0 %v65
    %1032 = vmatprep.subr.mxu0 0.0
    %1033 = vmatpush1.msra.mxu0 0.0
    %1034 = vmatprep.subr.mxu0 0.0
    %1035 = vmatpush1.msra.mxu0 0.0
    %1036 = vmatprep.subr.mxu0 0.0
    %1037 = vmatpush1.msra.mxu0 0.0
    %1038 = vmatprep.subr.mxu0 0.0
    %1039 = vmatpush1.msra.mxu0 0.0
    %1040 = vmatprep.subr.mxu0 0.0
    %1041 = vmatpush1.msra.mxu0 0.0
    %1042 = vmatprep.subr.mxu0 0.0
    %1043 = vmatpush1.msra.mxu0 0.0
    %1044 = vmatprep.subr.mxu0 0.0
    %1045 = vmatpush1.msra.mxu0 0.0
    %1046 = vmatprep.subr.mxu0 0.0
    %1047 = vmatpush1.msra.mxu0 0.0
    %1048 = vmatprep.subr.mxu0 0.0
    %1049 = vmatpush1.msra.mxu0 0.0
    %1050 = vmatprep.subr.mxu0 0.0
    %1051 = vmatpush1.msra.mxu0 0.0
    %1052 = vmatprep.subr.mxu0 0.0
    %1053 = vmatpush1.msra.mxu0 0.0
    %1054 = vmatprep.subr.mxu0 0.0
    %1055 = vmatpush1.msra.mxu0 0.0
    %1056 = vmatprep.subr.mxu0 0.0
    %1057 = vmatpush1.msra.mxu0 0.0
    %1058 = vmatprep.subr.mxu0 0.0
    %1059 = vmatpush1.msra.mxu0 0.0
    %1060 = vmatprep.subr.mxu0 0.0
    %1061 = vmatpush1.msra.mxu0 0.0
    %1062 = vmatprep.subr.mxu0 0.0
    %1063 = vmatpush1.msra.mxu0 0.0
    %1064 = vmatprep.mubr.f32.mxu0 0.0
    %1065 = vmatmul.mubr.f32.gmra.mrb[0].mxu0 %v66
    %v1066 = vpop.f32.mrb[0].mxu0
    %v1067 = vadd.f32 %v997, %v1066
    %v1068 = vpop.f32.mrb[0].mxu0
    %1069 = vdwg.mxu0
    %1070 = vmatprep.subr.mxu0 0.0
    %1071 = vmatpush1.msra.mxu0 %v226
    %1072 = vmatprep.subr.mxu0 0.0
    %1073 = vmatpush1.msra.mxu0 %v227
    %1074 = vmatprep.subr.mxu0 0.0
    %1075 = vmatpush1.msra.mxu0 %v228
    %1076 = vmatprep.subr.mxu0 0.0
    %1077 = vmatpush1.msra.mxu0 %v229
    %1078 = vmatprep.subr.mxu0 0.0
    %1079 = vmatpush1.msra.mxu0 %v230
    %1080 = vmatprep.subr.mxu0 0.0
    %1081 = vmatpush1.msra.mxu0 %v231
    %1082 = vmatprep.subr.mxu0 0.0
    %1083 = vmatpush1.msra.mxu0 %v232
    %1084 = vmatprep.subr.mxu0 0.0
    %1085 = vmatpush1.msra.mxu0 %v233
    %1086 = vmatprep.subr.mxu0 0.0
    %1087 = vmatpush1.msra.mxu0 %v234
    %1088 = vmatprep.subr.mxu0 0.0
    %1089 = vmatpush1.msra.mxu0 %v235
    %1090 = vmatprep.subr.mxu0 0.0
    %1091 = vmatpush1.msra.mxu0 %v236
    %1092 = vmatprep.subr.mxu0 0.0
    %1093 = vmatpush1.msra.mxu0 %v237
    %1094 = vmatprep.subr.mxu0 0.0
    %1095 = vmatpush1.msra.mxu0 %v238
    %1096 = vmatprep.subr.mxu0 0.0
    %1097 = vmatpush1.msra.mxu0 %v239
    %1098 = vmatprep.subr.mxu0 0.0
    %1099 = vmatpush1.msra.mxu0 %v240
    %1100 = vmatprep.subr.mxu0 0.0
    %1101 = vmatpush1.msra.mxu0 %v241
    %1102 = vmatprep.subr.mxu0 0.0
    %1103 = vmatpush1.msra.mxu0 0.0
    %1104 = vmatprep.subr.mxu0 0.0
    %1105 = vmatpush1.msra.mxu0 0.0
    %1106 = vmatprep.subr.mxu0 0.0
    %1107 = vmatpush1.msra.mxu0 0.0
    %1108 = vmatprep.subr.mxu0 0.0
    %1109 = vmatpush1.msra.mxu0 0.0
    %1110 = vmatprep.subr.mxu0 0.0
    %1111 = vmatpush1.msra.mxu0 0.0
    %1112 = vmatprep.subr.mxu0 0.0
    %1113 = vmatpush1.msra.mxu0 0.0
    %1114 = vmatprep.subr.mxu0 0.0
    %1115 = vmatpush1.msra.mxu0 0.0
    %1116 = vmatprep.subr.mxu0 0.0
    %1117 = vmatpush1.msra.mxu0 0.0
    %1118 = vmatprep.subr.mxu0 0.0
    %1119 = vmatpush1.msra.mxu0 0.0
    %1120 = vmatprep.subr.mxu0 0.0
    %1121 = vmatpush1.msra.mxu0 0.0
    %1122 = vmatprep.subr.mxu0 0.0
    %1123 = vmatpush1.msra.mxu0 0.0
    %1124 = vmatprep.subr.mxu0 0.0
    %1125 = vmatpush1.msra.mxu0 0.0
    %1126 = vmatprep.subr.mxu0 0.0
    %1127 = vmatpush1.msra.mxu0 0.0
    %1128 = vmatprep.subr.mxu0 0.0
    %1129 = vmatpush1.msra.mxu0 0.0
    %1130 = vmatprep.subr.mxu0 0.0
    %1131 = vmatpush1.msra.mxu0 0.0
    %1132 = vmatprep.subr.mxu0 0.0
    %1133 = vmatpush1.msra.mxu0 0.0
    %1134 = vmatprep.mubr.f32.mxu0 0.0
    %1135 = vmatmul.mubr.f32.gmra.mrb[0].mxu0 %v313
    %v1136 = vpop.f32.mrb[0].mxu0
    %v1137 = vadd.f32 0.0, %v1136
    %v1138 = vpop.f32.mrb[0].mxu0
    %1139 = vdwg.mxu0
    %v1140 = vadd.f32 %v1067, %v1137
    %1141 = vmatprep.subr.mxu0 0.0
    %1142 = vmatpush1.msra.mxu0 %v315
    %1143 = vmatprep.subr.mxu0 0.0
    %1144 = vmatpush1.msra.mxu0 %v316
    %1145 = vmatprep.subr.mxu0 0.0
    %1146 = vmatpush1.msra.mxu0 %v317
    %1147 = vmatprep.subr.mxu0 0.0
    %1148 = vmatpush1.msra.mxu0 %v318
    %1149 = vmatprep.subr.mxu0 0.0
    %1150 = vmatpush1.msra.mxu0 %v319
    %1151 = vmatprep.subr.mxu0 0.0
    %1152 = vmatpush1.msra.mxu0 %v320
    %1153 = vmatprep.subr.mxu0 0.0
    %1154 = vmatpush1.msra.mxu0 %v321
    %1155 = vmatprep.subr.mxu0 0.0
    %1156 = vmatpush1.msra.mxu0 %v322
    %1157 = vmatprep.subr.mxu0 0.0
    %1158 = vmatpush1.msra.mxu0 %v323
    %1159 = vmatprep.subr.mxu0 0.0
    %1160 = vmatpush1.msra.mxu0 %v324
    %1161 = vmatprep.subr.mxu0 0.0
    %1162 = vmatpush1.msra.mxu0 %v325
    %1163 = vmatprep.subr.mxu0 0.0
    %1164 = vmatpush1.msra.mxu0 %v326
    %1165 = vmatprep.subr.mxu0 0.0
    %1166 = vmatpush1.msra.mxu0 %v327
    %1167 = vmatprep.subr.mxu0 0.0
    %1168 = vmatpush1.msra.mxu0 %v328
    %1169 = vmatprep.subr.mxu0 0.0
    %1170 = vmatpush1.msra.mxu0 %v329
    %1171 = vmatprep.subr.mxu0 0.0
    %1172 = vmatpush1.msra.mxu0 %v330
    %1173 = vmatprep.subr.mxu0 0.0
    %1174 = vmatpush1.msra.mxu0 0.0
    %1175 = vmatprep.subr.mxu0 0.0
    %1176 = vmatpush1.msra.mxu0 0.0
    %1177 = vmatprep.subr.mxu0 0.0
    %1178 = vmatpush1.msra.mxu0 0.0
    %1179 = vmatprep.subr.mxu0 0.0
    %1180 = vmatpush1.msra.mxu0 0.0
    %1181 = vmatprep.subr.mxu0 0.0
    %1182 = vmatpush1.msra.mxu0 0.0
    %1183 = vmatprep.subr.mxu0 0.0
    %1184 = vmatpush1.msra.mxu0 0.0
    %1185 = vmatprep.subr.mxu0 0.0
    %1186 = vmatpush1.msra.mxu0 0.0
    %1187 = vmatprep.subr.mxu0 0.0
    %1188 = vmatpush1.msra.mxu0 0.0
    %1189 = vmatprep.subr.mxu0 0.0
    %1190 = vmatpush1.msra.mxu0 0.0
    %1191 = vmatprep.subr.mxu0 0.0
    %1192 = vmatpush1.msra.mxu0 0.0
    %1193 = vmatprep.subr.mxu0 0.0
    %1194 = vmatpush1.msra.mxu0 0.0
    %1195 = vmatprep.subr.mxu0 0.0
    %1196 = vmatpush1.msra.mxu0 0.0
    %1197 = vmatprep.subr.mxu0 0.0
    %1198 = vmatpush1.msra.mxu0 0.0
    %1199 = vmatprep.subr.mxu0 0.0
    %1200 = vmatpush1.msra.mxu0 0.0
    %1201 = vmatprep.subr.mxu0 0.0
    %1202 = vmatpush1.msra.mxu0 0.0
    %1203 = vmatprep.subr.mxu0 0.0
    %1204 = vmatpush1.msra.mxu0 0.0
    %1205 = vmatprep.mubr.f32.mxu0 0.0
    %1206 = vmatmul.mubr.f32.gmra.mrb[0].mxu0 %v402
    %v1207 = vpop.f32.mrb[0].mxu0
    %v1208 = vadd.f32 0.0, %v1207
    %v1209 = vpop.f32.mrb[0].mxu0
    %1210 = vdwg.mxu0
    %v1211 = vadd.f32 %v1140, %v1208
    %v1212 = vld [vmem:[%s1 + $0x2] sm:$0xf]
    %1213 = vmatprep.subr.mxu0 0.0
    %1214 = vmatpush1.msra.mxu0 %v404
    %1215 = vmatprep.subr.mxu0 0.0
    %1216 = vmatpush1.msra.mxu0 %v405
    %1217 = vmatprep.subr.mxu0 0.0
    %1218 = vmatpush1.msra.mxu0 %v406
    %1219 = vmatprep.subr.mxu0 0.0
    %1220 = vmatpush1.msra.mxu0 %v407
    %1221 = vmatprep.subr.mxu0 0.0
    %1222 = vmatpush1.msra.mxu0 %v408
    %1223 = vmatprep.subr.mxu0 0.0
    %1224 = vmatpush1.msra.mxu0 %v409
    %1225 = vmatprep.subr.mxu0 0.0
    %1226 = vmatpush1.msra.mxu0 %v410
    %1227 = vmatprep.subr.mxu0 0.0
    %1228 = vmatpush1.msra.mxu0 %v411
    %1229 = vmatprep.subr.mxu0 0.0
    %1230 = vmatpush1.msra.mxu0 %v412
    %1231 = vmatprep.subr.mxu0 0.0
    %1232 = vmatpush1.msra.mxu0 %v413
    %1233 = vmatprep.subr.mxu0 0.0
    %1234 = vmatpush1.msra.mxu0 %v414
    %1235 = vmatprep.subr.mxu0 0.0
    %1236 = vmatpush1.msra.mxu0 %v415
    %1237 = vmatprep.subr.mxu0 0.0
    %1238 = vmatpush1.msra.mxu0 %v416
    %1239 = vmatprep.subr.mxu0 0.0
    %1240 = vmatpush1.msra.mxu0 %v417
    %1241 = vmatprep.subr.mxu0 0.0
    %1242 = vmatpush1.msra.mxu0 %v418
    %1243 = vmatprep.subr.mxu0 0.0
    %1244 = vmatpush1.msra.mxu0 %v419
    %1245 = vmatprep.subr.mxu0 0.0
    %1246 = vmatpush1.msra.mxu0 0.0
    %1247 = vmatprep.subr.mxu0 0.0
    %1248 = vmatpush1.msra.mxu0 0.0
    %1249 = vmatprep.subr.mxu0 0.0
    %1250 = vmatpush1.msra.mxu0 0.0
    %1251 = vmatprep.subr.mxu0 0.0
    %1252 = vmatpush1.msra.mxu0 0.0
    %1253 = vmatprep.subr.mxu0 0.0
    %1254 = vmatpush1.msra.mxu0 0.0
    %1255 = vmatprep.subr.mxu0 0.0
    %1256 = vmatpush1.msra.mxu0 0.0
    %1257 = vmatprep.subr.mxu0 0.0
    %1258 = vmatpush1.msra.mxu0 0.0
    %1259 = vmatprep.subr.mxu0 0.0
    %1260 = vmatpush1.msra.mxu0 0.0
    %1261 = vmatprep.subr.mxu0 0.0
    %1262 = vmatpush1.msra.mxu0 0.0
    %1263 = vmatprep.subr.mxu0 0.0
    %1264 = vmatpush1.msra.mxu0 0.0
    %1265 = vmatprep.subr.mxu0 0.0
    %1266 = vmatpush1.msra.mxu0 0.0
    %1267 = vmatprep.subr.mxu0 0.0
    %1268 = vmatpush1.msra.mxu0 0.0
    %1269 = vmatprep.subr.mxu0 0.0
    %1270 = vmatpush1.msra.mxu0 0.0
    %1271 = vmatprep.subr.mxu0 0.0
    %1272 = vmatpush1.msra.mxu0 0.0
    %1273 = vmatprep.subr.mxu0 0.0
    %1274 = vmatpush1.msra.mxu0 0.0
    %1275 = vmatprep.subr.mxu0 0.0
    %1276 = vmatpush1.msra.mxu0 0.0
    %1277 = vmatprep.mubr.f32.mxu0 0.0
    %1278 = vmatmul.mubr.f32.gmra.mrb[0].mxu0 %v1212
    %v1279 = vpop.f32.mrb[0].mxu0
    %v1280 = vadd.f32 0.0, %v1279
    %v1281 = vpop.f32.mrb[0].mxu0
    %1282 = vdwg.mxu0
    %v1283 = vadd.f32 %v1211, %v1280
    %v1284 = vmax.f32 %v929, %v1283
    %1285 = vmatprep.subr.mxu0 0.0
    %1286 = vmatpush1.msra.mxu0 %v509
    %1287 = vmatprep.subr.mxu0 0.0
    %1288 = vmatpush1.msra.mxu0 %v510
    %1289 = vmatprep.subr.mxu0 0.0
    %1290 = vmatpush1.msra.mxu0 %v511
    %1291 = vmatprep.subr.mxu0 0.0
    %1292 = vmatpush1.msra.mxu0 %v512
    %1293 = vmatprep.subr.mxu0 0.0
    %1294 = vmatpush1.msra.mxu0 %v513
    %1295 = vmatprep.subr.mxu0 0.0
    %1296 = vmatpush1.msra.mxu0 %v514
    %1297 = vmatprep.subr.mxu0 0.0
    %1298 = vmatpush1.msra.mxu0 %v515
    %1299 = vmatprep.subr.mxu0 0.0
    %1300 = vmatpush1.msra.mxu0 %v516
    %1301 = vmatprep.subr.mxu0 0.0
    %1302 = vmatpush1.msra.mxu0 %v517
    %1303 = vmatprep.subr.mxu0 0.0
    %1304 = vmatpush1.msra.mxu0 %v518
    %1305 = vmatprep.subr.mxu0 0.0
    %1306 = vmatpush1.msra.mxu0 %v519
    %1307 = vmatprep.subr.mxu0 0.0
    %1308 = vmatpush1.msra.mxu0 %v520
    %1309 = vmatprep.subr.mxu0 0.0
    %1310 = vmatpush1.msra.mxu0 %v521
    %1311 = vmatprep.subr.mxu0 0.0
    %1312 = vmatpush1.msra.mxu0 %v522
    %1313 = vmatprep.subr.mxu0 0.0
    %1314 = vmatpush1.msra.mxu0 %v523
    %1315 = vmatprep.subr.mxu0 0.0
    %1316 = vmatpush1.msra.mxu0 %v524
    %1317 = vmatprep.subr.mxu0 0.0
    %1318 = vmatpush1.msra.mxu0 0.0
    %1319 = vmatprep.subr.mxu0 0.0
    %1320 = vmatpush1.msra.mxu0 0.0
    %1321 = vmatprep.subr.mxu0 0.0
    %1322 = vmatpush1.msra.mxu0 0.0
    %1323 = vmatprep.subr.mxu0 0.0
    %1324 = vmatpush1.msra.mxu0 0.0
    %1325 = vmatprep.subr.mxu0 0.0
    %1326 = vmatpush1.msra.mxu0 0.0
    %1327 = vmatprep.subr.mxu0 0.0
    %1328 = vmatpush1.msra.mxu0 0.0
    %1329 = vmatprep.subr.mxu0 0.0
    %1330 = vmatpush1.msra.mxu0 0.0
    %1331 = vmatprep.subr.mxu0 0.0
    %1332 = vmatpush1.msra.mxu0 0.0
    %1333 = vmatprep.subr.mxu0 0.0
    %1334 = vmatpush1.msra.mxu0 0.0
    %1335 = vmatprep.subr.mxu0 0.0
    %1336 = vmatpush1.msra.mxu0 0.0
    %1337 = vmatprep.subr.mxu0 0.0
    %1338 = vmatpush1.msra.mxu0 0.0
    %1339 = vmatprep.subr.mxu0 0.0
    %1340 = vmatpush1.msra.mxu0 0.0
    %1341 = vmatprep.subr.mxu0 0.0
    %1342 = vmatpush1.msra.mxu0 0.0
    %1343 = vmatprep.subr.mxu0 0.0
    %1344 = vmatpush1.msra.mxu0 0.0
    %1345 = vmatprep.subr.mxu0 0.0
    %1346 = vmatpush1.msra.mxu0 0.0
    %1347 = vmatprep.subr.mxu0 0.0
    %1348 = vmatpush1.msra.mxu0 0.0
    %1349 = vmatprep.mubr.f32.mxu0 0.0
    %1350 = vmatmul.mubr.f32.gmra.mrb[0].mxu0 %v224
    %v1351 = vpop.f32.mrb[0].mxu0
    %v1352 = vadd.f32 0.0, %v1351
    %v1353 = vpop.f32.mrb[0].mxu0
    %1354 = vdwg.mxu0
    %1355 = vmatprep.subr.mxu0 0.0
    %1356 = vmatpush1.msra.mxu0 %v492
    %1357 = vmatprep.subr.mxu0 0.0
    %1358 = vmatpush1.msra.mxu0 %v493
    %1359 = vmatprep.subr.mxu0 0.0
    %1360 = vmatpush1.msra.mxu0 %v494
    %1361 = vmatprep.subr.mxu0 0.0
    %1362 = vmatpush1.msra.mxu0 %v495
    %1363 = vmatprep.subr.mxu0 0.0
    %1364 = vmatpush1.msra.mxu0 %v496
    %1365 = vmatprep.subr.mxu0 0.0
    %1366 = vmatpush1.msra.mxu0 %v497
    %1367 = vmatprep.subr.mxu0 0.0
    %1368 = vmatpush1.msra.mxu0 %v498
    %1369 = vmatprep.subr.mxu0 0.0
    %1370 = vmatpush1.msra.mxu0 %v499
    %1371 = vmatprep.subr.mxu0 0.0
    %1372 = vmatpush1.msra.mxu0 %v500
    %1373 = vmatprep.subr.mxu0 0.0
    %1374 = vmatpush1.msra.mxu0 %v501
    %1375 = vmatprep.subr.mxu0 0.0
    %1376 = vmatpush1.msra.mxu0 %v502
    %1377 = vmatprep.subr.mxu0 0.0
    %1378 = vmatpush1.msra.mxu0 %v503
    %1379 = vmatprep.subr.mxu0 0.0
    %1380 = vmatpush1.msra.mxu0 %v504
    %1381 = vmatprep.subr.mxu0 0.0
    %1382 = vmatpush1.msra.mxu0 %v505
    %1383 = vmatprep.subr.mxu0 0.0
    %1384 = vmatpush1.msra.mxu0 %v506
    %1385 = vmatprep.subr.mxu0 0.0
    %1386 = vmatpush1.msra.mxu0 %v507
    %1387 = vmatprep.subr.mxu0 0.0
    %1388 = vmatpush1.msra.mxu0 0.0
    %1389 = vmatprep.subr.mxu0 0.0
    %1390 = vmatpush1.msra.mxu0 0.0
    %1391 = vmatprep.subr.mxu0 0.0
    %1392 = vmatpush1.msra.mxu0 0.0
    %1393 = vmatprep.subr.mxu0 0.0
    %1394 = vmatpush1.msra.mxu0 0.0
    %1395 = vmatprep.subr.mxu0 0.0
    %1396 = vmatpush1.msra.mxu0 0.0
    %1397 = vmatprep.subr.mxu0 0.0
    %1398 = vmatpush1.msra.mxu0 0.0
    %1399 = vmatprep.subr.mxu0 0.0
    %1400 = vmatpush1.msra.mxu0 0.0
    %1401 = vmatprep.subr.mxu0 0.0
    %1402 = vmatpush1.msra.mxu0 0.0
    %1403 = vmatprep.subr.mxu0 0.0
    %1404 = vmatpush1.msra.mxu0 0.0
    %1405 = vmatprep.subr.mxu0 0.0
    %1406 = vmatpush1.msra.mxu0 0.0
    %1407 = vmatprep.subr.mxu0 0.0
    %1408 = vmatpush1.msra.mxu0 0.0
    %1409 = vmatprep.subr.mxu0 0.0
    %1410 = vmatpush1.msra.mxu0 0.0
    %1411 = vmatprep.subr.mxu0 0.0
    %1412 = vmatpush1.msra.mxu0 0.0
    %1413 = vmatprep.subr.mxu0 0.0
    %1414 = vmatpush1.msra.mxu0 0.0
    %1415 = vmatprep.subr.mxu0 0.0
    %1416 = vmatpush1.msra.mxu0 0.0
    %1417 = vmatprep.subr.mxu0 0.0
    %1418 = vmatpush1.msra.mxu0 0.0
    %1419 = vmatprep.mubr.f32.mxu0 0.0
    %1420 = vmatmul.mubr.f32.gmra.mrb[0].mxu0 %v66
    %v1421 = vpop.f32.mrb[0].mxu0
    %v1422 = vadd.f32 %v1352, %v1421
    %v1423 = vpop.f32.mrb[0].mxu0
    %1424 = vdwg.mxu0
    %1425 = vmatprep.subr.mxu0 0.0
    %1426 = vmatpush1.msra.mxu0 %v666
    %1427 = vmatprep.subr.mxu0 0.0
    %1428 = vmatpush1.msra.mxu0 %v667
    %1429 = vmatprep.subr.mxu0 0.0
    %1430 = vmatpush1.msra.mxu0 %v668
    %1431 = vmatprep.subr.mxu0 0.0
    %1432 = vmatpush1.msra.mxu0 %v669
    %1433 = vmatprep.subr.mxu0 0.0
    %1434 = vmatpush1.msra.mxu0 %v670
    %1435 = vmatprep.subr.mxu0 0.0
    %1436 = vmatpush1.msra.mxu0 %v671
    %1437 = vmatprep.subr.mxu0 0.0
    %1438 = vmatpush1.msra.mxu0 %v672
    %1439 = vmatprep.subr.mxu0 0.0
    %1440 = vmatpush1.msra.mxu0 %v673
    %1441 = vmatprep.subr.mxu0 0.0
    %1442 = vmatpush1.msra.mxu0 %v674
    %1443 = vmatprep.subr.mxu0 0.0
    %1444 = vmatpush1.msra.mxu0 %v675
    %1445 = vmatprep.subr.mxu0 0.0
    %1446 = vmatpush1.msra.mxu0 %v676
    %1447 = vmatprep.subr.mxu0 0.0
    %1448 = vmatpush1.msra.mxu0 %v677
    %1449 = vmatprep.subr.mxu0 0.0
    %1450 = vmatpush1.msra.mxu0 %v678
    %1451 = vmatprep.subr.mxu0 0.0
    %1452 = vmatpush1.msra.mxu0 %v679
    %1453 = vmatprep.subr.mxu0 0.0
    %1454 = vmatpush1.msra.mxu0 %v680
    %1455 = vmatprep.subr.mxu0 0.0
    %1456 = vmatpush1.msra.mxu0 %v681
    %1457 = vmatprep.subr.mxu0 0.0
    %1458 = vmatpush1.msra.mxu0 0.0
    %1459 = vmatprep.subr.mxu0 0.0
    %1460 = vmatpush1.msra.mxu0 0.0
    %1461 = vmatprep.subr.mxu0 0.0
    %1462 = vmatpush1.msra.mxu0 0.0
    %1463 = vmatprep.subr.mxu0 0.0
    %1464 = vmatpush1.msra.mxu0 0.0
    %1465 = vmatprep.subr.mxu0 0.0
    %1466 = vmatpush1.msra.mxu0 0.0
    %1467 = vmatprep.subr.mxu0 0.0
    %1468 = vmatpush1.msra.mxu0 0.0
    %1469 = vmatprep.subr.mxu0 0.0
    %1470 = vmatpush1.msra.mxu0 0.0
    %1471 = vmatprep.subr.mxu0 0.0
    %1472 = vmatpush1.msra.mxu0 0.0
    %1473 = vmatprep.subr.mxu0 0.0
    %1474 = vmatpush1.msra.mxu0 0.0
    %1475 = vmatprep.subr.mxu0 0.0
    %1476 = vmatpush1.msra.mxu0 0.0
    %1477 = vmatprep.subr.mxu0 0.0
    %1478 = vmatpush1.msra.mxu0 0.0
    %1479 = vmatprep.subr.mxu0 0.0
    %1480 = vmatpush1.msra.mxu0 0.0
    %1481 = vmatprep.subr.mxu0 0.0
    %1482 = vmatpush1.msra.mxu0 0.0
    %1483 = vmatprep.subr.mxu0 0.0
    %1484 = vmatpush1.msra.mxu0 0.0
    %1485 = vmatprep.subr.mxu0 0.0
    %1486 = vmatpush1.msra.mxu0 0.0
    %1487 = vmatprep.subr.mxu0 0.0
    %1488 = vmatpush1.msra.mxu0 0.0
    %1489 = vmatprep.mubr.f32.mxu0 0.0
    %1490 = vmatmul.mubr.f32.gmra.mrb[0].mxu0 %v313
    %v1491 = vpop.f32.mrb[0].mxu0
    %v1492 = vadd.f32 0.0, %v1491
    %v1493 = vpop.f32.mrb[0].mxu0
    %1494 = vdwg.mxu0
    %v1495 = vadd.f32 %v1422, %v1492
    %1496 = vmatprep.subr.mxu0 0.0
    %1497 = vmatpush1.msra.mxu0 %v754
    %1498 = vmatprep.subr.mxu0 0.0
    %1499 = vmatpush1.msra.mxu0 %v755
    %1500 = vmatprep.subr.mxu0 0.0
    %1501 = vmatpush1.msra.mxu0 %v756
    %1502 = vmatprep.subr.mxu0 0.0
    %1503 = vmatpush1.msra.mxu0 %v757
    %1504 = vmatprep.subr.mxu0 0.0
    %1505 = vmatpush1.msra.mxu0 %v758
    %1506 = vmatprep.subr.mxu0 0.0
    %1507 = vmatpush1.msra.mxu0 %v759
    %1508 = vmatprep.subr.mxu0 0.0
    %1509 = vmatpush1.msra.mxu0 %v760
    %1510 = vmatprep.subr.mxu0 0.0
    %1511 = vmatpush1.msra.mxu0 %v761
    %1512 = vmatprep.subr.mxu0 0.0
    %1513 = vmatpush1.msra.mxu0 %v762
    %1514 = vmatprep.subr.mxu0 0.0
    %1515 = vmatpush1.msra.mxu0 %v763
    %1516 = vmatprep.subr.mxu0 0.0
    %1517 = vmatpush1.msra.mxu0 %v764
    %1518 = vmatprep.subr.mxu0 0.0
    %1519 = vmatpush1.msra.mxu0 %v765
    %1520 = vmatprep.subr.mxu0 0.0
    %1521 = vmatpush1.msra.mxu0 %v766
    %1522 = vmatprep.subr.mxu0 0.0
    %1523 = vmatpush1.msra.mxu0 %v767
    %1524 = vmatprep.subr.mxu0 0.0
    %1525 = vmatpush1.msra.mxu0 %v768
    %1526 = vmatprep.subr.mxu0 0.0
    %1527 = vmatpush1.msra.mxu0 %v769
    %1528 = vmatprep.subr.mxu0 0.0
    %1529 = vmatpush1.msra.mxu0 0.0
    %1530 = vmatprep.subr.mxu0 0.0
    %1531 = vmatpush1.msra.mxu0 0.0
    %1532 = vmatprep.subr.mxu0 0.0
    %1533 = vmatpush1.msra.mxu0 0.0
    %1534 = vmatprep.subr.mxu0 0.0
    %1535 = vmatpush1.msra.mxu0 0.0
    %1536 = vmatprep.subr.mxu0 0.0
    %1537 = vmatpush1.msra.mxu0 0.0
    %1538 = vmatprep.subr.mxu0 0.0
    %1539 = vmatpush1.msra.mxu0 0.0
    %1540 = vmatprep.subr.mxu0 0.0
    %1541 = vmatpush1.msra.mxu0 0.0
    %1542 = vmatprep.subr.mxu0 0.0
    %1543 = vmatpush1.msra.mxu0 0.0
    %1544 = vmatprep.subr.mxu0 0.0
    %1545 = vmatpush1.msra.mxu0 0.0
    %1546 = vmatprep.subr.mxu0 0.0
    %1547 = vmatpush1.msra.mxu0 0.0
    %1548 = vmatprep.subr.mxu0 0.0
    %1549 = vmatpush1.msra.mxu0 0.0
    %1550 = vmatprep.subr.mxu0 0.0
    %1551 = vmatpush1.msra.mxu0 0.0
    %1552 = vmatprep.subr.mxu0 0.0
    %1553 = vmatpush1.msra.mxu0 0.0
    %1554 = vmatprep.subr.mxu0 0.0
    %1555 = vmatpush1.msra.mxu0 0.0
    %1556 = vmatprep.subr.mxu0 0.0
    %1557 = vmatpush1.msra.mxu0 0.0
    %1558 = vmatprep.subr.mxu0 0.0
    %1559 = vmatpush1.msra.mxu0 0.0
    %1560 = vmatprep.mubr.f32.mxu0 0.0
    %1561 = vmatmul.mubr.f32.gmra.mrb[0].mxu0 %v402
    %v1562 = vpop.f32.mrb[0].mxu0
    %v1563 = vadd.f32 0.0, %v1562
    %v1564 = vpop.f32.mrb[0].mxu0
    %1565 = vdwg.mxu0
    %v1566 = vadd.f32 %v1495, %v1563
    %1567 = vmatprep.subr.mxu0 0.0
    %1568 = vmatpush1.msra.mxu0 %v842
    %1569 = vmatprep.subr.mxu0 0.0
    %1570 = vmatpush1.msra.mxu0 %v843
    %1571 = vmatprep.subr.mxu0 0.0
    %1572 = vmatpush1.msra.mxu0 %v844
    %1573 = vmatprep.subr.mxu0 0.0
    %1574 = vmatpush1.msra.mxu0 %v845
    %1575 = vmatprep.subr.mxu0 0.0
    %1576 = vmatpush1.msra.mxu0 %v846
    %1577 = vmatprep.subr.mxu0 0.0
    %1578 = vmatpush1.msra.mxu0 %v847
    %1579 = vmatprep.subr.mxu0 0.0
    %1580 = vmatpush1.msra.mxu0 %v848
    %1581 = vmatprep.subr.mxu0 0.0
    %1582 = vmatpush1.msra.mxu0 %v849
    %1583 = vmatprep.subr.mxu0 0.0
    %1584 = vmatpush1.msra.mxu0 %v850
    %1585 = vmatprep.subr.mxu0 0.0
    %1586 = vmatpush1.msra.mxu0 %v851
    %1587 = vmatprep.subr.mxu0 0.0
    %1588 = vmatpush1.msra.mxu0 %v852
    %1589 = vmatprep.subr.mxu0 0.0
    %1590 = vmatpush1.msra.mxu0 %v853
    %1591 = vmatprep.subr.mxu0 0.0
    %1592 = vmatpush1.msra.mxu0 %v854
    %1593 = vmatprep.subr.mxu0 0.0
    %1594 = vmatpush1.msra.mxu0 %v855
    %1595 = vmatprep.subr.mxu0 0.0
    %1596 = vmatpush1.msra.mxu0 %v856
    %1597 = vmatprep.subr.mxu0 0.0
    %1598 = vmatpush1.msra.mxu0 %v857
    %1599 = vmatprep.subr.mxu0 0.0
    %1600 = vmatpush1.msra.mxu0 0.0
    %1601 = vmatprep.subr.mxu0 0.0
    %1602 = vmatpush1.msra.mxu0 0.0
    %1603 = vmatprep.subr.mxu0 0.0
    %1604 = vmatpush1.msra.mxu0 0.0
    %1605 = vmatprep.subr.mxu0 0.0
    %1606 = vmatpush1.msra.mxu0 0.0
    %1607 = vmatprep.subr.mxu0 0.0
    %1608 = vmatpush1.msra.mxu0 0.0
    %1609 = vmatprep.subr.mxu0 0.0
    %1610 = vmatpush1.msra.mxu0 0.0
    %1611 = vmatprep.subr.mxu0 0.0
    %1612 = vmatpush1.msra.mxu0 0.0
    %1613 = vmatprep.subr.mxu0 0.0
    %1614 = vmatpush1.msra.mxu0 0.0
    %1615 = vmatprep.subr.mxu0 0.0
    %1616 = vmatpush1.msra.mxu0 0.0
    %1617 = vmatprep.subr.mxu0 0.0
    %1618 = vmatpush1.msra.mxu0 0.0
    %1619 = vmatprep.subr.mxu0 0.0
    %1620 = vmatpush1.msra.mxu0 0.0
    %1621 = vmatprep.subr.mxu0 0.0
    %1622 = vmatpush1.msra.mxu0 0.0
    %1623 = vmatprep.subr.mxu0 0.0
    %1624 = vmatpush1.msra.mxu0 0.0
    %1625 = vmatprep.subr.mxu0 0.0
    %1626 = vmatpush1.msra.mxu0 0.0
    %1627 = vmatprep.subr.mxu0 0.0
    %1628 = vmatpush1.msra.mxu0 0.0
    %1629 = vmatprep.subr.mxu0 0.0
    %1630 = vmatpush1.msra.mxu0 0.0
    %1631 = vmatprep.mubr.f32.mxu0 0.0
    %1632 = vmatmul.mubr.f32.gmra.mrb[0].mxu0 %v1212
    %v1633 = vpop.f32.mrb[0].mxu0
    %v1634 = vadd.f32 0.0, %v1633
    %v1635 = vpop.f32.mrb[0].mxu0
    %1636 = vdwg.mxu0
    %v1637 = vadd.f32 %v1566, %v1634
    %v1638 = vmax.f32 %v1284, %v1637
    %v1640 = vlaneseq
    %v1641 = vshrl.u32 %v1640, 7
    %v1642 = vsub.s32 0, %v1641
    %v1643 = vrot.slane %v30, %v1642
    %v1645 = vadd.f32 %v1638, %v1643
    %v1646 = vmax.f32 %v1645, 0.0
    %v1647 = vld [vmem:[%s4] sm:$0xff]
    %v1648 = vld [vmem:[%s4 + $0x8] sm:$0xff]
    %v1649 = vld [vmem:[%s4 + $0x10] sm:$0xff]
    %v1650 = vld [vmem:[%s4 + $0x18] sm:$0xff]
    %v1651 = vld [vmem:[%s4 + $0x20] sm:$0xff]
    %v1652 = vld [vmem:[%s4 + $0x28] sm:$0xff]
    %v1653 = vld [vmem:[%s4 + $0x30] sm:$0xff]
    %v1654 = vld [vmem:[%s4 + $0x38] sm:$0xff]
    %v1655 = vld [vmem:[%s4 + $0x40] sm:$0xff]
    %v1656 = vld [vmem:[%s4 + $0x48] sm:$0xff]
    %s1657 = scalar_lea.vmem %s4, 80
    %v1658 = vld [vmem:[%s1657] sm:$0xff]
    %v1659 = vld [vmem:[%s1657 + $0x8] sm:$0xff]
    %v1660 = vld [vmem:[%s1657 + $0x10] sm:$0xff]
    %v1661 = vld [vmem:[%s1657 + $0x18] sm:$0xff]
    %v1662 = vld [vmem:[%s1657 + $0x20] sm:$0xff]
    %v1663 = vld [vmem:[%s1657 + $0x28] sm:$0xff]
    %v1664 = vld [vmem:[%s1657 + $0x30] sm:$0xff]
    %v1665 = vld [vmem:[%s1657 + $0x38] sm:$0xff]
    %v1666 = vld [vmem:[%s1657 + $0x40] sm:$0xff]
    %v1667 = vld [vmem:[%s1657 + $0x48] sm:$0xff]
    %v1669 = vrot.slane %v1646, 1
    %vm1670 = vcmask 654336
    %v1671 = vsel %vm1670, %v1669, 0
    %1673 = vmatprep.subr.mxu0 0.0
    %1674 = vmatpush1.msra.mxu0 %v1658
    %1675 = vmatprep.subr.mxu0 0.0
    %1676 = vmatpush1.msra.mxu0 %v1659
    %1677 = vmatprep.subr.mxu0 0.0
    %1678 = vmatpush1.msra.mxu0 %v1660
    %1679 = vmatprep.subr.mxu0 0.0
    %1680 = vmatpush1.msra.mxu0 %v1661
    %1681 = vmatprep.subr.mxu0 0.0
    %1682 = vmatpush1.msra.mxu0 %v1662
    %1683 = vmatprep.subr.mxu0 0.0
    %1684 = vmatpush1.msra.mxu0 %v1663
    %1685 = vmatprep.subr.mxu0 0.0
    %1686 = vmatpush1.msra.mxu0 %v1664
    %1687 = vmatprep.subr.mxu0 0.0
    %1688 = vmatpush1.msra.mxu0 %v1665
    %1689 = vmatprep.subr.mxu0 0.0
    %1690 = vmatpush1.msra.mxu0 %v1666
    %1691 = vmatprep.subr.mxu0 0.0
    %1692 = vmatpush1.msra.mxu0 %v1667
    %1693 = vmatprep.subr.mxu0 0.0
    %1694 = vmatpush1.msra.mxu0 0.0
    %1695 = vmatprep.subr.mxu0 0.0
    %1696 = vmatpush1.msra.mxu0 0.0
    %1697 = vmatprep.subr.mxu0 0.0
    %1698 = vmatpush1.msra.mxu0 0.0
    %1699 = vmatprep.subr.mxu0 0.0
    %1700 = vmatpush1.msra.mxu0 0.0
    %1701 = vmatprep.subr.mxu0 0.0
    %1702 = vmatpush1.msra.mxu0 0.0
    %1703 = vmatprep.subr.mxu0 0.0
    %1704 = vmatpush1.msra.mxu0 0.0
    %1705 = vmatprep.subr.mxu0 0.0
    %1706 = vmatpush1.msra.mxu0 0.0
    %1707 = vmatprep.subr.mxu0 0.0
    %1708 = vmatpush1.msra.mxu0 0.0
    %1709 = vmatprep.subr.mxu0 0.0
    %1710 = vmatpush1.msra.mxu0 0.0
    %1711 = vmatprep.subr.mxu0 0.0
    %1712 = vmatpush1.msra.mxu0 0.0
    %1713 = vmatprep.subr.mxu0 0.0
    %1714 = vmatpush1.msra.mxu0 0.0
    %1715 = vmatprep.subr.mxu0 0.0
    %1716 = vmatpush1.msra.mxu0 0.0
    %1717 = vmatprep.subr.mxu0 0.0
    %1718 = vmatpush1.msra.mxu0 0.0
    %1719 = vmatprep.subr.mxu0 0.0
    %1720 = vmatpush1.msra.mxu0 0.0
    %1721 = vmatprep.subr.mxu0 0.0
    %1722 = vmatpush1.msra.mxu0 0.0
    %1723 = vmatprep.subr.mxu0 0.0
    %1724 = vmatpush1.msra.mxu0 0.0
    %1725 = vmatprep.subr.mxu0 0.0
    %1726 = vmatpush1.msra.mxu0 0.0
    %1727 = vmatprep.subr.mxu0 0.0
    %1728 = vmatpush1.msra.mxu0 0.0
    %1729 = vmatprep.subr.mxu0 0.0
    %1730 = vmatpush1.msra.mxu0 0.0
    %1731 = vmatprep.subr.mxu0 0.0
    %1732 = vmatpush1.msra.mxu0 0.0
    %1733 = vmatprep.subr.mxu0 0.0
    %1734 = vmatpush1.msra.mxu0 0.0
    %1735 = vmatprep.subr.mxu0 0.0
    %1736 = vmatpush1.msra.mxu0 0.0
    %1737 = vmatprep.mubr.f32.mxu0 0.0
    %1738 = vmatmul.mubr.f32.gmra.mrb[0].mxu0 %v1671
    %v1739 = vpop.f32.mrb[0].mxu0
    %v1740 = vadd.f32 0.0, %v1739
    %v1741 = vpop.f32.mrb[0].mxu0
    %1742 = vdwg.mxu0
    %v1743 = vsel %vm1670, %v1646, 0
    %1745 = vmatprep.subr.mxu0 0.0
    %1746 = vmatpush1.msra.mxu0 %v1647
    %1747 = vmatprep.subr.mxu0 0.0
    %1748 = vmatpush1.msra.mxu0 %v1648
    %1749 = vmatprep.subr.mxu0 0.0
    %1750 = vmatpush1.msra.mxu0 %v1649
    %1751 = vmatprep.subr.mxu0 0.0
    %1752 = vmatpush1.msra.mxu0 %v1650
    %1753 = vmatprep.subr.mxu0 0.0
    %1754 = vmatpush1.msra.mxu0 %v1651
    %1755 = vmatprep.subr.mxu0 0.0
    %1756 = vmatpush1.msra.mxu0 %v1652
    %1757 = vmatprep.subr.mxu0 0.0
    %1758 = vmatpush1.msra.mxu0 %v1653
    %1759 = vmatprep.subr.mxu0 0.0
    %1760 = vmatpush1.msra.mxu0 %v1654
    %1761 = vmatprep.subr.mxu0 0.0
    %1762 = vmatpush1.msra.mxu0 %v1655
    %1763 = vmatprep.subr.mxu0 0.0
    %1764 = vmatpush1.msra.mxu0 %v1656
    %1765 = vmatprep.subr.mxu0 0.0
    %1766 = vmatpush1.msra.mxu0 0.0
    %1767 = vmatprep.subr.mxu0 0.0
    %1768 = vmatpush1.msra.mxu0 0.0
    %1769 = vmatprep.subr.mxu0 0.0
    %1770 = vmatpush1.msra.mxu0 0.0
    %1771 = vmatprep.subr.mxu0 0.0
    %1772 = vmatpush1.msra.mxu0 0.0
    %1773 = vmatprep.subr.mxu0 0.0
    %1774 = vmatpush1.msra.mxu0 0.0
    %1775 = vmatprep.subr.mxu0 0.0
    %1776 = vmatpush1.msra.mxu0 0.0
    %1777 = vmatprep.subr.mxu0 0.0
    %1778 = vmatpush1.msra.mxu0 0.0
    %1779 = vmatprep.subr.mxu0 0.0
    %1780 = vmatpush1.msra.mxu0 0.0
    %1781 = vmatprep.subr.mxu0 0.0
    %1782 = vmatpush1.msra.mxu0 0.0
    %1783 = vmatprep.subr.mxu0 0.0
    %1784 = vmatpush1.msra.mxu0 0.0
    %1785 = vmatprep.subr.mxu0 0.0
    %1786 = vmatpush1.msra.mxu0 0.0
    %1787 = vmatprep.subr.mxu0 0.0
    %1788 = vmatpush1.msra.mxu0 0.0
    %1789 = vmatprep.subr.mxu0 0.0
    %1790 = vmatpush1.msra.mxu0 0.0
    %1791 = vmatprep.subr.mxu0 0.0
    %1792 = vmatpush1.msra.mxu0 0.0
    %1793 = vmatprep.subr.mxu0 0.0
    %1794 = vmatpush1.msra.mxu0 0.0
    %1795 = vmatprep.subr.mxu0 0.0
    %1796 = vmatpush1.msra.mxu0 0.0
    %1797 = vmatprep.subr.mxu0 0.0
    %1798 = vmatpush1.msra.mxu0 0.0
    %1799 = vmatprep.subr.mxu0 0.0
    %1800 = vmatpush1.msra.mxu0 0.0
    %1801 = vmatprep.subr.mxu0 0.0
    %1802 = vmatpush1.msra.mxu0 0.0
    %1803 = vmatprep.subr.mxu0 0.0
    %1804 = vmatpush1.msra.mxu0 0.0
    %1805 = vmatprep.subr.mxu0 0.0
    %1806 = vmatpush1.msra.mxu0 0.0
    %1807 = vmatprep.subr.mxu0 0.0
    %1808 = vmatpush1.msra.mxu0 0.0
    %1809 = vmatprep.mubr.f32.mxu0 0.0
    %1810 = vmatmul.mubr.f32.gmra.mrb[0].mxu0 %v1743
    %v1811 = vpop.f32.mrb[0].mxu0
    %v1812 = vadd.f32 %v1740, %v1811
    %v1813 = vpop.f32.mrb[0].mxu0
    %1814 = vdwg.mxu0
    %s1815 = scalar_lea.vmem %s4, 160
    %v1816 = vld [vmem:[%s1815] sm:$0xff]
    %v1817 = vld [vmem:[%s1815 + $0x8] sm:$0xff]
    %v1818 = vld [vmem:[%s1815 + $0x10] sm:$0xff]
    %v1819 = vld [vmem:[%s1815 + $0x18] sm:$0xff]
    %v1820 = vld [vmem:[%s1815 + $0x20] sm:$0xff]
    %v1821 = vld [vmem:[%s1815 + $0x28] sm:$0xff]
    %v1822 = vld [vmem:[%s1815 + $0x30] sm:$0xff]
    %v1823 = vld [vmem:[%s1815 + $0x38] sm:$0xff]
    %v1824 = vld [vmem:[%s1815 + $0x40] sm:$0xff]
    %v1825 = vld [vmem:[%s1815 + $0x48] sm:$0xff]
    %v1826 = vrot.slane %v1646, 2
    %v1827 = vsel %vm1670, %v1826, 0
    %1829 = vmatprep.subr.mxu0 0.0
    %1830 = vmatpush1.msra.mxu0 %v1816
    %1831 = vmatprep.subr.mxu0 0.0
    %1832 = vmatpush1.msra.mxu0 %v1817
    %1833 = vmatprep.subr.mxu0 0.0
    %1834 = vmatpush1.msra.mxu0 %v1818
    %1835 = vmatprep.subr.mxu0 0.0
    %1836 = vmatpush1.msra.mxu0 %v1819
    %1837 = vmatprep.subr.mxu0 0.0
    %1838 = vmatpush1.msra.mxu0 %v1820
    %1839 = vmatprep.subr.mxu0 0.0
    %1840 = vmatpush1.msra.mxu0 %v1821
    %1841 = vmatprep.subr.mxu0 0.0
    %1842 = vmatpush1.msra.mxu0 %v1822
    %1843 = vmatprep.subr.mxu0 0.0
    %1844 = vmatpush1.msra.mxu0 %v1823
    %1845 = vmatprep.subr.mxu0 0.0
    %1846 = vmatpush1.msra.mxu0 %v1824
    %1847 = vmatprep.subr.mxu0 0.0
    %1848 = vmatpush1.msra.mxu0 %v1825
    %1849 = vmatprep.subr.mxu0 0.0
    %1850 = vmatpush1.msra.mxu0 0.0
    %1851 = vmatprep.subr.mxu0 0.0
    %1852 = vmatpush1.msra.mxu0 0.0
    %1853 = vmatprep.subr.mxu0 0.0
    %1854 = vmatpush1.msra.mxu0 0.0
    %1855 = vmatprep.subr.mxu0 0.0
    %1856 = vmatpush1.msra.mxu0 0.0
    %1857 = vmatprep.subr.mxu0 0.0
    %1858 = vmatpush1.msra.mxu0 0.0
    %1859 = vmatprep.subr.mxu0 0.0
    %1860 = vmatpush1.msra.mxu0 0.0
    %1861 = vmatprep.subr.mxu0 0.0
    %1862 = vmatpush1.msra.mxu0 0.0
    %1863 = vmatprep.subr.mxu0 0.0
    %1864 = vmatpush1.msra.mxu0 0.0
    %1865 = vmatprep.subr.mxu0 0.0
    %1866 = vmatpush1.msra.mxu0 0.0
    %1867 = vmatprep.subr.mxu0 0.0
    %1868 = vmatpush1.msra.mxu0 0.0
    %1869 = vmatprep.subr.mxu0 0.0
    %1870 = vmatpush1.msra.mxu0 0.0
    %1871 = vmatprep.subr.mxu0 0.0
    %1872 = vmatpush1.msra.mxu0 0.0
    %1873 = vmatprep.subr.mxu0 0.0
    %1874 = vmatpush1.msra.mxu0 0.0
    %1875 = vmatprep.subr.mxu0 0.0
    %1876 = vmatpush1.msra.mxu0 0.0
    %1877 = vmatprep.subr.mxu0 0.0
    %1878 = vmatpush1.msra.mxu0 0.0
    %1879 = vmatprep.subr.mxu0 0.0
    %1880 = vmatpush1.msra.mxu0 0.0
    %1881 = vmatprep.subr.mxu0 0.0
    %1882 = vmatpush1.msra.mxu0 0.0
    %1883 = vmatprep.subr.mxu0 0.0
    %1884 = vmatpush1.msra.mxu0 0.0
    %1885 = vmatprep.subr.mxu0 0.0
    %1886 = vmatpush1.msra.mxu0 0.0
    %1887 = vmatprep.subr.mxu0 0.0
    %1888 = vmatpush1.msra.mxu0 0.0
    %1889 = vmatprep.subr.mxu0 0.0
    %1890 = vmatpush1.msra.mxu0 0.0
    %1891 = vmatprep.subr.mxu0 0.0
    %1892 = vmatpush1.msra.mxu0 0.0
    %1893 = vmatprep.mubr.f32.mxu0 0.0
    %1894 = vmatmul.mubr.f32.gmra.mrb[0].mxu0 %v1827
    %v1895 = vpop.f32.mrb[0].mxu0
    %v1896 = vadd.f32 0.0, %v1895
    %v1897 = vpop.f32.mrb[0].mxu0
    %1898 = vdwg.mxu0
    %v1899 = vadd.f32 %v1812, %v1896
    %s1900 = scalar_lea.vmem %s4, 240
    %v1901 = vld [vmem:[%s1900] sm:$0xff]
    %v1902 = vld [vmem:[%s1900 + $0x8] sm:$0xff]
    %v1903 = vld [vmem:[%s1900 + $0x10] sm:$0xff]
    %v1904 = vld [vmem:[%s1900 + $0x18] sm:$0xff]
    %v1905 = vld [vmem:[%s1900 + $0x20] sm:$0xff]
    %v1906 = vld [vmem:[%s1900 + $0x28] sm:$0xff]
    %v1907 = vld [vmem:[%s1900 + $0x30] sm:$0xff]
    %v1908 = vld [vmem:[%s1900 + $0x38] sm:$0xff]
    %v1909 = vld [vmem:[%s1900 + $0x40] sm:$0xff]
    %v1910 = vld [vmem:[%s1900 + $0x48] sm:$0xff]
    %v1911 = vrot.slane %v1646, 3
    %v1912 = vsel %vm1670, %v1911, 0
    %1914 = vmatprep.subr.mxu0 0.0
    %1915 = vmatpush1.msra.mxu0 %v1901
    %1916 = vmatprep.subr.mxu0 0.0
    %1917 = vmatpush1.msra.mxu0 %v1902
    %1918 = vmatprep.subr.mxu0 0.0
    %1919 = vmatpush1.msra.mxu0 %v1903
    %1920 = vmatprep.subr.mxu0 0.0
    %1921 = vmatpush1.msra.mxu0 %v1904
    %1922 = vmatprep.subr.mxu0 0.0
    %1923 = vmatpush1.msra.mxu0 %v1905
    %1924 = vmatprep.subr.mxu0 0.0
    %1925 = vmatpush1.msra.mxu0 %v1906
    %1926 = vmatprep.subr.mxu0 0.0
    %1927 = vmatpush1.msra.mxu0 %v1907
    %1928 = vmatprep.subr.mxu0 0.0
    %1929 = vmatpush1.msra.mxu0 %v1908
    %1930 = vmatprep.subr.mxu0 0.0
    %1931 = vmatpush1.msra.mxu0 %v1909
    %1932 = vmatprep.subr.mxu0 0.0
    %1933 = vmatpush1.msra.mxu0 %v1910
    %1934 = vmatprep.subr.mxu0 0.0
    %1935 = vmatpush1.msra.mxu0 0.0
    %1936 = vmatprep.subr.mxu0 0.0
    %1937 = vmatpush1.msra.mxu0 0.0
    %1938 = vmatprep.subr.mxu0 0.0
    %1939 = vmatpush1.msra.mxu0 0.0
    %1940 = vmatprep.subr.mxu0 0.0
    %1941 = vmatpush1.msra.mxu0 0.0
    %1942 = vmatprep.subr.mxu0 0.0
    %1943 = vmatpush1.msra.mxu0 0.0
    %1944 = vmatprep.subr.mxu0 0.0
    %1945 = vmatpush1.msra.mxu0 0.0
    %1946 = vmatprep.subr.mxu0 0.0
    %1947 = vmatpush1.msra.mxu0 0.0
    %1948 = vmatprep.subr.mxu0 0.0
    %1949 = vmatpush1.msra.mxu0 0.0
    %1950 = vmatprep.subr.mxu0 0.0
    %1951 = vmatpush1.msra.mxu0 0.0
    %1952 = vmatprep.subr.mxu0 0.0
    %1953 = vmatpush1.msra.mxu0 0.0
    %1954 = vmatprep.subr.mxu0 0.0
    %1955 = vmatpush1.msra.mxu0 0.0
    %1956 = vmatprep.subr.mxu0 0.0
    %1957 = vmatpush1.msra.mxu0 0.0
    %1958 = vmatprep.subr.mxu0 0.0
    %1959 = vmatpush1.msra.mxu0 0.0
    %1960 = vmatprep.subr.mxu0 0.0
    %1961 = vmatpush1.msra.mxu0 0.0
    %1962 = vmatprep.subr.mxu0 0.0
    %1963 = vmatpush1.msra.mxu0 0.0
    %1964 = vmatprep.subr.mxu0 0.0
    %1965 = vmatpush1.msra.mxu0 0.0
    %1966 = vmatprep.subr.mxu0 0.0
    %1967 = vmatpush1.msra.mxu0 0.0
    %1968 = vmatprep.subr.mxu0 0.0
    %1969 = vmatpush1.msra.mxu0 0.0
    %1970 = vmatprep.subr.mxu0 0.0
    %1971 = vmatpush1.msra.mxu0 0.0
    %1972 = vmatprep.subr.mxu0 0.0
    %1973 = vmatpush1.msra.mxu0 0.0
    %1974 = vmatprep.subr.mxu0 0.0
    %1975 = vmatpush1.msra.mxu0 0.0
    %1976 = vmatprep.subr.mxu0 0.0
    %1977 = vmatpush1.msra.mxu0 0.0
    %1978 = vmatprep.mubr.f32.mxu0 0.0
    %1979 = vmatmul.mubr.f32.gmra.mrb[0].mxu0 %v1912
    %v1980 = vpop.f32.mrb[0].mxu0
    %v1981 = vadd.f32 0.0, %v1980
    %v1982 = vpop.f32.mrb[0].mxu0
    %1983 = vdwg.mxu0
    %v1984 = vadd.f32 %v1899, %v1981
    %v1985 = vadd.f32 %v1984, %v31
    %v1986 = vmax.f32 %v1985, 0.0
    %1987 = vmatprep.subr.mxu0 0.0
    %1988 = vmatpush1.msra.mxu0 %v33
    %1989 = vmatprep.subr.mxu0 0.0
    %1990 = vmatpush1.msra.mxu0 %v34
    %1991 = vmatprep.subr.mxu0 0.0
    %1992 = vmatpush1.msra.mxu0 %v35
    %1993 = vmatprep.subr.mxu0 0.0
    %1994 = vmatpush1.msra.mxu0 %v36
    %1995 = vmatprep.subr.mxu0 0.0
    %1996 = vmatpush1.msra.mxu0 %v37
    %1997 = vmatprep.subr.mxu0 0.0
    %1998 = vmatpush1.msra.mxu0 %v38
    %1999 = vmatprep.subr.mxu0 0.0
    %2000 = vmatpush1.msra.mxu0 %v39
    %2001 = vmatprep.subr.mxu0 0.0
    %2002 = vmatpush1.msra.mxu0 %v40
    %2003 = vmatprep.subr.mxu0 0.0
    %2004 = vmatpush1.msra.mxu0 %v41
    %2005 = vmatprep.subr.mxu0 0.0
    %2006 = vmatpush1.msra.mxu0 %v42
    %2007 = vmatprep.subr.mxu0 0.0
    %2008 = vmatpush1.msra.mxu0 %v43
    %2009 = vmatprep.subr.mxu0 0.0
    %2010 = vmatpush1.msra.mxu0 %v44
    %2011 = vmatprep.subr.mxu0 0.0
    %2012 = vmatpush1.msra.mxu0 %v45
    %2013 = vmatprep.subr.mxu0 0.0
    %2014 = vmatpush1.msra.mxu0 %v46
    %2015 = vmatprep.subr.mxu0 0.0
    %2016 = vmatpush1.msra.mxu0 %v47
    %2017 = vmatprep.subr.mxu0 0.0
    %2018 = vmatpush1.msra.mxu0 %v48
    %2019 = vmatprep.subr.mxu0 0.0
    %2020 = vmatpush1.msra.mxu0 0.0
    %2021 = vmatprep.subr.mxu0 0.0
    %2022 = vmatpush1.msra.mxu0 0.0
    %2023 = vmatprep.subr.mxu0 0.0
    %2024 = vmatpush1.msra.mxu0 0.0
    %2025 = vmatprep.subr.mxu0 0.0
    %2026 = vmatpush1.msra.mxu0 0.0
    %2027 = vmatprep.subr.mxu0 0.0
    %2028 = vmatpush1.msra.mxu0 0.0
    %2029 = vmatprep.subr.mxu0 0.0
    %2030 = vmatpush1.msra.mxu0 0.0
    %2031 = vmatprep.subr.mxu0 0.0
    %2032 = vmatpush1.msra.mxu0 0.0
    %2033 = vmatprep.subr.mxu0 0.0
    %2034 = vmatpush1.msra.mxu0 0.0
    %2035 = vmatprep.subr.mxu0 0.0
    %2036 = vmatpush1.msra.mxu0 0.0
    %2037 = vmatprep.subr.mxu0 0.0
    %2038 = vmatpush1.msra.mxu0 0.0
    %2039 = vmatprep.subr.mxu0 0.0
    %2040 = vmatpush1.msra.mxu0 0.0
    %2041 = vmatprep.subr.mxu0 0.0
    %2042 = vmatpush1.msra.mxu0 0.0
    %2043 = vmatprep.subr.mxu0 0.0
    %2044 = vmatpush1.msra.mxu0 0.0
    %2045 = vmatprep.subr.mxu0 0.0
    %2046 = vmatpush1.msra.mxu0 0.0
    %2047 = vmatprep.subr.mxu0 0.0
    %2048 = vmatpush1.msra.mxu0 0.0
    %2049 = vmatprep.subr.mxu0 0.0
    %2050 = vmatpush1.msra.mxu0 0.0
    %2051 = vmatprep.mubr.f32.mxu0 0.0
    %2052 = vmatmul.mubr.f32.gmra.mrb[0].mxu0 %v1986
    %v2053 = vpop.f32.mrb[0].mxu0
    %v2054 = vadd.f32 %v32, %v2053
    %v2055 = vpop.f32.mrb[0].mxu0
    %2056 = vdwg.mxu0
    %vm2057 = vcmask 73728
    %v2058 = vsel %vm2057, %v2054, -inf
    %2059 = vmax.xlane.f32.xlu0 %v2058
    %v2060 = vpop.xlane.xlu0 %2059
    %v2061 = vsub.f32 %v2054, %v2060
    %v2062 = vmul.f32 %v2061, 1.442695
    %v2063 = vpow.pop %v2062
    %v2064 = vsel %vm2057, %v2063, 0.0
    %2065 = vadd.xlane.f32.xlu0 %v2064
    %v2066 = vpop.xlane.xlu0 %2065
    %v2067 = vlog2.pop %v2066
    %v2068 = vmul.f32 %v2067, 0.6931472
    %v2069 = vsub.f32 %v2061, %v2068
    %2070 = vst.msk [vmem:[#allocation2] sm:$0x1] %vm2057, %v2069
    %s2071 = scalar_lea.vmem %s0, 8
    %v2072 = vld [vmem:[%s2071] sm:$0xf]
    %v2073 = vld [vmem:[%s2] sm:$0xff]
    %v2074 = vld [vmem:[%s2 + $0x8] sm:$0xff]
    %v2075 = vld [vmem:[%s2 + $0x10] sm:$0xff]
    %v2076 = vld [vmem:[%s2 + $0x18] sm:$0xff]
    %v2077 = vld [vmem:[%s2 + $0x20] sm:$0xff]
    %v2078 = vld [vmem:[%s2 + $0x28] sm:$0xff]
    %v2079 = vld [vmem:[%s2 + $0x30] sm:$0xff]
    %v2080 = vld [vmem:[%s2 + $0x38] sm:$0xff]
    %v2081 = vld [vmem:[%s2 + $0x40] sm:$0xff]
    %v2082 = vld [vmem:[%s2 + $0x48] sm:$0xff]
    %v2083 = vld [vmem:[%s2 + $0x50] sm:$0xff]
    %v2084 = vld [vmem:[%s2 + $0x58] sm:$0xff]
    %v2085 = vld [vmem:[%s2 + $0x60] sm:$0xff]
    %v2086 = vld [vmem:[%s2 + $0x68] sm:$0xff]
    %v2087 = vld [vmem:[%s2 + $0x70] sm:$0xff]
    %v2088 = vld [vmem:[%s2 + $0x78] sm:$0xff]
    %s2089 = scalar_lea.vmem %s1, 8
    %v2090 = vld [vmem:[%s2089] sm:$0xf]
    %v2091 = vld [vmem:[%s67] sm:$0xff]
    %v2092 = vld [vmem:[%s67 + $0x8] sm:$0xff]
    %v2093 = vld [vmem:[%s67 + $0x10] sm:$0xff]
    %v2094 = vld [vmem:[%s67 + $0x18] sm:$0xff]
    %v2095 = vld [vmem:[%s67 + $0x20] sm:$0xff]
    %v2096 = vld [vmem:[%s67 + $0x28] sm:$0xff]
    %v2097 = vld [vmem:[%s67 + $0x30] sm:$0xff]
    %v2098 = vld [vmem:[%s67 + $0x38] sm:$0xff]
    %v2099 = vld [vmem:[%s67 + $0x40] sm:$0xff]
    %v2100 = vld [vmem:[%s67 + $0x48] sm:$0xff]
    %v2101 = vld [vmem:[%s67 + $0x50] sm:$0xff]
    %v2102 = vld [vmem:[%s67 + $0x58] sm:$0xff]
    %v2103 = vld [vmem:[%s67 + $0x60] sm:$0xff]
    %v2104 = vld [vmem:[%s67 + $0x68] sm:$0xff]
    %v2105 = vld [vmem:[%s67 + $0x70] sm:$0xff]
    %v2106 = vld [vmem:[%s67 + $0x78] sm:$0xff]
    %2107 = vmatprep.subr.mxu0 0.0
    %2108 = vmatpush1.msra.mxu0 %v2091
    %2109 = vmatprep.subr.mxu0 0.0
    %2110 = vmatpush1.msra.mxu0 %v2092
    %2111 = vmatprep.subr.mxu0 0.0
    %2112 = vmatpush1.msra.mxu0 %v2093
    %2113 = vmatprep.subr.mxu0 0.0
    %2114 = vmatpush1.msra.mxu0 %v2094
    %2115 = vmatprep.subr.mxu0 0.0
    %2116 = vmatpush1.msra.mxu0 %v2095
    %2117 = vmatprep.subr.mxu0 0.0
    %2118 = vmatpush1.msra.mxu0 %v2096
    %2119 = vmatprep.subr.mxu0 0.0
    %2120 = vmatpush1.msra.mxu0 %v2097
    %2121 = vmatprep.subr.mxu0 0.0
    %2122 = vmatpush1.msra.mxu0 %v2098
    %2123 = vmatprep.subr.mxu0 0.0
    %2124 = vmatpush1.msra.mxu0 %v2099
    %2125 = vmatprep.subr.mxu0 0.0
    %2126 = vmatpush1.msra.mxu0 %v2100
    %2127 = vmatprep.subr.mxu0 0.0
    %2128 = vmatpush1.msra.mxu0 %v2101
    %2129 = vmatprep.subr.mxu0 0.0
    %2130 = vmatpush1.msra.mxu0 %v2102
    %2131 = vmatprep.subr.mxu0 0.0
    %2132 = vmatpush1.msra.mxu0 %v2103
    %2133 = vmatprep.subr.mxu0 0.0
    %2134 = vmatpush1.msra.mxu0 %v2104
    %2135 = vmatprep.subr.mxu0 0.0
    %2136 = vmatpush1.msra.mxu0 %v2105
    %2137 = vmatprep.subr.mxu0 0.0
    %2138 = vmatpush1.msra.mxu0 %v2106
    %2139 = vmatprep.subr.mxu0 0.0
    %2140 = vmatpush1.msra.mxu0 0.0
    %2141 = vmatprep.subr.mxu0 0.0
    %2142 = vmatpush1.msra.mxu0 0.0
    %2143 = vmatprep.subr.mxu0 0.0
    %2144 = vmatpush1.msra.mxu0 0.0
    %2145 = vmatprep.subr.mxu0 0.0
    %2146 = vmatpush1.msra.mxu0 0.0
    %2147 = vmatprep.subr.mxu0 0.0
    %2148 = vmatpush1.msra.mxu0 0.0
    %2149 = vmatprep.subr.mxu0 0.0
    %2150 = vmatpush1.msra.mxu0 0.0
    %2151 = vmatprep.subr.mxu0 0.0
    %2152 = vmatpush1.msra.mxu0 0.0
    %2153 = vmatprep.subr.mxu0 0.0
    %2154 = vmatpush1.msra.mxu0 0.0
    %2155 = vmatprep.subr.mxu0 0.0
    %2156 = vmatpush1.msra.mxu0 0.0
    %2157 = vmatprep.subr.mxu0 0.0
    %2158 = vmatpush1.msra.mxu0 0.0
    %2159 = vmatprep.subr.mxu0 0.0
    %2160 = vmatpush1.msra.mxu0 0.0
    %2161 = vmatprep.subr.mxu0 0.0
    %2162 = vmatpush1.msra.mxu0 0.0
    %2163 = vmatprep.subr.mxu0 0.0
    %2164 = vmatpush1.msra.mxu0 0.0
    %2165 = vmatprep.subr.mxu0 0.0
    %2166 = vmatpush1.msra.mxu0 0.0
    %2167 = vmatprep.subr.mxu0 0.0
    %2168 = vmatpush1.msra.mxu0 0.0
    %2169 = vmatprep.subr.mxu0 0.0
    %2170 = vmatpush1.msra.mxu0 0.0
    %2171 = vmatprep.mubr.f32.mxu0 0.0
    %2172 = vmatmul.mubr.f32.gmra.mrb[0].mxu0 %v2090
    %v2173 = vpop.f32.mrb[0].mxu0
    %v2174 = vadd.f32 0.0, %v2173
    %v2175 = vpop.f32.mrb[0].mxu0
    %2176 = vdwg.mxu0
    %2177 = vmatprep.subr.mxu0 0.0
    %2178 = vmatpush1.msra.mxu0 %v2073
    %2179 = vmatprep.subr.mxu0 0.0
    %2180 = vmatpush1.msra.mxu0 %v2074
    %2181 = vmatprep.subr.mxu0 0.0
    %2182 = vmatpush1.msra.mxu0 %v2075
    %2183 = vmatprep.subr.mxu0 0.0
    %2184 = vmatpush1.msra.mxu0 %v2076
    %2185 = vmatprep.subr.mxu0 0.0
    %2186 = vmatpush1.msra.mxu0 %v2077
    %2187 = vmatprep.subr.mxu0 0.0
    %2188 = vmatpush1.msra.mxu0 %v2078
    %2189 = vmatprep.subr.mxu0 0.0
    %2190 = vmatpush1.msra.mxu0 %v2079
    %2191 = vmatprep.subr.mxu0 0.0
    %2192 = vmatpush1.msra.mxu0 %v2080
    %2193 = vmatprep.subr.mxu0 0.0
    %2194 = vmatpush1.msra.mxu0 %v2081
    %2195 = vmatprep.subr.mxu0 0.0
    %2196 = vmatpush1.msra.mxu0 %v2082
    %2197 = vmatprep.subr.mxu0 0.0
    %2198 = vmatpush1.msra.mxu0 %v2083
    %2199 = vmatprep.subr.mxu0 0.0
    %2200 = vmatpush1.msra.mxu0 %v2084
    %2201 = vmatprep.subr.mxu0 0.0
    %2202 = vmatpush1.msra.mxu0 %v2085
    %2203 = vmatprep.subr.mxu0 0.0
    %2204 = vmatpush1.msra.mxu0 %v2086
    %2205 = vmatprep.subr.mxu0 0.0
    %2206 = vmatpush1.msra.mxu0 %v2087
    %2207 = vmatprep.subr.mxu0 0.0
    %2208 = vmatpush1.msra.mxu0 %v2088
    %2209 = vmatprep.subr.mxu0 0.0
    %2210 = vmatpush1.msra.mxu0 0.0
    %2211 = vmatprep.subr.mxu0 0.0
    %2212 = vmatpush1.msra.mxu0 0.0
    %2213 = vmatprep.subr.mxu0 0.0
    %2214 = vmatpush1.msra.mxu0 0.0
    %2215 = vmatprep.subr.mxu0 0.0
    %2216 = vmatpush1.msra.mxu0 0.0
    %2217 = vmatprep.subr.mxu0 0.0
    %2218 = vmatpush1.msra.mxu0 0.0
    %2219 = vmatprep.subr.mxu0 0.0
    %2220 = vmatpush1.msra.mxu0 0.0
    %2221 = vmatprep.subr.mxu0 0.0
    %2222 = vmatpush1.msra.mxu0 0.0
    %2223 = vmatprep.subr.mxu0 0.0
    %2224 = vmatpush1.msra.mxu0 0.0
    %2225 = vmatprep.subr.mxu0 0.0
    %2226 = vmatpush1.msra.mxu0 0.0
    %2227 = vmatprep.subr.mxu0 0.0
    %2228 = vmatpush1.msra.mxu0 0.0
    %2229 = vmatprep.subr.mxu0 0.0
    %2230 = vmatpush1.msra.mxu0 0.0
    %2231 = vmatprep.subr.mxu0 0.0
    %2232 = vmatpush1.msra.mxu0 0.0
    %2233 = vmatprep.subr.mxu0 0.0
    %2234 = vmatpush1.msra.mxu0 0.0
    %2235 = vmatprep.subr.mxu0 0.0
    %2236 = vmatpush1.msra.mxu0 0.0
    %2237 = vmatprep.subr.mxu0 0.0
    %2238 = vmatpush1.msra.mxu0 0.0
    %2239 = vmatprep.subr.mxu0 0.0
    %2240 = vmatpush1.msra.mxu0 0.0
    %2241 = vmatprep.mubr.f32.mxu0 0.0
    %2242 = vmatmul.mubr.f32.gmra.mrb[0].mxu0 %v2072
    %v2243 = vpop.f32.mrb[0].mxu0
    %v2244 = vadd.f32 %v2174, %v2243
    %v2245 = vpop.f32.mrb[0].mxu0
    %2246 = vdwg.mxu0
    %v2247 = vld [vmem:[%s2071 + $0x1] sm:$0xf]
    %v2248 = vld [vmem:[%s225] sm:$0xff]
    %v2249 = vld [vmem:[%s225 + $0x8] sm:$0xff]
    %v2250 = vld [vmem:[%s225 + $0x10] sm:$0xff]
    %v2251 = vld [vmem:[%s225 + $0x18] sm:$0xff]
    %v2252 = vld [vmem:[%s225 + $0x20] sm:$0xff]
    %v2253 = vld [vmem:[%s225 + $0x28] sm:$0xff]
    %v2254 = vld [vmem:[%s225 + $0x30] sm:$0xff]
    %v2255 = vld [vmem:[%s225 + $0x38] sm:$0xff]
    %v2256 = vld [vmem:[%s225 + $0x40] sm:$0xff]
    %v2257 = vld [vmem:[%s225 + $0x48] sm:$0xff]
    %v2258 = vld [vmem:[%s225 + $0x50] sm:$0xff]
    %v2259 = vld [vmem:[%s225 + $0x58] sm:$0xff]
    %v2260 = vld [vmem:[%s225 + $0x60] sm:$0xff]
    %v2261 = vld [vmem:[%s225 + $0x68] sm:$0xff]
    %v2262 = vld [vmem:[%s225 + $0x70] sm:$0xff]
    %v2263 = vld [vmem:[%s225 + $0x78] sm:$0xff]
    %2264 = vmatprep.subr.mxu0 0.0
    %2265 = vmatpush1.msra.mxu0 %v2248
    %2266 = vmatprep.subr.mxu0 0.0
    %2267 = vmatpush1.msra.mxu0 %v2249
    %2268 = vmatprep.subr.mxu0 0.0
    %2269 = vmatpush1.msra.mxu0 %v2250
    %2270 = vmatprep.subr.mxu0 0.0
    %2271 = vmatpush1.msra.mxu0 %v2251
    %2272 = vmatprep.subr.mxu0 0.0
    %2273 = vmatpush1.msra.mxu0 %v2252
    %2274 = vmatprep.subr.mxu0 0.0
    %2275 = vmatpush1.msra.mxu0 %v2253
    %2276 = vmatprep.subr.mxu0 0.0
    %2277 = vmatpush1.msra.mxu0 %v2254
    %2278 = vmatprep.subr.mxu0 0.0
    %2279 = vmatpush1.msra.mxu0 %v2255
    %2280 = vmatprep.subr.mxu0 0.0
    %2281 = vmatpush1.msra.mxu0 %v2256
    %2282 = vmatprep.subr.mxu0 0.0
    %2283 = vmatpush1.msra.mxu0 %v2257
    %2284 = vmatprep.subr.mxu0 0.0
    %2285 = vmatpush1.msra.mxu0 %v2258
    %2286 = vmatprep.subr.mxu0 0.0
    %2287 = vmatpush1.msra.mxu0 %v2259
    %2288 = vmatprep.subr.mxu0 0.0
    %2289 = vmatpush1.msra.mxu0 %v2260
    %2290 = vmatprep.subr.mxu0 0.0
    %2291 = vmatpush1.msra.mxu0 %v2261
    %2292 = vmatprep.subr.mxu0 0.0
    %2293 = vmatpush1.msra.mxu0 %v2262
    %2294 = vmatprep.subr.mxu0 0.0
    %2295 = vmatpush1.msra.mxu0 %v2263
    %2296 = vmatprep.subr.mxu0 0.0
    %2297 = vmatpush1.msra.mxu0 0.0
    %2298 = vmatprep.subr.mxu0 0.0
    %2299 = vmatpush1.msra.mxu0 0.0
    %2300 = vmatprep.subr.mxu0 0.0
    %2301 = vmatpush1.msra.mxu0 0.0
    %2302 = vmatprep.subr.mxu0 0.0
    %2303 = vmatpush1.msra.mxu0 0.0
    %2304 = vmatprep.subr.mxu0 0.0
    %2305 = vmatpush1.msra.mxu0 0.0
    %2306 = vmatprep.subr.mxu0 0.0
    %2307 = vmatpush1.msra.mxu0 0.0
    %2308 = vmatprep.subr.mxu0 0.0
    %2309 = vmatpush1.msra.mxu0 0.0
    %2310 = vmatprep.subr.mxu0 0.0
    %2311 = vmatpush1.msra.mxu0 0.0
    %2312 = vmatprep.subr.mxu0 0.0
    %2313 = vmatpush1.msra.mxu0 0.0
    %2314 = vmatprep.subr.mxu0 0.0
    %2315 = vmatpush1.msra.mxu0 0.0
    %2316 = vmatprep.subr.mxu0 0.0
    %2317 = vmatpush1.msra.mxu0 0.0
    %2318 = vmatprep.subr.mxu0 0.0
    %2319 = vmatpush1.msra.mxu0 0.0
    %2320 = vmatprep.subr.mxu0 0.0
    %2321 = vmatpush1.msra.mxu0 0.0
    %2322 = vmatprep.subr.mxu0 0.0
    %2323 = vmatpush1.msra.mxu0 0.0
    %2324 = vmatprep.subr.mxu0 0.0
    %2325 = vmatpush1.msra.mxu0 0.0
    %2326 = vmatprep.subr.mxu0 0.0
    %2327 = vmatpush1.msra.mxu0 0.0
    %2328 = vmatprep.mubr.f32.mxu0 0.0
    %2329 = vmatmul.mubr.f32.gmra.mrb[0].mxu0 %v2247
    %v2330 = vpop.f32.mrb[0].mxu0
    %v2331 = vadd.f32 0.0, %v2330
    %v2332 = vpop.f32.mrb[0].mxu0
    %2333 = vdwg.mxu0
    %v2334 = vadd.f32 %v2244, %v2331
    %v2335 = vld [vmem:[%s2089 + $0x1] sm:$0xf]
    %v2336 = vld [vmem:[%s314] sm:$0xff]
    %v2337 = vld [vmem:[%s314 + $0x8] sm:$0xff]
    %v2338 = vld [vmem:[%s314 + $0x10] sm:$0xff]
    %v2339 = vld [vmem:[%s314 + $0x18] sm:$0xff]
    %v2340 = vld [vmem:[%s314 + $0x20] sm:$0xff]
    %v2341 = vld [vmem:[%s314 + $0x28] sm:$0xff]
    %v2342 = vld [vmem:[%s314 + $0x30] sm:$0xff]
    %v2343 = vld [vmem:[%s314 + $0x38] sm:$0xff]
    %v2344 = vld [vmem:[%s314 + $0x40] sm:$0xff]
    %v2345 = vld [vmem:[%s314 + $0x48] sm:$0xff]
    %v2346 = vld [vmem:[%s314 + $0x50] sm:$0xff]
    %v2347 = vld [vmem:[%s314 + $0x58] sm:$0xff]
    %v2348 = vld [vmem:[%s314 + $0x60] sm:$0xff]
    %v2349 = vld [vmem:[%s314 + $0x68] sm:$0xff]
    %v2350 = vld [vmem:[%s314 + $0x70] sm:$0xff]
    %v2351 = vld [vmem:[%s314 + $0x78] sm:$0xff]
    %2352 = vmatprep.subr.mxu0 0.0
    %2353 = vmatpush1.msra.mxu0 %v2336
    %2354 = vmatprep.subr.mxu0 0.0
    %2355 = vmatpush1.msra.mxu0 %v2337
    %2356 = vmatprep.subr.mxu0 0.0
    %2357 = vmatpush1.msra.mxu0 %v2338
    %2358 = vmatprep.subr.mxu0 0.0
    %2359 = vmatpush1.msra.mxu0 %v2339
    %2360 = vmatprep.subr.mxu0 0.0
    %2361 = vmatpush1.msra.mxu0 %v2340
    %2362 = vmatprep.subr.mxu0 0.0
    %2363 = vmatpush1.msra.mxu0 %v2341
    %2364 = vmatprep.subr.mxu0 0.0
    %2365 = vmatpush1.msra.mxu0 %v2342
    %2366 = vmatprep.subr.mxu0 0.0
    %2367 = vmatpush1.msra.mxu0 %v2343
    %2368 = vmatprep.subr.mxu0 0.0
    %2369 = vmatpush1.msra.mxu0 %v2344
    %2370 = vmatprep.subr.mxu0 0.0
    %2371 = vmatpush1.msra.mxu0 %v2345
    %2372 = vmatprep.subr.mxu0 0.0
    %2373 = vmatpush1.msra.mxu0 %v2346
    %2374 = vmatprep.subr.mxu0 0.0
    %2375 = vmatpush1.msra.mxu0 %v2347
    %2376 = vmatprep.subr.mxu0 0.0
    %2377 = vmatpush1.msra.mxu0 %v2348
    %2378 = vmatprep.subr.mxu0 0.0
    %2379 = vmatpush1.msra.mxu0 %v2349
    %2380 = vmatprep.subr.mxu0 0.0
    %2381 = vmatpush1.msra.mxu0 %v2350
    %2382 = vmatprep.subr.mxu0 0.0
    %2383 = vmatpush1.msra.mxu0 %v2351
    %2384 = vmatprep.subr.mxu0 0.0
    %2385 = vmatpush1.msra.mxu0 0.0
    %2386 = vmatprep.subr.mxu0 0.0
    %2387 = vmatpush1.msra.mxu0 0.0
    %2388 = vmatprep.subr.mxu0 0.0
    %2389 = vmatpush1.msra.mxu0 0.0
    %2390 = vmatprep.subr.mxu0 0.0
    %2391 = vmatpush1.msra.mxu0 0.0
    %2392 = vmatprep.subr.mxu0 0.0
    %2393 = vmatpush1.msra.mxu0 0.0
    %2394 = vmatprep.subr.mxu0 0.0
    %2395 = vmatpush1.msra.mxu0 0.0
    %2396 = vmatprep.subr.mxu0 0.0
    %2397 = vmatpush1.msra.mxu0 0.0
    %2398 = vmatprep.subr.mxu0 0.0
    %2399 = vmatpush1.msra.mxu0 0.0
    %2400 = vmatprep.subr.mxu0 0.0
    %2401 = vmatpush1.msra.mxu0 0.0
    %2402 = vmatprep.subr.mxu0 0.0
    %2403 = vmatpush1.msra.mxu0 0.0
    %2404 = vmatprep.subr.mxu0 0.0
    %2405 = vmatpush1.msra.mxu0 0.0
    %2406 = vmatprep.subr.mxu0 0.0
    %2407 = vmatpush1.msra.mxu0 0.0
    %2408 = vmatprep.subr.mxu0 0.0
    %2409 = vmatpush1.msra.mxu0 0.0
    %2410 = vmatprep.subr.mxu0 0.0
    %2411 = vmatpush1.msra.mxu0 0.0
    %2412 = vmatprep.subr.mxu0 0.0
    %2413 = vmatpush1.msra.mxu0 0.0
    %2414 = vmatprep.subr.mxu0 0.0
    %2415 = vmatpush1.msra.mxu0 0.0
    %2416 = vmatprep.mubr.f32.mxu0 0.0
    %2417 = vmatmul.mubr.f32.gmra.mrb[0].mxu0 %v2335
    %v2418 = vpop.f32.mrb[0].mxu0
    %v2419 = vadd.f32 0.0, %v2418
    %v2420 = vpop.f32.mrb[0].mxu0
    %2421 = vdwg.mxu0
    %v2422 = vadd.f32 %v2334, %v2419
    %v2423 = vld [vmem:[%s2071 + $0x2] sm:$0xf]
    %v2424 = vld [vmem:[%s403] sm:$0xff]
    %v2425 = vld [vmem:[%s403 + $0x8] sm:$0xff]
    %v2426 = vld [vmem:[%s403 + $0x10] sm:$0xff]
    %v2427 = vld [vmem:[%s403 + $0x18] sm:$0xff]
    %v2428 = vld [vmem:[%s403 + $0x20] sm:$0xff]
    %v2429 = vld [vmem:[%s403 + $0x28] sm:$0xff]
    %v2430 = vld [vmem:[%s403 + $0x30] sm:$0xff]
    %v2431 = vld [vmem:[%s403 + $0x38] sm:$0xff]
    %v2432 = vld [vmem:[%s403 + $0x40] sm:$0xff]
    %v2433 = vld [vmem:[%s403 + $0x48] sm:$0xff]
    %v2434 = vld [vmem:[%s403 + $0x50] sm:$0xff]
    %v2435 = vld [vmem:[%s403 + $0x58] sm:$0xff]
    %v2436 = vld [vmem:[%s403 + $0x60] sm:$0xff]
    %v2437 = vld [vmem:[%s403 + $0x68] sm:$0xff]
    %v2438 = vld [vmem:[%s403 + $0x70] sm:$0xff]
    %v2439 = vld [vmem:[%s403 + $0x78] sm:$0xff]
    %2440 = vmatprep.subr.mxu0 0.0
    %2441 = vmatpush1.msra.mxu0 %v2424
    %2442 = vmatprep.subr.mxu0 0.0
    %2443 = vmatpush1.msra.mxu0 %v2425
    %2444 = vmatprep.subr.mxu0 0.0
    %2445 = vmatpush1.msra.mxu0 %v2426
    %2446 = vmatprep.subr.mxu0 0.0
    %2447 = vmatpush1.msra.mxu0 %v2427
    %2448 = vmatprep.subr.mxu0 0.0
    %2449 = vmatpush1.msra.mxu0 %v2428
    %2450 = vmatprep.subr.mxu0 0.0
    %2451 = vmatpush1.msra.mxu0 %v2429
    %2452 = vmatprep.subr.mxu0 0.0
    %2453 = vmatpush1.msra.mxu0 %v2430
    %2454 = vmatprep.subr.mxu0 0.0
    %2455 = vmatpush1.msra.mxu0 %v2431
    %2456 = vmatprep.subr.mxu0 0.0
    %2457 = vmatpush1.msra.mxu0 %v2432
    %2458 = vmatprep.subr.mxu0 0.0
    %2459 = vmatpush1.msra.mxu0 %v2433
    %2460 = vmatprep.subr.mxu0 0.0
    %2461 = vmatpush1.msra.mxu0 %v2434
    %2462 = vmatprep.subr.mxu0 0.0
    %2463 = vmatpush1.msra.mxu0 %v2435
    %2464 = vmatprep.subr.mxu0 0.0
    %2465 = vmatpush1.msra.mxu0 %v2436
    %2466 = vmatprep.subr.mxu0 0.0
    %2467 = vmatpush1.msra.mxu0 %v2437
    %2468 = vmatprep.subr.mxu0 0.0
    %2469 = vmatpush1.msra.mxu0 %v2438
    %2470 = vmatprep.subr.mxu0 0.0
    %2471 = vmatpush1.msra.mxu0 %v2439
    %2472 = vmatprep.subr.mxu0 0.0
    %2473 = vmatpush1.msra.mxu0 0.0
    %2474 = vmatprep.subr.mxu0 0.0
    %2475 = vmatpush1.msra.mxu0 0.0
    %2476 = vmatprep.subr.mxu0 0.0
    %2477 = vmatpush1.msra.mxu0 0.0
    %2478 = vmatprep.subr.mxu0 0.0
    %2479 = vmatpush1.msra.mxu0 0.0
    %2480 = vmatprep.subr.mxu0 0.0
    %2481 = vmatpush1.msra.mxu0 0.0
    %2482 = vmatprep.subr.mxu0 0.0
    %2483 = vmatpush1.msra.mxu0 0.0
    %2484 = vmatprep.subr.mxu0 0.0
    %2485 = vmatpush1.msra.mxu0 0.0
    %2486 = vmatprep.subr.mxu0 0.0
    %2487 = vmatpush1.msra.mxu0 0.0
    %2488 = vmatprep.subr.mxu0 0.0
    %2489 = vmatpush1.msra.mxu0 0.0
    %2490 = vmatprep.subr.mxu0 0.0
    %2491 = vmatpush1.msra.mxu0 0.0
    %2492 = vmatprep.subr.mxu0 0.0
    %2493 = vmatpush1.msra.mxu0 0.0
    %2494 = vmatprep.subr.mxu0 0.0
    %2495 = vmatpush1.msra.mxu0 0.0
    %2496 = vmatprep.subr.mxu0 0.0
    %2497 = vmatpush1.msra.mxu0 0.0
    %2498 = vmatprep.subr.mxu0 0.0
    %2499 = vmatpush1.msra.mxu0 0.0
    %2500 = vmatprep.subr.mxu0 0.0
    %2501 = vmatpush1.msra.mxu0 0.0
    %2502 = vmatprep.subr.mxu0 0.0
    %2503 = vmatpush1.msra.mxu0 0.0
    %2504 = vmatprep.mubr.f32.mxu0 0.0
    %2505 = vmatmul.mubr.f32.gmra.mrb[0].mxu0 %v2423
    %v2506 = vpop.f32.mrb[0].mxu0
    %v2507 = vadd.f32 0.0, %v2506
    %v2508 = vpop.f32.mrb[0].mxu0
    %2509 = vdwg.mxu0
    %v2510 = vadd.f32 %v2422, %v2507
    %v2511 = vld [vmem:[%s491] sm:$0xff]
    %v2512 = vld [vmem:[%s491 + $0x8] sm:$0xff]
    %v2513 = vld [vmem:[%s491 + $0x10] sm:$0xff]
    %v2514 = vld [vmem:[%s491 + $0x18] sm:$0xff]
    %v2515 = vld [vmem:[%s491 + $0x20] sm:$0xff]
    %v2516 = vld [vmem:[%s491 + $0x28] sm:$0xff]
    %v2517 = vld [vmem:[%s491 + $0x30] sm:$0xff]
    %v2518 = vld [vmem:[%s491 + $0x38] sm:$0xff]
    %v2519 = vld [vmem:[%s491 + $0x40] sm:$0xff]
    %v2520 = vld [vmem:[%s491 + $0x48] sm:$0xff]
    %v2521 = vld [vmem:[%s491 + $0x50] sm:$0xff]
    %v2522 = vld [vmem:[%s491 + $0x58] sm:$0xff]
    %v2523 = vld [vmem:[%s491 + $0x60] sm:$0xff]
    %v2524 = vld [vmem:[%s491 + $0x68] sm:$0xff]
    %v2525 = vld [vmem:[%s491 + $0x70] sm:$0xff]
    %v2526 = vld [vmem:[%s491 + $0x78] sm:$0xff]
    %v2527 = vld [vmem:[%s508] sm:$0xff]
    %v2528 = vld [vmem:[%s508 + $0x8] sm:$0xff]
    %v2529 = vld [vmem:[%s508 + $0x10] sm:$0xff]
    %v2530 = vld [vmem:[%s508 + $0x18] sm:$0xff]
    %v2531 = vld [vmem:[%s508 + $0x20] sm:$0xff]
    %v2532 = vld [vmem:[%s508 + $0x28] sm:$0xff]
    %v2533 = vld [vmem:[%s508 + $0x30] sm:$0xff]
    %v2534 = vld [vmem:[%s508 + $0x38] sm:$0xff]
    %v2535 = vld [vmem:[%s508 + $0x40] sm:$0xff]
    %v2536 = vld [vmem:[%s508 + $0x48] sm:$0xff]
    %v2537 = vld [vmem:[%s508 + $0x50] sm:$0xff]
    %v2538 = vld [vmem:[%s508 + $0x58] sm:$0xff]
    %v2539 = vld [vmem:[%s508 + $0x60] sm:$0xff]
    %v2540 = vld [vmem:[%s508 + $0x68] sm:$0xff]
    %v2541 = vld [vmem:[%s508 + $0x70] sm:$0xff]
    %v2542 = vld [vmem:[%s508 + $0x78] sm:$0xff]
    %2543 = vmatprep.subr.mxu0 0.0
    %2544 = vmatpush1.msra.mxu0 %v2527
    %2545 = vmatprep.subr.mxu0 0.0
    %2546 = vmatpush1.msra.mxu0 %v2528
    %2547 = vmatprep.subr.mxu0 0.0
    %2548 = vmatpush1.msra.mxu0 %v2529
    %2549 = vmatprep.subr.mxu0 0.0
    %2550 = vmatpush1.msra.mxu0 %v2530
    %2551 = vmatprep.subr.mxu0 0.0
    %2552 = vmatpush1.msra.mxu0 %v2531
    %2553 = vmatprep.subr.mxu0 0.0
    %2554 = vmatpush1.msra.mxu0 %v2532
    %2555 = vmatprep.subr.mxu0 0.0
    %2556 = vmatpush1.msra.mxu0 %v2533
    %2557 = vmatprep.subr.mxu0 0.0
    %2558 = vmatpush1.msra.mxu0 %v2534
    %2559 = vmatprep.subr.mxu0 0.0
    %2560 = vmatpush1.msra.mxu0 %v2535
    %2561 = vmatprep.subr.mxu0 0.0
    %2562 = vmatpush1.msra.mxu0 %v2536
    %2563 = vmatprep.subr.mxu0 0.0
    %2564 = vmatpush1.msra.mxu0 %v2537
    %2565 = vmatprep.subr.mxu0 0.0
    %2566 = vmatpush1.msra.mxu0 %v2538
    %2567 = vmatprep.subr.mxu0 0.0
    %2568 = vmatpush1.msra.mxu0 %v2539
    %2569 = vmatprep.subr.mxu0 0.0
    %2570 = vmatpush1.msra.mxu0 %v2540
    %2571 = vmatprep.subr.mxu0 0.0
    %2572 = vmatpush1.msra.mxu0 %v2541
    %2573 = vmatprep.subr.mxu0 0.0
    %2574 = vmatpush1.msra.mxu0 %v2542
    %2575 = vmatprep.subr.mxu0 0.0
    %2576 = vmatpush1.msra.mxu0 0.0
    %2577 = vmatprep.subr.mxu0 0.0
    %2578 = vmatpush1.msra.mxu0 0.0
    %2579 = vmatprep.subr.mxu0 0.0
    %2580 = vmatpush1.msra.mxu0 0.0
    %2581 = vmatprep.subr.mxu0 0.0
    %2582 = vmatpush1.msra.mxu0 0.0
    %2583 = vmatprep.subr.mxu0 0.0
    %2584 = vmatpush1.msra.mxu0 0.0
    %2585 = vmatprep.subr.mxu0 0.0
    %2586 = vmatpush1.msra.mxu0 0.0
    %2587 = vmatprep.subr.mxu0 0.0
    %2588 = vmatpush1.msra.mxu0 0.0
    %2589 = vmatprep.subr.mxu0 0.0
    %2590 = vmatpush1.msra.mxu0 0.0
    %2591 = vmatprep.subr.mxu0 0.0
    %2592 = vmatpush1.msra.mxu0 0.0
    %2593 = vmatprep.subr.mxu0 0.0
    %2594 = vmatpush1.msra.mxu0 0.0
    %2595 = vmatprep.subr.mxu0 0.0
    %2596 = vmatpush1.msra.mxu0 0.0
    %2597 = vmatprep.subr.mxu0 0.0
    %2598 = vmatpush1.msra.mxu0 0.0
    %2599 = vmatprep.subr.mxu0 0.0
    %2600 = vmatpush1.msra.mxu0 0.0
    %2601 = vmatprep.subr.mxu0 0.0
    %2602 = vmatpush1.msra.mxu0 0.0
    %2603 = vmatprep.subr.mxu0 0.0
    %2604 = vmatpush1.msra.mxu0 0.0
    %2605 = vmatprep.subr.mxu0 0.0
    %2606 = vmatpush1.msra.mxu0 0.0
    %2607 = vmatprep.mubr.f32.mxu0 0.0
    %2608 = vmatmul.mubr.f32.gmra.mrb[0].mxu0 %v2090
    %v2609 = vpop.f32.mrb[0].mxu0
    %v2610 = vadd.f32 0.0, %v2609
    %v2611 = vpop.f32.mrb[0].mxu0
    %2612 = vdwg.mxu0
    %2613 = vmatprep.subr.mxu0 0.0
    %2614 = vmatpush1.msra.mxu0 %v2511
    %2615 = vmatprep.subr.mxu0 0.0
    %2616 = vmatpush1.msra.mxu0 %v2512
    %2617 = vmatprep.subr.mxu0 0.0
    %2618 = vmatpush1.msra.mxu0 %v2513
    %2619 = vmatprep.subr.mxu0 0.0
    %2620 = vmatpush1.msra.mxu0 %v2514
    %2621 = vmatprep.subr.mxu0 0.0
    %2622 = vmatpush1.msra.mxu0 %v2515
    %2623 = vmatprep.subr.mxu0 0.0
    %2624 = vmatpush1.msra.mxu0 %v2516
    %2625 = vmatprep.subr.mxu0 0.0
    %2626 = vmatpush1.msra.mxu0 %v2517
    %2627 = vmatprep.subr.mxu0 0.0
    %2628 = vmatpush1.msra.mxu0 %v2518
    %2629 = vmatprep.subr.mxu0 0.0
    %2630 = vmatpush1.msra.mxu0 %v2519
    %2631 = vmatprep.subr.mxu0 0.0
    %2632 = vmatpush1.msra.mxu0 %v2520
    %2633 = vmatprep.subr.mxu0 0.0
    %2634 = vmatpush1.msra.mxu0 %v2521
    %2635 = vmatprep.subr.mxu0 0.0
    %2636 = vmatpush1.msra.mxu0 %v2522
    %2637 = vmatprep.subr.mxu0 0.0
    %2638 = vmatpush1.msra.mxu0 %v2523
    %2639 = vmatprep.subr.mxu0 0.0
    %2640 = vmatpush1.msra.mxu0 %v2524
    %2641 = vmatprep.subr.mxu0 0.0
    %2642 = vmatpush1.msra.mxu0 %v2525
    %2643 = vmatprep.subr.mxu0 0.0
    %2644 = vmatpush1.msra.mxu0 %v2526
    %2645 = vmatprep.subr.mxu0 0.0
    %2646 = vmatpush1.msra.mxu0 0.0
    %2647 = vmatprep.subr.mxu0 0.0
    %2648 = vmatpush1.msra.mxu0 0.0
    %2649 = vmatprep.subr.mxu0 0.0
    %2650 = vmatpush1.msra.mxu0 0.0
    %2651 = vmatprep.subr.mxu0 0.0
    %2652 = vmatpush1.msra.mxu0 0.0
    %2653 = vmatprep.subr.mxu0 0.0
    %2654 = vmatpush1.msra.mxu0 0.0
    %2655 = vmatprep.subr.mxu0 0.0
    %2656 = vmatpush1.msra.mxu0 0.0
    %2657 = vmatprep.subr.mxu0 0.0
    %2658 = vmatpush1.msra.mxu0 0.0
    %2659 = vmatprep.subr.mxu0 0.0
    %2660 = vmatpush1.msra.mxu0 0.0
    %2661 = vmatprep.subr.mxu0 0.0
    %2662 = vmatpush1.msra.mxu0 0.0
    %2663 = vmatprep.subr.mxu0 0.0
    %2664 = vmatpush1.msra.mxu0 0.0
    %2665 = vmatprep.subr.mxu0 0.0
    %2666 = vmatpush1.msra.mxu0 0.0
    %2667 = vmatprep.subr.mxu0 0.0
    %2668 = vmatpush1.msra.mxu0 0.0
    %2669 = vmatprep.subr.mxu0 0.0
    %2670 = vmatpush1.msra.mxu0 0.0
    %2671 = vmatprep.subr.mxu0 0.0
    %2672 = vmatpush1.msra.mxu0 0.0
    %2673 = vmatprep.subr.mxu0 0.0
    %2674 = vmatpush1.msra.mxu0 0.0
    %2675 = vmatprep.subr.mxu0 0.0
    %2676 = vmatpush1.msra.mxu0 0.0
    %2677 = vmatprep.mubr.f32.mxu0 0.0
    %2678 = vmatmul.mubr.f32.gmra.mrb[0].mxu0 %v2072
    %v2679 = vpop.f32.mrb[0].mxu0
    %v2680 = vadd.f32 %v2610, %v2679
    %v2681 = vpop.f32.mrb[0].mxu0
    %2682 = vdwg.mxu0
    %v2683 = vld [vmem:[%s665] sm:$0xff]
    %v2684 = vld [vmem:[%s665 + $0x8] sm:$0xff]
    %v2685 = vld [vmem:[%s665 + $0x10] sm:$0xff]
    %v2686 = vld [vmem:[%s665 + $0x18] sm:$0xff]
    %v2687 = vld [vmem:[%s665 + $0x20] sm:$0xff]
    %v2688 = vld [vmem:[%s665 + $0x28] sm:$0xff]
    %v2689 = vld [vmem:[%s665 + $0x30] sm:$0xff]
    %v2690 = vld [vmem:[%s665 + $0x38] sm:$0xff]
    %v2691 = vld [vmem:[%s665 + $0x40] sm:$0xff]
    %v2692 = vld [vmem:[%s665 + $0x48] sm:$0xff]
    %v2693 = vld [vmem:[%s665 + $0x50] sm:$0xff]
    %v2694 = vld [vmem:[%s665 + $0x58] sm:$0xff]
    %v2695 = vld [vmem:[%s665 + $0x60] sm:$0xff]
    %v2696 = vld [vmem:[%s665 + $0x68] sm:$0xff]
    %v2697 = vld [vmem:[%s665 + $0x70] sm:$0xff]
    %v2698 = vld [vmem:[%s665 + $0x78] sm:$0xff]
    %2699 = vmatprep.subr.mxu0 0.0
    %2700 = vmatpush1.msra.mxu0 %v2683
    %2701 = vmatprep.subr.mxu0 0.0
    %2702 = vmatpush1.msra.mxu0 %v2684
    %2703 = vmatprep.subr.mxu0 0.0
    %2704 = vmatpush1.msra.mxu0 %v2685
    %2705 = vmatprep.subr.mxu0 0.0
    %2706 = vmatpush1.msra.mxu0 %v2686
    %2707 = vmatprep.subr.mxu0 0.0
    %2708 = vmatpush1.msra.mxu0 %v2687
    %2709 = vmatprep.subr.mxu0 0.0
    %2710 = vmatpush1.msra.mxu0 %v2688
    %2711 = vmatprep.subr.mxu0 0.0
    %2712 = vmatpush1.msra.mxu0 %v2689
    %2713 = vmatprep.subr.mxu0 0.0
    %2714 = vmatpush1.msra.mxu0 %v2690
    %2715 = vmatprep.subr.mxu0 0.0
    %2716 = vmatpush1.msra.mxu0 %v2691
    %2717 = vmatprep.subr.mxu0 0.0
    %2718 = vmatpush1.msra.mxu0 %v2692
    %2719 = vmatprep.subr.mxu0 0.0
    %2720 = vmatpush1.msra.mxu0 %v2693
    %2721 = vmatprep.subr.mxu0 0.0
    %2722 = vmatpush1.msra.mxu0 %v2694
    %2723 = vmatprep.subr.mxu0 0.0
    %2724 = vmatpush1.msra.mxu0 %v2695
    %2725 = vmatprep.subr.mxu0 0.0
    %2726 = vmatpush1.msra.mxu0 %v2696
    %2727 = vmatprep.subr.mxu0 0.0
    %2728 = vmatpush1.msra.mxu0 %v2697
    %2729 = vmatprep.subr.mxu0 0.0
    %2730 = vmatpush1.msra.mxu0 %v2698
    %2731 = vmatprep.subr.mxu0 0.0
    %2732 = vmatpush1.msra.mxu0 0.0
    %2733 = vmatprep.subr.mxu0 0.0
    %2734 = vmatpush1.msra.mxu0 0.0
    %2735 = vmatprep.subr.mxu0 0.0
    %2736 = vmatpush1.msra.mxu0 0.0
    %2737 = vmatprep.subr.mxu0 0.0
    %2738 = vmatpush1.msra.mxu0 0.0
    %2739 = vmatprep.subr.mxu0 0.0
    %2740 = vmatpush1.msra.mxu0 0.0
    %2741 = vmatprep.subr.mxu0 0.0
    %2742 = vmatpush1.msra.mxu0 0.0
    %2743 = vmatprep.subr.mxu0 0.0
    %2744 = vmatpush1.msra.mxu0 0.0
    %2745 = vmatprep.subr.mxu0 0.0
    %2746 = vmatpush1.msra.mxu0 0.0
    %2747 = vmatprep.subr.mxu0 0.0
    %2748 = vmatpush1.msra.mxu0 0.0
    %2749 = vmatprep.subr.mxu0 0.0
    %2750 = vmatpush1.msra.mxu0 0.0
    %2751 = vmatprep.subr.mxu0 0.0
    %2752 = vmatpush1.msra.mxu0 0.0
    %2753 = vmatprep.subr.mxu0 0.0
    %2754 = vmatpush1.msra.mxu0 0.0
    %2755 = vmatprep.subr.mxu0 0.0
    %2756 = vmatpush1.msra.mxu0 0.0
    %2757 = vmatprep.subr.mxu0 0.0
    %2758 = vmatpush1.msra.mxu0 0.0
    %2759 = vmatprep.subr.mxu0 0.0
    %2760 = vmatpush1.msra.mxu0 0.0
    %2761 = vmatprep.subr.mxu0 0.0
    %2762 = vmatpush1.msra.mxu0 0.0
    %2763 = vmatprep.mubr.f32.mxu0 0.0
    %2764 = vmatmul.mubr.f32.gmra.mrb[0].mxu0 %v2247
    %v2765 = vpop.f32.mrb[0].mxu0
    %v2766 = vadd.f32 0.0, %v2765
    %v2767 = vpop.f32.mrb[0].mxu0
    %2768 = vdwg.mxu0
    %v2769 = vadd.f32 %v2680, %v2766
    %v2770 = vld [vmem:[%s753] sm:$0xff]
    %v2771 = vld [vmem:[%s753 + $0x8] sm:$0xff]
    %v2772 = vld [vmem:[%s753 + $0x10] sm:$0xff]
    %v2773 = vld [vmem:[%s753 + $0x18] sm:$0xff]
    %v2774 = vld [vmem:[%s753 + $0x20] sm:$0xff]
    %v2775 = vld [vmem:[%s753 + $0x28] sm:$0xff]
    %v2776 = vld [vmem:[%s753 + $0x30] sm:$0xff]
    %v2777 = vld [vmem:[%s753 + $0x38] sm:$0xff]
    %v2778 = vld [vmem:[%s753 + $0x40] sm:$0xff]
    %v2779 = vld [vmem:[%s753 + $0x48] sm:$0xff]
    %v2780 = vld [vmem:[%s753 + $0x50] sm:$0xff]
    %v2781 = vld [vmem:[%s753 + $0x58] sm:$0xff]
    %v2782 = vld [vmem:[%s753 + $0x60] sm:$0xff]
    %v2783 = vld [vmem:[%s753 + $0x68] sm:$0xff]
    %v2784 = vld [vmem:[%s753 + $0x70] sm:$0xff]
    %v2785 = vld [vmem:[%s753 + $0x78] sm:$0xff]
    %2786 = vmatprep.subr.mxu0 0.0
    %2787 = vmatpush1.msra.mxu0 %v2770
    %2788 = vmatprep.subr.mxu0 0.0
    %2789 = vmatpush1.msra.mxu0 %v2771
    %2790 = vmatprep.subr.mxu0 0.0
    %2791 = vmatpush1.msra.mxu0 %v2772
    %2792 = vmatprep.subr.mxu0 0.0
    %2793 = vmatpush1.msra.mxu0 %v2773
    %2794 = vmatprep.subr.mxu0 0.0
    %2795 = vmatpush1.msra.mxu0 %v2774
    %2796 = vmatprep.subr.mxu0 0.0
    %2797 = vmatpush1.msra.mxu0 %v2775
    %2798 = vmatprep.subr.mxu0 0.0
    %2799 = vmatpush1.msra.mxu0 %v2776
    %2800 = vmatprep.subr.mxu0 0.0
    %2801 = vmatpush1.msra.mxu0 %v2777
    %2802 = vmatprep.subr.mxu0 0.0
    %2803 = vmatpush1.msra.mxu0 %v2778
    %2804 = vmatprep.subr.mxu0 0.0
    %2805 = vmatpush1.msra.mxu0 %v2779
    %2806 = vmatprep.subr.mxu0 0.0
    %2807 = vmatpush1.msra.mxu0 %v2780
    %2808 = vmatprep.subr.mxu0 0.0
    %2809 = vmatpush1.msra.mxu0 %v2781
    %2810 = vmatprep.subr.mxu0 0.0
    %2811 = vmatpush1.msra.mxu0 %v2782
    %2812 = vmatprep.subr.mxu0 0.0
    %2813 = vmatpush1.msra.mxu0 %v2783
    %2814 = vmatprep.subr.mxu0 0.0
    %2815 = vmatpush1.msra.mxu0 %v2784
    %2816 = vmatprep.subr.mxu0 0.0
    %2817 = vmatpush1.msra.mxu0 %v2785
    %2818 = vmatprep.subr.mxu0 0.0
    %2819 = vmatpush1.msra.mxu0 0.0
    %2820 = vmatprep.subr.mxu0 0.0
    %2821 = vmatpush1.msra.mxu0 0.0
    %2822 = vmatprep.subr.mxu0 0.0
    %2823 = vmatpush1.msra.mxu0 0.0
    %2824 = vmatprep.subr.mxu0 0.0
    %2825 = vmatpush1.msra.mxu0 0.0
    %2826 = vmatprep.subr.mxu0 0.0
    %2827 = vmatpush1.msra.mxu0 0.0
    %2828 = vmatprep.subr.mxu0 0.0
    %2829 = vmatpush1.msra.mxu0 0.0
    %2830 = vmatprep.subr.mxu0 0.0
    %2831 = vmatpush1.msra.mxu0 0.0
    %2832 = vmatprep.subr.mxu0 0.0
    %2833 = vmatpush1.msra.mxu0 0.0
    %2834 = vmatprep.subr.mxu0 0.0
    %2835 = vmatpush1.msra.mxu0 0.0
    %2836 = vmatprep.subr.mxu0 0.0
    %2837 = vmatpush1.msra.mxu0 0.0
    %2838 = vmatprep.subr.mxu0 0.0
    %2839 = vmatpush1.msra.mxu0 0.0
    %2840 = vmatprep.subr.mxu0 0.0
    %2841 = vmatpush1.msra.mxu0 0.0
    %2842 = vmatprep.subr.mxu0 0.0
    %2843 = vmatpush1.msra.mxu0 0.0
    %2844 = vmatprep.subr.mxu0 0.0
    %2845 = vmatpush1.msra.mxu0 0.0
    %2846 = vmatprep.subr.mxu0 0.0
    %2847 = vmatpush1.msra.mxu0 0.0
    %2848 = vmatprep.subr.mxu0 0.0
    %2849 = vmatpush1.msra.mxu0 0.0
    %2850 = vmatprep.mubr.f32.mxu0 0.0
    %2851 = vmatmul.mubr.f32.gmra.mrb[0].mxu0 %v2335
    %v2852 = vpop.f32.mrb[0].mxu0
    %v2853 = vadd.f32 0.0, %v2852
    %v2854 = vpop.f32.mrb[0].mxu0
    %2855 = vdwg.mxu0
    %v2856 = vadd.f32 %v2769, %v2853
    %v2857 = vld [vmem:[%s841] sm:$0xff]
    %v2858 = vld [vmem:[%s841 + $0x8] sm:$0xff]
    %v2859 = vld [vmem:[%s841 + $0x10] sm:$0xff]
    %v2860 = vld [vmem:[%s841 + $0x18] sm:$0xff]
    %v2861 = vld [vmem:[%s841 + $0x20] sm:$0xff]
    %v2862 = vld [vmem:[%s841 + $0x28] sm:$0xff]
    %v2863 = vld [vmem:[%s841 + $0x30] sm:$0xff]
    %v2864 = vld [vmem:[%s841 + $0x38] sm:$0xff]
    %v2865 = vld [vmem:[%s841 + $0x40] sm:$0xff]
    %v2866 = vld [vmem:[%s841 + $0x48] sm:$0xff]
    %v2867 = vld [vmem:[%s841 + $0x50] sm:$0xff]
    %v2868 = vld [vmem:[%s841 + $0x58] sm:$0xff]
    %v2869 = vld [vmem:[%s841 + $0x60] sm:$0xff]
    %v2870 = vld [vmem:[%s841 + $0x68] sm:$0xff]
    %v2871 = vld [vmem:[%s841 + $0x70] sm:$0xff]
    %v2872 = vld [vmem:[%s841 + $0x78] sm:$0xff]
    %2873 = vmatprep.subr.mxu0 0.0
    %2874 = vmatpush1.msra.mxu0 %v2857
    %2875 = vmatprep.subr.mxu0 0.0
    %2876 = vmatpush1.msra.mxu0 %v2858
    %2877 = vmatprep.subr.mxu0 0.0
    %2878 = vmatpush1.msra.mxu0 %v2859
    %2879 = vmatprep.subr.mxu0 0.0
    %2880 = vmatpush1.msra.mxu0 %v2860
    %2881 = vmatprep.subr.mxu0 0.0
    %2882 = vmatpush1.msra.mxu0 %v2861
    %2883 = vmatprep.subr.mxu0 0.0
    %2884 = vmatpush1.msra.mxu0 %v2862
    %2885 = vmatprep.subr.mxu0 0.0
    %2886 = vmatpush1.msra.mxu0 %v2863
    %2887 = vmatprep.subr.mxu0 0.0
    %2888 = vmatpush1.msra.mxu0 %v2864
    %2889 = vmatprep.subr.mxu0 0.0
    %2890 = vmatpush1.msra.mxu0 %v2865
    %2891 = vmatprep.subr.mxu0 0.0
    %2892 = vmatpush1.msra.mxu0 %v2866
    %2893 = vmatprep.subr.mxu0 0.0
    %2894 = vmatpush1.msra.mxu0 %v2867
    %2895 = vmatprep.subr.mxu0 0.0
    %2896 = vmatpush1.msra.mxu0 %v2868
    %2897 = vmatprep.subr.mxu0 0.0
    %2898 = vmatpush1.msra.mxu0 %v2869
    %2899 = vmatprep.subr.mxu0 0.0
    %2900 = vmatpush1.msra.mxu0 %v2870
    %2901 = vmatprep.subr.mxu0 0.0
    %2902 = vmatpush1.msra.mxu0 %v2871
    %2903 = vmatprep.subr.mxu0 0.0
    %2904 = vmatpush1.msra.mxu0 %v2872
    %2905 = vmatprep.subr.mxu0 0.0
    %2906 = vmatpush1.msra.mxu0 0.0
    %2907 = vmatprep.subr.mxu0 0.0
    %2908 = vmatpush1.msra.mxu0 0.0
    %2909 = vmatprep.subr.mxu0 0.0
    %2910 = vmatpush1.msra.mxu0 0.0
    %2911 = vmatprep.subr.mxu0 0.0
    %2912 = vmatpush1.msra.mxu0 0.0
    %2913 = vmatprep.subr.mxu0 0.0
    %2914 = vmatpush1.msra.mxu0 0.0
    %2915 = vmatprep.subr.mxu0 0.0
    %2916 = vmatpush1.msra.mxu0 0.0
    %2917 = vmatprep.subr.mxu0 0.0
    %2918 = vmatpush1.msra.mxu0 0.0
    %2919 = vmatprep.subr.mxu0 0.0
    %2920 = vmatpush1.msra.mxu0 0.0
    %2921 = vmatprep.subr.mxu0 0.0
    %2922 = vmatpush1.msra.mxu0 0.0
    %2923 = vmatprep.subr.mxu0 0.0
    %2924 = vmatpush1.msra.mxu0 0.0
    %2925 = vmatprep.subr.mxu0 0.0
    %2926 = vmatpush1.msra.mxu0 0.0
    %2927 = vmatprep.subr.mxu0 0.0
    %2928 = vmatpush1.msra.mxu0 0.0
    %2929 = vmatprep.subr.mxu0 0.0
    %2930 = vmatpush1.msra.mxu0 0.0
    %2931 = vmatprep.subr.mxu0 0.0
    %2932 = vmatpush1.msra.mxu0 0.0
    %2933 = vmatprep.subr.mxu0 0.0
    %2934 = vmatpush1.msra.mxu0 0.0
    %2935 = vmatprep.subr.mxu0 0.0
    %2936 = vmatpush1.msra.mxu0 0.0
    %2937 = vmatprep.mubr.f32.mxu0 0.0
    %2938 = vmatmul.mubr.f32.gmra.mrb[0].mxu0 %v2423
    %v2939 = vpop.f32.mrb[0].mxu0
    %v2940 = vadd.f32 0.0, %v2939
    %v2941 = vpop.f32.mrb[0].mxu0
    %2942 = vdwg.mxu0
    %v2943 = vadd.f32 %v2856, %v2940
    %v2944 = vmax.f32 %v2510, %v2943
    %2945 = vmatprep.subr.mxu0 0.0
    %2946 = vmatpush1.msra.mxu0 %v2091
    %2947 = vmatprep.subr.mxu0 0.0
    %2948 = vmatpush1.msra.mxu0 %v2092
    %2949 = vmatprep.subr.mxu0 0.0
    %2950 = vmatpush1.msra.mxu0 %v2093
    %2951 = vmatprep.subr.mxu0 0.0
    %2952 = vmatpush1.msra.mxu0 %v2094
    %2953 = vmatprep.subr.mxu0 0.0
    %2954 = vmatpush1.msra.mxu0 %v2095
    %2955 = vmatprep.subr.mxu0 0.0
    %2956 = vmatpush1.msra.mxu0 %v2096
    %2957 = vmatprep.subr.mxu0 0.0
    %2958 = vmatpush1.msra.mxu0 %v2097
    %2959 = vmatprep.subr.mxu0 0.0
    %2960 = vmatpush1.msra.mxu0 %v2098
    %2961 = vmatprep.subr.mxu0 0.0
    %2962 = vmatpush1.msra.mxu0 %v2099
    %2963 = vmatprep.subr.mxu0 0.0
    %2964 = vmatpush1.msra.mxu0 %v2100
    %2965 = vmatprep.subr.mxu0 0.0
    %2966 = vmatpush1.msra.mxu0 %v2101
    %2967 = vmatprep.subr.mxu0 0.0
    %2968 = vmatpush1.msra.mxu0 %v2102
    %2969 = vmatprep.subr.mxu0 0.0
    %2970 = vmatpush1.msra.mxu0 %v2103
    %2971 = vmatprep.subr.mxu0 0.0
    %2972 = vmatpush1.msra.mxu0 %v2104
    %2973 = vmatprep.subr.mxu0 0.0
    %2974 = vmatpush1.msra.mxu0 %v2105
    %2975 = vmatprep.subr.mxu0 0.0
    %2976 = vmatpush1.msra.mxu0 %v2106
    %2977 = vmatprep.subr.mxu0 0.0
    %2978 = vmatpush1.msra.mxu0 0.0
    %2979 = vmatprep.subr.mxu0 0.0
    %2980 = vmatpush1.msra.mxu0 0.0
    %2981 = vmatprep.subr.mxu0 0.0
    %2982 = vmatpush1.msra.mxu0 0.0
    %2983 = vmatprep.subr.mxu0 0.0
    %2984 = vmatpush1.msra.mxu0 0.0
    %2985 = vmatprep.subr.mxu0 0.0
    %2986 = vmatpush1.msra.mxu0 0.0
    %2987 = vmatprep.subr.mxu0 0.0
    %2988 = vmatpush1.msra.mxu0 0.0
    %2989 = vmatprep.subr.mxu0 0.0
    %2990 = vmatpush1.msra.mxu0 0.0
    %2991 = vmatprep.subr.mxu0 0.0
    %2992 = vmatpush1.msra.mxu0 0.0
    %2993 = vmatprep.subr.mxu0 0.0
    %2994 = vmatpush1.msra.mxu0 0.0
    %2995 = vmatprep.subr.mxu0 0.0
    %2996 = vmatpush1.msra.mxu0 0.0
    %2997 = vmatprep.subr.mxu0 0.0
    %2998 = vmatpush1.msra.mxu0 0.0
    %2999 = vmatprep.subr.mxu0 0.0
    %3000 = vmatpush1.msra.mxu0 0.0
    %3001 = vmatprep.subr.mxu0 0.0
    %3002 = vmatpush1.msra.mxu0 0.0
    %3003 = vmatprep.subr.mxu0 0.0
    %3004 = vmatpush1.msra.mxu0 0.0
    %3005 = vmatprep.subr.mxu0 0.0
    %3006 = vmatpush1.msra.mxu0 0.0
    %3007 = vmatprep.subr.mxu0 0.0
    %3008 = vmatpush1.msra.mxu0 0.0
    %3009 = vmatprep.mubr.f32.mxu0 0.0
    %3010 = vmatmul.mubr.f32.gmra.mrb[0].mxu0 %v2247
    %v3011 = vpop.f32.mrb[0].mxu0
    %v3012 = vadd.f32 0.0, %v3011
    %v3013 = vpop.f32.mrb[0].mxu0
    %3014 = vdwg.mxu0
    %3015 = vmatprep.subr.mxu0 0.0
    %3016 = vmatpush1.msra.mxu0 %v2073
    %3017 = vmatprep.subr.mxu0 0.0
    %3018 = vmatpush1.msra.mxu0 %v2074
    %3019 = vmatprep.subr.mxu0 0.0
    %3020 = vmatpush1.msra.mxu0 %v2075
    %3021 = vmatprep.subr.mxu0 0.0
    %3022 = vmatpush1.msra.mxu0 %v2076
    %3023 = vmatprep.subr.mxu0 0.0
    %3024 = vmatpush1.msra.mxu0 %v2077
    %3025 = vmatprep.subr.mxu0 0.0
    %3026 = vmatpush1.msra.mxu0 %v2078
    %3027 = vmatprep.subr.mxu0 0.0
    %3028 = vmatpush1.msra.mxu0 %v2079
    %3029 = vmatprep.subr.mxu0 0.0
    %3030 = vmatpush1.msra.mxu0 %v2080
    %3031 = vmatprep.subr.mxu0 0.0
    %3032 = vmatpush1.msra.mxu0 %v2081
    %3033 = vmatprep.subr.mxu0 0.0
    %3034 = vmatpush1.msra.mxu0 %v2082
    %3035 = vmatprep.subr.mxu0 0.0
    %3036 = vmatpush1.msra.mxu0 %v2083
    %3037 = vmatprep.subr.mxu0 0.0
    %3038 = vmatpush1.msra.mxu0 %v2084
    %3039 = vmatprep.subr.mxu0 0.0
    %3040 = vmatpush1.msra.mxu0 %v2085
    %3041 = vmatprep.subr.mxu0 0.0
    %3042 = vmatpush1.msra.mxu0 %v2086
    %3043 = vmatprep.subr.mxu0 0.0
    %3044 = vmatpush1.msra.mxu0 %v2087
    %3045 = vmatprep.subr.mxu0 0.0
    %3046 = vmatpush1.msra.mxu0 %v2088
    %3047 = vmatprep.subr.mxu0 0.0
    %3048 = vmatpush1.msra.mxu0 0.0
    %3049 = vmatprep.subr.mxu0 0.0
    %3050 = vmatpush1.msra.mxu0 0.0
    %3051 = vmatprep.subr.mxu0 0.0
    %3052 = vmatpush1.msra.mxu0 0.0
    %3053 = vmatprep.subr.mxu0 0.0
    %3054 = vmatpush1.msra.mxu0 0.0
    %3055 = vmatprep.subr.mxu0 0.0
    %3056 = vmatpush1.msra.mxu0 0.0
    %3057 = vmatprep.subr.mxu0 0.0
    %3058 = vmatpush1.msra.mxu0 0.0
    %3059 = vmatprep.subr.mxu0 0.0
    %3060 = vmatpush1.msra.mxu0 0.0
    %3061 = vmatprep.subr.mxu0 0.0
    %3062 = vmatpush1.msra.mxu0 0.0
    %3063 = vmatprep.subr.mxu0 0.0
    %3064 = vmatpush1.msra.mxu0 0.0
    %3065 = vmatprep.subr.mxu0 0.0
    %3066 = vmatpush1.msra.mxu0 0.0
    %3067 = vmatprep.subr.mxu0 0.0
    %3068 = vmatpush1.msra.mxu0 0.0
    %3069 = vmatprep.subr.mxu0 0.0
    %3070 = vmatpush1.msra.mxu0 0.0
    %3071 = vmatprep.subr.mxu0 0.0
    %3072 = vmatpush1.msra.mxu0 0.0
    %3073 = vmatprep.subr.mxu0 0.0
    %3074 = vmatpush1.msra.mxu0 0.0
    %3075 = vmatprep.subr.mxu0 0.0
    %3076 = vmatpush1.msra.mxu0 0.0
    %3077 = vmatprep.subr.mxu0 0.0
    %3078 = vmatpush1.msra.mxu0 0.0
    %3079 = vmatprep.mubr.f32.mxu0 0.0
    %3080 = vmatmul.mubr.f32.gmra.mrb[0].mxu0 %v2090
    %v3081 = vpop.f32.mrb[0].mxu0
    %v3082 = vadd.f32 %v3012, %v3081
    %v3083 = vpop.f32.mrb[0].mxu0
    %3084 = vdwg.mxu0
    %3085 = vmatprep.subr.mxu0 0.0
    %3086 = vmatpush1.msra.mxu0 %v2248
    %3087 = vmatprep.subr.mxu0 0.0
    %3088 = vmatpush1.msra.mxu0 %v2249
    %3089 = vmatprep.subr.mxu0 0.0
    %3090 = vmatpush1.msra.mxu0 %v2250
    %3091 = vmatprep.subr.mxu0 0.0
    %3092 = vmatpush1.msra.mxu0 %v2251
    %3093 = vmatprep.subr.mxu0 0.0
    %3094 = vmatpush1.msra.mxu0 %v2252
    %3095 = vmatprep.subr.mxu0 0.0
    %3096 = vmatpush1.msra.mxu0 %v2253
    %3097 = vmatprep.subr.mxu0 0.0
    %3098 = vmatpush1.msra.mxu0 %v2254
    %3099 = vmatprep.subr.mxu0 0.0
    %3100 = vmatpush1.msra.mxu0 %v2255
    %3101 = vmatprep.subr.mxu0 0.0
    %3102 = vmatpush1.msra.mxu0 %v2256
    %3103 = vmatprep.subr.mxu0 0.0
    %3104 = vmatpush1.msra.mxu0 %v2257
    %3105 = vmatprep.subr.mxu0 0.0
    %3106 = vmatpush1.msra.mxu0 %v2258
    %3107 = vmatprep.subr.mxu0 0.0
    %3108 = vmatpush1.msra.mxu0 %v2259
    %3109 = vmatprep.subr.mxu0 0.0
    %3110 = vmatpush1.msra.mxu0 %v2260
    %3111 = vmatprep.subr.mxu0 0.0
    %3112 = vmatpush1.msra.mxu0 %v2261
    %3113 = vmatprep.subr.mxu0 0.0
    %3114 = vmatpush1.msra.mxu0 %v2262
    %3115 = vmatprep.subr.mxu0 0.0
    %3116 = vmatpush1.msra.mxu0 %v2263
    %3117 = vmatprep.subr.mxu0 0.0
    %3118 = vmatpush1.msra.mxu0 0.0
    %3119 = vmatprep.subr.mxu0 0.0
    %3120 = vmatpush1.msra.mxu0 0.0
    %3121 = vmatprep.subr.mxu0 0.0
    %3122 = vmatpush1.msra.mxu0 0.0
    %3123 = vmatprep.subr.mxu0 0.0
    %3124 = vmatpush1.msra.mxu0 0.0
    %3125 = vmatprep.subr.mxu0 0.0
    %3126 = vmatpush1.msra.mxu0 0.0
    %3127 = vmatprep.subr.mxu0 0.0
    %3128 = vmatpush1.msra.mxu0 0.0
    %3129 = vmatprep.subr.mxu0 0.0
    %3130 = vmatpush1.msra.mxu0 0.0
    %3131 = vmatprep.subr.mxu0 0.0
    %3132 = vmatpush1.msra.mxu0 0.0
    %3133 = vmatprep.subr.mxu0 0.0
    %3134 = vmatpush1.msra.mxu0 0.0
    %3135 = vmatprep.subr.mxu0 0.0
    %3136 = vmatpush1.msra.mxu0 0.0
    %3137 = vmatprep.subr.mxu0 0.0
    %3138 = vmatpush1.msra.mxu0 0.0
    %3139 = vmatprep.subr.mxu0 0.0
    %3140 = vmatpush1.msra.mxu0 0.0
    %3141 = vmatprep.subr.mxu0 0.0
    %3142 = vmatpush1.msra.mxu0 0.0
    %3143 = vmatprep.subr.mxu0 0.0
    %3144 = vmatpush1.msra.mxu0 0.0
    %3145 = vmatprep.subr.mxu0 0.0
    %3146 = vmatpush1.msra.mxu0 0.0
    %3147 = vmatprep.subr.mxu0 0.0
    %3148 = vmatpush1.msra.mxu0 0.0
    %3149 = vmatprep.mubr.f32.mxu0 0.0
    %3150 = vmatmul.mubr.f32.gmra.mrb[0].mxu0 %v2335
    %v3151 = vpop.f32.mrb[0].mxu0
    %v3152 = vadd.f32 0.0, %v3151
    %v3153 = vpop.f32.mrb[0].mxu0
    %3154 = vdwg.mxu0
    %v3155 = vadd.f32 %v3082, %v3152
    %3156 = vmatprep.subr.mxu0 0.0
    %3157 = vmatpush1.msra.mxu0 %v2336
    %3158 = vmatprep.subr.mxu0 0.0
    %3159 = vmatpush1.msra.mxu0 %v2337
    %3160 = vmatprep.subr.mxu0 0.0
    %3161 = vmatpush1.msra.mxu0 %v2338
    %3162 = vmatprep.subr.mxu0 0.0
    %3163 = vmatpush1.msra.mxu0 %v2339
    %3164 = vmatprep.subr.mxu0 0.0
    %3165 = vmatpush1.msra.mxu0 %v2340
    %3166 = vmatprep.subr.mxu0 0.0
    %3167 = vmatpush1.msra.mxu0 %v2341
    %3168 = vmatprep.subr.mxu0 0.0
    %3169 = vmatpush1.msra.mxu0 %v2342
    %3170 = vmatprep.subr.mxu0 0.0
    %3171 = vmatpush1.msra.mxu0 %v2343
    %3172 = vmatprep.subr.mxu0 0.0
    %3173 = vmatpush1.msra.mxu0 %v2344
    %3174 = vmatprep.subr.mxu0 0.0
    %3175 = vmatpush1.msra.mxu0 %v2345
    %3176 = vmatprep.subr.mxu0 0.0
    %3177 = vmatpush1.msra.mxu0 %v2346
    %3178 = vmatprep.subr.mxu0 0.0
    %3179 = vmatpush1.msra.mxu0 %v2347
    %3180 = vmatprep.subr.mxu0 0.0
    %3181 = vmatpush1.msra.mxu0 %v2348
    %3182 = vmatprep.subr.mxu0 0.0
    %3183 = vmatpush1.msra.mxu0 %v2349
    %3184 = vmatprep.subr.mxu0 0.0
    %3185 = vmatpush1.msra.mxu0 %v2350
    %3186 = vmatprep.subr.mxu0 0.0
    %3187 = vmatpush1.msra.mxu0 %v2351
    %3188 = vmatprep.subr.mxu0 0.0
    %3189 = vmatpush1.msra.mxu0 0.0
    %3190 = vmatprep.subr.mxu0 0.0
    %3191 = vmatpush1.msra.mxu0 0.0
    %3192 = vmatprep.subr.mxu0 0.0
    %3193 = vmatpush1.msra.mxu0 0.0
    %3194 = vmatprep.subr.mxu0 0.0
    %3195 = vmatpush1.msra.mxu0 0.0
    %3196 = vmatprep.subr.mxu0 0.0
    %3197 = vmatpush1.msra.mxu0 0.0
    %3198 = vmatprep.subr.mxu0 0.0
    %3199 = vmatpush1.msra.mxu0 0.0
    %3200 = vmatprep.subr.mxu0 0.0
    %3201 = vmatpush1.msra.mxu0 0.0
    %3202 = vmatprep.subr.mxu0 0.0
    %3203 = vmatpush1.msra.mxu0 0.0
    %3204 = vmatprep.subr.mxu0 0.0
    %3205 = vmatpush1.msra.mxu0 0.0
    %3206 = vmatprep.subr.mxu0 0.0
    %3207 = vmatpush1.msra.mxu0 0.0
    %3208 = vmatprep.subr.mxu0 0.0
    %3209 = vmatpush1.msra.mxu0 0.0
    %3210 = vmatprep.subr.mxu0 0.0
    %3211 = vmatpush1.msra.mxu0 0.0
    %3212 = vmatprep.subr.mxu0 0.0
    %3213 = vmatpush1.msra.mxu0 0.0
    %3214 = vmatprep.subr.mxu0 0.0
    %3215 = vmatpush1.msra.mxu0 0.0
    %3216 = vmatprep.subr.mxu0 0.0
    %3217 = vmatpush1.msra.mxu0 0.0
    %3218 = vmatprep.subr.mxu0 0.0
    %3219 = vmatpush1.msra.mxu0 0.0
    %3220 = vmatprep.mubr.f32.mxu0 0.0
    %3221 = vmatmul.mubr.f32.gmra.mrb[0].mxu0 %v2423
    %v3222 = vpop.f32.mrb[0].mxu0
    %v3223 = vadd.f32 0.0, %v3222
    %v3224 = vpop.f32.mrb[0].mxu0
    %3225 = vdwg.mxu0
    %v3226 = vadd.f32 %v3155, %v3223
    %v3227 = vld [vmem:[%s2089 + $0x2] sm:$0xf]
    %3228 = vmatprep.subr.mxu0 0.0
    %3229 = vmatpush1.msra.mxu0 %v2424
    %3230 = vmatprep.subr.mxu0 0.0
    %3231 = vmatpush1.msra.mxu0 %v2425
    %3232 = vmatprep.subr.mxu0 0.0
    %3233 = vmatpush1.msra.mxu0 %v2426
    %3234 = vmatprep.subr.mxu0 0.0
    %3235 = vmatpush1.msra.mxu0 %v2427
    %3236 = vmatprep.subr.mxu0 0.0
    %3237 = vmatpush1.msra.mxu0 %v2428
    %3238 = vmatprep.subr.mxu0 0.0
    %3239 = vmatpush1.msra.mxu0 %v2429
    %3240 = vmatprep.subr.mxu0 0.0
    %3241 = vmatpush1.msra.mxu0 %v2430
    %3242 = vmatprep.subr.mxu0 0.0
    %3243 = vmatpush1.msra.mxu0 %v2431
    %3244 = vmatprep.subr.mxu0 0.0
    %3245 = vmatpush1.msra.mxu0 %v2432
    %3246 = vmatprep.subr.mxu0 0.0
    %3247 = vmatpush1.msra.mxu0 %v2433
    %3248 = vmatprep.subr.mxu0 0.0
    %3249 = vmatpush1.msra.mxu0 %v2434
    %3250 = vmatprep.subr.mxu0 0.0
    %3251 = vmatpush1.msra.mxu0 %v2435
    %3252 = vmatprep.subr.mxu0 0.0
    %3253 = vmatpush1.msra.mxu0 %v2436
    %3254 = vmatprep.subr.mxu0 0.0
    %3255 = vmatpush1.msra.mxu0 %v2437
    %3256 = vmatprep.subr.mxu0 0.0
    %3257 = vmatpush1.msra.mxu0 %v2438
    %3258 = vmatprep.subr.mxu0 0.0
    %3259 = vmatpush1.msra.mxu0 %v2439
    %3260 = vmatprep.subr.mxu0 0.0
    %3261 = vmatpush1.msra.mxu0 0.0
    %3262 = vmatprep.subr.mxu0 0.0
    %3263 = vmatpush1.msra.mxu0 0.0
    %3264 = vmatprep.subr.mxu0 0.0
    %3265 = vmatpush1.msra.mxu0 0.0
    %3266 = vmatprep.subr.mxu0 0.0
    %3267 = vmatpush1.msra.mxu0 0.0
    %3268 = vmatprep.subr.mxu0 0.0
    %3269 = vmatpush1.msra.mxu0 0.0
    %3270 = vmatprep.subr.mxu0 0.0
    %3271 = vmatpush1.msra.mxu0 0.0
    %3272 = vmatprep.subr.mxu0 0.0
    %3273 = vmatpush1.msra.mxu0 0.0
    %3274 = vmatprep.subr.mxu0 0.0
    %3275 = vmatpush1.msra.mxu0 0.0
    %3276 = vmatprep.subr.mxu0 0.0
    %3277 = vmatpush1.msra.mxu0 0.0
    %3278 = vmatprep.subr.mxu0 0.0
    %3279 = vmatpush1.msra.mxu0 0.0
    %3280 = vmatprep.subr.mxu0 0.0
    %3281 = vmatpush1.msra.mxu0 0.0
    %3282 = vmatprep.subr.mxu0 0.0
    %3283 = vmatpush1.msra.mxu0 0.0
    %3284 = vmatprep.subr.mxu0 0.0
    %3285 = vmatpush1.msra.mxu0 0.0
    %3286 = vmatprep.subr.mxu0 0.0
    %3287 = vmatpush1.msra.mxu0 0.0
    %3288 = vmatprep.subr.mxu0 0.0
    %3289 = vmatpush1.msra.mxu0 0.0
    %3290 = vmatprep.subr.mxu0 0.0
    %3291 = vmatpush1.msra.mxu0 0.0
    %3292 = vmatprep.mubr.f32.mxu0 0.0
    %3293 = vmatmul.mubr.f32.gmra.mrb[0].mxu0 %v3227
    %v3294 = vpop.f32.mrb[0].mxu0
    %v3295 = vadd.f32 0.0, %v3294
    %v3296 = vpop.f32.mrb[0].mxu0
    %3297 = vdwg.mxu0
    %v3298 = vadd.f32 %v3226, %v3295
    %v3299 = vmax.f32 %v2944, %v3298
    %3300 = vmatprep.subr.mxu0 0.0
    %3301 = vmatpush1.msra.mxu0 %v2527
    %3302 = vmatprep.subr.mxu0 0.0
    %3303 = vmatpush1.msra.mxu0 %v2528
    %3304 = vmatprep.subr.mxu0 0.0
    %3305 = vmatpush1.msra.mxu0 %v2529
    %3306 = vmatprep.subr.mxu0 0.0
    %3307 = vmatpush1.msra.mxu0 %v2530
    %3308 = vmatprep.subr.mxu0 0.0
    %3309 = vmatpush1.msra.mxu0 %v2531
    %3310 = vmatprep.subr.mxu0 0.0
    %3311 = vmatpush1.msra.mxu0 %v2532
    %3312 = vmatprep.subr.mxu0 0.0
    %3313 = vmatpush1.msra.mxu0 %v2533
    %3314 = vmatprep.subr.mxu0 0.0
    %3315 = vmatpush1.msra.mxu0 %v2534
    %3316 = vmatprep.subr.mxu0 0.0
    %3317 = vmatpush1.msra.mxu0 %v2535
    %3318 = vmatprep.subr.mxu0 0.0
    %3319 = vmatpush1.msra.mxu0 %v2536
    %3320 = vmatprep.subr.mxu0 0.0
    %3321 = vmatpush1.msra.mxu0 %v2537
    %3322 = vmatprep.subr.mxu0 0.0
    %3323 = vmatpush1.msra.mxu0 %v2538
    %3324 = vmatprep.subr.mxu0 0.0
    %3325 = vmatpush1.msra.mxu0 %v2539
    %3326 = vmatprep.subr.mxu0 0.0
    %3327 = vmatpush1.msra.mxu0 %v2540
    %3328 = vmatprep.subr.mxu0 0.0
    %3329 = vmatpush1.msra.mxu0 %v2541
    %3330 = vmatprep.subr.mxu0 0.0
    %3331 = vmatpush1.msra.mxu0 %v2542
    %3332 = vmatprep.subr.mxu0 0.0
    %3333 = vmatpush1.msra.mxu0 0.0
    %3334 = vmatprep.subr.mxu0 0.0
    %3335 = vmatpush1.msra.mxu0 0.0
    %3336 = vmatprep.subr.mxu0 0.0
    %3337 = vmatpush1.msra.mxu0 0.0
    %3338 = vmatprep.subr.mxu0 0.0
    %3339 = vmatpush1.msra.mxu0 0.0
    %3340 = vmatprep.subr.mxu0 0.0
    %3341 = vmatpush1.msra.mxu0 0.0
    %3342 = vmatprep.subr.mxu0 0.0
    %3343 = vmatpush1.msra.mxu0 0.0
    %3344 = vmatprep.subr.mxu0 0.0
    %3345 = vmatpush1.msra.mxu0 0.0
    %3346 = vmatprep.subr.mxu0 0.0
    %3347 = vmatpush1.msra.mxu0 0.0
    %3348 = vmatprep.subr.mxu0 0.0
    %3349 = vmatpush1.msra.mxu0 0.0
    %3350 = vmatprep.subr.mxu0 0.0
    %3351 = vmatpush1.msra.mxu0 0.0
    %3352 = vmatprep.subr.mxu0 0.0
    %3353 = vmatpush1.msra.mxu0 0.0
    %3354 = vmatprep.subr.mxu0 0.0
    %3355 = vmatpush1.msra.mxu0 0.0
    %3356 = vmatprep.subr.mxu0 0.0
    %3357 = vmatpush1.msra.mxu0 0.0
    %3358 = vmatprep.subr.mxu0 0.0
    %3359 = vmatpush1.msra.mxu0 0.0
    %3360 = vmatprep.subr.mxu0 0.0
    %3361 = vmatpush1.msra.mxu0 0.0
    %3362 = vmatprep.subr.mxu0 0.0
    %3363 = vmatpush1.msra.mxu0 0.0
    %3364 = vmatprep.mubr.f32.mxu0 0.0
    %3365 = vmatmul.mubr.f32.gmra.mrb[0].mxu0 %v2247
    %v3366 = vpop.f32.mrb[0].mxu0
    %v3367 = vadd.f32 0.0, %v3366
    %v3368 = vpop.f32.mrb[0].mxu0
    %3369 = vdwg.mxu0
    %3370 = vmatprep.subr.mxu0 0.0
    %3371 = vmatpush1.msra.mxu0 %v2511
    %3372 = vmatprep.subr.mxu0 0.0
    %3373 = vmatpush1.msra.mxu0 %v2512
    %3374 = vmatprep.subr.mxu0 0.0
    %3375 = vmatpush1.msra.mxu0 %v2513
    %3376 = vmatprep.subr.mxu0 0.0
    %3377 = vmatpush1.msra.mxu0 %v2514
    %3378 = vmatprep.subr.mxu0 0.0
    %3379 = vmatpush1.msra.mxu0 %v2515
    %3380 = vmatprep.subr.mxu0 0.0
    %3381 = vmatpush1.msra.mxu0 %v2516
    %3382 = vmatprep.subr.mxu0 0.0
    %3383 = vmatpush1.msra.mxu0 %v2517
    %3384 = vmatprep.subr.mxu0 0.0
    %3385 = vmatpush1.msra.mxu0 %v2518
    %3386 = vmatprep.subr.mxu0 0.0
    %3387 = vmatpush1.msra.mxu0 %v2519
    %3388 = vmatprep.subr.mxu0 0.0
    %3389 = vmatpush1.msra.mxu0 %v2520
    %3390 = vmatprep.subr.mxu0 0.0
    %3391 = vmatpush1.msra.mxu0 %v2521
    %3392 = vmatprep.subr.mxu0 0.0
    %3393 = vmatpush1.msra.mxu0 %v2522
    %3394 = vmatprep.subr.mxu0 0.0
    %3395 = vmatpush1.msra.mxu0 %v2523
    %3396 = vmatprep.subr.mxu0 0.0
    %3397 = vmatpush1.msra.mxu0 %v2524
    %3398 = vmatprep.subr.mxu0 0.0
    %3399 = vmatpush1.msra.mxu0 %v2525
    %3400 = vmatprep.subr.mxu0 0.0
    %3401 = vmatpush1.msra.mxu0 %v2526
    %3402 = vmatprep.subr.mxu0 0.0
    %3403 = vmatpush1.msra.mxu0 0.0
    %3404 = vmatprep.subr.mxu0 0.0
    %3405 = vmatpush1.msra.mxu0 0.0
    %3406 = vmatprep.subr.mxu0 0.0
    %3407 = vmatpush1.msra.mxu0 0.0
    %3408 = vmatprep.subr.mxu0 0.0
    %3409 = vmatpush1.msra.mxu0 0.0
    %3410 = vmatprep.subr.mxu0 0.0
    %3411 = vmatpush1.msra.mxu0 0.0
    %3412 = vmatprep.subr.mxu0 0.0
    %3413 = vmatpush1.msra.mxu0 0.0
    %3414 = vmatprep.subr.mxu0 0.0
    %3415 = vmatpush1.msra.mxu0 0.0
    %3416 = vmatprep.subr.mxu0 0.0
    %3417 = vmatpush1.msra.mxu0 0.0
    %3418 = vmatprep.subr.mxu0 0.0
    %3419 = vmatpush1.msra.mxu0 0.0
    %3420 = vmatprep.subr.mxu0 0.0
    %3421 = vmatpush1.msra.mxu0 0.0
    %3422 = vmatprep.subr.mxu0 0.0
    %3423 = vmatpush1.msra.mxu0 0.0
    %3424 = vmatprep.subr.mxu0 0.0
    %3425 = vmatpush1.msra.mxu0 0.0
    %3426 = vmatprep.subr.mxu0 0.0
    %3427 = vmatpush1.msra.mxu0 0.0
    %3428 = vmatprep.subr.mxu0 0.0
    %3429 = vmatpush1.msra.mxu0 0.0
    %3430 = vmatprep.subr.mxu0 0.0
    %3431 = vmatpush1.msra.mxu0 0.0
    %3432 = vmatprep.subr.mxu0 0.0
    %3433 = vmatpush1.msra.mxu0 0.0
    %3434 = vmatprep.mubr.f32.mxu0 0.0
    %3435 = vmatmul.mubr.f32.gmra.mrb[0].mxu0 %v2090
    %v3436 = vpop.f32.mrb[0].mxu0
    %v3437 = vadd.f32 %v3367, %v3436
    %v3438 = vpop.f32.mrb[0].mxu0
    %3439 = vdwg.mxu0
    %3440 = vmatprep.subr.mxu0 0.0
    %3441 = vmatpush1.msra.mxu0 %v2683
    %3442 = vmatprep.subr.mxu0 0.0
    %3443 = vmatpush1.msra.mxu0 %v2684
    %3444 = vmatprep.subr.mxu0 0.0
    %3445 = vmatpush1.msra.mxu0 %v2685
    %3446 = vmatprep.subr.mxu0 0.0
    %3447 = vmatpush1.msra.mxu0 %v2686
    %3448 = vmatprep.subr.mxu0 0.0
    %3449 = vmatpush1.msra.mxu0 %v2687
    %3450 = vmatprep.subr.mxu0 0.0
    %3451 = vmatpush1.msra.mxu0 %v2688
    %3452 = vmatprep.subr.mxu0 0.0
    %3453 = vmatpush1.msra.mxu0 %v2689
    %3454 = vmatprep.subr.mxu0 0.0
    %3455 = vmatpush1.msra.mxu0 %v2690
    %3456 = vmatprep.subr.mxu0 0.0
    %3457 = vmatpush1.msra.mxu0 %v2691
    %3458 = vmatprep.subr.mxu0 0.0
    %3459 = vmatpush1.msra.mxu0 %v2692
    %3460 = vmatprep.subr.mxu0 0.0
    %3461 = vmatpush1.msra.mxu0 %v2693
    %3462 = vmatprep.subr.mxu0 0.0
    %3463 = vmatpush1.msra.mxu0 %v2694
    %3464 = vmatprep.subr.mxu0 0.0
    %3465 = vmatpush1.msra.mxu0 %v2695
    %3466 = vmatprep.subr.mxu0 0.0
    %3467 = vmatpush1.msra.mxu0 %v2696
    %3468 = vmatprep.subr.mxu0 0.0
    %3469 = vmatpush1.msra.mxu0 %v2697
    %3470 = vmatprep.subr.mxu0 0.0
    %3471 = vmatpush1.msra.mxu0 %v2698
    %3472 = vmatprep.subr.mxu0 0.0
    %3473 = vmatpush1.msra.mxu0 0.0
    %3474 = vmatprep.subr.mxu0 0.0
    %3475 = vmatpush1.msra.mxu0 0.0
    %3476 = vmatprep.subr.mxu0 0.0
    %3477 = vmatpush1.msra.mxu0 0.0
    %3478 = vmatprep.subr.mxu0 0.0
    %3479 = vmatpush1.msra.mxu0 0.0
    %3480 = vmatprep.subr.mxu0 0.0
    %3481 = vmatpush1.msra.mxu0 0.0
    %3482 = vmatprep.subr.mxu0 0.0
    %3483 = vmatpush1.msra.mxu0 0.0
    %3484 = vmatprep.subr.mxu0 0.0
    %3485 = vmatpush1.msra.mxu0 0.0
    %3486 = vmatprep.subr.mxu0 0.0
    %3487 = vmatpush1.msra.mxu0 0.0
    %3488 = vmatprep.subr.mxu0 0.0
    %3489 = vmatpush1.msra.mxu0 0.0
    %3490 = vmatprep.subr.mxu0 0.0
    %3491 = vmatpush1.msra.mxu0 0.0
    %3492 = vmatprep.subr.mxu0 0.0
    %3493 = vmatpush1.msra.mxu0 0.0
    %3494 = vmatprep.subr.mxu0 0.0
    %3495 = vmatpush1.msra.mxu0 0.0
    %3496 = vmatprep.subr.mxu0 0.0
    %3497 = vmatpush1.msra.mxu0 0.0
    %3498 = vmatprep.subr.mxu0 0.0
    %3499 = vmatpush1.msra.mxu0 0.0
    %3500 = vmatprep.subr.mxu0 0.0
    %3501 = vmatpush1.msra.mxu0 0.0
    %3502 = vmatprep.subr.mxu0 0.0
    %3503 = vmatpush1.msra.mxu0 0.0
    %3504 = vmatprep.mubr.f32.mxu0 0.0
    %3505 = vmatmul.mubr.f32.gmra.mrb[0].mxu0 %v2335
    %v3506 = vpop.f32.mrb[0].mxu0
    %v3507 = vadd.f32 0.0, %v3506
    %v3508 = vpop.f32.mrb[0].mxu0
    %3509 = vdwg.mxu0
    %v3510 = vadd.f32 %v3437, %v3507
    %3511 = vmatprep.subr.mxu0 0.0
    %3512 = vmatpush1.msra.mxu0 %v2770
    %3513 = vmatprep.subr.mxu0 0.0
    %3514 = vmatpush1.msra.mxu0 %v2771
    %3515 = vmatprep.subr.mxu0 0.0
    %3516 = vmatpush1.msra.mxu0 %v2772
    %3517 = vmatprep.subr.mxu0 0.0
    %3518 = vmatpush1.msra.mxu0 %v2773
    %3519 = vmatprep.subr.mxu0 0.0
    %3520 = vmatpush1.msra.mxu0 %v2774
    %3521 = vmatprep.subr.mxu0 0.0
    %3522 = vmatpush1.msra.mxu0 %v2775
    %3523 = vmatprep.subr.mxu0 0.0
    %3524 = vmatpush1.msra.mxu0 %v2776
    %3525 = vmatprep.subr.mxu0 0.0
    %3526 = vmatpush1.msra.mxu0 %v2777
    %3527 = vmatprep.subr.mxu0 0.0
    %3528 = vmatpush1.msra.mxu0 %v2778
    %3529 = vmatprep.subr.mxu0 0.0
    %3530 = vmatpush1.msra.mxu0 %v2779
    %3531 = vmatprep.subr.mxu0 0.0
    %3532 = vmatpush1.msra.mxu0 %v2780
    %3533 = vmatprep.subr.mxu0 0.0
    %3534 = vmatpush1.msra.mxu0 %v2781
    %3535 = vmatprep.subr.mxu0 0.0
    %3536 = vmatpush1.msra.mxu0 %v2782
    %3537 = vmatprep.subr.mxu0 0.0
    %3538 = vmatpush1.msra.mxu0 %v2783
    %3539 = vmatprep.subr.mxu0 0.0
    %3540 = vmatpush1.msra.mxu0 %v2784
    %3541 = vmatprep.subr.mxu0 0.0
    %3542 = vmatpush1.msra.mxu0 %v2785
    %3543 = vmatprep.subr.mxu0 0.0
    %3544 = vmatpush1.msra.mxu0 0.0
    %3545 = vmatprep.subr.mxu0 0.0
    %3546 = vmatpush1.msra.mxu0 0.0
    %3547 = vmatprep.subr.mxu0 0.0
    %3548 = vmatpush1.msra.mxu0 0.0
    %3549 = vmatprep.subr.mxu0 0.0
    %3550 = vmatpush1.msra.mxu0 0.0
    %3551 = vmatprep.subr.mxu0 0.0
    %3552 = vmatpush1.msra.mxu0 0.0
    %3553 = vmatprep.subr.mxu0 0.0
    %3554 = vmatpush1.msra.mxu0 0.0
    %3555 = vmatprep.subr.mxu0 0.0
    %3556 = vmatpush1.msra.mxu0 0.0
    %3557 = vmatprep.subr.mxu0 0.0
    %3558 = vmatpush1.msra.mxu0 0.0
    %3559 = vmatprep.subr.mxu0 0.0
    %3560 = vmatpush1.msra.mxu0 0.0
    %3561 = vmatprep.subr.mxu0 0.0
    %3562 = vmatpush1.msra.mxu0 0.0
    %3563 = vmatprep.subr.mxu0 0.0
    %3564 = vmatpush1.msra.mxu0 0.0
    %3565 = vmatprep.subr.mxu0 0.0
    %3566 = vmatpush1.msra.mxu0 0.0
    %3567 = vmatprep.subr.mxu0 0.0
    %3568 = vmatpush1.msra.mxu0 0.0
    %3569 = vmatprep.subr.mxu0 0.0
    %3570 = vmatpush1.msra.mxu0 0.0
    %3571 = vmatprep.subr.mxu0 0.0
    %3572 = vmatpush1.msra.mxu0 0.0
    %3573 = vmatprep.subr.mxu0 0.0
    %3574 = vmatpush1.msra.mxu0 0.0
    %3575 = vmatprep.mubr.f32.mxu0 0.0
    %3576 = vmatmul.mubr.f32.gmra.mrb[0].mxu0 %v2423
    %v3577 = vpop.f32.mrb[0].mxu0
    %v3578 = vadd.f32 0.0, %v3577
    %v3579 = vpop.f32.mrb[0].mxu0
    %3580 = vdwg.mxu0
    %v3581 = vadd.f32 %v3510, %v3578
    %3582 = vmatprep.subr.mxu0 0.0
    %3583 = vmatpush1.msra.mxu0 %v2857
    %3584 = vmatprep.subr.mxu0 0.0
    %3585 = vmatpush1.msra.mxu0 %v2858
    %3586 = vmatprep.subr.mxu0 0.0
    %3587 = vmatpush1.msra.mxu0 %v2859
    %3588 = vmatprep.subr.mxu0 0.0
    %3589 = vmatpush1.msra.mxu0 %v2860
    %3590 = vmatprep.subr.mxu0 0.0
    %3591 = vmatpush1.msra.mxu0 %v2861
    %3592 = vmatprep.subr.mxu0 0.0
    %3593 = vmatpush1.msra.mxu0 %v2862
    %3594 = vmatprep.subr.mxu0 0.0
    %3595 = vmatpush1.msra.mxu0 %v2863
    %3596 = vmatprep.subr.mxu0 0.0
    %3597 = vmatpush1.msra.mxu0 %v2864
    %3598 = vmatprep.subr.mxu0 0.0
    %3599 = vmatpush1.msra.mxu0 %v2865
    %3600 = vmatprep.subr.mxu0 0.0
    %3601 = vmatpush1.msra.mxu0 %v2866
    %3602 = vmatprep.subr.mxu0 0.0
    %3603 = vmatpush1.msra.mxu0 %v2867
    %3604 = vmatprep.subr.mxu0 0.0
    %3605 = vmatpush1.msra.mxu0 %v2868
    %3606 = vmatprep.subr.mxu0 0.0
    %3607 = vmatpush1.msra.mxu0 %v2869
    %3608 = vmatprep.subr.mxu0 0.0
    %3609 = vmatpush1.msra.mxu0 %v2870
    %3610 = vmatprep.subr.mxu0 0.0
    %3611 = vmatpush1.msra.mxu0 %v2871
    %3612 = vmatprep.subr.mxu0 0.0
    %3613 = vmatpush1.msra.mxu0 %v2872
    %3614 = vmatprep.subr.mxu0 0.0
    %3615 = vmatpush1.msra.mxu0 0.0
    %3616 = vmatprep.subr.mxu0 0.0
    %3617 = vmatpush1.msra.mxu0 0.0
    %3618 = vmatprep.subr.mxu0 0.0
    %3619 = vmatpush1.msra.mxu0 0.0
    %3620 = vmatprep.subr.mxu0 0.0
    %3621 = vmatpush1.msra.mxu0 0.0
    %3622 = vmatprep.subr.mxu0 0.0
    %3623 = vmatpush1.msra.mxu0 0.0
    %3624 = vmatprep.subr.mxu0 0.0
    %3625 = vmatpush1.msra.mxu0 0.0
    %3626 = vmatprep.subr.mxu0 0.0
    %3627 = vmatpush1.msra.mxu0 0.0
    %3628 = vmatprep.subr.mxu0 0.0
    %3629 = vmatpush1.msra.mxu0 0.0
    %3630 = vmatprep.subr.mxu0 0.0
    %3631 = vmatpush1.msra.mxu0 0.0
    %3632 = vmatprep.subr.mxu0 0.0
    %3633 = vmatpush1.msra.mxu0 0.0
    %3634 = vmatprep.subr.mxu0 0.0
    %3635 = vmatpush1.msra.mxu0 0.0
    %3636 = vmatprep.subr.mxu0 0.0
    %3637 = vmatpush1.msra.mxu0 0.0
    %3638 = vmatprep.subr.mxu0 0.0
    %3639 = vmatpush1.msra.mxu0 0.0
    %3640 = vmatprep.subr.mxu0 0.0
    %3641 = vmatpush1.msra.mxu0 0.0
    %3642 = vmatprep.subr.mxu0 0.0
    %3643 = vmatpush1.msra.mxu0 0.0
    %3644 = vmatprep.subr.mxu0 0.0
    %3645 = vmatpush1.msra.mxu0 0.0
    %3646 = vmatprep.mubr.f32.mxu0 0.0
    %3647 = vmatmul.mubr.f32.gmra.mrb[0].mxu0 %v3227
    %v3648 = vpop.f32.mrb[0].mxu0
    %v3649 = vadd.f32 0.0, %v3648
    %v3650 = vpop.f32.mrb[0].mxu0
    %3651 = vdwg.mxu0
    %v3652 = vadd.f32 %v3581, %v3649
    %v3653 = vmax.f32 %v3299, %v3652
    %v3654 = vadd.f32 %v3653, %v1643
    %v3655 = vmax.f32 %v3654, 0.0
    %v3656 = vld [vmem:[%s4] sm:$0xff]
    %v3657 = vld [vmem:[%s4 + $0x8] sm:$0xff]
    %v3658 = vld [vmem:[%s4 + $0x10] sm:$0xff]
    %v3659 = vld [vmem:[%s4 + $0x18] sm:$0xff]
    %v3660 = vld [vmem:[%s4 + $0x20] sm:$0xff]
    %v3661 = vld [vmem:[%s4 + $0x28] sm:$0xff]
    %v3662 = vld [vmem:[%s4 + $0x30] sm:$0xff]
    %v3663 = vld [vmem:[%s4 + $0x38] sm:$0xff]
    %v3664 = vld [vmem:[%s4 + $0x40] sm:$0xff]
    %v3665 = vld [vmem:[%s4 + $0x48] sm:$0xff]
    %v3666 = vld [vmem:[%s1657] sm:$0xff]
    %v3667 = vld [vmem:[%s1657 + $0x8] sm:$0xff]
    %v3668 = vld [vmem:[%s1657 + $0x10] sm:$0xff]
    %v3669 = vld [vmem:[%s1657 + $0x18] sm:$0xff]
    %v3670 = vld [vmem:[%s1657 + $0x20] sm:$0xff]
    %v3671 = vld [vmem:[%s1657 + $0x28] sm:$0xff]
    %v3672 = vld [vmem:[%s1657 + $0x30] sm:$0xff]
    %v3673 = vld [vmem:[%s1657 + $0x38] sm:$0xff]
    %v3674 = vld [vmem:[%s1657 + $0x40] sm:$0xff]
    %v3675 = vld [vmem:[%s1657 + $0x48] sm:$0xff]
    %v3677 = vrot.slane %v3655, 1
    %v3678 = vsel %vm1670, %v3677, 0
    %3680 = vmatprep.subr.mxu0 0.0
    %3681 = vmatpush1.msra.mxu0 %v3666
    %3682 = vmatprep.subr.mxu0 0.0
    %3683 = vmatpush1.msra.mxu0 %v3667
    %3684 = vmatprep.subr.mxu0 0.0
    %3685 = vmatpush1.msra.mxu0 %v3668
    %3686 = vmatprep.subr.mxu0 0.0
    %3687 = vmatpush1.msra.mxu0 %v3669
    %3688 = vmatprep.subr.mxu0 0.0
    %3689 = vmatpush1.msra.mxu0 %v3670
    %3690 = vmatprep.subr.mxu0 0.0
    %3691 = vmatpush1.msra.mxu0 %v3671
    %3692 = vmatprep.subr.mxu0 0.0
    %3693 = vmatpush1.msra.mxu0 %v3672
    %3694 = vmatprep.subr.mxu0 0.0
    %3695 = vmatpush1.msra.mxu0 %v3673
    %3696 = vmatprep.subr.mxu0 0.0
    %3697 = vmatpush1.msra.mxu0 %v3674
    %3698 = vmatprep.subr.mxu0 0.0
    %3699 = vmatpush1.msra.mxu0 %v3675
    %3700 = vmatprep.subr.mxu0 0.0
    %3701 = vmatpush1.msra.mxu0 0.0
    %3702 = vmatprep.subr.mxu0 0.0
    %3703 = vmatpush1.msra.mxu0 0.0
    %3704 = vmatprep.subr.mxu0 0.0
    %3705 = vmatpush1.msra.mxu0 0.0
    %3706 = vmatprep.subr.mxu0 0.0
    %3707 = vmatpush1.msra.mxu0 0.0
    %3708 = vmatprep.subr.mxu0 0.0
    %3709 = vmatpush1.msra.mxu0 0.0
    %3710 = vmatprep.subr.mxu0 0.0
    %3711 = vmatpush1.msra.mxu0 0.0
    %3712 = vmatprep.subr.mxu0 0.0
    %3713 = vmatpush1.msra.mxu0 0.0
    %3714 = vmatprep.subr.mxu0 0.0
    %3715 = vmatpush1.msra.mxu0 0.0
    %3716 = vmatprep.subr.mxu0 0.0
    %3717 = vmatpush1.msra.mxu0 0.0
    %3718 = vmatprep.subr.mxu0 0.0
    %3719 = vmatpush1.msra.mxu0 0.0
    %3720 = vmatprep.subr.mxu0 0.0
    %3721 = vmatpush1.msra.mxu0 0.0
    %3722 = vmatprep.subr.mxu0 0.0
    %3723 = vmatpush1.msra.mxu0 0.0
    %3724 = vmatprep.subr.mxu0 0.0
    %3725 = vmatpush1.msra.mxu0 0.0
    %3726 = vmatprep.subr.mxu0 0.0
    %3727 = vmatpush1.msra.mxu0 0.0
    %3728 = vmatprep.subr.mxu0 0.0
    %3729 = vmatpush1.msra.mxu0 0.0
    %3730 = vmatprep.subr.mxu0 0.0
    %3731 = vmatpush1.msra.mxu0 0.0
    %3732 = vmatprep.subr.mxu0 0.0
    %3733 = vmatpush1.msra.mxu0 0.0
    %3734 = vmatprep.subr.mxu0 0.0
    %3735 = vmatpush1.msra.mxu0 0.0
    %3736 = vmatprep.subr.mxu0 0.0
    %3737 = vmatpush1.msra.mxu0 0.0
    %3738 = vmatprep.subr.mxu0 0.0
    %3739 = vmatpush1.msra.mxu0 0.0
    %3740 = vmatprep.subr.mxu0 0.0
    %3741 = vmatpush1.msra.mxu0 0.0
    %3742 = vmatprep.subr.mxu0 0.0
    %3743 = vmatpush1.msra.mxu0 0.0
    %3744 = vmatprep.mubr.f32.mxu0 0.0
    %3745 = vmatmul.mubr.f32.gmra.mrb[0].mxu0 %v3678
    %v3746 = vpop.f32.mrb[0].mxu0
    %v3747 = vadd.f32 0.0, %v3746
    %v3748 = vpop.f32.mrb[0].mxu0
    %3749 = vdwg.mxu0
    %v3750 = vsel %vm1670, %v3655, 0
    %3752 = vmatprep.subr.mxu0 0.0
    %3753 = vmatpush1.msra.mxu0 %v3656
    %3754 = vmatprep.subr.mxu0 0.0
    %3755 = vmatpush1.msra.mxu0 %v3657
    %3756 = vmatprep.subr.mxu0 0.0
    %3757 = vmatpush1.msra.mxu0 %v3658
    %3758 = vmatprep.subr.mxu0 0.0
    %3759 = vmatpush1.msra.mxu0 %v3659
    %3760 = vmatprep.subr.mxu0 0.0
    %3761 = vmatpush1.msra.mxu0 %v3660
    %3762 = vmatprep.subr.mxu0 0.0
    %3763 = vmatpush1.msra.mxu0 %v3661
    %3764 = vmatprep.subr.mxu0 0.0
    %3765 = vmatpush1.msra.mxu0 %v3662
    %3766 = vmatprep.subr.mxu0 0.0
    %3767 = vmatpush1.msra.mxu0 %v3663
    %3768 = vmatprep.subr.mxu0 0.0
    %3769 = vmatpush1.msra.mxu0 %v3664
    %3770 = vmatprep.subr.mxu0 0.0
    %3771 = vmatpush1.msra.mxu0 %v3665
    %3772 = vmatprep.subr.mxu0 0.0
    %3773 = vmatpush1.msra.mxu0 0.0
    %3774 = vmatprep.subr.mxu0 0.0
    %3775 = vmatpush1.msra.mxu0 0.0
    %3776 = vmatprep.subr.mxu0 0.0
    %3777 = vmatpush1.msra.mxu0 0.0
    %3778 = vmatprep.subr.mxu0 0.0
    %3779 = vmatpush1.msra.mxu0 0.0
    %3780 = vmatprep.subr.mxu0 0.0
    %3781 = vmatpush1.msra.mxu0 0.0
    %3782 = vmatprep.subr.mxu0 0.0
    %3783 = vmatpush1.msra.mxu0 0.0
    %3784 = vmatprep.subr.mxu0 0.0
    %3785 = vmatpush1.msra.mxu0 0.0
    %3786 = vmatprep.subr.mxu0 0.0
    %3787 = vmatpush1.msra.mxu0 0.0
    %3788 = vmatprep.subr.mxu0 0.0
    %3789 = vmatpush1.msra.mxu0 0.0
    %3790 = vmatprep.subr.mxu0 0.0
    %3791 = vmatpush1.msra.mxu0 0.0
    %3792 = vmatprep.subr.mxu0 0.0
    %3793 = vmatpush1.msra.mxu0 0.0
    %3794 = vmatprep.subr.mxu0 0.0
    %3795 = vmatpush1.msra.mxu0 0.0
    %3796 = vmatprep.subr.mxu0 0.0
    %3797 = vmatpush1.msra.mxu0 0.0
    %3798 = vmatprep.subr.mxu0 0.0
    %3799 = vmatpush1.msra.mxu0 0.0
    %3800 = vmatprep.subr.mxu0 0.0
    %3801 = vmatpush1.msra.mxu0 0.0
    %3802 = vmatprep.subr.mxu0 0.0
    %3803 = vmatpush1.msra.mxu0 0.0
    %3804 = vmatprep.subr.mxu0 0.0
    %3805 = vmatpush1.msra.mxu0 0.0
    %3806 = vmatprep.subr.mxu0 0.0
    %3807 = vmatpush1.msra.mxu0 0.0
    %3808 = vmatprep.subr.mxu0 0.0
    %3809 = vmatpush1.msra.mxu0 0.0
    %3810 = vmatprep.subr.mxu0 0.0
    %3811 = vmatpush1.msra.mxu0 0.0
    %3812 = vmatprep.subr.mxu0 0.0
    %3813 = vmatpush1.msra.mxu0 0.0
    %3814 = vmatprep.subr.mxu0 0.0
    %3815 = vmatpush1.msra.mxu0 0.0
    %3816 = vmatprep.mubr.f32.mxu0 0.0
    %3817 = vmatmul.mubr.f32.gmra.mrb[0].mxu0 %v3750
    %v3818 = vpop.f32.mrb[0].mxu0
    %v3819 = vadd.f32 %v3747, %v3818
    %v3820 = vpop.f32.mrb[0].mxu0
    %3821 = vdwg.mxu0
    %v3822 = vld [vmem:[%s1815] sm:$0xff]
    %v3823 = vld [vmem:[%s1815 + $0x8] sm:$0xff]
    %v3824 = vld [vmem:[%s1815 + $0x10] sm:$0xff]
    %v3825 = vld [vmem:[%s1815 + $0x18] sm:$0xff]
    %v3826 = vld [vmem:[%s1815 + $0x20] sm:$0xff]
    %v3827 = vld [vmem:[%s1815 + $0x28] sm:$0xff]
    %v3828 = vld [vmem:[%s1815 + $0x30] sm:$0xff]
    %v3829 = vld [vmem:[%s1815 + $0x38] sm:$0xff]
    %v3830 = vld [vmem:[%s1815 + $0x40] sm:$0xff]
    %v3831 = vld [vmem:[%s1815 + $0x48] sm:$0xff]
    %v3832 = vrot.slane %v3655, 2
    %v3833 = vsel %vm1670, %v3832, 0
    %3835 = vmatprep.subr.mxu0 0.0
    %3836 = vmatpush1.msra.mxu0 %v3822
    %3837 = vmatprep.subr.mxu0 0.0
    %3838 = vmatpush1.msra.mxu0 %v3823
    %3839 = vmatprep.subr.mxu0 0.0
    %3840 = vmatpush1.msra.mxu0 %v3824
    %3841 = vmatprep.subr.mxu0 0.0
    %3842 = vmatpush1.msra.mxu0 %v3825
    %3843 = vmatprep.subr.mxu0 0.0
    %3844 = vmatpush1.msra.mxu0 %v3826
    %3845 = vmatprep.subr.mxu0 0.0
    %3846 = vmatpush1.msra.mxu0 %v3827
    %3847 = vmatprep.subr.mxu0 0.0
    %3848 = vmatpush1.msra.mxu0 %v3828
    %3849 = vmatprep.subr.mxu0 0.0
    %3850 = vmatpush1.msra.mxu0 %v3829
    %3851 = vmatprep.subr.mxu0 0.0
    %3852 = vmatpush1.msra.mxu0 %v3830
    %3853 = vmatprep.subr.mxu0 0.0
    %3854 = vmatpush1.msra.mxu0 %v3831
    %3855 = vmatprep.subr.mxu0 0.0
    %3856 = vmatpush1.msra.mxu0 0.0
    %3857 = vmatprep.subr.mxu0 0.0
    %3858 = vmatpush1.msra.mxu0 0.0
    %3859 = vmatprep.subr.mxu0 0.0
    %3860 = vmatpush1.msra.mxu0 0.0
    %3861 = vmatprep.subr.mxu0 0.0
    %3862 = vmatpush1.msra.mxu0 0.0
    %3863 = vmatprep.subr.mxu0 0.0
    %3864 = vmatpush1.msra.mxu0 0.0
    %3865 = vmatprep.subr.mxu0 0.0
    %3866 = vmatpush1.msra.mxu0 0.0
    %3867 = vmatprep.subr.mxu0 0.0
    %3868 = vmatpush1.msra.mxu0 0.0
    %3869 = vmatprep.subr.mxu0 0.0
    %3870 = vmatpush1.msra.mxu0 0.0
    %3871 = vmatprep.subr.mxu0 0.0
    %3872 = vmatpush1.msra.mxu0 0.0
    %3873 = vmatprep.subr.mxu0 0.0
    %3874 = vmatpush1.msra.mxu0 0.0
    %3875 = vmatprep.subr.mxu0 0.0
    %3876 = vmatpush1.msra.mxu0 0.0
    %3877 = vmatprep.subr.mxu0 0.0
    %3878 = vmatpush1.msra.mxu0 0.0
    %3879 = vmatprep.subr.mxu0 0.0
    %3880 = vmatpush1.msra.mxu0 0.0
    %3881 = vmatprep.subr.mxu0 0.0
    %3882 = vmatpush1.msra.mxu0 0.0
    %3883 = vmatprep.subr.mxu0 0.0
    %3884 = vmatpush1.msra.mxu0 0.0
    %3885 = vmatprep.subr.mxu0 0.0
    %3886 = vmatpush1.msra.mxu0 0.0
    %3887 = vmatprep.subr.mxu0 0.0
    %3888 = vmatpush1.msra.mxu0 0.0
    %3889 = vmatprep.subr.mxu0 0.0
    %3890 = vmatpush1.msra.mxu0 0.0
    %3891 = vmatprep.subr.mxu0 0.0
    %3892 = vmatpush1.msra.mxu0 0.0
    %3893 = vmatprep.subr.mxu0 0.0
    %3894 = vmatpush1.msra.mxu0 0.0
    %3895 = vmatprep.subr.mxu0 0.0
    %3896 = vmatpush1.msra.mxu0 0.0
    %3897 = vmatprep.subr.mxu0 0.0
    %3898 = vmatpush1.msra.mxu0 0.0
    %3899 = vmatprep.mubr.f32.mxu0 0.0
    %3900 = vmatmul.mubr.f32.gmra.mrb[0].mxu0 %v3833
    %v3901 = vpop.f32.mrb[0].mxu0
    %v3902 = vadd.f32 0.0, %v3901
    %v3903 = vpop.f32.mrb[0].mxu0
    %3904 = vdwg.mxu0
    %v3905 = vadd.f32 %v3819, %v3902
    %v3906 = vld [vmem:[%s1900] sm:$0xff]
    %v3907 = vld [vmem:[%s1900 + $0x8] sm:$0xff]
    %v3908 = vld [vmem:[%s1900 + $0x10] sm:$0xff]
    %v3909 = vld [vmem:[%s1900 + $0x18] sm:$0xff]
    %v3910 = vld [vmem:[%s1900 + $0x20] sm:$0xff]
    %v3911 = vld [vmem:[%s1900 + $0x28] sm:$0xff]
    %v3912 = vld [vmem:[%s1900 + $0x30] sm:$0xff]
    %v3913 = vld [vmem:[%s1900 + $0x38] sm:$0xff]
    %v3914 = vld [vmem:[%s1900 + $0x40] sm:$0xff]
    %v3915 = vld [vmem:[%s1900 + $0x48] sm:$0xff]
    %v3916 = vrot.slane %v3655, 3
    %v3917 = vsel %vm1670, %v3916, 0
    %3919 = vmatprep.subr.mxu0 0.0
    %3920 = vmatpush1.msra.mxu0 %v3906
    %3921 = vmatprep.subr.mxu0 0.0
    %3922 = vmatpush1.msra.mxu0 %v3907
    %3923 = vmatprep.subr.mxu0 0.0
    %3924 = vmatpush1.msra.mxu0 %v3908
    %3925 = vmatprep.subr.mxu0 0.0
    %3926 = vmatpush1.msra.mxu0 %v3909
    %3927 = vmatprep.subr.mxu0 0.0
    %3928 = vmatpush1.msra.mxu0 %v3910
    %3929 = vmatprep.subr.mxu0 0.0
    %3930 = vmatpush1.msra.mxu0 %v3911
    %3931 = vmatprep.subr.mxu0 0.0
    %3932 = vmatpush1.msra.mxu0 %v3912
    %3933 = vmatprep.subr.mxu0 0.0
    %3934 = vmatpush1.msra.mxu0 %v3913
    %3935 = vmatprep.subr.mxu0 0.0
    %3936 = vmatpush1.msra.mxu0 %v3914
    %3937 = vmatprep.subr.mxu0 0.0
    %3938 = vmatpush1.msra.mxu0 %v3915
    %3939 = vmatprep.subr.mxu0 0.0
    %3940 = vmatpush1.msra.mxu0 0.0
    %3941 = vmatprep.subr.mxu0 0.0
    %3942 = vmatpush1.msra.mxu0 0.0
    %3943 = vmatprep.subr.mxu0 0.0
    %3944 = vmatpush1.msra.mxu0 0.0
    %3945 = vmatprep.subr.mxu0 0.0
    %3946 = vmatpush1.msra.mxu0 0.0
    %3947 = vmatprep.subr.mxu0 0.0
    %3948 = vmatpush1.msra.mxu0 0.0
    %3949 = vmatprep.subr.mxu0 0.0
    %3950 = vmatpush1.msra.mxu0 0.0
    %3951 = vmatprep.subr.mxu0 0.0
    %3952 = vmatpush1.msra.mxu0 0.0
    %3953 = vmatprep.subr.mxu0 0.0
    %3954 = vmatpush1.msra.mxu0 0.0
    %3955 = vmatprep.subr.mxu0 0.0
    %3956 = vmatpush1.msra.mxu0 0.0
    %3957 = vmatprep.subr.mxu0 0.0
    %3958 = vmatpush1.msra.mxu0 0.0
    %3959 = vmatprep.subr.mxu0 0.0
    %3960 = vmatpush1.msra.mxu0 0.0
    %3961 = vmatprep.subr.mxu0 0.0
    %3962 = vmatpush1.msra.mxu0 0.0
    %3963 = vmatprep.subr.mxu0 0.0
    %3964 = vmatpush1.msra.mxu0 0.0
    %3965 = vmatprep.subr.mxu0 0.0
    %3966 = vmatpush1.msra.mxu0 0.0
    %3967 = vmatprep.subr.mxu0 0.0
    %3968 = vmatpush1.msra.mxu0 0.0
    %3969 = vmatprep.subr.mxu0 0.0
    %3970 = vmatpush1.msra.mxu0 0.0
    %3971 = vmatprep.subr.mxu0 0.0
    %3972 = vmatpush1.msra.mxu0 0.0
    %3973 = vmatprep.subr.mxu0 0.0
    %3974 = vmatpush1.msra.mxu0 0.0
    %3975 = vmatprep.subr.mxu0 0.0
    %3976 = vmatpush1.msra.mxu0 0.0
    %3977 = vmatprep.subr.mxu0 0.0
    %3978 = vmatpush1.msra.mxu0 0.0
    %3979 = vmatprep.subr.mxu0 0.0
    %3980 = vmatpush1.msra.mxu0 0.0
    %3981 = vmatprep.subr.mxu0 0.0
    %3982 = vmatpush1.msra.mxu0 0.0
    %3983 = vmatprep.mubr.f32.mxu0 0.0
    %3984 = vmatmul.mubr.f32.gmra.mrb[0].mxu0 %v3917
    %v3985 = vpop.f32.mrb[0].mxu0
    %v3986 = vadd.f32 0.0, %v3985
    %v3987 = vpop.f32.mrb[0].mxu0
    %3988 = vdwg.mxu0
    %v3989 = vadd.f32 %v3905, %v3986
    %v3990 = vadd.f32 %v3989, %v31
    %v3991 = vmax.f32 %v3990, 0.0
    %3992 = vmatprep.subr.mxu0 0.0
    %3993 = vmatpush1.msra.mxu0 %v33
    %3994 = vmatprep.subr.mxu0 0.0
    %3995 = vmatpush1.msra.mxu0 %v34
    %3996 = vmatprep.subr.mxu0 0.0
    %3997 = vmatpush1.msra.mxu0 %v35
    %3998 = vmatprep.subr.mxu0 0.0
    %3999 = vmatpush1.msra.mxu0 %v36
    %4000 = vmatprep.subr.mxu0 0.0
    %4001 = vmatpush1.msra.mxu0 %v37
    %4002 = vmatprep.subr.mxu0 0.0
    %4003 = vmatpush1.msra.mxu0 %v38
    %4004 = vmatprep.subr.mxu0 0.0
    %4005 = vmatpush1.msra.mxu0 %v39
    %4006 = vmatprep.subr.mxu0 0.0
    %4007 = vmatpush1.msra.mxu0 %v40
    %4008 = vmatprep.subr.mxu0 0.0
    %4009 = vmatpush1.msra.mxu0 %v41
    %4010 = vmatprep.subr.mxu0 0.0
    %4011 = vmatpush1.msra.mxu0 %v42
    %4012 = vmatprep.subr.mxu0 0.0
    %4013 = vmatpush1.msra.mxu0 %v43
    %4014 = vmatprep.subr.mxu0 0.0
    %4015 = vmatpush1.msra.mxu0 %v44
    %4016 = vmatprep.subr.mxu0 0.0
    %4017 = vmatpush1.msra.mxu0 %v45
    %4018 = vmatprep.subr.mxu0 0.0
    %4019 = vmatpush1.msra.mxu0 %v46
    %4020 = vmatprep.subr.mxu0 0.0
    %4021 = vmatpush1.msra.mxu0 %v47
    %4022 = vmatprep.subr.mxu0 0.0
    %4023 = vmatpush1.msra.mxu0 %v48
    %4024 = vmatprep.subr.mxu0 0.0
    %4025 = vmatpush1.msra.mxu0 0.0
    %4026 = vmatprep.subr.mxu0 0.0
    %4027 = vmatpush1.msra.mxu0 0.0
    %4028 = vmatprep.subr.mxu0 0.0
    %4029 = vmatpush1.msra.mxu0 0.0
    %4030 = vmatprep.subr.mxu0 0.0
    %4031 = vmatpush1.msra.mxu0 0.0
    %4032 = vmatprep.subr.mxu0 0.0
    %4033 = vmatpush1.msra.mxu0 0.0
    %4034 = vmatprep.subr.mxu0 0.0
    %4035 = vmatpush1.msra.mxu0 0.0
    %4036 = vmatprep.subr.mxu0 0.0
    %4037 = vmatpush1.msra.mxu0 0.0
    %4038 = vmatprep.subr.mxu0 0.0
    %4039 = vmatpush1.msra.mxu0 0.0
    %4040 = vmatprep.subr.mxu0 0.0
    %4041 = vmatpush1.msra.mxu0 0.0
    %4042 = vmatprep.subr.mxu0 0.0
    %4043 = vmatpush1.msra.mxu0 0.0
    %4044 = vmatprep.subr.mxu0 0.0
    %4045 = vmatpush1.msra.mxu0 0.0
    %4046 = vmatprep.subr.mxu0 0.0
    %4047 = vmatpush1.msra.mxu0 0.0
    %4048 = vmatprep.subr.mxu0 0.0
    %4049 = vmatpush1.msra.mxu0 0.0
    %4050 = vmatprep.subr.mxu0 0.0
    %4051 = vmatpush1.msra.mxu0 0.0
    %4052 = vmatprep.subr.mxu0 0.0
    %4053 = vmatpush1.msra.mxu0 0.0
    %4054 = vmatprep.subr.mxu0 0.0
    %4055 = vmatpush1.msra.mxu0 0.0
    %4056 = vmatprep.mubr.f32.mxu0 0.0
    %4057 = vmatmul.mubr.f32.gmra.mrb[0].mxu0 %v3991
    %v4058 = vpop.f32.mrb[0].mxu0
    %v4059 = vadd.f32 %v32, %v4058
    %v4060 = vpop.f32.mrb[0].mxu0
    %4061 = vdwg.mxu0
    %v4062 = vsel %vm2057, %v4059, -inf
    %4063 = vmax.xlane.f32.xlu0 %v4062
    %v4064 = vpop.xlane.xlu0 %4063
    %v4065 = vsub.f32 %v4059, %v4064
    %v4066 = vmul.f32 %v4065, 1.442695
    %v4067 = vpow.pop %v4066
    %v4068 = vsel %vm2057, %v4067, 0.0
    %4069 = vadd.xlane.f32.xlu0 %v4068
    %v4070 = vpop.xlane.xlu0 %4069
    %v4071 = vlog2.pop %v4070
    %v4072 = vmul.f32 %v4071, 0.6931472
    %v4073 = vsub.f32 %v4065, %v4072
    %4074 = vst.msk [vmem:[#allocation2 + $0x1] sm:$0x1] %vm2057, %v4073
    // Predicated region
    $region34: #{convnet_forward.3} parent=1 // pred_check
      _
    $region35: #{convnet_forward.3} parent=1 // pred_check_branch
      %4076 = sbr.rel (0) target = $region37
    $region36: #{convnet_forward.3} parent=1 // pred_region
      %s4078 = ssub.s32 32, 32
      %4079 = vsyncadd [#allocation3], %s4078
      %s4081 = sshll.u32 [#allocation2], 4
      %s4082 = int_to_ptr.vmem [resolvable:$true] %s4081
      %4084 = dma.vmem_to_hbm [thread:$0]  %s4082, 32, %s8, [#allocation3]
    $region37: #{convnet_forward.3} parent=1 // pred_fallthru
      _
    // Predicated region
    $region38: #{convnet_forward.3} parent=1 // pred_check
      _
    $region39: #{convnet_forward.3} parent=1 // pred_check_branch
      %4086 = sbr.rel (0) target = $region41
    $region40: #{convnet_forward.3} parent=1 // pred_region
      %4087 = dma.done [#allocation3], 32
    $region41: #{convnet_forward.3} parent=1 // pred_fallthru
      _
    %4088 = vsyncpa [#allocation3], 1

</llo_original>
